<compile_context>
chip_gen: v7x
topology: tpu7x:2x2x1
jax: 0.10.0
libtpu: 0.0.40
codegen_flags: <defaults>
</compile_context>

<pallas_src>
import functools
import jax
import jax.numpy as jnp
from jax.experimental import pallas as pl
from jax.experimental.pallas import tpu as pltpu


_SPATIAL_TILE = 1024   # target lane tile for the pointwise kernels
_MODE_TILE_L = 512     # target lane tile for the spectral mode-mix
_MODE_TILE_CO = 16     # out-channel tile for the spectral mode-mix


def _spatial_tile(s, target=_SPATIAL_TILE):
    # Full dim if it fits (always legal); otherwise a 128-multiple tile with a
    # pl.cdiv grid -- Pallas masks the ragged last block.
    return s if s <= target else (target // 128) * 128


# ----------------------------------------------------------------------------
# GELU (exact erf semantics, like torch F.gelu default).
# Abramowitz-Stegun 7.1.26; 1/(1+p|z|) via EUP reciprocal + one Newton step.
# ----------------------------------------------------------------------------
def _gelu(x):
    z = x * 0.7071067811865476
    az = jnp.abs(z)
    d = 1.0 + 0.3275911 * az
    t = pl.reciprocal(d, approx=True)
    t = t * (2.0 - d * t)                       # one Newton step -> ~f32 exact
    poly = ((((1.061405429 * t - 1.453152027) * t + 1.421413741) * t
             - 0.284496736) * t + 0.254829592) * t
    e = 1.0 - poly * jnp.exp(-az * az)          # erf(|z|)
    erf = jnp.where(z >= 0.0, e, -e)
    return 0.5 * x * (1.0 + erf)


# ----------------------------------------------------------------------------
# Kernel 1: fc0 with fused grid-channel concat (all channels-first).
#   x tile (Cin, ts)  ->  out tile (W, ts).
# ----------------------------------------------------------------------------
def _fc0_kernel(x_ref, g_ref, wx_ref, wg_ref, b_ref, o_ref):
    y = jnp.dot(wx_ref[...], x_ref[0], preferred_element_type=jnp.float32)
    g = g_ref[...]                                   # (3, ts)
    wg = wg_ref[...]                                 # (W, 3)
    y = (y + wg[:, 0:1] * g[0:1, :] + wg[:, 1:2] * g[1:2, :]
           + wg[:, 2:3] * g[2:3, :] + b_ref[...])
    o_ref[0] = y


def _fc0(x_cf, g, wx, wg, b0):
    bsz, cin, ns = x_cf.shape
    w = wx.shape[0]
    ts = _spatial_tile(ns)
    grid = (bsz, pl.cdiv(ns, ts))
    return pl.pallas_call(
        _fc0_kernel,
        out_shape=jax.ShapeDtypeStruct((bsz, w, ns), jnp.float32),
        grid=grid,
        in_specs=[
            pl.BlockSpec((1, cin, ts), lambda bi, si: (bi, 0, si)),
            pl.BlockSpec((3, ts), lambda bi, si: (0, si)),
            pl.BlockSpec((w, cin), lambda bi, si: (0, 0)),
            pl.BlockSpec((w, 3), lambda bi, si: (0, 0)),
            pl.BlockSpec((w, 1), lambda bi, si: (0, 0)),
        ],
        out_specs=pl.BlockSpec((1, w, ts), lambda bi, si: (bi, 0, si)),
        compiler_params=pltpu.CompilerParams(
            dimension_semantics=("parallel", "parallel")),
    )(x_cf, g, wx, wg, b0)


# ----------------------------------------------------------------------------
# Kernel 2: fused Fourier-layer pointwise part:
#   out = [GELU]( W @ act + b + spectral_skip ),   all channels-first.
# ----------------------------------------------------------------------------
def _wlayer_kernel(a_ref, s_ref, w_ref, b_ref, o_ref, *, apply_gelu):
    y = jnp.dot(w_ref[...], a_ref[0], preferred_element_type=jnp.float32)
    y = y + b_ref[...] + s_ref[0]
    if apply_gelu:
        y = _gelu(y)
    o_ref[0] = y


def _wlayer(act, skip, wt, bt, *, apply_gelu):
    bsz, ci, s = act.shape
    co = wt.shape[0]
    ts = _spatial_tile(s)
    grid = (bsz, pl.cdiv(s, ts))
    kernel = functools.partial(_wlayer_kernel, apply_gelu=apply_gelu)
    return pl.pallas_call(
        kernel,
        out_shape=jax.ShapeDtypeStruct((bsz, co, s), jnp.float32),
        grid=grid,
        in_specs=[
            pl.BlockSpec((1, ci, ts), lambda bi, si: (bi, 0, si)),
            pl.BlockSpec((1, co, ts), lambda bi, si: (bi, 0, si)),
            pl.BlockSpec((co, ci), lambda bi, si: (0, 0)),
            pl.BlockSpec((co, 1), lambda bi, si: (0, 0)),
        ],
        out_specs=pl.BlockSpec((1, co, ts), lambda bi, si: (bi, 0, si)),
        compiler_params=pltpu.CompilerParams(
            dimension_semantics=("parallel", "parallel")),
    )(act, skip, wt, bt)


# ----------------------------------------------------------------------------
# Kernel 3: fused head  fc1 -> GELU -> fc2 (the (128, ts) hidden stays on-chip).
# ----------------------------------------------------------------------------
def _head_kernel(a_ref, w1_ref, b1_ref, w2_ref, b2_ref, o_ref):
    h = jnp.dot(w1_ref[...], a_ref[0], preferred_element_type=jnp.float32)
    h = _gelu(h + b1_ref[...])
    y = jnp.dot(w2_ref[...], h, preferred_element_type=jnp.float32) + b2_ref[...]
    o_ref[0] = y


def _head(act, w1t, b1, w2t, b2):
    bsz, w, s = act.shape
    hdim = w1t.shape[0]
    co = w2t.shape[0]
    ts = _spatial_tile(s)
    grid = (bsz, pl.cdiv(s, ts))
    return pl.pallas_call(
        _head_kernel,
        out_shape=jax.ShapeDtypeStruct((bsz, co, s), jnp.float32),
        grid=grid,
        in_specs=[
            pl.BlockSpec((1, w, ts), lambda bi, si: (bi, 0, si)),
            pl.BlockSpec((hdim, w), lambda bi, si: (0, 0)),
            pl.BlockSpec((hdim, 1), lambda bi, si: (0, 0)),
            pl.BlockSpec((co, hdim), lambda bi, si: (0, 0)),
            pl.BlockSpec((co, 1), lambda bi, si: (0, 0)),
        ],
        out_specs=pl.BlockSpec((1, co, ts), lambda bi, si: (bi, 0, si)),
        compiler_params=pltpu.CompilerParams(
            dimension_semantics=("parallel", "parallel")),
    )(act, w1t, b1, w2t, b2)


# ----------------------------------------------------------------------------
# Kernel 4: complex spectral mode mixing, all 4 corners in one call.
#   out[b, o, l] = sum_i x[b, i, l] * w[i, o, l]  (complex), l = (corner, mode)
#   flattened so the lane axis is 4*m1*m2*m3 >= 128 (lane dense).
# ----------------------------------------------------------------------------
def _mode_mix_kernel(xr_ref, xi_ref, wr_ref, wi_ref, or_ref, oi_ref):
    ci = wr_ref.shape[0]
    acc_r = None
    acc_i = None
    for i in range(ci):                     # small Ci; per-iter ref loads keep
        xr_i = xr_ref[0, i:i + 1, :]        # live vreg ranges bounded.
        xi_i = xi_ref[0, i:i + 1, :]
        wr_i = wr_ref[i]
        wi_i = wi_ref[i]
        pr = xr_i * wr_i - xi_i * wi_i
        pi = xr_i * wi_i + xi_i * wr_i
        acc_r = pr if acc_r is None else acc_r + pr
        acc_i = pi if acc_i is None else acc_i + pi
    or_ref[0] = acc_r
    oi_ref[0] = acc_i


def _mode_mix(xr, xi, wr, wi):
    bsz, ci, l = xr.shape
    co = wr.shape[1]
    lt = min(_MODE_TILE_L, l) if l % 128 == 0 else l
    ct = min(_MODE_TILE_CO, co) if co % 8 == 0 else co
    grid = (bsz, pl.cdiv(co, ct), pl.cdiv(l, lt))
    x_spec = pl.BlockSpec((1, ci, lt), lambda b, c, m: (b, 0, m))
    w_spec = pl.BlockSpec((ci, ct, lt), lambda b, c, m: (0, c, m))
    o_spec = pl.BlockSpec((1, ct, lt), lambda b, c, m: (b, c, m))
    return pl.pallas_call(
        _mode_mix_kernel,
        out_shape=(jax.ShapeDtypeStruct((bsz, co, l), jnp.float32),
                   jax.ShapeDtypeStruct((bsz, co, l), jnp.float32)),
        grid=grid,
        in_specs=[x_spec, x_spec, w_spec, w_spec],
        out_specs=(o_spec, o_spec),
        compiler_params=pltpu.CompilerParams(
            dimension_semantics=("parallel", "parallel", "parallel"),
            vmem_limit_bytes=48 * 1024 * 1024),
    )(xr, xi, wr, wi)


def _stack_spectral_weights(ws):
    """4 complex (Ci,Co,m1,m2,m3) -> real/imag (Ci, Co, 4*m1*m2*m3) f32."""
    w = jnp.stack(ws, axis=2)                        # (Ci, Co, 4, m1, m2, m3)
    ci, co = w.shape[0], w.shape[1]
    w = w.reshape(ci, co, -1)
    return jnp.real(w).astype(jnp.float32), jnp.imag(w).astype(jnp.float32)


def spectral_conv3d(x, wr, wi, m1, m2, m3):
    """x: (B, Ci, X, Y, Tp) f32 channels-first; wr/wi: (Ci, Co, 4*M) f32."""
    # TODO(synk): rfftn / irfftn have no Pallas primitive; computed in plain JAX.
    bsz, ci, sx, sy, tp = x.shape
    co = wr.shape[1]
    tf = tp // 2 + 1
    m = m1 * m2 * m3
    x_ft = jnp.fft.rfftn(x, axes=(2, 3, 4))
    corners = jnp.stack(
        [x_ft[:, :, :m1, :m2, :m3],
         x_ft[:, :, -m1:, :m2, :m3],
         x_ft[:, :, :m1, -m2:, :m3],
         x_ft[:, :, -m1:, -m2:, :m3]], axis=2)       # (B, Ci, 4, m1, m2, m3)
    xc = corners.reshape(bsz, ci, 4 * m)
    out_r, out_i = _mode_mix(jnp.real(xc).astype(jnp.float32),
                             jnp.imag(xc).astype(jnp.float32), wr, wi)
    oc = (out_r + 1j * out_i).astype(jnp.complex64).reshape(bsz, co, 4, m1, m2, m3)
    out_ft = jnp.zeros((bsz, co, sx, sy, tf), jnp.complex64)
    out_ft = out_ft.at[:, :, :m1, :m2, :m3].set(oc[:, :, 0])
    out_ft = out_ft.at[:, :, -m1:, :m2, :m3].set(oc[:, :, 1])
    out_ft = out_ft.at[:, :, :m1, -m2:, :m3].set(oc[:, :, 2])
    out_ft = out_ft.at[:, :, -m1:, -m2:, :m3].set(oc[:, :, 3])
    x_out = jnp.fft.irfftn(out_ft, s=(sx, sy, tp), axes=(2, 3, 4))
    return x_out.astype(jnp.float32)


# ----------------------------------------------------------------------------
# FNO3d_binseg forward
# ----------------------------------------------------------------------------
def fno3d_binseg_forward(params, x, *, modes1, modes2, modes3, padding=6):
    bsz, sx, sy, st, c_in = x.shape
    width = params["fc0_w"].shape[1]
    ns = sx * sy * st

    # Grid channels as a tiny (3, Ns) array; fused into the fc0 kernel so the
    # 67-channel concat never hits HBM.
    gx = jnp.linspace(0.0, 1.0, sx, dtype=jnp.float32)
    gy = jnp.linspace(0.0, 1.0, sy, dtype=jnp.float32)
    gz = jnp.linspace(0.0, 1.0, st, dtype=jnp.float32)
    g = jnp.stack([
        jnp.broadcast_to(gx[:, None, None], (sx, sy, st)).reshape(ns),
        jnp.broadcast_to(gy[None, :, None], (sx, sy, st)).reshape(ns),
        jnp.broadcast_to(gz[None, None, :], (sx, sy, st)).reshape(ns),
    ], axis=0)                                                 # (3, Ns)

    # Channels-first input so fc0 is a clean (W,Cin)@(Cin,ts) MXU matmul.
    x_cf = jnp.transpose(x.reshape(bsz, ns, c_in).astype(jnp.float32),
                         (0, 2, 1))                            # (B, Cin, Ns)
    wx = params["fc0_w"][:c_in].T                              # (W, Cin)
    wg = params["fc0_w"][c_in:].T                              # (W, 3)
    b0 = params["fc0_b"].reshape(width, 1)
    act = _fc0(x_cf, g, wx, wg, b0)                            # (B, W, Ns)

    act = act.reshape(bsz, width, sx, sy, st)
    act = jnp.pad(act, ((0, 0), (0, 0), (0, 0), (0, 0), (0, padding)))
    tp = st + padding
    s = sx * sy * tp
    act = act.reshape(bsz, width, s)

    for l in range(4):
        wr, wi = _stack_spectral_weights(params[f"conv{l}"])
        x1 = spectral_conv3d(act.reshape(bsz, width, sx, sy, tp), wr, wi,
                             modes1, modes2, modes3)           # (B, W, X, Y, Tp)
        act = _wlayer(act, x1.reshape(bsz, width, s),
                      params[f"w{l}_w"].T,
                      params[f"w{l}_b"].reshape(width, 1),
                      apply_gelu=(l < 3))                      # (B, W, S)

    act = act.reshape(bsz, width, sx, sy, tp)[..., :st]        # crop T padding
    act = act.reshape(bsz, width, ns)

    out = _head(act, params["fc1_w"].T, params["fc1_b"].reshape(-1, 1),
                params["fc2_w"].T, params["fc2_b"].reshape(-1, 1))  # (B, 2, Ns)
    out = out.reshape(bsz, 2, sx, sy, st)
    return jnp.transpose(out, (0, 2, 3, 4, 1))                 # (B, X, Y, T, 2)


# ----------------------------------------------------------------------------
# Deterministic parameter initialization (synthetic; shapes match the module)
# ----------------------------------------------------------------------------
def init_params(key, width, modes1, modes2, modes3, c_in=64):
    keys = jax.random.split(key, 16)
    ki = iter(keys)

    def lin(k, ci, co):
        kw, kb = jax.random.split(k)
        w = jax.random.normal(kw, (ci, co), jnp.float32) / jnp.sqrt(float(ci))
        bias = jax.random.normal(kb, (co,), jnp.float32) * 0.01
        return w, bias

    def spec(k, ci, co):
        scale = 1.0 / (ci * co)
        ks = jax.random.split(k, 8)
        ws = []
        for j in range(4):
            re = jax.random.uniform(ks[2 * j], (ci, co, modes1, modes2, modes3),
                                    jnp.float32)
            im = jax.random.uniform(ks[2 * j + 1], (ci, co, modes1, modes2, modes3),
                                    jnp.float32)
            ws.append((scale * (re + 1j * im)).astype(jnp.complex64))
        return ws

    p = {}
    p["fc0_w"], p["fc0_b"] = lin(next(ki), c_in + 3, width)
    for l in range(4):
        p[f"conv{l}"] = spec(next(ki), width, width)
        p[f"w{l}_w"], p[f"w{l}_b"] = lin(next(ki), width, width)
    p["fc1_w"], p["fc1_b"] = lin(next(ki), width, 128)
    p["fc2_w"], p["fc2_b"] = lin(next(ki), 128, 2)
    return p


if __name__ == "__main__":
    B, X, Y, T = 2, 8, 8, 8
    C_IN = 64                      # fc0 expects 64 + 3 grid channels = 67
    MODES1 = MODES2 = MODES3 = 4
    WIDTH = 8

    key = jax.random.PRNGKey(0)
    k_in, k_par = jax.random.split(key)
    x = jax.random.normal(k_in, (B, X, Y, T, C_IN), dtype=jnp.float32)
    params = init_params(k_par, WIDTH, MODES1, MODES2, MODES3, c_in=C_IN)

    fwd = jax.jit(functools.partial(fno3d_binseg_forward, modes1=MODES1,
                                    modes2=MODES2, modes3=MODES3, padding=6))
    out = fwd(params, x)
    out = jax.block_until_ready(out)
    assert out.shape == (B, X, Y, T, 2), out.shape
    assert bool(jnp.all(jnp.isfinite(out)))
    print("KERNEL_OK")
</pallas_src>

<mosaic_0001>
module attributes {stable_mosaic.version = 11 : i64} {
  func.func @_fc0_kernel(%arg0: i32, %arg1: i32, %arg2: memref<1x64x512xf32, #tpu.memory_space<vmem>>, %arg3: memref<3x512xf32, #tpu.memory_space<vmem>>, %arg4: memref<8x64xf32, #tpu.memory_space<vmem>>, %arg5: memref<8x3xf32, #tpu.memory_space<vmem>>, %arg6: memref<8x1xf32, #tpu.memory_space<vmem>>, %arg7: memref<1x8x512xf32, #tpu.memory_space<vmem>>) attributes {dimension_semantics = [#tpu.dimension_semantics<parallel>, #tpu.dimension_semantics<parallel>], iteration_bounds = array<i64: 2, 1>, scalar_prefetch = 0 : i64, scratch_operands = 0 : i64, tpu.core_type = #tpu.core_type<tc>, window_params = [{transform_indices = @transform_0, window_bounds = array<i64: 1, 64, 512>}, {transform_indices = @transform_1, window_bounds = array<i64: 3, 512>}, {pipeline_mode = #tpu.pipeline_mode<synchronous>, transform_indices = @transform_2, window_bounds = array<i64: 8, 64>}, {pipeline_mode = #tpu.pipeline_mode<synchronous>, transform_indices = @transform_3, window_bounds = array<i64: 8, 3>}, {pipeline_mode = #tpu.pipeline_mode<synchronous>, transform_indices = @transform_4, window_bounds = array<i64: 8, 1>}, {transform_indices = @transform_5, window_bounds = array<i64: 1, 8, 512>}]} {
    %c0 = arith.constant 0 : index
    %c0_0 = arith.constant 0 : index
    %0 = vector.load %arg4[%c0, %c0_0] : memref<8x64xf32, #tpu.memory_space<vmem>>, vector<8x64xf32>
    %c0_1 = arith.constant 0 : index
    %c0_2 = arith.constant 0 : index
    %c0_3 = arith.constant 0 : index
    %1 = vector.load %arg2[%c0_1, %c0_2, %c0_3] : memref<1x64x512xf32, #tpu.memory_space<vmem>>, vector<1x64x512xf32>
    %2 = vector.shape_cast %1 : vector<1x64x512xf32> to vector<64x512xf32>
    %cst = arith.constant dense<0.000000e+00> : vector<8x512xf32>
    %3 = tpu.matmul %0, %2, %cst {dimension_numbers = #tpu.dot_dimension_numbers<[1], [0], [0], [1], [0, 0, 1, 1], [], []>} : vector<8x64xf32>, vector<64x512xf32>, vector<8x512xf32> -> vector<8x512xf32>
    %c0_4 = arith.constant 0 : index
    %c0_5 = arith.constant 0 : index
    %4 = vector.load %arg3[%c0_4, %c0_5] : memref<3x512xf32, #tpu.memory_space<vmem>>, vector<3x512xf32>
    %c0_6 = arith.constant 0 : index
    %c0_7 = arith.constant 0 : index
    %5 = vector.load %arg5[%c0_6, %c0_7] : memref<8x3xf32, #tpu.memory_space<vmem>>, vector<8x3xf32>
    %6 = vector.extract_strided_slice %5 {offsets = [0, 0], sizes = [8, 1], strides = [1, 1]} : vector<8x3xf32> to vector<8x1xf32>
    %7 = vector.extract_strided_slice %4 {offsets = [0, 0], sizes = [1, 512], strides = [1, 1]} : vector<3x512xf32> to vector<1x512xf32>
    %8 = vector.broadcast %6 : vector<8x1xf32> to vector<8x512xf32>
    %9 = vector.broadcast %7 : vector<1x512xf32> to vector<8x512xf32>
    %10 = arith.mulf %8, %9 : vector<8x512xf32>
    %11 = arith.addf %3, %10 : vector<8x512xf32>
    %12 = vector.extract_strided_slice %5 {offsets = [0, 1], sizes = [8, 1], strides = [1, 1]} : vector<8x3xf32> to vector<8x1xf32>
    %13 = vector.extract_strided_slice %4 {offsets = [1, 0], sizes = [1, 512], strides = [1, 1]} : vector<3x512xf32> to vector<1x512xf32>
    %14 = vector.broadcast %12 : vector<8x1xf32> to vector<8x512xf32>
    %15 = vector.broadcast %13 : vector<1x512xf32> to vector<8x512xf32>
    %16 = arith.mulf %14, %15 : vector<8x512xf32>
    %17 = arith.addf %11, %16 : vector<8x512xf32>
    %18 = vector.extract_strided_slice %5 {offsets = [0, 2], sizes = [8, 1], strides = [1, 1]} : vector<8x3xf32> to vector<8x1xf32>
    %19 = vector.extract_strided_slice %4 {offsets = [2, 0], sizes = [1, 512], strides = [1, 1]} : vector<3x512xf32> to vector<1x512xf32>
    %20 = vector.broadcast %18 : vector<8x1xf32> to vector<8x512xf32>
    %21 = vector.broadcast %19 : vector<1x512xf32> to vector<8x512xf32>
    %22 = arith.mulf %20, %21 : vector<8x512xf32>
    %23 = arith.addf %17, %22 : vector<8x512xf32>
    %c0_8 = arith.constant 0 : index
    %c0_9 = arith.constant 0 : index
    %24 = vector.load %arg6[%c0_8, %c0_9] : memref<8x1xf32, #tpu.memory_space<vmem>>, vector<8x1xf32>
    %25 = vector.broadcast %24 : vector<8x1xf32> to vector<8x512xf32>
    %26 = arith.addf %23, %25 : vector<8x512xf32>
    %c0_10 = arith.constant 0 : index
    %c0_11 = arith.constant 0 : index
    %c0_12 = arith.constant 0 : index
    %27 = vector.load %arg7[%c0_10, %c0_11, %c0_12] : memref<1x8x512xf32, #tpu.memory_space<vmem>>, vector<1x8x512xf32>
    %28 = vector.shape_cast %27 : vector<1x8x512xf32> to vector<8x512xf32>
    %29 = vector.shape_cast %26 : vector<8x512xf32> to vector<1x8x512xf32>
    tpu.vector_store %arg7[%c0_10, %c0_11, %c0_12], %29 {strides = array<i32>} : memref<1x8x512xf32, #tpu.memory_space<vmem>>, vector<1x8x512xf32>,
    return
  }
  func.func @transform_0(%arg0: i32, %arg1: i32) -> (i32, i32, i32) {
    %c0_i32 = arith.constant 0 : i32
    %c0_i32_0 = arith.constant 0 : i32
    return %arg0, %c0_i32, %arg1 : i32, i32, i32
  }
  func.func @transform_1(%arg0: i32, %arg1: i32) -> (i32, i32) {
    %c0_i32 = arith.constant 0 : i32
    %c0_i32_0 = arith.constant 0 : i32
    return %c0_i32, %arg1 : i32, i32
  }
  func.func @transform_2(%arg0: i32, %arg1: i32) -> (i32, i32) {
    %c0_i32 = arith.constant 0 : i32
    %c0_i32_0 = arith.constant 0 : i32
    %c0_i32_1 = arith.constant 0 : i32
    return %c0_i32, %c0_i32_0 : i32, i32
  }
  func.func @transform_3(%arg0: i32, %arg1: i32) -> (i32, i32) {
    %c0_i32 = arith.constant 0 : i32
    %c0_i32_0 = arith.constant 0 : i32
    %c0_i32_1 = arith.constant 0 : i32
    return %c0_i32, %c0_i32_0 : i32, i32
  }
  func.func @transform_4(%arg0: i32, %arg1: i32) -> (i32, i32) {
    %c0_i32 = arith.constant 0 : i32
    %c0_i32_0 = arith.constant 0 : i32
    %c0_i32_1 = arith.constant 0 : i32
    return %c0_i32, %c0_i32_0 : i32, i32
  }
  func.func @transform_5(%arg0: i32, %arg1: i32) -> (i32, i32, i32) {
    %c0_i32 = arith.constant 0 : i32
    %c0_i32_0 = arith.constant 0 : i32
    return %arg0, %c0_i32, %arg1 : i32, i32, i32
  }
}

module attributes {stable_mosaic.version = 11 : i64} {
  func.func @_mode_mix_kernel(%arg0: i32, %arg1: i32, %arg2: i32, %arg3: memref<1x8x256xf32, #tpu.memory_space<vmem>>, %arg4: memref<1x8x256xf32, #tpu.memory_space<vmem>>, %arg5: memref<8x8x256xf32, #tpu.memory_space<vmem>>, %arg6: memref<8x8x256xf32, #tpu.memory_space<vmem>>, %arg7: memref<1x8x256xf32, #tpu.memory_space<vmem>>, %arg8: memref<1x8x256xf32, #tpu.memory_space<vmem>>) attributes {dimension_semantics = [#tpu.dimension_semantics<parallel>, #tpu.dimension_semantics<parallel>, #tpu.dimension_semantics<parallel>], iteration_bounds = array<i64: 2, 1, 1>, scalar_prefetch = 0 : i64, scratch_operands = 0 : i64, tpu.core_type = #tpu.core_type<tc>, window_params = [{transform_indices = @transform_0, window_bounds = array<i64: 1, 8, 256>}, {transform_indices = @transform_1, window_bounds = array<i64: 1, 8, 256>}, {transform_indices = @transform_2, window_bounds = array<i64: 8, 8, 256>}, {transform_indices = @transform_3, window_bounds = array<i64: 8, 8, 256>}, {transform_indices = @transform_4, window_bounds = array<i64: 1, 8, 256>}, {transform_indices = @transform_5, window_bounds = array<i64: 1, 8, 256>}]} {
    %c0 = arith.constant 0 : index
    %c0_0 = arith.constant 0 : index
    %c0_1 = arith.constant 0 : index
    %0 = vector.load %arg3[%c0, %c0_0, %c0_1] : memref<1x8x256xf32, #tpu.memory_space<vmem>>, vector<1x1x256xf32>
    %1 = vector.shape_cast %0 : vector<1x1x256xf32> to vector<1x256xf32>
    %c0_2 = arith.constant 0 : index
    %c0_3 = arith.constant 0 : index
    %c0_4 = arith.constant 0 : index
    %2 = vector.load %arg4[%c0_2, %c0_3, %c0_4] : memref<1x8x256xf32, #tpu.memory_space<vmem>>, vector<1x1x256xf32>
    %3 = vector.shape_cast %2 : vector<1x1x256xf32> to vector<1x256xf32>
    %c0_5 = arith.constant 0 : index
    %c0_6 = arith.constant 0 : index
    %c0_7 = arith.constant 0 : index
    %4 = vector.load %arg5[%c0_5, %c0_6, %c0_7] : memref<8x8x256xf32, #tpu.memory_space<vmem>>, vector<1x8x256xf32>
    %5 = vector.shape_cast %4 : vector<1x8x256xf32> to vector<8x256xf32>
    %c0_8 = arith.constant 0 : index
    %c0_9 = arith.constant 0 : index
    %c0_10 = arith.constant 0 : index
    %6 = vector.load %arg6[%c0_8, %c0_9, %c0_10] : memref<8x8x256xf32, #tpu.memory_space<vmem>>, vector<1x8x256xf32>
    %7 = vector.shape_cast %6 : vector<1x8x256xf32> to vector<8x256xf32>
    %8 = vector.broadcast %1 : vector<1x256xf32> to vector<8x256xf32>
    %9 = arith.mulf %8, %5 : vector<8x256xf32>
    %10 = vector.broadcast %3 : vector<1x256xf32> to vector<8x256xf32>
    %11 = arith.mulf %10, %7 : vector<8x256xf32>
    %12 = arith.subf %9, %11 : vector<8x256xf32>
    %13 = vector.broadcast %1 : vector<1x256xf32> to vector<8x256xf32>
    %14 = arith.mulf %13, %7 : vector<8x256xf32>
    %15 = vector.broadcast %3 : vector<1x256xf32> to vector<8x256xf32>
    %16 = arith.mulf %15, %5 : vector<8x256xf32>
    %17 = arith.addf %14, %16 : vector<8x256xf32>
    %c0_11 = arith.constant 0 : index
    %c1 = arith.constant 1 : index
    %c0_12 = arith.constant 0 : index
    %18 = vector.load %arg3[%c0_11, %c1, %c0_12] : memref<1x8x256xf32, #tpu.memory_space<vmem>>, vector<1x1x256xf32>
    %19 = vector.shape_cast %18 : vector<1x1x256xf32> to vector<1x256xf32>
    %c0_13 = arith.constant 0 : index
    %c1_14 = arith.constant 1 : index
    %c0_15 = arith.constant 0 : index
    %20 = vector.load %arg4[%c0_13, %c1_14, %c0_15] : memref<1x8x256xf32, #tpu.memory_space<vmem>>, vector<1x1x256xf32>
    %21 = vector.shape_cast %20 : vector<1x1x256xf32> to vector<1x256xf32>
    %c1_16 = arith.constant 1 : index
    %c0_17 = arith.constant 0 : index
    %c0_18 = arith.constant 0 : index
    %22 = vector.load %arg5[%c1_16, %c0_17, %c0_18] : memref<8x8x256xf32, #tpu.memory_space<vmem>>, vector<1x8x256xf32>
    %23 = vector.shape_cast %22 : vector<1x8x256xf32> to vector<8x256xf32>
    %c1_19 = arith.constant 1 : index
    %c0_20 = arith.constant 0 : index
    %c0_21 = arith.constant 0 : index
    %24 = vector.load %arg6[%c1_19, %c0_20, %c0_21] : memref<8x8x256xf32, #tpu.memory_space<vmem>>, vector<1x8x256xf32>
    %25 = vector.shape_cast %24 : vector<1x8x256xf32> to vector<8x256xf32>
    %26 = vector.broadcast %19 : vector<1x256xf32> to vector<8x256xf32>
    %27 = arith.mulf %26, %23 : vector<8x256xf32>
    %28 = vector.broadcast %21 : vector<1x256xf32> to vector<8x256xf32>
    %29 = arith.mulf %28, %25 : vector<8x256xf32>
    %30 = arith.subf %27, %29 : vector<8x256xf32>
    %31 = vector.broadcast %19 : vector<1x256xf32> to vector<8x256xf32>
    %32 = arith.mulf %31, %25 : vector<8x256xf32>
    %33 = vector.broadcast %21 : vector<1x256xf32> to vector<8x256xf32>
    %34 = arith.mulf %33, %23 : vector<8x256xf32>
    %35 = arith.addf %32, %34 : vector<8x256xf32>
    %36 = arith.addf %12, %30 : vector<8x256xf32>
    %37 = arith.addf %17, %35 : vector<8x256xf32>
    %c0_22 = arith.constant 0 : index
    %c2 = arith.constant 2 : index
    %c0_23 = arith.constant 0 : index
    %38 = vector.load %arg3[%c0_22, %c2, %c0_23] : memref<1x8x256xf32, #tpu.memory_space<vmem>>, vector<1x1x256xf32>
    %39 = vector.shape_cast %38 : vector<1x1x256xf32> to vector<1x256xf32>
    %c0_24 = arith.constant 0 : index
    %c2_25 = arith.constant 2 : index
    %c0_26 = arith.constant 0 : index
    %40 = vector.load %arg4[%c0_24, %c2_25, %c0_26] : memref<1x8x256xf32, #tpu.memory_space<vmem>>, vector<1x1x256xf32>
    %41 = vector.shape_cast %40 : vector<1x1x256xf32> to vector<1x256xf32>
    %c2_27 = arith.constant 2 : index
    %c0_28 = arith.constant 0 : index
    %c0_29 = arith.constant 0 : index
    %42 = vector.load %arg5[%c2_27, %c0_28, %c0_29] : memref<8x8x256xf32, #tpu.memory_space<vmem>>, vector<1x8x256xf32>
    %43 = vector.shape_cast %42 : vector<1x8x256xf32> to vector<8x256xf32>
    %c2_30 = arith.constant 2 : index
    %c0_31 = arith.constant 0 : index
    %c0_32 = arith.constant 0 : index
    %44 = vector.load %arg6[%c2_30, %c0_31, %c0_32] : memref<8x8x256xf32, #tpu.memory_space<vmem>>, vector<1x8x256xf32>
    %45 = vector.shape_cast %44 : vector<1x8x256xf32> to vector<8x256xf32>
    %46 = vector.broadcast %39 : vector<1x256xf32> to vector<8x256xf32>
    %47 = arith.mulf %46, %43 : vector<8x256xf32>
    %48 = vector.broadcast %41 : vector<1x256xf32> to vector<8x256xf32>
    %49 = arith.mulf %48, %45 : vector<8x256xf32>
    %50 = arith.subf %47, %49 : vector<8x256xf32>
    %51 = vector.broadcast %39 : vector<1x256xf32> to vector<8x256xf32>
    %52 = arith.mulf %51, %45 : vector<8x256xf32>
    %53 = vector.broadcast %41 : vector<1x256xf32> to vector<8x256xf32>
    %54 = arith.mulf %53, %43 : vector<8x256xf32>
    %55 = arith.addf %52, %54 : vector<8x256xf32>
    %56 = arith.addf %36, %50 : vector<8x256xf32>
    %57 = arith.addf %37, %55 : vector<8x256xf32>
    %c0_33 = arith.constant 0 : index
    %c3 = arith.constant 3 : index
    %c0_34 = arith.constant 0 : index
    %58 = vector.load %arg3[%c0_33, %c3, %c0_34] : memref<1x8x256xf32, #tpu.memory_space<vmem>>, vector<1x1x256xf32>
    %59 = vector.shape_cast %58 : vector<1x1x256xf32> to vector<1x256xf32>
    %c0_35 = arith.constant 0 : index
    %c3_36 = arith.constant 3 : index
    %c0_37 = arith.constant 0 : index
    %60 = vector.load %arg4[%c0_35, %c3_36, %c0_37] : memref<1x8x256xf32, #tpu.memory_space<vmem>>, vector<1x1x256xf32>
    %61 = vector.shape_cast %60 : vector<1x1x256xf32> to vector<1x256xf32>
    %c3_38 = arith.constant 3 : index
    %c0_39 = arith.constant 0 : index
    %c0_40 = arith.constant 0 : index
    %62 = vector.load %arg5[%c3_38, %c0_39, %c0_40] : memref<8x8x256xf32, #tpu.memory_space<vmem>>, vector<1x8x256xf32>
    %63 = vector.shape_cast %62 : vector<1x8x256xf32> to vector<8x256xf32>
    %c3_41 = arith.constant 3 : index
    %c0_42 = arith.constant 0 : index
    %c0_43 = arith.constant 0 : index
    %64 = vector.load %arg6[%c3_41, %c0_42, %c0_43] : memref<8x8x256xf32, #tpu.memory_space<vmem>>, vector<1x8x256xf32>
    %65 = vector.shape_cast %64 : vector<1x8x256xf32> to vector<8x256xf32>
    %66 = vector.broadcast %59 : vector<1x256xf32> to vector<8x256xf32>
    %67 = arith.mulf %66, %63 : vector<8x256xf32>
    %68 = vector.broadcast %61 : vector<1x256xf32> to vector<8x256xf32>
    %69 = arith.mulf %68, %65 : vector<8x256xf32>
    %70 = arith.subf %67, %69 : vector<8x256xf32>
    %71 = vector.broadcast %59 : vector<1x256xf32> to vector<8x256xf32>
    %72 = arith.mulf %71, %65 : vector<8x256xf32>
    %73 = vector.broadcast %61 : vector<1x256xf32> to vector<8x256xf32>
    %74 = arith.mulf %73, %63 : vector<8x256xf32>
    %75 = arith.addf %72, %74 : vector<8x256xf32>
    %76 = arith.addf %56, %70 : vector<8x256xf32>
    %77 = arith.addf %57, %75 : vector<8x256xf32>
    %c0_44 = arith.constant 0 : index
    %c4 = arith.constant 4 : index
    %c0_45 = arith.constant 0 : index
    %78 = vector.load %arg3[%c0_44, %c4, %c0_45] : memref<1x8x256xf32, #tpu.memory_space<vmem>>, vector<1x1x256xf32>
    %79 = vector.shape_cast %78 : vector<1x1x256xf32> to vector<1x256xf32>
    %c0_46 = arith.constant 0 : index
    %c4_47 = arith.constant 4 : index
    %c0_48 = arith.constant 0 : index
    %80 = vector.load %arg4[%c0_46, %c4_47, %c0_48] : memref<1x8x256xf32, #tpu.memory_space<vmem>>, vector<1x1x256xf32>
    %81 = vector.shape_cast %80 : vector<1x1x256xf32> to vector<1x256xf32>
    %c4_49 = arith.constant 4 : index
    %c0_50 = arith.constant 0 : index
    %c0_51 = arith.constant 0 : index
    %82 = vector.load %arg5[%c4_49, %c0_50, %c0_51] : memref<8x8x256xf32, #tpu.memory_space<vmem>>, vector<1x8x256xf32>
    %83 = vector.shape_cast %82 : vector<1x8x256xf32> to vector<8x256xf32>
    %c4_52 = arith.constant 4 : index
    %c0_53 = arith.constant 0 : index
    %c0_54 = arith.constant 0 : index
    %84 = vector.load %arg6[%c4_52, %c0_53, %c0_54] : memref<8x8x256xf32, #tpu.memory_space<vmem>>, vector<1x8x256xf32>
    %85 = vector.shape_cast %84 : vector<1x8x256xf32> to vector<8x256xf32>
    %86 = vector.broadcast %79 : vector<1x256xf32> to vector<8x256xf32>
    %87 = arith.mulf %86, %83 : vector<8x256xf32>
    %88 = vector.broadcast %81 : vector<1x256xf32> to vector<8x256xf32>
    %89 = arith.mulf %88, %85 : vector<8x256xf32>
    %90 = arith.subf %87, %89 : vector<8x256xf32>
    %91 = vector.broadcast %79 : vector<1x256xf32> to vector<8x256xf32>
    %92 = arith.mulf %91, %85 : vector<8x256xf32>
    %93 = vector.broadcast %81 : vector<1x256xf32> to vector<8x256xf32>
    %94 = arith.mulf %93, %83 : vector<8x256xf32>
    %95 = arith.addf %92, %94 : vector<8x256xf32>
    %96 = arith.addf %76, %90 : vector<8x256xf32>
    %97 = arith.addf %77, %95 : vector<8x256xf32>
    %c0_55 = arith.constant 0 : index
    %c5 = arith.constant 5 : index
    %c0_56 = arith.constant 0 : index
    %98 = vector.load %arg3[%c0_55, %c5, %c0_56] : memref<1x8x256xf32, #tpu.memory_space<vmem>>, vector<1x1x256xf32>
    %99 = vector.shape_cast %98 : vector<1x1x256xf32> to vector<1x256xf32>
    %c0_57 = arith.constant 0 : index
    %c5_58 = arith.constant 5 : index
    %c0_59 = arith.constant 0 : index
    %100 = vector.load %arg4[%c0_57, %c5_58, %c0_59] : memref<1x8x256xf32, #tpu.memory_space<vmem>>, vector<1x1x256xf32>
    %101 = vector.shape_cast %100 : vector<1x1x256xf32> to vector<1x256xf32>
    %c5_60 = arith.constant 5 : index
    %c0_61 = arith.constant 0 : index
    %c0_62 = arith.constant 0 : index
    %102 = vector.load %arg5[%c5_60, %c0_61, %c0_62] : memref<8x8x256xf32, #tpu.memory_space<vmem>>, vector<1x8x256xf32>
    %103 = vector.shape_cast %102 : vector<1x8x256xf32> to vector<8x256xf32>
    %c5_63 = arith.constant 5 : index
    %c0_64 = arith.constant 0 : index
    %c0_65 = arith.constant 0 : index
    %104 = vector.load %arg6[%c5_63, %c0_64, %c0_65] : memref<8x8x256xf32, #tpu.memory_space<vmem>>, vector<1x8x256xf32>
    %105 = vector.shape_cast %104 : vector<1x8x256xf32> to vector<8x256xf32>
    %106 = vector.broadcast %99 : vector<1x256xf32> to vector<8x256xf32>
    %107 = arith.mulf %106, %103 : vector<8x256xf32>
    %108 = vector.broadcast %101 : vector<1x256xf32> to vector<8x256xf32>
    %109 = arith.mulf %108, %105 : vector<8x256xf32>
    %110 = arith.subf %107, %109 : vector<8x256xf32>
    %111 = vector.broadcast %99 : vector<1x256xf32> to vector<8x256xf32>
    %112 = arith.mulf %111, %105 : vector<8x256xf32>
    %113 = vector.broadcast %101 : vector<1x256xf32> to vector<8x256xf32>
    %114 = arith.mulf %113, %103 : vector<8x256xf32>
    %115 = arith.addf %112, %114 : vector<8x256xf32>
    %116 = arith.addf %96, %110 : vector<8x256xf32>
    %117 = arith.addf %97, %115 : vector<8x256xf32>
    %c0_66 = arith.constant 0 : index
    %c6 = arith.constant 6 : index
    %c0_67 = arith.constant 0 : index
    %118 = vector.load %arg3[%c0_66, %c6, %c0_67] : memref<1x8x256xf32, #tpu.memory_space<vmem>>, vector<1x1x256xf32>
    %119 = vector.shape_cast %118 : vector<1x1x256xf32> to vector<1x256xf32>
    %c0_68 = arith.constant 0 : index
    %c6_69 = arith.constant 6 : index
    %c0_70 = arith.constant 0 : index
    %120 = vector.load %arg4[%c0_68, %c6_69, %c0_70] : memref<1x8x256xf32, #tpu.memory_space<vmem>>, vector<1x1x256xf32>
    %121 = vector.shape_cast %120 : vector<1x1x256xf32> to vector<1x256xf32>
    %c6_71 = arith.constant 6 : index
    %c0_72 = arith.constant 0 : index
    %c0_73 = arith.constant 0 : index
    %122 = vector.load %arg5[%c6_71, %c0_72, %c0_73] : memref<8x8x256xf32, #tpu.memory_space<vmem>>, vector<1x8x256xf32>
    %123 = vector.shape_cast %122 : vector<1x8x256xf32> to vector<8x256xf32>
    %c6_74 = arith.constant 6 : index
    %c0_75 = arith.constant 0 : index
    %c0_76 = arith.constant 0 : index
    %124 = vector.load %arg6[%c6_74, %c0_75, %c0_76] : memref<8x8x256xf32, #tpu.memory_space<vmem>>, vector<1x8x256xf32>
    %125 = vector.shape_cast %124 : vector<1x8x256xf32> to vector<8x256xf32>
    %126 = vector.broadcast %119 : vector<1x256xf32> to vector<8x256xf32>
    %127 = arith.mulf %126, %123 : vector<8x256xf32>
    %128 = vector.broadcast %121 : vector<1x256xf32> to vector<8x256xf32>
    %129 = arith.mulf %128, %125 : vector<8x256xf32>
    %130 = arith.subf %127, %129 : vector<8x256xf32>
    %131 = vector.broadcast %119 : vector<1x256xf32> to vector<8x256xf32>
    %132 = arith.mulf %131, %125 : vector<8x256xf32>
    %133 = vector.broadcast %121 : vector<1x256xf32> to vector<8x256xf32>
    %134 = arith.mulf %133, %123 : vector<8x256xf32>
    %135 = arith.addf %132, %134 : vector<8x256xf32>
    %136 = arith.addf %116, %130 : vector<8x256xf32>
    %137 = arith.addf %117, %135 : vector<8x256xf32>
    %c0_77 = arith.constant 0 : index
    %c7 = arith.constant 7 : index
    %c0_78 = arith.constant 0 : index
    %138 = vector.load %arg3[%c0_77, %c7, %c0_78] : memref<1x8x256xf32, #tpu.memory_space<vmem>>, vector<1x1x256xf32>
    %139 = vector.shape_cast %138 : vector<1x1x256xf32> to vector<1x256xf32>
    %c0_79 = arith.constant 0 : index
    %c7_80 = arith.constant 7 : index
    %c0_81 = arith.constant 0 : index
    %140 = vector.load %arg4[%c0_79, %c7_80, %c0_81] : memref<1x8x256xf32, #tpu.memory_space<vmem>>, vector<1x1x256xf32>
    %141 = vector.shape_cast %140 : vector<1x1x256xf32> to vector<1x256xf32>
    %c7_82 = arith.constant 7 : index
    %c0_83 = arith.constant 0 : index
    %c0_84 = arith.constant 0 : index
    %142 = vector.load %arg5[%c7_82, %c0_83, %c0_84] : memref<8x8x256xf32, #tpu.memory_space<vmem>>, vector<1x8x256xf32>
    %143 = vector.shape_cast %142 : vector<1x8x256xf32> to vector<8x256xf32>
    %c7_85 = arith.constant 7 : index
    %c0_86 = arith.constant 0 : index
    %c0_87 = arith.constant 0 : index
    %144 = vector.load %arg6[%c7_85, %c0_86, %c0_87] : memref<8x8x256xf32, #tpu.memory_space<vmem>>, vector<1x8x256xf32>
    %145 = vector.shape_cast %144 : vector<1x8x256xf32> to vector<8x256xf32>
    %146 = vector.broadcast %139 : vector<1x256xf32> to vector<8x256xf32>
    %147 = arith.mulf %146, %143 : vector<8x256xf32>
    %148 = vector.broadcast %141 : vector<1x256xf32> to vector<8x256xf32>
    %149 = arith.mulf %148, %145 : vector<8x256xf32>
    %150 = arith.subf %147, %149 : vector<8x256xf32>
    %151 = vector.broadcast %139 : vector<1x256xf32> to vector<8x256xf32>
    %152 = arith.mulf %151, %145 : vector<8x256xf32>
    %153 = vector.broadcast %141 : vector<1x256xf32> to vector<8x256xf32>
    %154 = arith.mulf %153, %143 : vector<8x256xf32>
    %155 = arith.addf %152, %154 : vector<8x256xf32>
    %156 = arith.addf %136, %150 : vector<8x256xf32>
    %157 = arith.addf %137, %155 : vector<8x256xf32>
    %c0_88 = arith.constant 0 : index
    %c0_89 = arith.constant 0 : index
    %c0_90 = arith.constant 0 : index
    %158 = vector.load %arg7[%c0_88, %c0_89, %c0_90] : memref<1x8x256xf32, #tpu.memory_space<vmem>>, vector<1x8x256xf32>
    %159 = vector.shape_cast %158 : vector<1x8x256xf32> to vector<8x256xf32>
    %160 = vector.shape_cast %156 : vector<8x256xf32> to vector<1x8x256xf32>
    tpu.vector_store %arg7[%c0_88, %c0_89, %c0_90], %160 {strides = array<i32>} : memref<1x8x256xf32, #tpu.memory_space<vmem>>, vector<1x8x256xf32>,
    %c0_91 = arith.constant 0 : index
    %c0_92 = arith.constant 0 : index
    %c0_93 = arith.constant 0 : index
    %161 = vector.load %arg8[%c0_91, %c0_92, %c0_93] : memref<1x8x256xf32, #tpu.memory_space<vmem>>, vector<1x8x256xf32>
    %162 = vector.shape_cast %161 : vector<1x8x256xf32> to vector<8x256xf32>
    %163 = vector.shape_cast %157 : vector<8x256xf32> to vector<1x8x256xf32>
    tpu.vector_store %arg8[%c0_91, %c0_92, %c0_93], %163 {strides = array<i32>} : memref<1x8x256xf32, #tpu.memory_space<vmem>>, vector<1x8x256xf32>,
    return
  }
  func.func @transform_0(%arg0: i32, %arg1: i32, %arg2: i32) -> (i32, i32, i32) {
    %c0_i32 = arith.constant 0 : i32
    %c0_i32_0 = arith.constant 0 : i32
    return %arg0, %c0_i32, %arg2 : i32, i32, i32
  }
  func.func @transform_1(%arg0: i32, %arg1: i32, %arg2: i32) -> (i32, i32, i32) {
    %c0_i32 = arith.constant 0 : i32
    %c0_i32_0 = arith.constant 0 : i32
    return %arg0, %c0_i32, %arg2 : i32, i32, i32
  }
  func.func @transform_2(%arg0: i32, %arg1: i32, %arg2: i32) -> (i32, i32, i32) {
    %c0_i32 = arith.constant 0 : i32
    %c0_i32_0 = arith.constant 0 : i32
    return %c0_i32, %arg1, %arg2 : i32, i32, i32
  }
  func.func @transform_3(%arg0: i32, %arg1: i32, %arg2: i32) -> (i32, i32, i32) {
    %c0_i32 = arith.constant 0 : i32
    %c0_i32_0 = arith.constant 0 : i32
    return %c0_i32, %arg1, %arg2 : i32, i32, i32
  }
  func.func @transform_4(%arg0: i32, %arg1: i32, %arg2: i32) -> (i32, i32, i32) {
    %c0_i32 = arith.constant 0 : i32
    return %arg0, %arg1, %arg2 : i32, i32, i32
  }
  func.func @transform_5(%arg0: i32, %arg1: i32, %arg2: i32) -> (i32, i32, i32) {
    %c0_i32 = arith.constant 0 : i32
    return %arg0, %arg1, %arg2 : i32, i32, i32
  }
}

module attributes {stable_mosaic.version = 11 : i64} {
  func.func @_wlayer_kernel(%arg0: i32, %arg1: i32, %arg2: memref<1x8x896xf32, #tpu.memory_space<vmem>>, %arg3: memref<1x8x896xf32, #tpu.memory_space<vmem>>, %arg4: memref<8x8xf32, #tpu.memory_space<vmem>>, %arg5: memref<8x1xf32, #tpu.memory_space<vmem>>, %arg6: memref<1x8x896xf32, #tpu.memory_space<vmem>>) attributes {dimension_semantics = [#tpu.dimension_semantics<parallel>, #tpu.dimension_semantics<parallel>], iteration_bounds = array<i64: 2, 1>, scalar_prefetch = 0 : i64, scratch_operands = 0 : i64, tpu.core_type = #tpu.core_type<tc>, window_params = [{transform_indices = @transform_0, window_bounds = array<i64: 1, 8, 896>}, {transform_indices = @transform_1, window_bounds = array<i64: 1, 8, 896>}, {pipeline_mode = #tpu.pipeline_mode<synchronous>, transform_indices = @transform_2, window_bounds = array<i64: 8, 8>}, {pipeline_mode = #tpu.pipeline_mode<synchronous>, transform_indices = @transform_3, window_bounds = array<i64: 8, 1>}, {transform_indices = @transform_4, window_bounds = array<i64: 1, 8, 896>}]} {
    %c0 = arith.constant 0 : index
    %c0_0 = arith.constant 0 : index
    %0 = vector.load %arg4[%c0, %c0_0] : memref<8x8xf32, #tpu.memory_space<vmem>>, vector<8x8xf32>
    %c0_1 = arith.constant 0 : index
    %c0_2 = arith.constant 0 : index
    %c0_3 = arith.constant 0 : index
    %1 = vector.load %arg2[%c0_1, %c0_2, %c0_3] : memref<1x8x896xf32, #tpu.memory_space<vmem>>, vector<1x8x896xf32>
    %2 = vector.shape_cast %1 : vector<1x8x896xf32> to vector<8x896xf32>
    %cst = arith.constant dense<0.000000e+00> : vector<8x896xf32>
    %3 = tpu.matmul %0, %2, %cst {dimension_numbers = #tpu.dot_dimension_numbers<[1], [0], [0], [1], [0, 0, 1, 1], [], []>} : vector<8x8xf32>, vector<8x896xf32>, vector<8x896xf32> -> vector<8x896xf32>
    %c0_4 = arith.constant 0 : index
    %c0_5 = arith.constant 0 : index
    %4 = vector.load %arg5[%c0_4, %c0_5] : memref<8x1xf32, #tpu.memory_space<vmem>>, vector<8x1xf32>
    %5 = vector.broadcast %4 : vector<8x1xf32> to vector<8x896xf32>
    %6 = arith.addf %3, %5 : vector<8x896xf32>
    %c0_6 = arith.constant 0 : index
    %c0_7 = arith.constant 0 : index
    %c0_8 = arith.constant 0 : index
    %7 = vector.load %arg3[%c0_6, %c0_7, %c0_8] : memref<1x8x896xf32, #tpu.memory_space<vmem>>, vector<1x8x896xf32>
    %8 = vector.shape_cast %7 : vector<1x8x896xf32> to vector<8x896xf32>
    %9 = arith.addf %6, %8 : vector<8x896xf32>
    %cst_9 = arith.constant 0.707106769 : f32
    %10 = vector.broadcast %cst_9 : f32 to vector<8x896xf32>
    %11 = arith.mulf %9, %10 : vector<8x896xf32>
    %12 = math.absf %11 : vector<8x896xf32>
    %cst_10 = arith.constant 0.327591091 : f32
    %13 = vector.broadcast %cst_10 : f32 to vector<8x896xf32>
    %14 = arith.mulf %13, %12 : vector<8x896xf32>
    %cst_11 = arith.constant 1.000000e+00 : f32
    %15 = vector.broadcast %cst_11 : f32 to vector<8x896xf32>
    %16 = arith.addf %15, %14 : vector<8x896xf32>
    %17 = tpu.reciprocal %16 {approx = true} : vector<8x896xf32> -> vector<8x896xf32>
    %18 = arith.mulf %16, %17 : vector<8x896xf32>
    %cst_12 = arith.constant 2.000000e+00 : f32
    %19 = vector.broadcast %cst_12 : f32 to vector<8x896xf32>
    %20 = arith.subf %19, %18 : vector<8x896xf32>
    %21 = arith.mulf %17, %20 : vector<8x896xf32>
    %cst_13 = arith.constant 1.06140542 : f32
    %22 = vector.broadcast %cst_13 : f32 to vector<8x896xf32>
    %23 = arith.mulf %22, %21 : vector<8x896xf32>
    %cst_14 = arith.constant 1.45315206 : f32
    %24 = vector.broadcast %cst_14 : f32 to vector<8x896xf32>
    %25 = arith.subf %23, %24 : vector<8x896xf32>
    %26 = arith.mulf %25, %21 : vector<8x896xf32>
    %cst_15 = arith.constant 1.42141378 : f32
    %27 = vector.broadcast %cst_15 : f32 to vector<8x896xf32>
    %28 = arith.addf %26, %27 : vector<8x896xf32>
    %29 = arith.mulf %28, %21 : vector<8x896xf32>
    %cst_16 = arith.constant 0.284496725 : f32
    %30 = vector.broadcast %cst_16 : f32 to vector<8x896xf32>
    %31 = arith.subf %29, %30 : vector<8x896xf32>
    %32 = arith.mulf %31, %21 : vector<8x896xf32>
    %cst_17 = arith.constant 0.254829586 : f32
    %33 = vector.broadcast %cst_17 : f32 to vector<8x896xf32>
    %34 = arith.addf %32, %33 : vector<8x896xf32>
    %35 = arith.mulf %34, %21 : vector<8x896xf32>
    %cst_18 = arith.constant 0.000000e+00 : f32
    %36 = vector.broadcast %cst_18 : f32 to vector<8x896xf32>
    %37 = arith.subf %36, %12 : vector<8x896xf32>
    %38 = arith.mulf %37, %12 : vector<8x896xf32>
    %39 = math.exp %38 : vector<8x896xf32>
    %40 = arith.mulf %35, %39 : vector<8x896xf32>
    %cst_19 = arith.constant 1.000000e+00 : f32
    %41 = vector.broadcast %cst_19 : f32 to vector<8x896xf32>
    %42 = arith.subf %41, %40 : vector<8x896xf32>
    %cst_20 = arith.constant 0.000000e+00 : f32
    %43 = vector.broadcast %cst_20 : f32 to vector<8x896xf32>
    %44 = arith.cmpf oge, %11, %43 : vector<8x896xf32>
    %cst_21 = arith.constant 0.000000e+00 : f32
    %45 = vector.broadcast %cst_21 : f32 to vector<8x896xf32>
    %46 = arith.subf %45, %42 : vector<8x896xf32>
    %47 = arith.select %44, %42, %46 : vector<8x896xi1>, vector<8x896xf32>
    %cst_22 = arith.constant 5.000000e-01 : f32
    %48 = vector.broadcast %cst_22 : f32 to vector<8x896xf32>
    %49 = arith.mulf %48, %9 : vector<8x896xf32>
    %cst_23 = arith.constant 1.000000e+00 : f32
    %50 = vector.broadcast %cst_23 : f32 to vector<8x896xf32>
    %51 = arith.addf %50, %47 : vector<8x896xf32>
    %52 = arith.mulf %49, %51 : vector<8x896xf32>
    %c0_24 = arith.constant 0 : index
    %c0_25 = arith.constant 0 : index
    %c0_26 = arith.constant 0 : index
    %53 = vector.load %arg6[%c0_24, %c0_25, %c0_26] : memref<1x8x896xf32, #tpu.memory_space<vmem>>, vector<1x8x896xf32>
    %54 = vector.shape_cast %53 : vector<1x8x896xf32> to vector<8x896xf32>
    %55 = vector.shape_cast %52 : vector<8x896xf32> to vector<1x8x896xf32>
    tpu.vector_store %arg6[%c0_24, %c0_25, %c0_26], %55 {strides = array<i32>} : memref<1x8x896xf32, #tpu.memory_space<vmem>>, vector<1x8x896xf32>,
    return
  }
  func.func @transform_0(%arg0: i32, %arg1: i32) -> (i32, i32, i32) {
    %c0_i32 = arith.constant 0 : i32
    %c0_i32_0 = arith.constant 0 : i32
    return %arg0, %c0_i32, %arg1 : i32, i32, i32
  }
  func.func @transform_1(%arg0: i32, %arg1: i32) -> (i32, i32, i32) {
    %c0_i32 = arith.constant 0 : i32
    %c0_i32_0 = arith.constant 0 : i32
    return %arg0, %c0_i32, %arg1 : i32, i32, i32
  }
  func.func @transform_2(%arg0: i32, %arg1: i32) -> (i32, i32) {
    %c0_i32 = arith.constant 0 : i32
    %c0_i32_0 = arith.constant 0 : i32
    %c0_i32_1 = arith.constant 0 : i32
    return %c0_i32, %c0_i32_0 : i32, i32
  }
  func.func @transform_3(%arg0: i32, %arg1: i32) -> (i32, i32) {
    %c0_i32 = arith.constant 0 : i32
    %c0_i32_0 = arith.constant 0 : i32
    %c0_i32_1 = arith.constant 0 : i32
    return %c0_i32, %c0_i32_0 : i32, i32
  }
  func.func @transform_4(%arg0: i32, %arg1: i32) -> (i32, i32, i32) {
    %c0_i32 = arith.constant 0 : i32
    %c0_i32_0 = arith.constant 0 : i32
    return %arg0, %c0_i32, %arg1 : i32, i32, i32
  }
}

module attributes {stable_mosaic.version = 11 : i64} {
  func.func @_wlayer_kernel(%arg0: i32, %arg1: i32, %arg2: memref<1x8x896xf32, #tpu.memory_space<vmem>>, %arg3: memref<1x8x896xf32, #tpu.memory_space<vmem>>, %arg4: memref<8x8xf32, #tpu.memory_space<vmem>>, %arg5: memref<8x1xf32, #tpu.memory_space<vmem>>, %arg6: memref<1x8x896xf32, #tpu.memory_space<vmem>>) attributes {dimension_semantics = [#tpu.dimension_semantics<parallel>, #tpu.dimension_semantics<parallel>], iteration_bounds = array<i64: 2, 1>, scalar_prefetch = 0 : i64, scratch_operands = 0 : i64, tpu.core_type = #tpu.core_type<tc>, window_params = [{transform_indices = @transform_0, window_bounds = array<i64: 1, 8, 896>}, {transform_indices = @transform_1, window_bounds = array<i64: 1, 8, 896>}, {pipeline_mode = #tpu.pipeline_mode<synchronous>, transform_indices = @transform_2, window_bounds = array<i64: 8, 8>}, {pipeline_mode = #tpu.pipeline_mode<synchronous>, transform_indices = @transform_3, window_bounds = array<i64: 8, 1>}, {transform_indices = @transform_4, window_bounds = array<i64: 1, 8, 896>}]} {
    %c0 = arith.constant 0 : index
    %c0_0 = arith.constant 0 : index
    %0 = vector.load %arg4[%c0, %c0_0] : memref<8x8xf32, #tpu.memory_space<vmem>>, vector<8x8xf32>
    %c0_1 = arith.constant 0 : index
    %c0_2 = arith.constant 0 : index
    %c0_3 = arith.constant 0 : index
    %1 = vector.load %arg2[%c0_1, %c0_2, %c0_3] : memref<1x8x896xf32, #tpu.memory_space<vmem>>, vector<1x8x896xf32>
    %2 = vector.shape_cast %1 : vector<1x8x896xf32> to vector<8x896xf32>
    %cst = arith.constant dense<0.000000e+00> : vector<8x896xf32>
    %3 = tpu.matmul %0, %2, %cst {dimension_numbers = #tpu.dot_dimension_numbers<[1], [0], [0], [1], [0, 0, 1, 1], [], []>} : vector<8x8xf32>, vector<8x896xf32>, vector<8x896xf32> -> vector<8x896xf32>
    %c0_4 = arith.constant 0 : index
    %c0_5 = arith.constant 0 : index
    %4 = vector.load %arg5[%c0_4, %c0_5] : memref<8x1xf32, #tpu.memory_space<vmem>>, vector<8x1xf32>
    %5 = vector.broadcast %4 : vector<8x1xf32> to vector<8x896xf32>
    %6 = arith.addf %3, %5 : vector<8x896xf32>
    %c0_6 = arith.constant 0 : index
    %c0_7 = arith.constant 0 : index
    %c0_8 = arith.constant 0 : index
    %7 = vector.load %arg3[%c0_6, %c0_7, %c0_8] : memref<1x8x896xf32, #tpu.memory_space<vmem>>, vector<1x8x896xf32>
    %8 = vector.shape_cast %7 : vector<1x8x896xf32> to vector<8x896xf32>
    %9 = arith.addf %6, %8 : vector<8x896xf32>
    %c0_9 = arith.constant 0 : index
    %c0_10 = arith.constant 0 : index
    %c0_11 = arith.constant 0 : index
    %10 = vector.load %arg6[%c0_9, %c0_10, %c0_11] : memref<1x8x896xf32, #tpu.memory_space<vmem>>, vector<1x8x896xf32>
    %11 = vector.shape_cast %10 : vector<1x8x896xf32> to vector<8x896xf32>
    %12 = vector.shape_cast %9 : vector<8x896xf32> to vector<1x8x896xf32>
    tpu.vector_store %arg6[%c0_9, %c0_10, %c0_11], %12 {strides = array<i32>} : memref<1x8x896xf32, #tpu.memory_space<vmem>>, vector<1x8x896xf32>,
    return
  }
  func.func @transform_0(%arg0: i32, %arg1: i32) -> (i32, i32, i32) {
    %c0_i32 = arith.constant 0 : i32
    %c0_i32_0 = arith.constant 0 : i32
    return %arg0, %c0_i32, %arg1 : i32, i32, i32
  }
  func.func @transform_1(%arg0: i32, %arg1: i32) -> (i32, i32, i32) {
    %c0_i32 = arith.constant 0 : i32
    %c0_i32_0 = arith.constant 0 : i32
    return %arg0, %c0_i32, %arg1 : i32, i32, i32
  }
  func.func @transform_2(%arg0: i32, %arg1: i32) -> (i32, i32) {
    %c0_i32 = arith.constant 0 : i32
    %c0_i32_0 = arith.constant 0 : i32
    %c0_i32_1 = arith.constant 0 : i32
    return %c0_i32, %c0_i32_0 : i32, i32
  }
  func.func @transform_3(%arg0: i32, %arg1: i32) -> (i32, i32) {
    %c0_i32 = arith.constant 0 : i32
    %c0_i32_0 = arith.constant 0 : i32
    %c0_i32_1 = arith.constant 0 : i32
    return %c0_i32, %c0_i32_0 : i32, i32
  }
  func.func @transform_4(%arg0: i32, %arg1: i32) -> (i32, i32, i32) {
    %c0_i32 = arith.constant 0 : i32
    %c0_i32_0 = arith.constant 0 : i32
    return %arg0, %c0_i32, %arg1 : i32, i32, i32
  }
}

module attributes {stable_mosaic.version = 11 : i64} {
  func.func @_head_kernel(%arg0: i32, %arg1: i32, %arg2: memref<1x8x512xf32, #tpu.memory_space<vmem>>, %arg3: memref<128x8xf32, #tpu.memory_space<vmem>>, %arg4: memref<128x1xf32, #tpu.memory_space<vmem>>, %arg5: memref<2x128xf32, #tpu.memory_space<vmem>>, %arg6: memref<2x1xf32, #tpu.memory_space<vmem>>, %arg7: memref<1x2x512xf32, #tpu.memory_space<vmem>>) attributes {dimension_semantics = [#tpu.dimension_semantics<parallel>, #tpu.dimension_semantics<parallel>], iteration_bounds = array<i64: 2, 1>, scalar_prefetch = 0 : i64, scratch_operands = 0 : i64, tpu.core_type = #tpu.core_type<tc>, window_params = [{transform_indices = @transform_0, window_bounds = array<i64: 1, 8, 512>}, {pipeline_mode = #tpu.pipeline_mode<synchronous>, transform_indices = @transform_1, window_bounds = array<i64: 128, 8>}, {pipeline_mode = #tpu.pipeline_mode<synchronous>, transform_indices = @transform_2, window_bounds = array<i64: 128, 1>}, {pipeline_mode = #tpu.pipeline_mode<synchronous>, transform_indices = @transform_3, window_bounds = array<i64: 2, 128>}, {pipeline_mode = #tpu.pipeline_mode<synchronous>, transform_indices = @transform_4, window_bounds = array<i64: 2, 1>}, {transform_indices = @transform_5, window_bounds = array<i64: 1, 2, 512>}]} {
    %c0 = arith.constant 0 : index
    %c0_0 = arith.constant 0 : index
    %0 = vector.load %arg3[%c0, %c0_0] : memref<128x8xf32, #tpu.memory_space<vmem>>, vector<128x8xf32>
    %c0_1 = arith.constant 0 : index
    %c0_2 = arith.constant 0 : index
    %c0_3 = arith.constant 0 : index
    %1 = vector.load %arg2[%c0_1, %c0_2, %c0_3] : memref<1x8x512xf32, #tpu.memory_space<vmem>>, vector<1x8x512xf32>
    %2 = vector.shape_cast %1 : vector<1x8x512xf32> to vector<8x512xf32>
    %cst = arith.constant dense<0.000000e+00> : vector<128x512xf32>
    %3 = tpu.matmul %0, %2, %cst {dimension_numbers = #tpu.dot_dimension_numbers<[1], [0], [0], [1], [0, 0, 1, 1], [], []>} : vector<128x8xf32>, vector<8x512xf32>, vector<128x512xf32> -> vector<128x512xf32>
    %c0_4 = arith.constant 0 : index
    %c0_5 = arith.constant 0 : index
    %4 = vector.load %arg4[%c0_4, %c0_5] : memref<128x1xf32, #tpu.memory_space<vmem>>, vector<128x1xf32>
    %5 = vector.broadcast %4 : vector<128x1xf32> to vector<128x512xf32>
    %6 = arith.addf %3, %5 : vector<128x512xf32>
    %cst_6 = arith.constant 0.707106769 : f32
    %7 = vector.broadcast %cst_6 : f32 to vector<128x512xf32>
    %8 = arith.mulf %6, %7 : vector<128x512xf32>
    %9 = math.absf %8 : vector<128x512xf32>
    %cst_7 = arith.constant 0.327591091 : f32
    %10 = vector.broadcast %cst_7 : f32 to vector<128x512xf32>
    %11 = arith.mulf %10, %9 : vector<128x512xf32>
    %cst_8 = arith.constant 1.000000e+00 : f32
    %12 = vector.broadcast %cst_8 : f32 to vector<128x512xf32>
    %13 = arith.addf %12, %11 : vector<128x512xf32>
    %14 = tpu.reciprocal %13 {approx = true} : vector<128x512xf32> -> vector<128x512xf32>
    %15 = arith.mulf %13, %14 : vector<128x512xf32>
    %cst_9 = arith.constant 2.000000e+00 : f32
    %16 = vector.broadcast %cst_9 : f32 to vector<128x512xf32>
    %17 = arith.subf %16, %15 : vector<128x512xf32>
    %18 = arith.mulf %14, %17 : vector<128x512xf32>
    %cst_10 = arith.constant 1.06140542 : f32
    %19 = vector.broadcast %cst_10 : f32 to vector<128x512xf32>
    %20 = arith.mulf %19, %18 : vector<128x512xf32>
    %cst_11 = arith.constant 1.45315206 : f32
    %21 = vector.broadcast %cst_11 : f32 to vector<128x512xf32>
    %22 = arith.subf %20, %21 : vector<128x512xf32>
    %23 = arith.mulf %22, %18 : vector<128x512xf32>
    %cst_12 = arith.constant 1.42141378 : f32
    %24 = vector.broadcast %cst_12 : f32 to vector<128x512xf32>
    %25 = arith.addf %23, %24 : vector<128x512xf32>
    %26 = arith.mulf %25, %18 : vector<128x512xf32>
    %cst_13 = arith.constant 0.284496725 : f32
    %27 = vector.broadcast %cst_13 : f32 to vector<128x512xf32>
    %28 = arith.subf %26, %27 : vector<128x512xf32>
    %29 = arith.mulf %28, %18 : vector<128x512xf32>
    %cst_14 = arith.constant 0.254829586 : f32
    %30 = vector.broadcast %cst_14 : f32 to vector<128x512xf32>
    %31 = arith.addf %29, %30 : vector<128x512xf32>
    %32 = arith.mulf %31, %18 : vector<128x512xf32>
    %cst_15 = arith.constant 0.000000e+00 : f32
    %33 = vector.broadcast %cst_15 : f32 to vector<128x512xf32>
    %34 = arith.subf %33, %9 : vector<128x512xf32>
    %35 = arith.mulf %34, %9 : vector<128x512xf32>
    %36 = math.exp %35 : vector<128x512xf32>
    %37 = arith.mulf %32, %36 : vector<128x512xf32>
    %cst_16 = arith.constant 1.000000e+00 : f32
    %38 = vector.broadcast %cst_16 : f32 to vector<128x512xf32>
    %39 = arith.subf %38, %37 : vector<128x512xf32>
    %cst_17 = arith.constant 0.000000e+00 : f32
    %40 = vector.broadcast %cst_17 : f32 to vector<128x512xf32>
    %41 = arith.cmpf oge, %8, %40 : vector<128x512xf32>
    %cst_18 = arith.constant 0.000000e+00 : f32
    %42 = vector.broadcast %cst_18 : f32 to vector<128x512xf32>
    %43 = arith.subf %42, %39 : vector<128x512xf32>
    %44 = arith.select %41, %39, %43 : vector<128x512xi1>, vector<128x512xf32>
    %cst_19 = arith.constant 5.000000e-01 : f32
    %45 = vector.broadcast %cst_19 : f32 to vector<128x512xf32>
    %46 = arith.mulf %45, %6 : vector<128x512xf32>
    %cst_20 = arith.constant 1.000000e+00 : f32
    %47 = vector.broadcast %cst_20 : f32 to vector<128x512xf32>
    %48 = arith.addf %47, %44 : vector<128x512xf32>
    %49 = arith.mulf %46, %48 : vector<128x512xf32>
    %c0_21 = arith.constant 0 : index
    %c0_22 = arith.constant 0 : index
    %50 = vector.load %arg5[%c0_21, %c0_22] : memref<2x128xf32, #tpu.memory_space<vmem>>, vector<2x128xf32>
    %cst_23 = arith.constant dense<0.000000e+00> : vector<2x512xf32>
    %51 = tpu.matmul %50, %49, %cst_23 {dimension_numbers = #tpu.dot_dimension_numbers<[1], [0], [0], [1], [0, 0, 1, 1], [], []>} : vector<2x128xf32>, vector<128x512xf32>, vector<2x512xf32> -> vector<2x512xf32>
    %c0_24 = arith.constant 0 : index
    %c0_25 = arith.constant 0 : index
    %52 = vector.load %arg6[%c0_24, %c0_25] : memref<2x1xf32, #tpu.memory_space<vmem>>, vector<2x1xf32>
    %53 = vector.broadcast %52 : vector<2x1xf32> to vector<2x512xf32>
    %54 = arith.addf %51, %53 : vector<2x512xf32>
    %c0_26 = arith.constant 0 : index
    %c0_27 = arith.constant 0 : index
    %c0_28 = arith.constant 0 : index
    %55 = vector.load %arg7[%c0_26, %c0_27, %c0_28] : memref<1x2x512xf32, #tpu.memory_space<vmem>>, vector<1x2x512xf32>
    %56 = vector.shape_cast %55 : vector<1x2x512xf32> to vector<2x512xf32>
    %57 = vector.shape_cast %54 : vector<2x512xf32> to vector<1x2x512xf32>
    tpu.vector_store %arg7[%c0_26, %c0_27, %c0_28], %57 {strides = array<i32>} : memref<1x2x512xf32, #tpu.memory_space<vmem>>, vector<1x2x512xf32>,
    return
  }
  func.func @transform_0(%arg0: i32, %arg1: i32) -> (i32, i32, i32) {
    %c0_i32 = arith.constant 0 : i32
    %c0_i32_0 = arith.constant 0 : i32
    return %arg0, %c0_i32, %arg1 : i32, i32, i32
  }
  func.func @transform_1(%arg0: i32, %arg1: i32) -> (i32, i32) {
    %c0_i32 = arith.constant 0 : i32
    %c0_i32_0 = arith.constant 0 : i32
    %c0_i32_1 = arith.constant 0 : i32
    return %c0_i32, %c0_i32_0 : i32, i32
  }
  func.func @transform_2(%arg0: i32, %arg1: i32) -> (i32, i32) {
    %c0_i32 = arith.constant 0 : i32
    %c0_i32_0 = arith.constant 0 : i32
    %c0_i32_1 = arith.constant 0 : i32
    return %c0_i32, %c0_i32_0 : i32, i32
  }
  func.func @transform_3(%arg0: i32, %arg1: i32) -> (i32, i32) {
    %c0_i32 = arith.constant 0 : i32
    %c0_i32_0 = arith.constant 0 : i32
    %c0_i32_1 = arith.constant 0 : i32
    return %c0_i32, %c0_i32_0 : i32, i32
  }
  func.func @transform_4(%arg0: i32, %arg1: i32) -> (i32, i32) {
    %c0_i32 = arith.constant 0 : i32
    %c0_i32_0 = arith.constant 0 : i32
    %c0_i32_1 = arith.constant 0 : i32
    return %c0_i32, %c0_i32_0 : i32, i32
  }
  func.func @transform_5(%arg0: i32, %arg1: i32) -> (i32, i32, i32) {
    %c0_i32 = arith.constant 0 : i32
    %c0_i32_0 = arith.constant 0 : i32
    return %arg0, %c0_i32, %arg1 : i32, i32, i32
  }
}

</mosaic_0001>

<llo_original>
// kernel: fno3d_binseg_forward.10
$region0: #{fno3d_binseg_forward.10}
  #allocation0 [shape = 'u32[]', space=smem, size = 0x4, offset = 0x4, fixed_abs, tag = 'smem constant byte address 0x4 - core index']
  #allocation1 [shape = 'u32[144,128]{1,0:T(1,128)}', space=vmem, size = 0x12000, scoped, tag = 'internal scratch']
  %s0 = inlined_call_operand.vmem [shape: f32[2,64,512], index: 0, kind: input, shape index: {}]
  %s1 = inlined_call_operand.vmem [shape: f32[3,512], index: 1, kind: input, shape index: {}]
  %s2 = inlined_call_operand.vmem [shape: f32[8,64], index: 2, kind: input, shape index: {}]
  %s3 = inlined_call_operand.vmem [shape: f32[8,3], index: 3, kind: input, shape index: {}]
  %s4 = inlined_call_operand.vmem [shape: f32[8,1], index: 4, kind: input, shape index: {}]
  %s5 = inlined_call_operand.vmem [shape: f32[2,8,512], index: 5, kind: output, shape index: {}]
  %s6 = sld [smem:[#allocation0]]
  $region53: #{fno3d_binseg_forward.10} parent=0
    _
  %s8 = ssub.s32 1, %s6
  %s9 = scalar_select 0, %s8, %s6
  loop: start=0, step=1, limit=4
  $region2: #{fno3d_binseg_forward.10} parent=0 // loop_pre_header
    _
  $region3: #{fno3d_binseg_forward.10} parent=0 // loop_header
    %s11 = sphi 0, %s15
    %p12 = scmp.ge.s32.totalorder %s11, 4
    %s18 = sphi 0, %s30
    %s19 = sphi 0, %s26
    %s20 = sphi 0, %s18
    %s21 = sphi 0, %s19
    %s22 = sphi 0, %s20
    %s23 = sphi 0, %s21
    %s35 = sphi 0, %s37
    %s38 = sphi 0, %s35
    %s39 = sphi 0, %s38
    %s55 = sphi 0, %s39
    %s61 = sphi 0, %s63
    %s64 = sphi 0, %s61
    %s65 = sphi 0, %s64
    %s81 = sphi 0, %s65
    %s85 = sphi 0, %s85
    %s87 = sphi 0, %s85
    %s88 = sphi 0, %s87
    %s102 = sphi 0, %s88
    %s106 = sphi 0, %s106
    %s108 = sphi 0, %s106
    %s109 = sphi 0, %s108
    %s123 = sphi 0, %s109
    %s127 = sphi 0, %s127
    %s129 = sphi 0, %s127
    %s130 = sphi 0, %s129
    %s144 = sphi 0, %s130
    %s152 = sphi 0, %s154
    %s155 = sphi 0, %s152
    %s156 = sphi 0, %s155
    %s172 = sphi 0, %s156
  $region4: #{fno3d_binseg_forward.10} parent=0 // loop_header_branch
    %14 = sbr.rel (%p12) target = $region8
  $region5: #{fno3d_binseg_forward.10} parent=0 // loop_body
    %s16 = ssub.s32 %s11, 1
    %s17 = ssub.s32 %s11, 2
    %s24 = sadd.s32 1, %s19
    %p25 = scmp.ge.s32.totalorder %s24, 1
    %s26 = scalar_select %p25, 0, %s24
    %s27 = sadd.s32 1, %s18
    %s28 = scalar_select %p25, %s27, %s18
    %p29 = scmp.ge.s32.totalorder %s28, 2
    %s30 = scalar_select %p29, 0, %s28
    %s31 = ssub.s32 %s18, %s30
    %s32 = ssub.s32 %s19, %s26
    %s33 = sor.u32 %s31, %s32
    %p34 = scmp.eq.s32.totalorder %s33, 0
    %s36 = sadd.s32 %s35, 1
    %s37 = scalar_select %p34, %s35, %s36
    %p40 = pneg %p34
    %p41 = scmp.eq.s32.totalorder %s11, 1
    %p42 = por %p40, %p41
    %p43 = scmp.ne.s32.totalorder %s35, %s38
    %p44 = scmp.eq.s32.totalorder %s11, 0
    %p45 = por %p43, %p44
    %p46 = scmp.ne.s32.totalorder %s35, %s38
    %p47 = scmp.eq.s32.totalorder %s16, 1
    %p48 = por %p46, %p47
    %p49 = scmp.ne.s32.totalorder %s38, %s39
    %p50 = scmp.eq.s32.totalorder %s16, 0
    %p51 = por %p49, %p50
    %p52 = scmp.ne.s32.totalorder %s38, %s39
    %p53 = scmp.eq.s32.totalorder %s17, 1
    %p54 = por %p52, %p53
    %p56 = scmp.ne.s32.totalorder %s39, %s55
    %p57 = scmp.eq.s32.totalorder %s17, 0
    %p58 = por %p56, %p57
    %s59 = ssub.s32 %s19, %s26
    %p60 = scmp.eq.s32.totalorder %s59, 0
    %s62 = sadd.s32 %s61, 1
    %s63 = scalar_select %p60, %s61, %s62
    %p66 = pneg %p60
    %p67 = scmp.eq.s32.totalorder %s11, 1
    %p68 = por %p66, %p67
    %p69 = scmp.ne.s32.totalorder %s61, %s64
    %p70 = scmp.eq.s32.totalorder %s11, 0
    %p71 = por %p69, %p70
    %p72 = scmp.ne.s32.totalorder %s61, %s64
    %p73 = scmp.eq.s32.totalorder %s16, 1
    %p74 = por %p72, %p73
    %p75 = scmp.ne.s32.totalorder %s64, %s65
    %p76 = scmp.eq.s32.totalorder %s16, 0
    %p77 = por %p75, %p76
    %p78 = scmp.ne.s32.totalorder %s64, %s65
    %p79 = scmp.eq.s32.totalorder %s17, 1
    %p80 = por %p78, %p79
    %p82 = scmp.ne.s32.totalorder %s65, %s81
    %p83 = scmp.eq.s32.totalorder %s17, 0
    %p84 = por %p82, %p83
    %s86 = sadd.s32 %s85, 1
    %p89 = scmp.eq.s32.totalorder %s11, 1
    %p90 = scmp.ne.s32.totalorder %s85, %s87
    %p91 = scmp.eq.s32.totalorder %s11, 0
    %p92 = por %p90, %p91
    %p93 = scmp.ne.s32.totalorder %s85, %s87
    %p94 = scmp.eq.s32.totalorder %s16, 1
    %p95 = por %p93, %p94
    %p96 = scmp.ne.s32.totalorder %s87, %s88
    %p97 = scmp.eq.s32.totalorder %s16, 0
    %p98 = por %p96, %p97
    %p99 = scmp.ne.s32.totalorder %s87, %s88
    %p100 = scmp.eq.s32.totalorder %s17, 1
    %p101 = por %p99, %p100
    %p103 = scmp.ne.s32.totalorder %s88, %s102
    %p104 = scmp.eq.s32.totalorder %s17, 0
    %p105 = por %p103, %p104
    %s107 = sadd.s32 %s106, 1
    %p110 = scmp.eq.s32.totalorder %s11, 1
    %p111 = scmp.ne.s32.totalorder %s106, %s108
    %p112 = scmp.eq.s32.totalorder %s11, 0
    %p113 = por %p111, %p112
    %p114 = scmp.ne.s32.totalorder %s106, %s108
    %p115 = scmp.eq.s32.totalorder %s16, 1
    %p116 = por %p114, %p115
    %p117 = scmp.ne.s32.totalorder %s108, %s109
    %p118 = scmp.eq.s32.totalorder %s16, 0
    %p119 = por %p117, %p118
    %p120 = scmp.ne.s32.totalorder %s108, %s109
    %p121 = scmp.eq.s32.totalorder %s17, 1
    %p122 = por %p120, %p121
    %p124 = scmp.ne.s32.totalorder %s109, %s123
    %p125 = scmp.eq.s32.totalorder %s17, 0
    %p126 = por %p124, %p125
    %s128 = sadd.s32 %s127, 1
    %p131 = scmp.eq.s32.totalorder %s11, 1
    %p132 = scmp.ne.s32.totalorder %s127, %s129
    %p133 = scmp.eq.s32.totalorder %s11, 0
    %p134 = por %p132, %p133
    %p135 = scmp.ne.s32.totalorder %s127, %s129
    %p136 = scmp.eq.s32.totalorder %s16, 1
    %p137 = por %p135, %p136
    %p138 = scmp.ne.s32.totalorder %s129, %s130
    %p139 = scmp.eq.s32.totalorder %s16, 0
    %p140 = por %p138, %p139
    %p141 = scmp.ne.s32.totalorder %s129, %s130
    %p142 = scmp.eq.s32.totalorder %s17, 1
    %p143 = por %p141, %p142
    %p145 = scmp.ne.s32.totalorder %s130, %s144
    %p146 = scmp.eq.s32.totalorder %s17, 0
    %p147 = por %p145, %p146
    %s148 = ssub.s32 %s18, %s30
    %s149 = ssub.s32 %s19, %s26
    %s150 = sor.u32 %s148, %s149
    %p151 = scmp.eq.s32.totalorder %s150, 0
    %s153 = sadd.s32 %s152, 1
    %s154 = scalar_select %p151, %s152, %s153
    %p157 = pneg %p151
    %p158 = scmp.eq.s32.totalorder %s11, 1
    %p159 = por %p157, %p158
    %p160 = scmp.ne.s32.totalorder %s152, %s155
    %p161 = scmp.eq.s32.totalorder %s11, 0
    %p162 = por %p160, %p161
    %p163 = scmp.ne.s32.totalorder %s152, %s155
    %p164 = scmp.eq.s32.totalorder %s16, 1
    %p165 = por %p163, %p164
    %p166 = scmp.ne.s32.totalorder %s155, %s156
    %p167 = scmp.eq.s32.totalorder %s16, 0
    %p168 = por %p166, %p167
    %p169 = scmp.ne.s32.totalorder %s155, %s156
    %p170 = scmp.eq.s32.totalorder %s17, 1
    %p171 = por %p169, %p170
    %p173 = scmp.ne.s32.totalorder %s156, %s172
    %p174 = scmp.eq.s32.totalorder %s17, 0
    %p175 = por %p173, %p174
    %p176 = scmp.le.s32.totalorder 1, %s11
    %p177 = scmp.lt.s32.totalorder %s11, 3
    %p178 = pnand %p176, %p177
    %p179 = pneg %p178
    // Predicated region
    $region9: #{fno3d_binseg_forward.10} parent=5 // pred_check
      _
    $region10: #{fno3d_binseg_forward.10} parent=5 // pred_check_branch
      %181 = sbr.rel (%p178) target = $region12
    $region11: #{fno3d_binseg_forward.10} parent=5 // pred_region
      %s182 = ssub.s32 %s11, 1
      // Predicated region
      $region13: #{fno3d_binseg_forward.10} parent=11 // pred_check
        %p183 = pneg %p77
      $region14: #{fno3d_binseg_forward.10} parent=11 // pred_check_branch
        %185 = sbr.rel (%p183) target = $region16
      $region15: #{fno3d_binseg_forward.10} parent=11 // pred_region
        %s186 = smul.u32 4, %s21
        %p187 = scmp.lt.s32.totalorder %s186, 3
        %s188 = scalar_select %p187, %s186, 3
        %s189 = smul.addr %s188, 4
        %s190 = scalar_lea.vmem %s1, %s189
        %s191 = smul.u32 4, %s21
      $region16: #{fno3d_binseg_forward.10} parent=11 // pred_fallthru
        _
      // Predicated region
      $region17: #{fno3d_binseg_forward.10} parent=11 // pred_check
        %p192 = pneg %p98
      $region18: #{fno3d_binseg_forward.10} parent=11 // pred_check_branch
        %194 = sbr.rel (%p192) target = $region20
      $region19: #{fno3d_binseg_forward.10} parent=11 // pred_region
        _
      $region20: #{fno3d_binseg_forward.10} parent=11 // pred_fallthru
        _
      // Predicated region
      $region21: #{fno3d_binseg_forward.10} parent=11 // pred_check
        %p195 = pneg %p119
      $region22: #{fno3d_binseg_forward.10} parent=11 // pred_check_branch
        %197 = sbr.rel (%p195) target = $region24
      $region23: #{fno3d_binseg_forward.10} parent=11 // pred_region
        _
      $region24: #{fno3d_binseg_forward.10} parent=11 // pred_fallthru
        _
      // Predicated region
      $region25: #{fno3d_binseg_forward.10} parent=11 // pred_check
        %p198 = pneg %p140
      $region26: #{fno3d_binseg_forward.10} parent=11 // pred_check_branch
        %200 = sbr.rel (%p198) target = $region28
      $region27: #{fno3d_binseg_forward.10} parent=11 // pred_region
        _
      $region28: #{fno3d_binseg_forward.10} parent=11 // pred_fallthru
        _
    $region12: #{fno3d_binseg_forward.10} parent=5 // pred_fallthru
      _
    %p201 = scmp.lt.s32.totalorder %s11, 2
    // Predicated region
    $region29: #{fno3d_binseg_forward.10} parent=5 // pred_check
      %p202 = pneg %p201
    $region30: #{fno3d_binseg_forward.10} parent=5 // pred_check_branch
      %204 = sbr.rel (%p202) target = $region32
    $region31: #{fno3d_binseg_forward.10} parent=5 // pred_region
      // Predicated region
      $region33: #{fno3d_binseg_forward.10} parent=31 // pred_check
        %p205 = pneg %p45
      $region34: #{fno3d_binseg_forward.10} parent=31 // pred_check_branch
        %207 = sbr.rel (%p205) target = $region36
      $region35: #{fno3d_binseg_forward.10} parent=31 // pred_region
        %s208 = smul.u32 4, %s19
        %p209 = scmp.lt.s32.totalorder %s18, 1
        %s210 = scalar_select %p209, %s18, 1
        %p211 = scmp.lt.s32.totalorder %s208, 3
        %s212 = scalar_select %p211, %s208, 3
        %s213 = smul.addr %s210, 32
        %s214 = sadd.s32 %s212, %s213
        %s215 = smul.addr %s214, 8
        %s216 = scalar_lea.vmem %s0, %s215
        %s217 = smul.u32 4, %s19
      $region36: #{fno3d_binseg_forward.10} parent=31 // pred_fallthru
        _
    $region32: #{fno3d_binseg_forward.10} parent=5 // pred_fallthru
      _
    %p218 = scmp.le.s32.totalorder 1, %s11
    %p219 = scmp.lt.s32.totalorder %s11, 3
    %p220 = pnand %p218, %p219
    %p221 = pneg %p220
    // Predicated region
    $region37: #{fno3d_binseg_forward.10} parent=5 // pred_check
      _
    $region38: #{fno3d_binseg_forward.10} parent=5 // pred_check_branch
      %223 = sbr.rel (%p220) target = $region40
    $region39: #{fno3d_binseg_forward.10} parent=5 // pred_region
      %s224 = ssub.s32 %s11, 1
      %s225 = smul.u32 4, %s21
      %p226 = scmp.lt.s32.totalorder %s20, 1
      %s227 = scalar_select %p226, %s20, 1
      %p228 = scmp.lt.s32.totalorder %s225, 3
      %s229 = scalar_select %p228, %s225, 3
      %s230 = smul.addr %s227, 32
      %s231 = sadd.s32 %s229, %s230
      %s232 = smul.addr %s231, 8
      %s233 = scalar_lea.vmem %s0, %s232
      %p234 = pneg %p51
      %p235 = pneg %p48
      %s236 = smul.u32 4, %s21
      %p237 = scmp.lt.s32.totalorder %s236, 3
      %s238 = scalar_select %p237, %s236, 3
      %s239 = smul.addr %s238, 4
      %s240 = scalar_lea.vmem %s1, %s239
      %p241 = pneg %p77
      %p242 = pneg %p74
      %p243 = pneg %p98
      %p244 = pneg %p95
      %p245 = pneg %p119
      %p246 = pneg %p116
      %p247 = pneg %p140
      %p248 = pneg %p137
      %p249 = pneg %p168
      %p250 = pneg %p165
      %s251 = smul.u32 4, %s21
      %p252 = scmp.lt.s32.totalorder %s20, 1
      %s253 = scalar_select %p252, %s20, 1
      %p254 = scmp.lt.s32.totalorder %s251, 3
      %s255 = scalar_select %p254, %s251, 3
      %s256 = smul.addr %s253, 4
      %s257 = sadd.s32 %s255, %s256
      %s258 = smul.addr %s257, 8
      %s259 = scalar_lea.vmem %s5, %s258
      %s260 = smul.u32 4, %s21
      %p261 = scmp.lt.s32.totalorder %s20, 1
      %s262 = scalar_select %p261, %s20, 1
      %p263 = scmp.lt.s32.totalorder %s260, 3
      %s264 = scalar_select %p263, %s260, 3
      %s265 = smul.addr %s262, 32
      %s266 = sadd.s32 %s264, %s265
      %s267 = smul.addr %s266, 8
      %s268 = scalar_lea.vmem %s0, %s267
      %s269 = smul.u32 4, %s21
      %s270 = smul.u32 4, %s21
      %p271 = scmp.lt.s32.totalorder %s270, 3
      %s272 = scalar_select %p271, %s270, 3
      %s273 = smul.addr %s272, 4
      %s274 = scalar_lea.vmem %s1, %s273
      %s275 = smul.u32 4, %s21
      %s276 = smul.u32 4, %s21
      %p277 = scmp.lt.s32.totalorder %s20, 1
      %s278 = scalar_select %p277, %s20, 1
      %p279 = scmp.lt.s32.totalorder %s276, 3
      %s280 = scalar_select %p279, %s276, 3
      %s281 = smul.addr %s278, 4
      %s282 = sadd.s32 %s280, %s281
      %s283 = smul.addr %s282, 8
      %s284 = scalar_lea.vmem %s5, %s283
      %s285 = smul.u32 4, %s21
      %v286 = vld [vmem:[%s2] sm:$0xff]
      %v287 = vld [vmem:[%s268] sm:$0xff]
      %v288 = vld [vmem:[%s268 + $0x8] sm:$0xff]
      %v289 = vld [vmem:[%s268 + $0x10] sm:$0xff]
      %v290 = vld [vmem:[%s268 + $0x18] sm:$0xff]
      %v291 = vld [vmem:[%s268 + $0x20] sm:$0xff]
      %v292 = vld [vmem:[%s268 + $0x28] sm:$0xff]
      %v293 = vld [vmem:[%s268 + $0x30] sm:$0xff]
      %v294 = vld [vmem:[%s268 + $0x38] sm:$0xff]
      %v295 = vld [vmem:[%s268 + $0x40] sm:$0xff]
      %v296 = vld [vmem:[%s268 + $0x48] sm:$0xff]
      %v297 = vld [vmem:[%s268 + $0x50] sm:$0xff]
      %v298 = vld [vmem:[%s268 + $0x58] sm:$0xff]
      %v299 = vld [vmem:[%s268 + $0x60] sm:$0xff]
      %v300 = vld [vmem:[%s268 + $0x68] sm:$0xff]
      %v301 = vld [vmem:[%s268 + $0x70] sm:$0xff]
      %v302 = vld [vmem:[%s268 + $0x78] sm:$0xff]
      %v303 = vld [vmem:[%s268 + $0x80] sm:$0xff]
      %v304 = vld [vmem:[%s268 + $0x88] sm:$0xff]
      %v305 = vld [vmem:[%s268 + $0x90] sm:$0xff]
      %v306 = vld [vmem:[%s268 + $0x98] sm:$0xff]
      %v307 = vld [vmem:[%s268 + $0xa0] sm:$0xff]
      %v308 = vld [vmem:[%s268 + $0xa8] sm:$0xff]
      %v309 = vld [vmem:[%s268 + $0xb0] sm:$0xff]
      %v310 = vld [vmem:[%s268 + $0xb8] sm:$0xff]
      %v311 = vld [vmem:[%s268 + $0xc0] sm:$0xff]
      %v312 = vld [vmem:[%s268 + $0xc8] sm:$0xff]
      %v313 = vld [vmem:[%s268 + $0xd0] sm:$0xff]
      %v314 = vld [vmem:[%s268 + $0xd8] sm:$0xff]
      %v315 = vld [vmem:[%s268 + $0xe0] sm:$0xff]
      %v316 = vld [vmem:[%s268 + $0xe8] sm:$0xff]
      %v317 = vld [vmem:[%s268 + $0xf0] sm:$0xff]
      %v318 = vld [vmem:[%s268 + $0xf8] sm:$0xff]
      %v319 = vld [vmem:[%s274] sm:$0x77]
      %v320 = vld [vmem:[%s274 + $0x8] sm:$0x77]
      %v321 = vld [vmem:[%s3] sm:$0xff]
      %323 = vset.pattern.permute.xlu0 0
      %324 = vperm.xlu0 %323, %v321
      %v325 = vpop.permute.xlu0 %324
      %v329 = vlaneseq
      %v330 = vshrl.u32 %v329, 7
      %v331 = vsub.s32 0, %v330
      %v332 = vrot.slane %v319, %v331
      %v333 = vlaneseq
      %v334 = vshrl.u32 %v333, 7
      %v335 = vsub.s32 4, %v334
      %v336 = vrot.slane %v319, %v335
      %v337 = vlaneseq
      %v338 = vshrl.u32 %v337, 7
      %v339 = vsub.s32 0, %v338
      %v340 = vrot.slane %v320, %v339
      %v341 = vlaneseq
      %v342 = vshrl.u32 %v341, 7
      %v343 = vsub.s32 4, %v342
      %v344 = vrot.slane %v320, %v343
      %v349 = vlaneseq
      %v350 = vshrl.u32 %v349, 7
      %v351 = vsub.s32 0, %v350
      %v352 = vrot.slane %v332, %v351
      %v353 = vlaneseq
      %v354 = vshrl.u32 %v353, 7
      %v355 = vsub.s32 0, %v354
      %v356 = vrot.slane %v336, %v355
      %v357 = vlaneseq
      %v358 = vshrl.u32 %v357, 7
      %v359 = vsub.s32 0, %v358
      %v360 = vrot.slane %v340, %v359
      %v361 = vlaneseq
      %v362 = vshrl.u32 %v361, 7
      %v363 = vsub.s32 0, %v362
      %v364 = vrot.slane %v344, %v363
      %v365 = vmul.f32 %v325, %v352
      %v366 = vmul.f32 %v325, %v356
      %v367 = vmul.f32 %v325, %v360
      %v368 = vmul.f32 %v325, %v364
      %vm369 = vcmask 523264
      %v371 = vsel %vm369, %v286, 0
      %373 = vmatprep.subr.mxu0 %v288
      %374 = vmatpush1.msra.mxu0 %v287
      %375 = vmatprep.subr.mxu0 %v292
      %376 = vmatpush1.msra.mxu0 %v291
      %377 = vmatprep.subr.mxu0 %v296
      %378 = vmatpush1.msra.mxu0 %v295
      %379 = vmatprep.subr.mxu0 %v300
      %380 = vmatpush1.msra.mxu0 %v299
      %381 = vmatprep.subr.mxu0 %v304
      %382 = vmatpush1.msra.mxu0 %v303
      %383 = vmatprep.subr.mxu0 %v308
      %384 = vmatpush1.msra.mxu0 %v307
      %385 = vmatprep.subr.mxu0 %v312
      %386 = vmatpush1.msra.mxu0 %v311
      %387 = vmatprep.subr.mxu0 %v316
      %388 = vmatpush1.msra.mxu0 %v315
      %389 = vmatprep.subr.mxu0 0.0
      %390 = vmatpush1.msra.mxu0 0.0
      %391 = vmatprep.subr.mxu0 0.0
      %392 = vmatpush1.msra.mxu0 0.0
      %393 = vmatprep.subr.mxu0 0.0
      %394 = vmatpush1.msra.mxu0 0.0
      %395 = vmatprep.subr.mxu0 0.0
      %396 = vmatpush1.msra.mxu0 0.0
      %397 = vmatprep.subr.mxu0 0.0
      %398 = vmatpush1.msra.mxu0 0.0
      %399 = vmatprep.subr.mxu0 0.0
      %400 = vmatpush1.msra.mxu0 0.0
      %401 = vmatprep.subr.mxu0 0.0
      %402 = vmatpush1.msra.mxu0 0.0
      %403 = vmatprep.subr.mxu0 0.0
      %404 = vmatpush1.msra.mxu0 0.0
      %405 = vmatprep.subr.mxu0 0.0
      %406 = vmatpush1.msra.mxu0 0.0
      %407 = vmatprep.subr.mxu0 0.0
      %408 = vmatpush1.msra.mxu0 0.0
      %409 = vmatprep.subr.mxu0 0.0
      %410 = vmatpush1.msra.mxu0 0.0
      %411 = vmatprep.subr.mxu0 0.0
      %412 = vmatpush1.msra.mxu0 0.0
      %413 = vmatprep.subr.mxu0 0.0
      %414 = vmatpush1.msra.mxu0 0.0
      %415 = vmatprep.subr.mxu0 0.0
      %416 = vmatpush1.msra.mxu0 0.0
      %417 = vmatprep.subr.mxu0 0.0
      %418 = vmatpush1.msra.mxu0 0.0
      %419 = vmatprep.subr.mxu0 0.0
      %420 = vmatpush1.msra.mxu0 0.0
      %421 = vmatprep.subr.mxu0 0.0
      %422 = vmatpush1.msra.mxu0 0.0
      %423 = vmatprep.subr.mxu0 0.0
      %424 = vmatpush1.msra.mxu0 0.0
      %425 = vmatprep.subr.mxu0 0.0
      %426 = vmatpush1.msra.mxu0 0.0
      %427 = vmatprep.subr.mxu0 0.0
      %428 = vmatpush1.msra.mxu0 0.0
      %429 = vmatprep.subr.mxu0 0.0
      %430 = vmatpush1.msra.mxu0 0.0
      %431 = vmatprep.subr.mxu0 0.0
      %432 = vmatpush1.msra.mxu0 0.0
      %433 = vmatprep.subr.mxu0 0.0
      %434 = vmatpush1.msra.mxu0 0.0
      %435 = vmatprep.subr.mxu0 0.0
      %436 = vmatpush1.msra.mxu0 0.0
      %437 = vmatprep.mubr.f32.mxu0 0.0
      %438 = vmatmul.mubr.f32.gmra.mrb[0].mxu0 %v371
      %v439 = vpop.f32.mrb[0].mxu0
      %v440 = vadd.f32 %v365, %v439
      %v441 = vpop.f32.mrb[0].mxu0
      %v442 = vadd.f32 %v366, %v441
      %443 = vdwg.mxu0
      %444 = vmatprep.subr.mxu0 %v290
      %445 = vmatpush1.msra.mxu0 %v289
      %446 = vmatprep.subr.mxu0 %v294
      %447 = vmatpush1.msra.mxu0 %v293
      %448 = vmatprep.subr.mxu0 %v298
      %449 = vmatpush1.msra.mxu0 %v297
      %450 = vmatprep.subr.mxu0 %v302
      %451 = vmatpush1.msra.mxu0 %v301
      %452 = vmatprep.subr.mxu0 %v306
      %453 = vmatpush1.msra.mxu0 %v305
      %454 = vmatprep.subr.mxu0 %v310
      %455 = vmatpush1.msra.mxu0 %v309
      %456 = vmatprep.subr.mxu0 %v314
      %457 = vmatpush1.msra.mxu0 %v313
      %458 = vmatprep.subr.mxu0 %v318
      %459 = vmatpush1.msra.mxu0 %v317
      %460 = vmatprep.subr.mxu0 0.0
      %461 = vmatpush1.msra.mxu0 0.0
      %462 = vmatprep.subr.mxu0 0.0
      %463 = vmatpush1.msra.mxu0 0.0
      %464 = vmatprep.subr.mxu0 0.0
      %465 = vmatpush1.msra.mxu0 0.0
      %466 = vmatprep.subr.mxu0 0.0
      %467 = vmatpush1.msra.mxu0 0.0
      %468 = vmatprep.subr.mxu0 0.0
      %469 = vmatpush1.msra.mxu0 0.0
      %470 = vmatprep.subr.mxu0 0.0
      %471 = vmatpush1.msra.mxu0 0.0
      %472 = vmatprep.subr.mxu0 0.0
      %473 = vmatpush1.msra.mxu0 0.0
      %474 = vmatprep.subr.mxu0 0.0
      %475 = vmatpush1.msra.mxu0 0.0
      %476 = vmatprep.subr.mxu0 0.0
      %477 = vmatpush1.msra.mxu0 0.0
      %478 = vmatprep.subr.mxu0 0.0
      %479 = vmatpush1.msra.mxu0 0.0
      %480 = vmatprep.subr.mxu0 0.0
      %481 = vmatpush1.msra.mxu0 0.0
      %482 = vmatprep.subr.mxu0 0.0
      %483 = vmatpush1.msra.mxu0 0.0
      %484 = vmatprep.subr.mxu0 0.0
      %485 = vmatpush1.msra.mxu0 0.0
      %486 = vmatprep.subr.mxu0 0.0
      %487 = vmatpush1.msra.mxu0 0.0
      %488 = vmatprep.subr.mxu0 0.0
      %489 = vmatpush1.msra.mxu0 0.0
      %490 = vmatprep.subr.mxu0 0.0
      %491 = vmatpush1.msra.mxu0 0.0
      %492 = vmatprep.subr.mxu0 0.0
      %493 = vmatpush1.msra.mxu0 0.0
      %494 = vmatprep.subr.mxu0 0.0
      %495 = vmatpush1.msra.mxu0 0.0
      %496 = vmatprep.subr.mxu0 0.0
      %497 = vmatpush1.msra.mxu0 0.0
      %498 = vmatprep.subr.mxu0 0.0
      %499 = vmatpush1.msra.mxu0 0.0
      %500 = vmatprep.subr.mxu0 0.0
      %501 = vmatpush1.msra.mxu0 0.0
      %502 = vmatprep.subr.mxu0 0.0
      %503 = vmatpush1.msra.mxu0 0.0
      %504 = vmatprep.subr.mxu0 0.0
      %505 = vmatpush1.msra.mxu0 0.0
      %506 = vmatprep.subr.mxu0 0.0
      %507 = vmatpush1.msra.mxu0 0.0
      %508 = vmatprep.mubr.f32.mxu0 0.0
      %509 = vmatmul.mubr.f32.gmra.mrb[0].mxu0 %v371
      %v510 = vpop.f32.mrb[0].mxu0
      %v511 = vadd.f32 %v367, %v510
      %v512 = vpop.f32.mrb[0].mxu0
      %v513 = vadd.f32 %v368, %v512
      %514 = vdwg.mxu0
      %515 = vset.pattern.permute.xlu0 1
      %516 = vperm.xlu0 %515, %v321
      %v517 = vpop.permute.xlu0 %516
      %v519 = vlaneseq
      %v520 = vshrl.u32 %v519, 7
      %v521 = vsub.s32 1, %v520
      %v522 = vrot.slane %v319, %v521
      %v523 = vlaneseq
      %v524 = vshrl.u32 %v523, 7
      %v525 = vsub.s32 5, %v524
      %v526 = vrot.slane %v319, %v525
      %v527 = vlaneseq
      %v528 = vshrl.u32 %v527, 7
      %v529 = vsub.s32 1, %v528
      %v530 = vrot.slane %v320, %v529
      %v531 = vlaneseq
      %v532 = vshrl.u32 %v531, 7
      %v533 = vsub.s32 5, %v532
      %v534 = vrot.slane %v320, %v533
      %v539 = vlaneseq
      %v540 = vshrl.u32 %v539, 7
      %v541 = vsub.s32 1, %v540
      %v542 = vrot.slane %v522, %v541
      %v543 = vlaneseq
      %v544 = vshrl.u32 %v543, 7
      %v545 = vsub.s32 1, %v544
      %v546 = vrot.slane %v526, %v545
      %v547 = vlaneseq
      %v548 = vshrl.u32 %v547, 7
      %v549 = vsub.s32 1, %v548
      %v550 = vrot.slane %v530, %v549
      %v551 = vlaneseq
      %v552 = vshrl.u32 %v551, 7
      %v553 = vsub.s32 1, %v552
      %v554 = vrot.slane %v534, %v553
      %v555 = vmul.f32 %v517, %v542
      %v556 = vmul.f32 %v517, %v546
      %v557 = vmul.f32 %v517, %v550
      %v558 = vmul.f32 %v517, %v554
      %v559 = vadd.f32 %v440, %v555
      %v560 = vadd.f32 %v442, %v556
      %v561 = vadd.f32 %v511, %v557
      %v562 = vadd.f32 %v513, %v558
      %563 = vset.pattern.permute.xlu0 2
      %564 = vperm.xlu0 %563, %v321
      %v565 = vpop.permute.xlu0 %564
      %v567 = vlaneseq
      %v568 = vshrl.u32 %v567, 7
      %v569 = vsub.s32 2, %v568
      %v570 = vrot.slane %v319, %v569
      %v571 = vlaneseq
      %v572 = vshrl.u32 %v571, 7
      %v573 = vsub.s32 6, %v572
      %v574 = vrot.slane %v319, %v573
      %v575 = vlaneseq
      %v576 = vshrl.u32 %v575, 7
      %v577 = vsub.s32 2, %v576
      %v578 = vrot.slane %v320, %v577
      %v579 = vlaneseq
      %v580 = vshrl.u32 %v579, 7
      %v581 = vsub.s32 6, %v580
      %v582 = vrot.slane %v320, %v581
      %v587 = vlaneseq
      %v588 = vshrl.u32 %v587, 7
      %v589 = vsub.s32 2, %v588
      %v590 = vrot.slane %v570, %v589
      %v591 = vlaneseq
      %v592 = vshrl.u32 %v591, 7
      %v593 = vsub.s32 2, %v592
      %v594 = vrot.slane %v574, %v593
      %v595 = vlaneseq
      %v596 = vshrl.u32 %v595, 7
      %v597 = vsub.s32 2, %v596
      %v598 = vrot.slane %v578, %v597
      %v599 = vlaneseq
      %v600 = vshrl.u32 %v599, 7
      %v601 = vsub.s32 2, %v600
      %v602 = vrot.slane %v582, %v601
      %v603 = vmul.f32 %v565, %v590
      %v604 = vmul.f32 %v565, %v594
      %v605 = vmul.f32 %v565, %v598
      %v606 = vmul.f32 %v565, %v602
      %v607 = vadd.f32 %v559, %v603
      %v608 = vadd.f32 %v560, %v604
      %v609 = vadd.f32 %v561, %v605
      %v610 = vadd.f32 %v562, %v606
      %v611 = vld [vmem:[%s4] sm:$0xff]
      %613 = vset.pattern.permute.xlu0 0
      %614 = vperm.xlu0 %613, %v611
      %v615 = vpop.permute.xlu0 %614
      %v617 = vadd.f32 %v607, %v615
      %v618 = vadd.f32 %v608, %v615
      %v619 = vadd.f32 %v609, %v615
      %v620 = vadd.f32 %v610, %v615
      %621 = vst [vmem:[%s284] sm:$0xff] %v617
      %622 = vst [vmem:[%s284 + $0x8] sm:$0xff] %v618
      %623 = vst [vmem:[%s284 + $0x10] sm:$0xff] %v619
      %624 = vst [vmem:[%s284 + $0x18] sm:$0xff] %v620
      %s625 = smul.u32 4, %s21
      %p626 = scmp.lt.s32.totalorder %s20, 1
      %s627 = scalar_select %p626, %s20, 1
      %p628 = scmp.lt.s32.totalorder %s625, 3
      %s629 = scalar_select %p628, %s625, 3
      %s630 = smul.addr %s627, 4
      %s631 = sadd.s32 %s629, %s630
      %s632 = smul.addr %s631, 8
      %s633 = scalar_lea.vmem %s5, %s632
      // Predicated region
      $region41: #{fno3d_binseg_forward.10} parent=39 // pred_check
        %p634 = pneg %p165
      $region42: #{fno3d_binseg_forward.10} parent=39 // pred_check_branch
        %636 = sbr.rel (%p634) target = $region44
      $region43: #{fno3d_binseg_forward.10} parent=39 // pred_region
        %s637 = smul.u32 4, %s21
      $region44: #{fno3d_binseg_forward.10} parent=39 // pred_fallthru
        _
    $region40: #{fno3d_binseg_forward.10} parent=5 // pred_fallthru
      _
    %p638 = scmp.le.s32.totalorder 2, %s11
    // Predicated region
    $region45: #{fno3d_binseg_forward.10} parent=5 // pred_check
      %p639 = pneg %p638
    $region46: #{fno3d_binseg_forward.10} parent=5 // pred_check_branch
      %641 = sbr.rel (%p639) target = $region48
    $region47: #{fno3d_binseg_forward.10} parent=5 // pred_region
      %s642 = ssub.s32 %s11, 2
      // Predicated region
      $region49: #{fno3d_binseg_forward.10} parent=47 // pred_check
        %p643 = pneg %p171
      $region50: #{fno3d_binseg_forward.10} parent=47 // pred_check_branch
        %645 = sbr.rel (%p643) target = $region52
      $region51: #{fno3d_binseg_forward.10} parent=47 // pred_region
        %s646 = smul.u32 4, %s23
        %p647 = scmp.lt.s32.totalorder %s22, 1
        %s648 = scalar_select %p647, %s22, 1
        %p649 = scmp.lt.s32.totalorder %s646, 3
        %s650 = scalar_select %p649, %s646, 3
        %s651 = smul.addr %s648, 4
        %s652 = sadd.s32 %s650, %s651
        %s653 = smul.addr %s652, 8
        %s654 = scalar_lea.vmem %s5, %s653
      $region52: #{fno3d_binseg_forward.10} parent=47 // pred_fallthru
        _
    $region48: #{fno3d_binseg_forward.10} parent=5 // pred_fallthru
      _
  $region6: #{fno3d_binseg_forward.10} parent=0 // loop_footer
    %s15 = sadd.s32 1, %s11
  $region7: #{fno3d_binseg_forward.10} parent=0 // loop_footer_branch
    %10 = sbr.rel target = $region3
  $region8: #{fno3d_binseg_forward.10} parent=0 // loop_exit
    _

// kernel: custom-call.6
$region0: #{custom-call.6}
  %s0 = inlined_call_operand.hbm [shape: c64[8,8,4,4,4], index: 0, kind: input, shape index: {}]
  %s1 = inlined_call_operand.vmem [shape: f32[8,8,4,4,4], index: 1, kind: output, shape index: {}]
  $region1: #{custom-call.6} parent=0
    #allocation0 [shape = 's32[1]{0}', space=sflag, size = 0x4, scoped, tag = 'scoped memory for custom-call.6']
    %2 = vsyncpa [#allocation0], 0
    %s3 = sshll.u32 %s1, 4
    %s4 = int_to_ptr.vmem [resolvable:$true] %s3
    %6 = dma.hbm_to_vmem [thread:$0]  %s0, 8192, %s4, [#allocation0]
    %7 = dma.done [#allocation0], 8192
    %8 = vsyncpa [#allocation0], 1

// kernel: custom-call.7
$region0: #{custom-call.7}
  %s0 = inlined_call_operand.hbm [shape: c64[8,8,4,4,4], index: 0, kind: input, shape index: {}]
  %s1 = inlined_call_operand.vmem [shape: f32[8,8,4,4,4], index: 1, kind: output, shape index: {}]
  %s2 = scalar_lea.hbm %s0, 8192
  $region1: #{custom-call.7} parent=0
    #allocation0 [shape = 's32[1]{0}', space=sflag, size = 0x4, scoped, tag = 'scoped memory for custom-call.7']
    %3 = vsyncpa [#allocation0], 0
    %s4 = sshll.u32 %s1, 4
    %s5 = int_to_ptr.vmem [resolvable:$true] %s4
    %7 = dma.hbm_to_vmem [thread:$0]  %s2, 8192, %s5, [#allocation0]
    %8 = dma.done [#allocation0], 8192
    %9 = vsyncpa [#allocation0], 1

// kernel: fno3d_binseg_forward.11
$region0: #{fno3d_binseg_forward.11}
  #allocation0 [shape = 'u32[]', space=smem, size = 0x4, offset = 0x4, fixed_abs, tag = 'smem constant byte address 0x4 - core index']
  #allocation1 [shape = 'u32[144,128]{1,0:T(1,128)}', space=vmem, size = 0x12000, scoped, tag = 'internal scratch']
  %s0 = inlined_call_operand.vmem [shape: f32[2,8,256], index: 0, kind: input, shape index: {}]
  %s1 = inlined_call_operand.vmem [shape: f32[2,8,256], index: 1, kind: input, shape index: {}]
  %s2 = inlined_call_operand.vmem [shape: f32[8,8,256], index: 2, kind: input, shape index: {}]
  %s3 = inlined_call_operand.vmem [shape: f32[8,8,256], index: 3, kind: input, shape index: {}]
  %s4 = inlined_call_operand.vmem [shape: f32[2,8,256], index: 4, kind: output, shape index: {0}]
  %s5 = inlined_call_operand.vmem [shape: f32[2,8,256], index: 5, kind: output, shape index: {1}]
  %6 = xla_tuple %s4, %s5
  %s7 = sld [smem:[#allocation0]]
  $region57: #{fno3d_binseg_forward.11} parent=0
    _
  %s9 = ssub.s32 1, %s7
  %s10 = scalar_select 0, %s9, %s7
  loop: start=0, step=1, limit=4
  $region2: #{fno3d_binseg_forward.11} parent=0 // loop_pre_header
    _
  $region3: #{fno3d_binseg_forward.11} parent=0 // loop_header
    %s12 = sphi 0, %s16
    %p13 = scmp.ge.s32.totalorder %s12, 4
    %s19 = sphi 0, %s38
    %s20 = sphi 0, %s34
    %s21 = sphi 0, %s30
    %s22 = sphi 0, %s19
    %s23 = sphi 0, %s20
    %s24 = sphi 0, %s21
    %s25 = sphi 0, %s22
    %s26 = sphi 0, %s23
    %s27 = sphi 0, %s24
    %s43 = sphi 0, %s45
    %s46 = sphi 0, %s43
    %s47 = sphi 0, %s46
    %s63 = sphi 0, %s47
    %s71 = sphi 0, %s73
    %s74 = sphi 0, %s71
    %s75 = sphi 0, %s74
    %s91 = sphi 0, %s75
    %s99 = sphi 0, %s101
    %s102 = sphi 0, %s99
    %s103 = sphi 0, %s102
    %s119 = sphi 0, %s103
    %s127 = sphi 0, %s129
    %s130 = sphi 0, %s127
    %s131 = sphi 0, %s130
    %s147 = sphi 0, %s131
    %s157 = sphi 0, %s159
    %s160 = sphi 0, %s157
    %s161 = sphi 0, %s160
    %s177 = sphi 0, %s161
    %s187 = sphi 0, %s189
    %s190 = sphi 0, %s187
    %s191 = sphi 0, %s190
    %s207 = sphi 0, %s191
  $region4: #{fno3d_binseg_forward.11} parent=0 // loop_header_branch
    %15 = sbr.rel (%p13) target = $region8
  $region5: #{fno3d_binseg_forward.11} parent=0 // loop_body
    %s17 = ssub.s32 %s12, 1
    %s18 = ssub.s32 %s12, 2
    %s28 = sadd.s32 1, %s21
    %p29 = scmp.ge.s32.totalorder %s28, 1
    %s30 = scalar_select %p29, 0, %s28
    %s31 = sadd.s32 1, %s20
    %s32 = scalar_select %p29, %s31, %s20
    %p33 = scmp.ge.s32.totalorder %s32, 1
    %s34 = scalar_select %p33, 0, %s32
    %s35 = sadd.s32 1, %s19
    %s36 = scalar_select %p33, %s35, %s19
    %p37 = scmp.ge.s32.totalorder %s36, 2
    %s38 = scalar_select %p37, 0, %s36
    %s39 = ssub.s32 %s19, %s38
    %s40 = ssub.s32 %s21, %s30
    %s41 = sor.u32 %s39, %s40
    %p42 = scmp.eq.s32.totalorder %s41, 0
    %s44 = sadd.s32 %s43, 1
    %s45 = scalar_select %p42, %s43, %s44
    %p48 = pneg %p42
    %p49 = scmp.eq.s32.totalorder %s12, 1
    %p50 = por %p48, %p49
    %p51 = scmp.ne.s32.totalorder %s43, %s46
    %p52 = scmp.eq.s32.totalorder %s12, 0
    %p53 = por %p51, %p52
    %p54 = scmp.ne.s32.totalorder %s43, %s46
    %p55 = scmp.eq.s32.totalorder %s17, 1
    %p56 = por %p54, %p55
    %p57 = scmp.ne.s32.totalorder %s46, %s47
    %p58 = scmp.eq.s32.totalorder %s17, 0
    %p59 = por %p57, %p58
    %p60 = scmp.ne.s32.totalorder %s46, %s47
    %p61 = scmp.eq.s32.totalorder %s18, 1
    %p62 = por %p60, %p61
    %p64 = scmp.ne.s32.totalorder %s47, %s63
    %p65 = scmp.eq.s32.totalorder %s18, 0
    %p66 = por %p64, %p65
    %s67 = ssub.s32 %s19, %s38
    %s68 = ssub.s32 %s21, %s30
    %s69 = sor.u32 %s67, %s68
    %p70 = scmp.eq.s32.totalorder %s69, 0
    %s72 = sadd.s32 %s71, 1
    %s73 = scalar_select %p70, %s71, %s72
    %p76 = pneg %p70
    %p77 = scmp.eq.s32.totalorder %s12, 1
    %p78 = por %p76, %p77
    %p79 = scmp.ne.s32.totalorder %s71, %s74
    %p80 = scmp.eq.s32.totalorder %s12, 0
    %p81 = por %p79, %p80
    %p82 = scmp.ne.s32.totalorder %s71, %s74
    %p83 = scmp.eq.s32.totalorder %s17, 1
    %p84 = por %p82, %p83
    %p85 = scmp.ne.s32.totalorder %s74, %s75
    %p86 = scmp.eq.s32.totalorder %s17, 0
    %p87 = por %p85, %p86
    %p88 = scmp.ne.s32.totalorder %s74, %s75
    %p89 = scmp.eq.s32.totalorder %s18, 1
    %p90 = por %p88, %p89
    %p92 = scmp.ne.s32.totalorder %s75, %s91
    %p93 = scmp.eq.s32.totalorder %s18, 0
    %p94 = por %p92, %p93
    %s95 = ssub.s32 %s20, %s34
    %s96 = ssub.s32 %s21, %s30
    %s97 = sor.u32 %s95, %s96
    %p98 = scmp.eq.s32.totalorder %s97, 0
    %s100 = sadd.s32 %s99, 1
    %s101 = scalar_select %p98, %s99, %s100
    %p104 = pneg %p98
    %p105 = scmp.eq.s32.totalorder %s12, 1
    %p106 = por %p104, %p105
    %p107 = scmp.ne.s32.totalorder %s99, %s102
    %p108 = scmp.eq.s32.totalorder %s12, 0
    %p109 = por %p107, %p108
    %p110 = scmp.ne.s32.totalorder %s99, %s102
    %p111 = scmp.eq.s32.totalorder %s17, 1
    %p112 = por %p110, %p111
    %p113 = scmp.ne.s32.totalorder %s102, %s103
    %p114 = scmp.eq.s32.totalorder %s17, 0
    %p115 = por %p113, %p114
    %p116 = scmp.ne.s32.totalorder %s102, %s103
    %p117 = scmp.eq.s32.totalorder %s18, 1
    %p118 = por %p116, %p117
    %p120 = scmp.ne.s32.totalorder %s103, %s119
    %p121 = scmp.eq.s32.totalorder %s18, 0
    %p122 = por %p120, %p121
    %s123 = ssub.s32 %s20, %s34
    %s124 = ssub.s32 %s21, %s30
    %s125 = sor.u32 %s123, %s124
    %p126 = scmp.eq.s32.totalorder %s125, 0
    %s128 = sadd.s32 %s127, 1
    %s129 = scalar_select %p126, %s127, %s128
    %p132 = pneg %p126
    %p133 = scmp.eq.s32.totalorder %s12, 1
    %p134 = por %p132, %p133
    %p135 = scmp.ne.s32.totalorder %s127, %s130
    %p136 = scmp.eq.s32.totalorder %s12, 0
    %p137 = por %p135, %p136
    %p138 = scmp.ne.s32.totalorder %s127, %s130
    %p139 = scmp.eq.s32.totalorder %s17, 1
    %p140 = por %p138, %p139
    %p141 = scmp.ne.s32.totalorder %s130, %s131
    %p142 = scmp.eq.s32.totalorder %s17, 0
    %p143 = por %p141, %p142
    %p144 = scmp.ne.s32.totalorder %s130, %s131
    %p145 = scmp.eq.s32.totalorder %s18, 1
    %p146 = por %p144, %p145
    %p148 = scmp.ne.s32.totalorder %s131, %s147
    %p149 = scmp.eq.s32.totalorder %s18, 0
    %p150 = por %p148, %p149
    %s151 = ssub.s32 %s19, %s38
    %s152 = ssub.s32 %s20, %s34
    %s153 = sor.u32 %s151, %s152
    %s154 = ssub.s32 %s21, %s30
    %s155 = sor.u32 %s153, %s154
    %p156 = scmp.eq.s32.totalorder %s155, 0
    %s158 = sadd.s32 %s157, 1
    %s159 = scalar_select %p156, %s157, %s158
    %p162 = pneg %p156
    %p163 = scmp.eq.s32.totalorder %s12, 1
    %p164 = por %p162, %p163
    %p165 = scmp.ne.s32.totalorder %s157, %s160
    %p166 = scmp.eq.s32.totalorder %s12, 0
    %p167 = por %p165, %p166
    %p168 = scmp.ne.s32.totalorder %s157, %s160
    %p169 = scmp.eq.s32.totalorder %s17, 1
    %p170 = por %p168, %p169
    %p171 = scmp.ne.s32.totalorder %s160, %s161
    %p172 = scmp.eq.s32.totalorder %s17, 0
    %p173 = por %p171, %p172
    %p174 = scmp.ne.s32.totalorder %s160, %s161
    %p175 = scmp.eq.s32.totalorder %s18, 1
    %p176 = por %p174, %p175
    %p178 = scmp.ne.s32.totalorder %s161, %s177
    %p179 = scmp.eq.s32.totalorder %s18, 0
    %p180 = por %p178, %p179
    %s181 = ssub.s32 %s19, %s38
    %s182 = ssub.s32 %s20, %s34
    %s183 = sor.u32 %s181, %s182
    %s184 = ssub.s32 %s21, %s30
    %s185 = sor.u32 %s183, %s184
    %p186 = scmp.eq.s32.totalorder %s185, 0
    %s188 = sadd.s32 %s187, 1
    %s189 = scalar_select %p186, %s187, %s188
    %p192 = pneg %p186
    %p193 = scmp.eq.s32.totalorder %s12, 1
    %p194 = por %p192, %p193
    %p195 = scmp.ne.s32.totalorder %s187, %s190
    %p196 = scmp.eq.s32.totalorder %s12, 0
    %p197 = por %p195, %p196
    %p198 = scmp.ne.s32.totalorder %s187, %s190
    %p199 = scmp.eq.s32.totalorder %s17, 1
    %p200 = por %p198, %p199
    %p201 = scmp.ne.s32.totalorder %s190, %s191
    %p202 = scmp.eq.s32.totalorder %s17, 0
    %p203 = por %p201, %p202
    %p204 = scmp.ne.s32.totalorder %s190, %s191
    %p205 = scmp.eq.s32.totalorder %s18, 1
    %p206 = por %p204, %p205
    %p208 = scmp.ne.s32.totalorder %s191, %s207
    %p209 = scmp.eq.s32.totalorder %s18, 0
    %p210 = por %p208, %p209
    %p211 = scmp.le.s32.totalorder 1, %s12
    %p212 = scmp.lt.s32.totalorder %s12, 3
    %p213 = pnand %p211, %p212
    %p214 = pneg %p213
    // Predicated region
    $region9: #{fno3d_binseg_forward.11} parent=5 // pred_check
      _
    $region10: #{fno3d_binseg_forward.11} parent=5 // pred_check_branch
      %216 = sbr.rel (%p213) target = $region12
    $region11: #{fno3d_binseg_forward.11} parent=5 // pred_region
      %s217 = ssub.s32 %s12, 1
      // Predicated region
      $region13: #{fno3d_binseg_forward.11} parent=11 // pred_check
        %p218 = pneg %p115
      $region14: #{fno3d_binseg_forward.11} parent=11 // pred_check_branch
        %220 = sbr.rel (%p218) target = $region16
      $region15: #{fno3d_binseg_forward.11} parent=11 // pred_region
        %s221 = smul.u32 2, %s24
        %p222 = scmp.lt.s32.totalorder %s23, 0
        %s223 = scalar_select %p222, %s23, 0
        %p224 = scmp.lt.s32.totalorder %s221, 1
        %s225 = scalar_select %p224, %s221, 1
        %s226 = smul.addr %s223, 2
        %s227 = sadd.s32 %s225, %s226
        %s228 = smul.addr %s227, 8
        %s229 = scalar_lea.vmem %s2, %s228
        %s230 = smul.u32 2, %s24
      $region16: #{fno3d_binseg_forward.11} parent=11 // pred_fallthru
        _
      // Predicated region
      $region17: #{fno3d_binseg_forward.11} parent=11 // pred_check
        %p231 = pneg %p143
      $region18: #{fno3d_binseg_forward.11} parent=11 // pred_check_branch
        %233 = sbr.rel (%p231) target = $region20
      $region19: #{fno3d_binseg_forward.11} parent=11 // pred_region
        %s234 = smul.u32 2, %s24
        %p235 = scmp.lt.s32.totalorder %s23, 0
        %s236 = scalar_select %p235, %s23, 0
        %p237 = scmp.lt.s32.totalorder %s234, 1
        %s238 = scalar_select %p237, %s234, 1
        %s239 = smul.addr %s236, 2
        %s240 = sadd.s32 %s238, %s239
        %s241 = smul.addr %s240, 8
        %s242 = scalar_lea.vmem %s3, %s241
        %s243 = smul.u32 2, %s24
      $region20: #{fno3d_binseg_forward.11} parent=11 // pred_fallthru
        _
    $region12: #{fno3d_binseg_forward.11} parent=5 // pred_fallthru
      _
    %p244 = scmp.lt.s32.totalorder %s12, 2
    // Predicated region
    $region21: #{fno3d_binseg_forward.11} parent=5 // pred_check
      %p245 = pneg %p244
    $region22: #{fno3d_binseg_forward.11} parent=5 // pred_check_branch
      %247 = sbr.rel (%p245) target = $region24
    $region23: #{fno3d_binseg_forward.11} parent=5 // pred_region
      // Predicated region
      $region25: #{fno3d_binseg_forward.11} parent=23 // pred_check
        %p248 = pneg %p53
      $region26: #{fno3d_binseg_forward.11} parent=23 // pred_check_branch
        %250 = sbr.rel (%p248) target = $region28
      $region27: #{fno3d_binseg_forward.11} parent=23 // pred_region
        %s251 = smul.u32 2, %s21
        %p252 = scmp.lt.s32.totalorder %s19, 1
        %s253 = scalar_select %p252, %s19, 1
        %p254 = scmp.lt.s32.totalorder %s251, 1
        %s255 = scalar_select %p254, %s251, 1
        %s256 = smul.addr %s253, 2
        %s257 = sadd.s32 %s255, %s256
        %s258 = smul.addr %s257, 8
        %s259 = scalar_lea.vmem %s0, %s258
        %s260 = smul.u32 2, %s21
      $region28: #{fno3d_binseg_forward.11} parent=23 // pred_fallthru
        _
      // Predicated region
      $region29: #{fno3d_binseg_forward.11} parent=23 // pred_check
        %p261 = pneg %p81
      $region30: #{fno3d_binseg_forward.11} parent=23 // pred_check_branch
        %263 = sbr.rel (%p261) target = $region32
      $region31: #{fno3d_binseg_forward.11} parent=23 // pred_region
        %s264 = smul.u32 2, %s21
        %p265 = scmp.lt.s32.totalorder %s19, 1
        %s266 = scalar_select %p265, %s19, 1
        %p267 = scmp.lt.s32.totalorder %s264, 1
        %s268 = scalar_select %p267, %s264, 1
        %s269 = smul.addr %s266, 2
        %s270 = sadd.s32 %s268, %s269
        %s271 = smul.addr %s270, 8
        %s272 = scalar_lea.vmem %s1, %s271
        %s273 = smul.u32 2, %s21
      $region32: #{fno3d_binseg_forward.11} parent=23 // pred_fallthru
        _
    $region24: #{fno3d_binseg_forward.11} parent=5 // pred_fallthru
      _
    %p274 = scmp.le.s32.totalorder 1, %s12
    %p275 = scmp.lt.s32.totalorder %s12, 3
    %p276 = pnand %p274, %p275
    %p277 = pneg %p276
    // Predicated region
    $region33: #{fno3d_binseg_forward.11} parent=5 // pred_check
      _
    $region34: #{fno3d_binseg_forward.11} parent=5 // pred_check_branch
      %279 = sbr.rel (%p276) target = $region36
    $region35: #{fno3d_binseg_forward.11} parent=5 // pred_region
      %s280 = ssub.s32 %s12, 1
      %s281 = smul.u32 2, %s24
      %p282 = scmp.lt.s32.totalorder %s22, 1
      %s283 = scalar_select %p282, %s22, 1
      %p284 = scmp.lt.s32.totalorder %s281, 1
      %s285 = scalar_select %p284, %s281, 1
      %s286 = smul.addr %s283, 2
      %s287 = sadd.s32 %s285, %s286
      %s288 = smul.addr %s287, 8
      %s289 = scalar_lea.vmem %s0, %s288
      %p290 = pneg %p59
      %p291 = pneg %p56
      %s292 = smul.u32 2, %s24
      %p293 = scmp.lt.s32.totalorder %s22, 1
      %s294 = scalar_select %p293, %s22, 1
      %p295 = scmp.lt.s32.totalorder %s292, 1
      %s296 = scalar_select %p295, %s292, 1
      %s297 = smul.addr %s294, 2
      %s298 = sadd.s32 %s296, %s297
      %s299 = smul.addr %s298, 8
      %s300 = scalar_lea.vmem %s1, %s299
      %p301 = pneg %p87
      %p302 = pneg %p84
      %s303 = smul.u32 2, %s24
      %p304 = scmp.lt.s32.totalorder %s23, 0
      %s305 = scalar_select %p304, %s23, 0
      %p306 = scmp.lt.s32.totalorder %s303, 1
      %s307 = scalar_select %p306, %s303, 1
      %s308 = smul.addr %s305, 2
      %s309 = sadd.s32 %s307, %s308
      %s310 = smul.addr %s309, 8
      %s311 = scalar_lea.vmem %s2, %s310
      %p312 = pneg %p115
      %p313 = pneg %p112
      %s314 = smul.u32 2, %s24
      %p315 = scmp.lt.s32.totalorder %s23, 0
      %s316 = scalar_select %p315, %s23, 0
      %p317 = scmp.lt.s32.totalorder %s314, 1
      %s318 = scalar_select %p317, %s314, 1
      %s319 = smul.addr %s316, 2
      %s320 = sadd.s32 %s318, %s319
      %s321 = smul.addr %s320, 8
      %s322 = scalar_lea.vmem %s3, %s321
      %p323 = pneg %p143
      %p324 = pneg %p140
      %p325 = pneg %p173
      %p326 = pneg %p170
      %s327 = smul.u32 2, %s24
      %p328 = scmp.lt.s32.totalorder %s22, 1
      %s329 = scalar_select %p328, %s22, 1
      %p330 = scmp.lt.s32.totalorder %s23, 0
      %s331 = scalar_select %p330, %s23, 0
      %p332 = scmp.lt.s32.totalorder %s327, 1
      %s333 = scalar_select %p332, %s327, 1
      %s334 = smul.addr %s331, 2
      %s335 = sadd.s32 %s333, %s334
      %s336 = smul.addr %s329, 2
      %s337 = sadd.s32 %s335, %s336
      %s338 = smul.addr %s337, 8
      %s339 = scalar_lea.vmem %s4, %s338
      %p340 = pneg %p203
      %p341 = pneg %p200
      %s342 = smul.u32 2, %s24
      %p343 = scmp.lt.s32.totalorder %s22, 1
      %s344 = scalar_select %p343, %s22, 1
      %p345 = scmp.lt.s32.totalorder %s23, 0
      %s346 = scalar_select %p345, %s23, 0
      %p347 = scmp.lt.s32.totalorder %s342, 1
      %s348 = scalar_select %p347, %s342, 1
      %s349 = smul.addr %s346, 2
      %s350 = sadd.s32 %s348, %s349
      %s351 = smul.addr %s344, 2
      %s352 = sadd.s32 %s350, %s351
      %s353 = smul.addr %s352, 8
      %s354 = scalar_lea.vmem %s5, %s353
      %s355 = smul.u32 2, %s24
      %p356 = scmp.lt.s32.totalorder %s22, 1
      %s357 = scalar_select %p356, %s22, 1
      %p358 = scmp.lt.s32.totalorder %s355, 1
      %s359 = scalar_select %p358, %s355, 1
      %s360 = smul.addr %s357, 2
      %s361 = sadd.s32 %s359, %s360
      %s362 = smul.addr %s361, 8
      %s363 = scalar_lea.vmem %s0, %s362
      %s364 = smul.u32 2, %s24
      %s365 = smul.u32 2, %s24
      %p366 = scmp.lt.s32.totalorder %s22, 1
      %s367 = scalar_select %p366, %s22, 1
      %p368 = scmp.lt.s32.totalorder %s365, 1
      %s369 = scalar_select %p368, %s365, 1
      %s370 = smul.addr %s367, 2
      %s371 = sadd.s32 %s369, %s370
      %s372 = smul.addr %s371, 8
      %s373 = scalar_lea.vmem %s1, %s372
      %s374 = smul.u32 2, %s24
      %s375 = smul.u32 2, %s24
      %p376 = scmp.lt.s32.totalorder %s23, 0
      %s377 = scalar_select %p376, %s23, 0
      %p378 = scmp.lt.s32.totalorder %s375, 1
      %s379 = scalar_select %p378, %s375, 1
      %s380 = smul.addr %s377, 2
      %s381 = sadd.s32 %s379, %s380
      %s382 = smul.addr %s381, 8
      %s383 = scalar_lea.vmem %s2, %s382
      %s384 = smul.u32 2, %s24
      %s385 = smul.u32 2, %s24
      %p386 = scmp.lt.s32.totalorder %s23, 0
      %s387 = scalar_select %p386, %s23, 0
      %p388 = scmp.lt.s32.totalorder %s385, 1
      %s389 = scalar_select %p388, %s385, 1
      %s390 = smul.addr %s387, 2
      %s391 = sadd.s32 %s389, %s390
      %s392 = smul.addr %s391, 8
      %s393 = scalar_lea.vmem %s3, %s392
      %s394 = smul.u32 2, %s24
      %s395 = smul.u32 2, %s24
      %p396 = scmp.lt.s32.totalorder %s22, 1
      %s397 = scalar_select %p396, %s22, 1
      %p398 = scmp.lt.s32.totalorder %s23, 0
      %s399 = scalar_select %p398, %s23, 0
      %p400 = scmp.lt.s32.totalorder %s395, 1
      %s401 = scalar_select %p400, %s395, 1
      %s402 = smul.addr %s399, 2
      %s403 = sadd.s32 %s401, %s402
      %s404 = smul.addr %s397, 2
      %s405 = sadd.s32 %s403, %s404
      %s406 = smul.addr %s405, 8
      %s407 = scalar_lea.vmem %s4, %s406
      %s408 = smul.u32 2, %s24
      %s409 = smul.u32 2, %s24
      %p410 = scmp.lt.s32.totalorder %s22, 1
      %s411 = scalar_select %p410, %s22, 1
      %p412 = scmp.lt.s32.totalorder %s23, 0
      %s413 = scalar_select %p412, %s23, 0
      %p414 = scmp.lt.s32.totalorder %s409, 1
      %s415 = scalar_select %p414, %s409, 1
      %s416 = smul.addr %s413, 2
      %s417 = sadd.s32 %s415, %s416
      %s418 = smul.addr %s411, 2
      %s419 = sadd.s32 %s417, %s418
      %s420 = smul.addr %s419, 8
      %s421 = scalar_lea.vmem %s5, %s420
      %s422 = smul.u32 2, %s24
      %v423 = vld [vmem:[%s363] ss:$8 sm:$0x3]
      %v424 = vld [vmem:[%s373] ss:$8 sm:$0x3]
      %v425 = vld [vmem:[%s383] sm:$0xff]
      %v426 = vld [vmem:[%s383 + $0x8] sm:$0xff]
      %v427 = vld [vmem:[%s393] sm:$0xff]
      %v428 = vld [vmem:[%s393 + $0x8] sm:$0xff]
      %v430 = vlaneseq
      %v431 = vshrl.u32 %v430, 7
      %v432 = vsub.s32 0, %v431
      %v433 = vrot.slane %v423, %v432
      %v434 = vlaneseq
      %v435 = vshrl.u32 %v434, 7
      %v436 = vsub.s32 1, %v435
      %v437 = vrot.slane %v423, %v436
      %v440 = vmul.f32 %v433, %v425
      %v441 = vmul.f32 %v437, %v426
      %v443 = vlaneseq
      %v444 = vshrl.u32 %v443, 7
      %v445 = vsub.s32 0, %v444
      %v446 = vrot.slane %v424, %v445
      %v447 = vlaneseq
      %v448 = vshrl.u32 %v447, 7
      %v449 = vsub.s32 1, %v448
      %v450 = vrot.slane %v424, %v449
      %v453 = vmul.f32 %v446, %v427
      %v454 = vmul.f32 %v450, %v428
      %v455 = vsub.f32 %v440, %v453
      %v456 = vsub.f32 %v441, %v454
      %v457 = vmul.f32 %v433, %v427
      %v458 = vmul.f32 %v437, %v428
      %v459 = vmul.f32 %v446, %v425
      %v460 = vmul.f32 %v450, %v426
      %v461 = vadd.f32 %v457, %v459
      %v462 = vadd.f32 %v458, %v460
      %s463 = scalar_lea.vmem %s363, 1
      %v464 = vld [vmem:[%s463] ss:$8 sm:$0x3]
      %s465 = scalar_lea.vmem %s373, 1
      %v466 = vld [vmem:[%s465] ss:$8 sm:$0x3]
      %s467 = scalar_lea.vmem %s383, 16
      %v468 = vld [vmem:[%s467] sm:$0xff]
      %v469 = vld [vmem:[%s467 + $0x8] sm:$0xff]
      %s470 = scalar_lea.vmem %s393, 16
      %v471 = vld [vmem:[%s470] sm:$0xff]
      %v472 = vld [vmem:[%s470 + $0x8] sm:$0xff]
      %v474 = vlaneseq
      %v475 = vshrl.u32 %v474, 7
      %v476 = vsub.s32 0, %v475
      %v477 = vrot.slane %v464, %v476
      %v478 = vlaneseq
      %v479 = vshrl.u32 %v478, 7
      %v480 = vsub.s32 1, %v479
      %v481 = vrot.slane %v464, %v480
      %v484 = vmul.f32 %v477, %v468
      %v485 = vmul.f32 %v481, %v469
      %v487 = vlaneseq
      %v488 = vshrl.u32 %v487, 7
      %v489 = vsub.s32 0, %v488
      %v490 = vrot.slane %v466, %v489
      %v491 = vlaneseq
      %v492 = vshrl.u32 %v491, 7
      %v493 = vsub.s32 1, %v492
      %v494 = vrot.slane %v466, %v493
      %v497 = vmul.f32 %v490, %v471
      %v498 = vmul.f32 %v494, %v472
      %v499 = vsub.f32 %v484, %v497
      %v500 = vsub.f32 %v485, %v498
      %v501 = vmul.f32 %v477, %v471
      %v502 = vmul.f32 %v481, %v472
      %v503 = vmul.f32 %v490, %v468
      %v504 = vmul.f32 %v494, %v469
      %v505 = vadd.f32 %v501, %v503
      %v506 = vadd.f32 %v502, %v504
      %v507 = vadd.f32 %v455, %v499
      %v508 = vadd.f32 %v456, %v500
      %v509 = vadd.f32 %v461, %v505
      %v510 = vadd.f32 %v462, %v506
      %s511 = scalar_lea.vmem %s363, 2
      %v512 = vld [vmem:[%s511] ss:$8 sm:$0x3]
      %s513 = scalar_lea.vmem %s373, 2
      %v514 = vld [vmem:[%s513] ss:$8 sm:$0x3]
      %s515 = scalar_lea.vmem %s383, 32
      %v516 = vld [vmem:[%s515] sm:$0xff]
      %v517 = vld [vmem:[%s515 + $0x8] sm:$0xff]
      %s518 = scalar_lea.vmem %s393, 32
      %v519 = vld [vmem:[%s518] sm:$0xff]
      %v520 = vld [vmem:[%s518 + $0x8] sm:$0xff]
      %v522 = vlaneseq
      %v523 = vshrl.u32 %v522, 7
      %v524 = vsub.s32 0, %v523
      %v525 = vrot.slane %v512, %v524
      %v526 = vlaneseq
      %v527 = vshrl.u32 %v526, 7
      %v528 = vsub.s32 1, %v527
      %v529 = vrot.slane %v512, %v528
      %v532 = vmul.f32 %v525, %v516
      %v533 = vmul.f32 %v529, %v517
      %v535 = vlaneseq
      %v536 = vshrl.u32 %v535, 7
      %v537 = vsub.s32 0, %v536
      %v538 = vrot.slane %v514, %v537
      %v539 = vlaneseq
      %v540 = vshrl.u32 %v539, 7
      %v541 = vsub.s32 1, %v540
      %v542 = vrot.slane %v514, %v541
      %v545 = vmul.f32 %v538, %v519
      %v546 = vmul.f32 %v542, %v520
      %v547 = vsub.f32 %v532, %v545
      %v548 = vsub.f32 %v533, %v546
      %v549 = vmul.f32 %v525, %v519
      %v550 = vmul.f32 %v529, %v520
      %v551 = vmul.f32 %v538, %v516
      %v552 = vmul.f32 %v542, %v517
      %v553 = vadd.f32 %v549, %v551
      %v554 = vadd.f32 %v550, %v552
      %v555 = vadd.f32 %v507, %v547
      %v556 = vadd.f32 %v508, %v548
      %v557 = vadd.f32 %v509, %v553
      %v558 = vadd.f32 %v510, %v554
      %s559 = scalar_lea.vmem %s363, 3
      %v560 = vld [vmem:[%s559] ss:$8 sm:$0x3]
      %s561 = scalar_lea.vmem %s373, 3
      %v562 = vld [vmem:[%s561] ss:$8 sm:$0x3]
      %s563 = scalar_lea.vmem %s383, 48
      %v564 = vld [vmem:[%s563] sm:$0xff]
      %v565 = vld [vmem:[%s563 + $0x8] sm:$0xff]
      %s566 = scalar_lea.vmem %s393, 48
      %v567 = vld [vmem:[%s566] sm:$0xff]
      %v568 = vld [vmem:[%s566 + $0x8] sm:$0xff]
      %v570 = vlaneseq
      %v571 = vshrl.u32 %v570, 7
      %v572 = vsub.s32 0, %v571
      %v573 = vrot.slane %v560, %v572
      %v574 = vlaneseq
      %v575 = vshrl.u32 %v574, 7
      %v576 = vsub.s32 1, %v575
      %v577 = vrot.slane %v560, %v576
      %v580 = vmul.f32 %v573, %v564
      %v581 = vmul.f32 %v577, %v565
      %v583 = vlaneseq
      %v584 = vshrl.u32 %v583, 7
      %v585 = vsub.s32 0, %v584
      %v586 = vrot.slane %v562, %v585
      %v587 = vlaneseq
      %v588 = vshrl.u32 %v587, 7
      %v589 = vsub.s32 1, %v588
      %v590 = vrot.slane %v562, %v589
      %v593 = vmul.f32 %v586, %v567
      %v594 = vmul.f32 %v590, %v568
      %v595 = vsub.f32 %v580, %v593
      %v596 = vsub.f32 %v581, %v594
      %v597 = vmul.f32 %v573, %v567
      %v598 = vmul.f32 %v577, %v568
      %v599 = vmul.f32 %v586, %v564
      %v600 = vmul.f32 %v590, %v565
      %v601 = vadd.f32 %v597, %v599
      %v602 = vadd.f32 %v598, %v600
      %v603 = vadd.f32 %v555, %v595
      %v604 = vadd.f32 %v556, %v596
      %v605 = vadd.f32 %v557, %v601
      %v606 = vadd.f32 %v558, %v602
      %s607 = scalar_lea.vmem %s363, 4
      %v608 = vld [vmem:[%s607] ss:$8 sm:$0x3]
      %s609 = scalar_lea.vmem %s373, 4
      %v610 = vld [vmem:[%s609] ss:$8 sm:$0x3]
      %s611 = scalar_lea.vmem %s383, 64
      %v612 = vld [vmem:[%s611] sm:$0xff]
      %v613 = vld [vmem:[%s611 + $0x8] sm:$0xff]
      %s614 = scalar_lea.vmem %s393, 64
      %v615 = vld [vmem:[%s614] sm:$0xff]
      %v616 = vld [vmem:[%s614 + $0x8] sm:$0xff]
      %v618 = vlaneseq
      %v619 = vshrl.u32 %v618, 7
      %v620 = vsub.s32 0, %v619
      %v621 = vrot.slane %v608, %v620
      %v622 = vlaneseq
      %v623 = vshrl.u32 %v622, 7
      %v624 = vsub.s32 1, %v623
      %v625 = vrot.slane %v608, %v624
      %v628 = vmul.f32 %v621, %v612
      %v629 = vmul.f32 %v625, %v613
      %v631 = vlaneseq
      %v632 = vshrl.u32 %v631, 7
      %v633 = vsub.s32 0, %v632
      %v634 = vrot.slane %v610, %v633
      %v635 = vlaneseq
      %v636 = vshrl.u32 %v635, 7
      %v637 = vsub.s32 1, %v636
      %v638 = vrot.slane %v610, %v637
      %v641 = vmul.f32 %v634, %v615
      %v642 = vmul.f32 %v638, %v616
      %v643 = vsub.f32 %v628, %v641
      %v644 = vsub.f32 %v629, %v642
      %v645 = vmul.f32 %v621, %v615
      %v646 = vmul.f32 %v625, %v616
      %v647 = vmul.f32 %v634, %v612
      %v648 = vmul.f32 %v638, %v613
      %v649 = vadd.f32 %v645, %v647
      %v650 = vadd.f32 %v646, %v648
      %v651 = vadd.f32 %v603, %v643
      %v652 = vadd.f32 %v604, %v644
      %v653 = vadd.f32 %v605, %v649
      %v654 = vadd.f32 %v606, %v650
      %s655 = scalar_lea.vmem %s363, 5
      %v656 = vld [vmem:[%s655] ss:$8 sm:$0x3]
      %s657 = scalar_lea.vmem %s373, 5
      %v658 = vld [vmem:[%s657] ss:$8 sm:$0x3]
      %s659 = scalar_lea.vmem %s383, 80
      %v660 = vld [vmem:[%s659] sm:$0xff]
      %v661 = vld [vmem:[%s659 + $0x8] sm:$0xff]
      %s662 = scalar_lea.vmem %s393, 80
      %v663 = vld [vmem:[%s662] sm:$0xff]
      %v664 = vld [vmem:[%s662 + $0x8] sm:$0xff]
      %v666 = vlaneseq
      %v667 = vshrl.u32 %v666, 7
      %v668 = vsub.s32 0, %v667
      %v669 = vrot.slane %v656, %v668
      %v670 = vlaneseq
      %v671 = vshrl.u32 %v670, 7
      %v672 = vsub.s32 1, %v671
      %v673 = vrot.slane %v656, %v672
      %v676 = vmul.f32 %v669, %v660
      %v677 = vmul.f32 %v673, %v661
      %v679 = vlaneseq
      %v680 = vshrl.u32 %v679, 7
      %v681 = vsub.s32 0, %v680
      %v682 = vrot.slane %v658, %v681
      %v683 = vlaneseq
      %v684 = vshrl.u32 %v683, 7
      %v685 = vsub.s32 1, %v684
      %v686 = vrot.slane %v658, %v685
      %v689 = vmul.f32 %v682, %v663
      %v690 = vmul.f32 %v686, %v664
      %v691 = vsub.f32 %v676, %v689
      %v692 = vsub.f32 %v677, %v690
      %v693 = vmul.f32 %v669, %v663
      %v694 = vmul.f32 %v673, %v664
      %v695 = vmul.f32 %v682, %v660
      %v696 = vmul.f32 %v686, %v661
      %v697 = vadd.f32 %v693, %v695
      %v698 = vadd.f32 %v694, %v696
      %v699 = vadd.f32 %v651, %v691
      %v700 = vadd.f32 %v652, %v692
      %v701 = vadd.f32 %v653, %v697
      %v702 = vadd.f32 %v654, %v698
      %s703 = scalar_lea.vmem %s363, 6
      %v704 = vld [vmem:[%s703] ss:$8 sm:$0x3]
      %s705 = scalar_lea.vmem %s373, 6
      %v706 = vld [vmem:[%s705] ss:$8 sm:$0x3]
      %s707 = scalar_lea.vmem %s383, 96
      %v708 = vld [vmem:[%s707] sm:$0xff]
      %v709 = vld [vmem:[%s707 + $0x8] sm:$0xff]
      %s710 = scalar_lea.vmem %s393, 96
      %v711 = vld [vmem:[%s710] sm:$0xff]
      %v712 = vld [vmem:[%s710 + $0x8] sm:$0xff]
      %v714 = vlaneseq
      %v715 = vshrl.u32 %v714, 7
      %v716 = vsub.s32 0, %v715
      %v717 = vrot.slane %v704, %v716
      %v718 = vlaneseq
      %v719 = vshrl.u32 %v718, 7
      %v720 = vsub.s32 1, %v719
      %v721 = vrot.slane %v704, %v720
      %v724 = vmul.f32 %v717, %v708
      %v725 = vmul.f32 %v721, %v709
      %v727 = vlaneseq
      %v728 = vshrl.u32 %v727, 7
      %v729 = vsub.s32 0, %v728
      %v730 = vrot.slane %v706, %v729
      %v731 = vlaneseq
      %v732 = vshrl.u32 %v731, 7
      %v733 = vsub.s32 1, %v732
      %v734 = vrot.slane %v706, %v733
      %v737 = vmul.f32 %v730, %v711
      %v738 = vmul.f32 %v734, %v712
      %v739 = vsub.f32 %v724, %v737
      %v740 = vsub.f32 %v725, %v738
      %v741 = vmul.f32 %v717, %v711
      %v742 = vmul.f32 %v721, %v712
      %v743 = vmul.f32 %v730, %v708
      %v744 = vmul.f32 %v734, %v709
      %v745 = vadd.f32 %v741, %v743
      %v746 = vadd.f32 %v742, %v744
      %v747 = vadd.f32 %v699, %v739
      %v748 = vadd.f32 %v700, %v740
      %v749 = vadd.f32 %v701, %v745
      %v750 = vadd.f32 %v702, %v746
      %s751 = scalar_lea.vmem %s363, 7
      %v752 = vld [vmem:[%s751] ss:$8 sm:$0x3]
      %s753 = scalar_lea.vmem %s373, 7
      %v754 = vld [vmem:[%s753] ss:$8 sm:$0x3]
      %s755 = scalar_lea.vmem %s383, 112
      %v756 = vld [vmem:[%s755] sm:$0xff]
      %v757 = vld [vmem:[%s755 + $0x8] sm:$0xff]
      %s758 = scalar_lea.vmem %s393, 112
      %v759 = vld [vmem:[%s758] sm:$0xff]
      %v760 = vld [vmem:[%s758 + $0x8] sm:$0xff]
      %v762 = vlaneseq
      %v763 = vshrl.u32 %v762, 7
      %v764 = vsub.s32 0, %v763
      %v765 = vrot.slane %v752, %v764
      %v766 = vlaneseq
      %v767 = vshrl.u32 %v766, 7
      %v768 = vsub.s32 1, %v767
      %v769 = vrot.slane %v752, %v768
      %v772 = vmul.f32 %v765, %v756
      %v773 = vmul.f32 %v769, %v757
      %v775 = vlaneseq
      %v776 = vshrl.u32 %v775, 7
      %v777 = vsub.s32 0, %v776
      %v778 = vrot.slane %v754, %v777
      %v779 = vlaneseq
      %v780 = vshrl.u32 %v779, 7
      %v781 = vsub.s32 1, %v780
      %v782 = vrot.slane %v754, %v781
      %v785 = vmul.f32 %v778, %v759
      %v786 = vmul.f32 %v782, %v760
      %v787 = vsub.f32 %v772, %v785
      %v788 = vsub.f32 %v773, %v786
      %v789 = vmul.f32 %v765, %v759
      %v790 = vmul.f32 %v769, %v760
      %v791 = vmul.f32 %v778, %v756
      %v792 = vmul.f32 %v782, %v757
      %v793 = vadd.f32 %v789, %v791
      %v794 = vadd.f32 %v790, %v792
      %v795 = vadd.f32 %v747, %v787
      %v796 = vadd.f32 %v748, %v788
      %v797 = vadd.f32 %v749, %v793
      %v798 = vadd.f32 %v750, %v794
      %799 = vst [vmem:[%s407] sm:$0xff] %v795
      %800 = vst [vmem:[%s407 + $0x8] sm:$0xff] %v796
      %801 = vst [vmem:[%s421] sm:$0xff] %v797
      %802 = vst [vmem:[%s421 + $0x8] sm:$0xff] %v798
      %s803 = smul.u32 2, %s24
      %p804 = scmp.lt.s32.totalorder %s22, 1
      %s805 = scalar_select %p804, %s22, 1
      %p806 = scmp.lt.s32.totalorder %s23, 0
      %s807 = scalar_select %p806, %s23, 0
      %p808 = scmp.lt.s32.totalorder %s803, 1
      %s809 = scalar_select %p808, %s803, 1
      %s810 = smul.addr %s807, 2
      %s811 = sadd.s32 %s809, %s810
      %s812 = smul.addr %s805, 2
      %s813 = sadd.s32 %s811, %s812
      %s814 = smul.addr %s813, 8
      %s815 = scalar_lea.vmem %s4, %s814
      %s816 = smul.u32 2, %s24
      %p817 = scmp.lt.s32.totalorder %s22, 1
      %s818 = scalar_select %p817, %s22, 1
      %p819 = scmp.lt.s32.totalorder %s23, 0
      %s820 = scalar_select %p819, %s23, 0
      %p821 = scmp.lt.s32.totalorder %s816, 1
      %s822 = scalar_select %p821, %s816, 1
      %s823 = smul.addr %s820, 2
      %s824 = sadd.s32 %s822, %s823
      %s825 = smul.addr %s818, 2
      %s826 = sadd.s32 %s824, %s825
      %s827 = smul.addr %s826, 8
      %s828 = scalar_lea.vmem %s5, %s827
      // Predicated region
      $region37: #{fno3d_binseg_forward.11} parent=35 // pred_check
        %p829 = pneg %p170
      $region38: #{fno3d_binseg_forward.11} parent=35 // pred_check_branch
        %831 = sbr.rel (%p829) target = $region40
      $region39: #{fno3d_binseg_forward.11} parent=35 // pred_region
        %s832 = smul.u32 2, %s24
      $region40: #{fno3d_binseg_forward.11} parent=35 // pred_fallthru
        _
      // Predicated region
      $region41: #{fno3d_binseg_forward.11} parent=35 // pred_check
        %p833 = pneg %p200
      $region42: #{fno3d_binseg_forward.11} parent=35 // pred_check_branch
        %835 = sbr.rel (%p833) target = $region44
      $region43: #{fno3d_binseg_forward.11} parent=35 // pred_region
        %s836 = smul.u32 2, %s24
      $region44: #{fno3d_binseg_forward.11} parent=35 // pred_fallthru
        _
    $region36: #{fno3d_binseg_forward.11} parent=5 // pred_fallthru
      _
    %p837 = scmp.le.s32.totalorder 2, %s12
    // Predicated region
    $region45: #{fno3d_binseg_forward.11} parent=5 // pred_check
      %p838 = pneg %p837
    $region46: #{fno3d_binseg_forward.11} parent=5 // pred_check_branch
      %840 = sbr.rel (%p838) target = $region48
    $region47: #{fno3d_binseg_forward.11} parent=5 // pred_region
      %s841 = ssub.s32 %s12, 2
      // Predicated region
      $region49: #{fno3d_binseg_forward.11} parent=47 // pred_check
        %p842 = pneg %p176
      $region50: #{fno3d_binseg_forward.11} parent=47 // pred_check_branch
        %844 = sbr.rel (%p842) target = $region52
      $region51: #{fno3d_binseg_forward.11} parent=47 // pred_region
        %s845 = smul.u32 2, %s27
        %p846 = scmp.lt.s32.totalorder %s25, 1
        %s847 = scalar_select %p846, %s25, 1
        %p848 = scmp.lt.s32.totalorder %s26, 0
        %s849 = scalar_select %p848, %s26, 0
        %p850 = scmp.lt.s32.totalorder %s845, 1
        %s851 = scalar_select %p850, %s845, 1
        %s852 = smul.addr %s849, 2
        %s853 = sadd.s32 %s851, %s852
        %s854 = smul.addr %s847, 2
        %s855 = sadd.s32 %s853, %s854
        %s856 = smul.addr %s855, 8
        %s857 = scalar_lea.vmem %s4, %s856
      $region52: #{fno3d_binseg_forward.11} parent=47 // pred_fallthru
        _
      // Predicated region
      $region53: #{fno3d_binseg_forward.11} parent=47 // pred_check
        %p858 = pneg %p206
      $region54: #{fno3d_binseg_forward.11} parent=47 // pred_check_branch
        %860 = sbr.rel (%p858) target = $region56
      $region55: #{fno3d_binseg_forward.11} parent=47 // pred_region
        %s861 = smul.u32 2, %s27
        %p862 = scmp.lt.s32.totalorder %s25, 1
        %s863 = scalar_select %p862, %s25, 1
        %p864 = scmp.lt.s32.totalorder %s26, 0
        %s865 = scalar_select %p864, %s26, 0
        %p866 = scmp.lt.s32.totalorder %s861, 1
        %s867 = scalar_select %p866, %s861, 1
        %s868 = smul.addr %s865, 2
        %s869 = sadd.s32 %s867, %s868
        %s870 = smul.addr %s863, 2
        %s871 = sadd.s32 %s869, %s870
        %s872 = smul.addr %s871, 8
        %s873 = scalar_lea.vmem %s5, %s872
      $region56: #{fno3d_binseg_forward.11} parent=47 // pred_fallthru
        _
    $region48: #{fno3d_binseg_forward.11} parent=5 // pred_fallthru
      _
  $region6: #{fno3d_binseg_forward.11} parent=0 // loop_footer
    %s16 = sadd.s32 1, %s12
  $region7: #{fno3d_binseg_forward.11} parent=0 // loop_footer_branch
    %11 = sbr.rel target = $region3
  $region8: #{fno3d_binseg_forward.11} parent=0 // loop_exit
    _

// kernel: reverse.8
$region0: #{reverse.8}
  #allocation0 [shape = 's32[1]{0}', space=sflag, size = 0x4, scoped, tag = 'scoped memory for reverse.8']
  %s0 = inlined_call_operand.vmem [shape: f32[2,8,8,8,6], index: 0, kind: input, shape index: {}]
  %s1 = inlined_call_operand.vmem [shape: f32[2,8,8,8,6], index: 1, kind: output, shape index: {}]
  %s2 = scalar_lea.vmem %s0, 40
  %v3 = vld [vmem:[%s2] sm:$0xff]
  %4 = vst [vmem:[%s1] sm:$0xff] %v3
  %s5 = scalar_lea.vmem %s0, 424
  %v6 = vld [vmem:[%s5] sm:$0xff]
  %s7 = scalar_lea.vmem %s1, 384
  %8 = vst [vmem:[%s7] sm:$0xff] %v6
  %s9 = scalar_lea.vmem %s0, 88
  %v10 = vld [vmem:[%s9] sm:$0xff]
  %s11 = scalar_lea.vmem %s1, 48
  %12 = vst [vmem:[%s11] sm:$0xff] %v10
  %s13 = scalar_lea.vmem %s0, 472
  %v14 = vld [vmem:[%s13] sm:$0xff]
  %s15 = scalar_lea.vmem %s1, 432
  %16 = vst [vmem:[%s15] sm:$0xff] %v14
  %s17 = scalar_lea.vmem %s0, 136
  %v18 = vld [vmem:[%s17] sm:$0xff]
  %s19 = scalar_lea.vmem %s1, 96
  %20 = vst [vmem:[%s19] sm:$0xff] %v18
  %s21 = scalar_lea.vmem %s0, 520
  %v22 = vld [vmem:[%s21] sm:$0xff]
  %s23 = scalar_lea.vmem %s1, 480
  %24 = vst [vmem:[%s23] sm:$0xff] %v22
  %s25 = scalar_lea.vmem %s0, 184
  %v26 = vld [vmem:[%s25] sm:$0xff]
  %s27 = scalar_lea.vmem %s1, 144
  %28 = vst [vmem:[%s27] sm:$0xff] %v26
  %s29 = scalar_lea.vmem %s0, 568
  %v30 = vld [vmem:[%s29] sm:$0xff]
  %s31 = scalar_lea.vmem %s1, 528
  %32 = vst [vmem:[%s31] sm:$0xff] %v30
  %s33 = scalar_lea.vmem %s0, 232
  %v34 = vld [vmem:[%s33] sm:$0xff]
  %s35 = scalar_lea.vmem %s1, 192
  %36 = vst [vmem:[%s35] sm:$0xff] %v34
  %s37 = scalar_lea.vmem %s0, 616
  %v38 = vld [vmem:[%s37] sm:$0xff]
  %s39 = scalar_lea.vmem %s1, 576
  %40 = vst [vmem:[%s39] sm:$0xff] %v38
  %s41 = scalar_lea.vmem %s0, 280
  %v42 = vld [vmem:[%s41] sm:$0xff]
  %s43 = scalar_lea.vmem %s1, 240
  %44 = vst [vmem:[%s43] sm:$0xff] %v42
  %s45 = scalar_lea.vmem %s0, 664
  %v46 = vld [vmem:[%s45] sm:$0xff]
  %s47 = scalar_lea.vmem %s1, 624
  %48 = vst [vmem:[%s47] sm:$0xff] %v46
  %s49 = scalar_lea.vmem %s0, 328
  %v50 = vld [vmem:[%s49] sm:$0xff]
  %s51 = scalar_lea.vmem %s1, 288
  %52 = vst [vmem:[%s51] sm:$0xff] %v50
  %s53 = scalar_lea.vmem %s0, 712
  %v54 = vld [vmem:[%s53] sm:$0xff]
  %s55 = scalar_lea.vmem %s1, 672
  %56 = vst [vmem:[%s55] sm:$0xff] %v54
  %s57 = scalar_lea.vmem %s0, 376
  %v58 = vld [vmem:[%s57] sm:$0xff]
  %s59 = scalar_lea.vmem %s1, 336
  %60 = vst [vmem:[%s59] sm:$0xff] %v58
  %s61 = scalar_lea.vmem %s0, 760
  %v62 = vld [vmem:[%s61] sm:$0xff]
  %s63 = scalar_lea.vmem %s1, 720
  %64 = vst [vmem:[%s63] sm:$0xff] %v62
  %s65 = scalar_lea.vmem %s0, 32
  %v66 = vld [vmem:[%s65] sm:$0xff]
  %s67 = scalar_lea.vmem %s1, 8
  %68 = vst [vmem:[%s67] sm:$0xff] %v66
  %s69 = scalar_lea.vmem %s0, 416
  %v70 = vld [vmem:[%s69] sm:$0xff]
  %s71 = scalar_lea.vmem %s1, 392
  %72 = vst [vmem:[%s71] sm:$0xff] %v70
  %s73 = scalar_lea.vmem %s0, 80
  %v74 = vld [vmem:[%s73] sm:$0xff]
  %s75 = scalar_lea.vmem %s1, 56
  %76 = vst [vmem:[%s75] sm:$0xff] %v74
  %s77 = scalar_lea.vmem %s0, 464
  %v78 = vld [vmem:[%s77] sm:$0xff]
  %s79 = scalar_lea.vmem %s1, 440
  %80 = vst [vmem:[%s79] sm:$0xff] %v78
  %s81 = scalar_lea.vmem %s0, 128
  %v82 = vld [vmem:[%s81] sm:$0xff]
  %s83 = scalar_lea.vmem %s1, 104
  %84 = vst [vmem:[%s83] sm:$0xff] %v82
  %s85 = scalar_lea.vmem %s0, 512
  %v86 = vld [vmem:[%s85] sm:$0xff]
  %s87 = scalar_lea.vmem %s1, 488
  %88 = vst [vmem:[%s87] sm:$0xff] %v86
  %s89 = scalar_lea.vmem %s0, 176
  %v90 = vld [vmem:[%s89] sm:$0xff]
  %s91 = scalar_lea.vmem %s1, 152
  %92 = vst [vmem:[%s91] sm:$0xff] %v90
  %s93 = scalar_lea.vmem %s0, 560
  %v94 = vld [vmem:[%s93] sm:$0xff]
  %s95 = scalar_lea.vmem %s1, 536
  %96 = vst [vmem:[%s95] sm:$0xff] %v94
  %s97 = scalar_lea.vmem %s0, 224
  %v98 = vld [vmem:[%s97] sm:$0xff]
  %s99 = scalar_lea.vmem %s1, 200
  %100 = vst [vmem:[%s99] sm:$0xff] %v98
  %s101 = scalar_lea.vmem %s0, 608
  %v102 = vld [vmem:[%s101] sm:$0xff]
  %s103 = scalar_lea.vmem %s1, 584
  %104 = vst [vmem:[%s103] sm:$0xff] %v102
  %s105 = scalar_lea.vmem %s0, 272
  %v106 = vld [vmem:[%s105] sm:$0xff]
  %s107 = scalar_lea.vmem %s1, 248
  %108 = vst [vmem:[%s107] sm:$0xff] %v106
  %s109 = scalar_lea.vmem %s0, 656
  %v110 = vld [vmem:[%s109] sm:$0xff]
  %s111 = scalar_lea.vmem %s1, 632
  %112 = vst [vmem:[%s111] sm:$0xff] %v110
  %s113 = scalar_lea.vmem %s0, 320
  %v114 = vld [vmem:[%s113] sm:$0xff]
  %s115 = scalar_lea.vmem %s1, 296
  %116 = vst [vmem:[%s115] sm:$0xff] %v114
  %s117 = scalar_lea.vmem %s0, 704
  %v118 = vld [vmem:[%s117] sm:$0xff]
  %s119 = scalar_lea.vmem %s1, 680
  %120 = vst [vmem:[%s119] sm:$0xff] %v118
  %s121 = scalar_lea.vmem %s0, 368
  %v122 = vld [vmem:[%s121] sm:$0xff]
  %s123 = scalar_lea.vmem %s1, 344
  %124 = vst [vmem:[%s123] sm:$0xff] %v122
  %s125 = scalar_lea.vmem %s0, 752
  %v126 = vld [vmem:[%s125] sm:$0xff]
  %s127 = scalar_lea.vmem %s1, 728
  %128 = vst [vmem:[%s127] sm:$0xff] %v126
  %s129 = scalar_lea.vmem %s0, 24
  %v130 = vld [vmem:[%s129] sm:$0xff]
  %s131 = scalar_lea.vmem %s1, 16
  %132 = vst [vmem:[%s131] sm:$0xff] %v130
  %s133 = scalar_lea.vmem %s0, 408
  %v134 = vld [vmem:[%s133] sm:$0xff]
  %s135 = scalar_lea.vmem %s1, 400
  %136 = vst [vmem:[%s135] sm:$0xff] %v134
  %s137 = scalar_lea.vmem %s0, 72
  %v138 = vld [vmem:[%s137] sm:$0xff]
  %s139 = scalar_lea.vmem %s1, 64
  %140 = vst [vmem:[%s139] sm:$0xff] %v138
  %s141 = scalar_lea.vmem %s0, 456
  %v142 = vld [vmem:[%s141] sm:$0xff]
  %s143 = scalar_lea.vmem %s1, 448
  %144 = vst [vmem:[%s143] sm:$0xff] %v142
  %s145 = scalar_lea.vmem %s0, 120
  %v146 = vld [vmem:[%s145] sm:$0xff]
  %s147 = scalar_lea.vmem %s1, 112
  %148 = vst [vmem:[%s147] sm:$0xff] %v146
  %s149 = scalar_lea.vmem %s0, 504
  %v150 = vld [vmem:[%s149] sm:$0xff]
  %s151 = scalar_lea.vmem %s1, 496
  %152 = vst [vmem:[%s151] sm:$0xff] %v150
  %s153 = scalar_lea.vmem %s0, 168
  %v154 = vld [vmem:[%s153] sm:$0xff]
  %s155 = scalar_lea.vmem %s1, 160
  %156 = vst [vmem:[%s155] sm:$0xff] %v154
  %s157 = scalar_lea.vmem %s0, 552
  %v158 = vld [vmem:[%s157] sm:$0xff]
  %s159 = scalar_lea.vmem %s1, 544
  %160 = vst [vmem:[%s159] sm:$0xff] %v158
  %s161 = scalar_lea.vmem %s0, 216
  %v162 = vld [vmem:[%s161] sm:$0xff]
  %s163 = scalar_lea.vmem %s1, 208
  %164 = vst [vmem:[%s163] sm:$0xff] %v162
  %s165 = scalar_lea.vmem %s0, 600
  %v166 = vld [vmem:[%s165] sm:$0xff]
  %s167 = scalar_lea.vmem %s1, 592
  %168 = vst [vmem:[%s167] sm:$0xff] %v166
  %s169 = scalar_lea.vmem %s0, 264
  %v170 = vld [vmem:[%s169] sm:$0xff]
  %s171 = scalar_lea.vmem %s1, 256
  %172 = vst [vmem:[%s171] sm:$0xff] %v170
  %s173 = scalar_lea.vmem %s0, 648
  %v174 = vld [vmem:[%s173] sm:$0xff]
  %s175 = scalar_lea.vmem %s1, 640
  %176 = vst [vmem:[%s175] sm:$0xff] %v174
  %s177 = scalar_lea.vmem %s0, 312
  %v178 = vld [vmem:[%s177] sm:$0xff]
  %s179 = scalar_lea.vmem %s1, 304
  %180 = vst [vmem:[%s179] sm:$0xff] %v178
  %s181 = scalar_lea.vmem %s0, 696
  %v182 = vld [vmem:[%s181] sm:$0xff]
  %s183 = scalar_lea.vmem %s1, 688
  %184 = vst [vmem:[%s183] sm:$0xff] %v182
  %s185 = scalar_lea.vmem %s0, 360
  %v186 = vld [vmem:[%s185] sm:$0xff]
  %s187 = scalar_lea.vmem %s1, 352
  %188 = vst [vmem:[%s187] sm:$0xff] %v186
  %s189 = scalar_lea.vmem %s0, 744
  %v190 = vld [vmem:[%s189] sm:$0xff]
  %s191 = scalar_lea.vmem %s1, 736
  %192 = vst [vmem:[%s191] sm:$0xff] %v190
  %s193 = scalar_lea.vmem %s0, 16
  %v194 = vld [vmem:[%s193] sm:$0xff]
  %s195 = scalar_lea.vmem %s1, 24
  %196 = vst [vmem:[%s195] sm:$0xff] %v194
  %s197 = scalar_lea.vmem %s0, 400
  %v198 = vld [vmem:[%s197] sm:$0xff]
  %s199 = scalar_lea.vmem %s1, 408
  %200 = vst [vmem:[%s199] sm:$0xff] %v198
  %s201 = scalar_lea.vmem %s0, 64
  %v202 = vld [vmem:[%s201] sm:$0xff]
  %s203 = scalar_lea.vmem %s1, 72
  %204 = vst [vmem:[%s203] sm:$0xff] %v202
  %s205 = scalar_lea.vmem %s0, 448
  %v206 = vld [vmem:[%s205] sm:$0xff]
  %s207 = scalar_lea.vmem %s1, 456
  %208 = vst [vmem:[%s207] sm:$0xff] %v206
  %s209 = scalar_lea.vmem %s0, 112
  %v210 = vld [vmem:[%s209] sm:$0xff]
  %s211 = scalar_lea.vmem %s1, 120
  %212 = vst [vmem:[%s211] sm:$0xff] %v210
  %s213 = scalar_lea.vmem %s0, 496
  %v214 = vld [vmem:[%s213] sm:$0xff]
  %s215 = scalar_lea.vmem %s1, 504
  %216 = vst [vmem:[%s215] sm:$0xff] %v214
  %s217 = scalar_lea.vmem %s0, 160
  %v218 = vld [vmem:[%s217] sm:$0xff]
  %s219 = scalar_lea.vmem %s1, 168
  %220 = vst [vmem:[%s219] sm:$0xff] %v218
  %s221 = scalar_lea.vmem %s0, 544
  %v222 = vld [vmem:[%s221] sm:$0xff]
  %s223 = scalar_lea.vmem %s1, 552
  %224 = vst [vmem:[%s223] sm:$0xff] %v222
  %s225 = scalar_lea.vmem %s0, 208
  %v226 = vld [vmem:[%s225] sm:$0xff]
  %s227 = scalar_lea.vmem %s1, 216
  %228 = vst [vmem:[%s227] sm:$0xff] %v226
  %s229 = scalar_lea.vmem %s0, 592
  %v230 = vld [vmem:[%s229] sm:$0xff]
  %s231 = scalar_lea.vmem %s1, 600
  %232 = vst [vmem:[%s231] sm:$0xff] %v230
  %s233 = scalar_lea.vmem %s0, 256
  %v234 = vld [vmem:[%s233] sm:$0xff]
  %s235 = scalar_lea.vmem %s1, 264
  %236 = vst [vmem:[%s235] sm:$0xff] %v234
  %s237 = scalar_lea.vmem %s0, 640
  %v238 = vld [vmem:[%s237] sm:$0xff]
  %s239 = scalar_lea.vmem %s1, 648
  %240 = vst [vmem:[%s239] sm:$0xff] %v238
  %s241 = scalar_lea.vmem %s0, 304
  %v242 = vld [vmem:[%s241] sm:$0xff]
  %s243 = scalar_lea.vmem %s1, 312
  %244 = vst [vmem:[%s243] sm:$0xff] %v242
  %s245 = scalar_lea.vmem %s0, 688
  %v246 = vld [vmem:[%s245] sm:$0xff]
  %s247 = scalar_lea.vmem %s1, 696
  %248 = vst [vmem:[%s247] sm:$0xff] %v246
  %s249 = scalar_lea.vmem %s0, 352
  %v250 = vld [vmem:[%s249] sm:$0xff]
  %s251 = scalar_lea.vmem %s1, 360
  %252 = vst [vmem:[%s251] sm:$0xff] %v250
  %s253 = scalar_lea.vmem %s0, 736
  %v254 = vld [vmem:[%s253] sm:$0xff]
  %s255 = scalar_lea.vmem %s1, 744
  %256 = vst [vmem:[%s255] sm:$0xff] %v254
  %s257 = scalar_lea.vmem %s0, 8
  %v258 = vld [vmem:[%s257] sm:$0xff]
  %s259 = scalar_lea.vmem %s1, 32
  %260 = vst [vmem:[%s259] sm:$0xff] %v258
  %s261 = scalar_lea.vmem %s0, 392
  %v262 = vld [vmem:[%s261] sm:$0xff]
  %s263 = scalar_lea.vmem %s1, 416
  %264 = vst [vmem:[%s263] sm:$0xff] %v262
  %s265 = scalar_lea.vmem %s0, 56
  %v266 = vld [vmem:[%s265] sm:$0xff]
  %s267 = scalar_lea.vmem %s1, 80
  %268 = vst [vmem:[%s267] sm:$0xff] %v266
  %s269 = scalar_lea.vmem %s0, 440
  %v270 = vld [vmem:[%s269] sm:$0xff]
  %s271 = scalar_lea.vmem %s1, 464
  %272 = vst [vmem:[%s271] sm:$0xff] %v270
  %s273 = scalar_lea.vmem %s0, 104
  %v274 = vld [vmem:[%s273] sm:$0xff]
  %s275 = scalar_lea.vmem %s1, 128
  %276 = vst [vmem:[%s275] sm:$0xff] %v274
  %s277 = scalar_lea.vmem %s0, 488
  %v278 = vld [vmem:[%s277] sm:$0xff]
  %s279 = scalar_lea.vmem %s1, 512
  %280 = vst [vmem:[%s279] sm:$0xff] %v278
  %s281 = scalar_lea.vmem %s0, 152
  %v282 = vld [vmem:[%s281] sm:$0xff]
  %s283 = scalar_lea.vmem %s1, 176
  %284 = vst [vmem:[%s283] sm:$0xff] %v282
  %s285 = scalar_lea.vmem %s0, 536
  %v286 = vld [vmem:[%s285] sm:$0xff]
  %s287 = scalar_lea.vmem %s1, 560
  %288 = vst [vmem:[%s287] sm:$0xff] %v286
  %s289 = scalar_lea.vmem %s0, 200
  %v290 = vld [vmem:[%s289] sm:$0xff]
  %s291 = scalar_lea.vmem %s1, 224
  %292 = vst [vmem:[%s291] sm:$0xff] %v290
  %s293 = scalar_lea.vmem %s0, 584
  %v294 = vld [vmem:[%s293] sm:$0xff]
  %s295 = scalar_lea.vmem %s1, 608
  %296 = vst [vmem:[%s295] sm:$0xff] %v294
  %s297 = scalar_lea.vmem %s0, 248
  %v298 = vld [vmem:[%s297] sm:$0xff]
  %s299 = scalar_lea.vmem %s1, 272
  %300 = vst [vmem:[%s299] sm:$0xff] %v298
  %s301 = scalar_lea.vmem %s0, 632
  %v302 = vld [vmem:[%s301] sm:$0xff]
  %s303 = scalar_lea.vmem %s1, 656
  %304 = vst [vmem:[%s303] sm:$0xff] %v302
  %s305 = scalar_lea.vmem %s0, 296
  %v306 = vld [vmem:[%s305] sm:$0xff]
  %s307 = scalar_lea.vmem %s1, 320
  %308 = vst [vmem:[%s307] sm:$0xff] %v306
  %s309 = scalar_lea.vmem %s0, 680
  %v310 = vld [vmem:[%s309] sm:$0xff]
  %s311 = scalar_lea.vmem %s1, 704
  %312 = vst [vmem:[%s311] sm:$0xff] %v310
  %s313 = scalar_lea.vmem %s0, 344
  %v314 = vld [vmem:[%s313] sm:$0xff]
  %s315 = scalar_lea.vmem %s1, 368
  %316 = vst [vmem:[%s315] sm:$0xff] %v314
  %s317 = scalar_lea.vmem %s0, 728
  %v318 = vld [vmem:[%s317] sm:$0xff]
  %s319 = scalar_lea.vmem %s1, 752
  %320 = vst [vmem:[%s319] sm:$0xff] %v318
  %v321 = vld [vmem:[%s0] sm:$0xff]
  %s322 = scalar_lea.vmem %s1, 40
  %323 = vst [vmem:[%s322] sm:$0xff] %v321
  %s324 = scalar_lea.vmem %s0, 384
  %v325 = vld [vmem:[%s324] sm:$0xff]
  %s326 = scalar_lea.vmem %s1, 424
  %327 = vst [vmem:[%s326] sm:$0xff] %v325
  %s328 = scalar_lea.vmem %s0, 48
  %v329 = vld [vmem:[%s328] sm:$0xff]
  %s330 = scalar_lea.vmem %s1, 88
  %331 = vst [vmem:[%s330] sm:$0xff] %v329
  %s332 = scalar_lea.vmem %s0, 432
  %v333 = vld [vmem:[%s332] sm:$0xff]
  %s334 = scalar_lea.vmem %s1, 472
  %335 = vst [vmem:[%s334] sm:$0xff] %v333
  %s336 = scalar_lea.vmem %s0, 96
  %v337 = vld [vmem:[%s336] sm:$0xff]
  %s338 = scalar_lea.vmem %s1, 136
  %339 = vst [vmem:[%s338] sm:$0xff] %v337
  %s340 = scalar_lea.vmem %s0, 480
  %v341 = vld [vmem:[%s340] sm:$0xff]
  %s342 = scalar_lea.vmem %s1, 520
  %343 = vst [vmem:[%s342] sm:$0xff] %v341
  %s344 = scalar_lea.vmem %s0, 144
  %v345 = vld [vmem:[%s344] sm:$0xff]
  %s346 = scalar_lea.vmem %s1, 184
  %347 = vst [vmem:[%s346] sm:$0xff] %v345
  %s348 = scalar_lea.vmem %s0, 528
  %v349 = vld [vmem:[%s348] sm:$0xff]
  %s350 = scalar_lea.vmem %s1, 568
  %351 = vst [vmem:[%s350] sm:$0xff] %v349
  %s352 = scalar_lea.vmem %s0, 192
  %v353 = vld [vmem:[%s352] sm:$0xff]
  %s354 = scalar_lea.vmem %s1, 232
  %355 = vst [vmem:[%s354] sm:$0xff] %v353
  %s356 = scalar_lea.vmem %s0, 576
  %v357 = vld [vmem:[%s356] sm:$0xff]
  %s358 = scalar_lea.vmem %s1, 616
  %359 = vst [vmem:[%s358] sm:$0xff] %v357
  %s360 = scalar_lea.vmem %s0, 240
  %v361 = vld [vmem:[%s360] sm:$0xff]
  %s362 = scalar_lea.vmem %s1, 280
  %363 = vst [vmem:[%s362] sm:$0xff] %v361
  %s364 = scalar_lea.vmem %s0, 624
  %v365 = vld [vmem:[%s364] sm:$0xff]
  %s366 = scalar_lea.vmem %s1, 664
  %367 = vst [vmem:[%s366] sm:$0xff] %v365
  %s368 = scalar_lea.vmem %s0, 288
  %v369 = vld [vmem:[%s368] sm:$0xff]
  %s370 = scalar_lea.vmem %s1, 328
  %371 = vst [vmem:[%s370] sm:$0xff] %v369
  %s372 = scalar_lea.vmem %s0, 672
  %v373 = vld [vmem:[%s372] sm:$0xff]
  %s374 = scalar_lea.vmem %s1, 712
  %375 = vst [vmem:[%s374] sm:$0xff] %v373
  %s376 = scalar_lea.vmem %s0, 336
  %v377 = vld [vmem:[%s376] sm:$0xff]
  %s378 = scalar_lea.vmem %s1, 376
  %379 = vst [vmem:[%s378] sm:$0xff] %v377
  %s380 = scalar_lea.vmem %s0, 720
  %v381 = vld [vmem:[%s380] sm:$0xff]
  %s382 = scalar_lea.vmem %s1, 760
  %383 = vst [vmem:[%s382] sm:$0xff] %v381

// kernel: fno3d_binseg_forward.12
$region0: #{fno3d_binseg_forward.12}
  #allocation0 [shape = 'u32[]', space=smem, size = 0x4, offset = 0x4, fixed_abs, tag = 'smem constant byte address 0x4 - core index']
  #allocation1 [shape = 'u32[144,128]{1,0:T(1,128)}', space=vmem, size = 0x12000, scoped, tag = 'internal scratch']
  %s0 = inlined_call_operand.vmem [shape: f32[2,8,896], index: 0, kind: input, shape index: {}]
  %s1 = inlined_call_operand.vmem [shape: f32[2,8,896], index: 1, kind: input, shape index: {}]
  %s2 = inlined_call_operand.vmem [shape: f32[8,8], index: 2, kind: input, shape index: {}]
  %s3 = inlined_call_operand.vmem [shape: f32[8,1], index: 3, kind: input, shape index: {}]
  %s4 = inlined_call_operand.vmem [shape: f32[2,8,896], index: 4, kind: output, shape index: {}]
  %s5 = sld [smem:[#allocation0]]
  $region49: #{fno3d_binseg_forward.12} parent=0
    _
  %s7 = ssub.s32 1, %s5
  %s8 = scalar_select 0, %s7, %s5
  loop: start=0, step=1, limit=4
  $region2: #{fno3d_binseg_forward.12} parent=0 // loop_pre_header
    _
  $region3: #{fno3d_binseg_forward.12} parent=0 // loop_header
    %s10 = sphi 0, %s14
    %p11 = scmp.ge.s32.totalorder %s10, 4
    %s17 = sphi 0, %s29
    %s18 = sphi 0, %s25
    %s19 = sphi 0, %s17
    %s20 = sphi 0, %s18
    %s21 = sphi 0, %s19
    %s22 = sphi 0, %s20
    %s34 = sphi 0, %s36
    %s37 = sphi 0, %s34
    %s38 = sphi 0, %s37
    %s54 = sphi 0, %s38
    %s62 = sphi 0, %s64
    %s65 = sphi 0, %s62
    %s66 = sphi 0, %s65
    %s82 = sphi 0, %s66
    %s86 = sphi 0, %s86
    %s88 = sphi 0, %s86
    %s89 = sphi 0, %s88
    %s103 = sphi 0, %s89
    %s107 = sphi 0, %s107
    %s109 = sphi 0, %s107
    %s110 = sphi 0, %s109
    %s124 = sphi 0, %s110
    %s132 = sphi 0, %s134
    %s135 = sphi 0, %s132
    %s136 = sphi 0, %s135
    %s152 = sphi 0, %s136
  $region4: #{fno3d_binseg_forward.12} parent=0 // loop_header_branch
    %13 = sbr.rel (%p11) target = $region8
  $region5: #{fno3d_binseg_forward.12} parent=0 // loop_body
    %s15 = ssub.s32 %s10, 1
    %s16 = ssub.s32 %s10, 2
    %s23 = sadd.s32 1, %s18
    %p24 = scmp.ge.s32.totalorder %s23, 1
    %s25 = scalar_select %p24, 0, %s23
    %s26 = sadd.s32 1, %s17
    %s27 = scalar_select %p24, %s26, %s17
    %p28 = scmp.ge.s32.totalorder %s27, 2
    %s29 = scalar_select %p28, 0, %s27
    %s30 = ssub.s32 %s17, %s29
    %s31 = ssub.s32 %s18, %s25
    %s32 = sor.u32 %s30, %s31
    %p33 = scmp.eq.s32.totalorder %s32, 0
    %s35 = sadd.s32 %s34, 1
    %s36 = scalar_select %p33, %s34, %s35
    %p39 = pneg %p33
    %p40 = scmp.eq.s32.totalorder %s10, 1
    %p41 = por %p39, %p40
    %p42 = scmp.ne.s32.totalorder %s34, %s37
    %p43 = scmp.eq.s32.totalorder %s10, 0
    %p44 = por %p42, %p43
    %p45 = scmp.ne.s32.totalorder %s34, %s37
    %p46 = scmp.eq.s32.totalorder %s15, 1
    %p47 = por %p45, %p46
    %p48 = scmp.ne.s32.totalorder %s37, %s38
    %p49 = scmp.eq.s32.totalorder %s15, 0
    %p50 = por %p48, %p49
    %p51 = scmp.ne.s32.totalorder %s37, %s38
    %p52 = scmp.eq.s32.totalorder %s16, 1
    %p53 = por %p51, %p52
    %p55 = scmp.ne.s32.totalorder %s38, %s54
    %p56 = scmp.eq.s32.totalorder %s16, 0
    %p57 = por %p55, %p56
    %s58 = ssub.s32 %s17, %s29
    %s59 = ssub.s32 %s18, %s25
    %s60 = sor.u32 %s58, %s59
    %p61 = scmp.eq.s32.totalorder %s60, 0
    %s63 = sadd.s32 %s62, 1
    %s64 = scalar_select %p61, %s62, %s63
    %p67 = pneg %p61
    %p68 = scmp.eq.s32.totalorder %s10, 1
    %p69 = por %p67, %p68
    %p70 = scmp.ne.s32.totalorder %s62, %s65
    %p71 = scmp.eq.s32.totalorder %s10, 0
    %p72 = por %p70, %p71
    %p73 = scmp.ne.s32.totalorder %s62, %s65
    %p74 = scmp.eq.s32.totalorder %s15, 1
    %p75 = por %p73, %p74
    %p76 = scmp.ne.s32.totalorder %s65, %s66
    %p77 = scmp.eq.s32.totalorder %s15, 0
    %p78 = por %p76, %p77
    %p79 = scmp.ne.s32.totalorder %s65, %s66
    %p80 = scmp.eq.s32.totalorder %s16, 1
    %p81 = por %p79, %p80
    %p83 = scmp.ne.s32.totalorder %s66, %s82
    %p84 = scmp.eq.s32.totalorder %s16, 0
    %p85 = por %p83, %p84
    %s87 = sadd.s32 %s86, 1
    %p90 = scmp.eq.s32.totalorder %s10, 1
    %p91 = scmp.ne.s32.totalorder %s86, %s88
    %p92 = scmp.eq.s32.totalorder %s10, 0
    %p93 = por %p91, %p92
    %p94 = scmp.ne.s32.totalorder %s86, %s88
    %p95 = scmp.eq.s32.totalorder %s15, 1
    %p96 = por %p94, %p95
    %p97 = scmp.ne.s32.totalorder %s88, %s89
    %p98 = scmp.eq.s32.totalorder %s15, 0
    %p99 = por %p97, %p98
    %p100 = scmp.ne.s32.totalorder %s88, %s89
    %p101 = scmp.eq.s32.totalorder %s16, 1
    %p102 = por %p100, %p101
    %p104 = scmp.ne.s32.totalorder %s89, %s103
    %p105 = scmp.eq.s32.totalorder %s16, 0
    %p106 = por %p104, %p105
    %s108 = sadd.s32 %s107, 1
    %p111 = scmp.eq.s32.totalorder %s10, 1
    %p112 = scmp.ne.s32.totalorder %s107, %s109
    %p113 = scmp.eq.s32.totalorder %s10, 0
    %p114 = por %p112, %p113
    %p115 = scmp.ne.s32.totalorder %s107, %s109
    %p116 = scmp.eq.s32.totalorder %s15, 1
    %p117 = por %p115, %p116
    %p118 = scmp.ne.s32.totalorder %s109, %s110
    %p119 = scmp.eq.s32.totalorder %s15, 0
    %p120 = por %p118, %p119
    %p121 = scmp.ne.s32.totalorder %s109, %s110
    %p122 = scmp.eq.s32.totalorder %s16, 1
    %p123 = por %p121, %p122
    %p125 = scmp.ne.s32.totalorder %s110, %s124
    %p126 = scmp.eq.s32.totalorder %s16, 0
    %p127 = por %p125, %p126
    %s128 = ssub.s32 %s17, %s29
    %s129 = ssub.s32 %s18, %s25
    %s130 = sor.u32 %s128, %s129
    %p131 = scmp.eq.s32.totalorder %s130, 0
    %s133 = sadd.s32 %s132, 1
    %s134 = scalar_select %p131, %s132, %s133
    %p137 = pneg %p131
    %p138 = scmp.eq.s32.totalorder %s10, 1
    %p139 = por %p137, %p138
    %p140 = scmp.ne.s32.totalorder %s132, %s135
    %p141 = scmp.eq.s32.totalorder %s10, 0
    %p142 = por %p140, %p141
    %p143 = scmp.ne.s32.totalorder %s132, %s135
    %p144 = scmp.eq.s32.totalorder %s15, 1
    %p145 = por %p143, %p144
    %p146 = scmp.ne.s32.totalorder %s135, %s136
    %p147 = scmp.eq.s32.totalorder %s15, 0
    %p148 = por %p146, %p147
    %p149 = scmp.ne.s32.totalorder %s135, %s136
    %p150 = scmp.eq.s32.totalorder %s16, 1
    %p151 = por %p149, %p150
    %p153 = scmp.ne.s32.totalorder %s136, %s152
    %p154 = scmp.eq.s32.totalorder %s16, 0
    %p155 = por %p153, %p154
    %p156 = scmp.le.s32.totalorder 1, %s10
    %p157 = scmp.lt.s32.totalorder %s10, 3
    %p158 = pnand %p156, %p157
    %p159 = pneg %p158
    // Predicated region
    $region9: #{fno3d_binseg_forward.12} parent=5 // pred_check
      _
    $region10: #{fno3d_binseg_forward.12} parent=5 // pred_check_branch
      %161 = sbr.rel (%p158) target = $region12
    $region11: #{fno3d_binseg_forward.12} parent=5 // pred_region
      %s162 = ssub.s32 %s10, 1
      // Predicated region
      $region13: #{fno3d_binseg_forward.12} parent=11 // pred_check
        %p163 = pneg %p99
      $region14: #{fno3d_binseg_forward.12} parent=11 // pred_check_branch
        %165 = sbr.rel (%p163) target = $region16
      $region15: #{fno3d_binseg_forward.12} parent=11 // pred_region
        _
      $region16: #{fno3d_binseg_forward.12} parent=11 // pred_fallthru
        _
      // Predicated region
      $region17: #{fno3d_binseg_forward.12} parent=11 // pred_check
        %p166 = pneg %p120
      $region18: #{fno3d_binseg_forward.12} parent=11 // pred_check_branch
        %168 = sbr.rel (%p166) target = $region20
      $region19: #{fno3d_binseg_forward.12} parent=11 // pred_region
        _
      $region20: #{fno3d_binseg_forward.12} parent=11 // pred_fallthru
        _
    $region12: #{fno3d_binseg_forward.12} parent=5 // pred_fallthru
      _
    %p169 = scmp.lt.s32.totalorder %s10, 2
    // Predicated region
    $region21: #{fno3d_binseg_forward.12} parent=5 // pred_check
      %p170 = pneg %p169
    $region22: #{fno3d_binseg_forward.12} parent=5 // pred_check_branch
      %172 = sbr.rel (%p170) target = $region24
    $region23: #{fno3d_binseg_forward.12} parent=5 // pred_region
      // Predicated region
      $region25: #{fno3d_binseg_forward.12} parent=23 // pred_check
        %p173 = pneg %p44
      $region26: #{fno3d_binseg_forward.12} parent=23 // pred_check_branch
        %175 = sbr.rel (%p173) target = $region28
      $region27: #{fno3d_binseg_forward.12} parent=23 // pred_region
        %s176 = smul.u32 7, %s18
        %p177 = scmp.lt.s32.totalorder %s17, 1
        %s178 = scalar_select %p177, %s17, 1
        %p179 = scmp.lt.s32.totalorder %s176, 6
        %s180 = scalar_select %p179, %s176, 6
        %s181 = smul.addr %s178, 7
        %s182 = sadd.s32 %s180, %s181
        %s183 = smul.addr %s182, 8
        %s184 = scalar_lea.vmem %s0, %s183
        %s185 = smul.u32 7, %s18
      $region28: #{fno3d_binseg_forward.12} parent=23 // pred_fallthru
        _
      // Predicated region
      $region29: #{fno3d_binseg_forward.12} parent=23 // pred_check
        %p186 = pneg %p72
      $region30: #{fno3d_binseg_forward.12} parent=23 // pred_check_branch
        %188 = sbr.rel (%p186) target = $region32
      $region31: #{fno3d_binseg_forward.12} parent=23 // pred_region
        %s189 = smul.u32 7, %s18
        %p190 = scmp.lt.s32.totalorder %s17, 1
        %s191 = scalar_select %p190, %s17, 1
        %p192 = scmp.lt.s32.totalorder %s189, 6
        %s193 = scalar_select %p192, %s189, 6
        %s194 = smul.addr %s191, 7
        %s195 = sadd.s32 %s193, %s194
        %s196 = smul.addr %s195, 8
        %s197 = scalar_lea.vmem %s1, %s196
        %s198 = smul.u32 7, %s18
      $region32: #{fno3d_binseg_forward.12} parent=23 // pred_fallthru
        _
    $region24: #{fno3d_binseg_forward.12} parent=5 // pred_fallthru
      _
    %p199 = scmp.le.s32.totalorder 1, %s10
    %p200 = scmp.lt.s32.totalorder %s10, 3
    %p201 = pnand %p199, %p200
    %p202 = pneg %p201
    // Predicated region
    $region33: #{fno3d_binseg_forward.12} parent=5 // pred_check
      _
    $region34: #{fno3d_binseg_forward.12} parent=5 // pred_check_branch
      %204 = sbr.rel (%p201) target = $region36
    $region35: #{fno3d_binseg_forward.12} parent=5 // pred_region
      %s205 = ssub.s32 %s10, 1
      %s206 = smul.u32 7, %s20
      %p207 = scmp.lt.s32.totalorder %s19, 1
      %s208 = scalar_select %p207, %s19, 1
      %p209 = scmp.lt.s32.totalorder %s206, 6
      %s210 = scalar_select %p209, %s206, 6
      %s211 = smul.addr %s208, 7
      %s212 = sadd.s32 %s210, %s211
      %s213 = smul.addr %s212, 8
      %s214 = scalar_lea.vmem %s0, %s213
      %p215 = pneg %p50
      %p216 = pneg %p47
      %s217 = smul.u32 7, %s20
      %p218 = scmp.lt.s32.totalorder %s19, 1
      %s219 = scalar_select %p218, %s19, 1
      %p220 = scmp.lt.s32.totalorder %s217, 6
      %s221 = scalar_select %p220, %s217, 6
      %s222 = smul.addr %s219, 7
      %s223 = sadd.s32 %s221, %s222
      %s224 = smul.addr %s223, 8
      %s225 = scalar_lea.vmem %s1, %s224
      %p226 = pneg %p78
      %p227 = pneg %p75
      %p228 = pneg %p99
      %p229 = pneg %p96
      %p230 = pneg %p120
      %p231 = pneg %p117
      %p232 = pneg %p148
      %p233 = pneg %p145
      %s234 = smul.u32 7, %s20
      %p235 = scmp.lt.s32.totalorder %s19, 1
      %s236 = scalar_select %p235, %s19, 1
      %p237 = scmp.lt.s32.totalorder %s234, 6
      %s238 = scalar_select %p237, %s234, 6
      %s239 = smul.addr %s236, 7
      %s240 = sadd.s32 %s238, %s239
      %s241 = smul.addr %s240, 8
      %s242 = scalar_lea.vmem %s4, %s241
      %s243 = smul.u32 7, %s20
      %p244 = scmp.lt.s32.totalorder %s19, 1
      %s245 = scalar_select %p244, %s19, 1
      %p246 = scmp.lt.s32.totalorder %s243, 6
      %s247 = scalar_select %p246, %s243, 6
      %s248 = smul.addr %s245, 7
      %s249 = sadd.s32 %s247, %s248
      %s250 = smul.addr %s249, 8
      %s251 = scalar_lea.vmem %s0, %s250
      %s252 = smul.u32 7, %s20
      %s253 = smul.u32 7, %s20
      %p254 = scmp.lt.s32.totalorder %s19, 1
      %s255 = scalar_select %p254, %s19, 1
      %p256 = scmp.lt.s32.totalorder %s253, 6
      %s257 = scalar_select %p256, %s253, 6
      %s258 = smul.addr %s255, 7
      %s259 = sadd.s32 %s257, %s258
      %s260 = smul.addr %s259, 8
      %s261 = scalar_lea.vmem %s1, %s260
      %s262 = smul.u32 7, %s20
      %s263 = smul.u32 7, %s20
      %p264 = scmp.lt.s32.totalorder %s19, 1
      %s265 = scalar_select %p264, %s19, 1
      %p266 = scmp.lt.s32.totalorder %s263, 6
      %s267 = scalar_select %p266, %s263, 6
      %s268 = smul.addr %s265, 7
      %s269 = sadd.s32 %s267, %s268
      %s270 = smul.addr %s269, 8
      %s271 = scalar_lea.vmem %s4, %s270
      %s272 = smul.u32 7, %s20
      %v273 = vld [vmem:[%s2] sm:$0xff]
      %v274 = vld [vmem:[%s251] sm:$0xff]
      %v275 = vld [vmem:[%s251 + $0x8] sm:$0xff]
      %v276 = vld [vmem:[%s251 + $0x10] sm:$0xff]
      %v277 = vld [vmem:[%s251 + $0x18] sm:$0xff]
      %v278 = vld [vmem:[%s251 + $0x20] sm:$0xff]
      %v279 = vld [vmem:[%s251 + $0x28] sm:$0xff]
      %v280 = vld [vmem:[%s251 + $0x30] sm:$0xff]
      %v281 = vld [vmem:[%s3] sm:$0xff]
      %283 = vset.pattern.permute.xlu0 0
      %284 = vperm.xlu0 %283, %v281
      %v285 = vpop.permute.xlu0 %284
      %vm287 = vcmask 64512
      %v289 = vsel %vm287, %v273, 0
      %291 = vmatprep.subr.mxu0 %v275
      %292 = vmatpush1.msra.mxu0 %v274
      %293 = vmatprep.subr.mxu0 0.0
      %294 = vmatpush1.msra.mxu0 0.0
      %295 = vmatprep.subr.mxu0 0.0
      %296 = vmatpush1.msra.mxu0 0.0
      %297 = vmatprep.subr.mxu0 0.0
      %298 = vmatpush1.msra.mxu0 0.0
      %299 = vmatprep.subr.mxu0 0.0
      %300 = vmatpush1.msra.mxu0 0.0
      %301 = vmatprep.subr.mxu0 0.0
      %302 = vmatpush1.msra.mxu0 0.0
      %303 = vmatprep.subr.mxu0 0.0
      %304 = vmatpush1.msra.mxu0 0.0
      %305 = vmatprep.subr.mxu0 0.0
      %306 = vmatpush1.msra.mxu0 0.0
      %307 = vmatprep.subr.mxu0 0.0
      %308 = vmatpush1.msra.mxu0 0.0
      %309 = vmatprep.subr.mxu0 0.0
      %310 = vmatpush1.msra.mxu0 0.0
      %311 = vmatprep.subr.mxu0 0.0
      %312 = vmatpush1.msra.mxu0 0.0
      %313 = vmatprep.subr.mxu0 0.0
      %314 = vmatpush1.msra.mxu0 0.0
      %315 = vmatprep.subr.mxu0 0.0
      %316 = vmatpush1.msra.mxu0 0.0
      %317 = vmatprep.subr.mxu0 0.0
      %318 = vmatpush1.msra.mxu0 0.0
      %319 = vmatprep.subr.mxu0 0.0
      %320 = vmatpush1.msra.mxu0 0.0
      %321 = vmatprep.subr.mxu0 0.0
      %322 = vmatpush1.msra.mxu0 0.0
      %323 = vmatprep.subr.mxu0 0.0
      %324 = vmatpush1.msra.mxu0 0.0
      %325 = vmatprep.subr.mxu0 0.0
      %326 = vmatpush1.msra.mxu0 0.0
      %327 = vmatprep.subr.mxu0 0.0
      %328 = vmatpush1.msra.mxu0 0.0
      %329 = vmatprep.subr.mxu0 0.0
      %330 = vmatpush1.msra.mxu0 0.0
      %331 = vmatprep.subr.mxu0 0.0
      %332 = vmatpush1.msra.mxu0 0.0
      %333 = vmatprep.subr.mxu0 0.0
      %334 = vmatpush1.msra.mxu0 0.0
      %335 = vmatprep.subr.mxu0 0.0
      %336 = vmatpush1.msra.mxu0 0.0
      %337 = vmatprep.subr.mxu0 0.0
      %338 = vmatpush1.msra.mxu0 0.0
      %339 = vmatprep.subr.mxu0 0.0
      %340 = vmatpush1.msra.mxu0 0.0
      %341 = vmatprep.subr.mxu0 0.0
      %342 = vmatpush1.msra.mxu0 0.0
      %343 = vmatprep.subr.mxu0 0.0
      %344 = vmatpush1.msra.mxu0 0.0
      %345 = vmatprep.subr.mxu0 0.0
      %346 = vmatpush1.msra.mxu0 0.0
      %347 = vmatprep.subr.mxu0 0.0
      %348 = vmatpush1.msra.mxu0 0.0
      %349 = vmatprep.subr.mxu0 0.0
      %350 = vmatpush1.msra.mxu0 0.0
      %351 = vmatprep.subr.mxu0 0.0
      %352 = vmatpush1.msra.mxu0 0.0
      %353 = vmatprep.subr.mxu0 0.0
      %354 = vmatpush1.msra.mxu0 0.0
      %355 = vmatprep.mubr.f32.mxu0 0.0
      %356 = vmatmul.mubr.f32.gmra.mrb[0].mxu0 %v289
      %v357 = vpop.f32.mrb[0].mxu0
      %v358 = vadd.f32 %v285, %v357
      %v359 = vpop.f32.mrb[0].mxu0
      %v360 = vadd.f32 %v285, %v359
      %361 = vdwg.mxu0
      %362 = vmatprep.subr.mxu0 %v277
      %363 = vmatpush1.msra.mxu0 %v276
      %364 = vmatprep.subr.mxu0 0.0
      %365 = vmatpush1.msra.mxu0 0.0
      %366 = vmatprep.subr.mxu0 0.0
      %367 = vmatpush1.msra.mxu0 0.0
      %368 = vmatprep.subr.mxu0 0.0
      %369 = vmatpush1.msra.mxu0 0.0
      %370 = vmatprep.subr.mxu0 0.0
      %371 = vmatpush1.msra.mxu0 0.0
      %372 = vmatprep.subr.mxu0 0.0
      %373 = vmatpush1.msra.mxu0 0.0
      %374 = vmatprep.subr.mxu0 0.0
      %375 = vmatpush1.msra.mxu0 0.0
      %376 = vmatprep.subr.mxu0 0.0
      %377 = vmatpush1.msra.mxu0 0.0
      %378 = vmatprep.subr.mxu0 0.0
      %379 = vmatpush1.msra.mxu0 0.0
      %380 = vmatprep.subr.mxu0 0.0
      %381 = vmatpush1.msra.mxu0 0.0
      %382 = vmatprep.subr.mxu0 0.0
      %383 = vmatpush1.msra.mxu0 0.0
      %384 = vmatprep.subr.mxu0 0.0
      %385 = vmatpush1.msra.mxu0 0.0
      %386 = vmatprep.subr.mxu0 0.0
      %387 = vmatpush1.msra.mxu0 0.0
      %388 = vmatprep.subr.mxu0 0.0
      %389 = vmatpush1.msra.mxu0 0.0
      %390 = vmatprep.subr.mxu0 0.0
      %391 = vmatpush1.msra.mxu0 0.0
      %392 = vmatprep.subr.mxu0 0.0
      %393 = vmatpush1.msra.mxu0 0.0
      %394 = vmatprep.subr.mxu0 0.0
      %395 = vmatpush1.msra.mxu0 0.0
      %396 = vmatprep.subr.mxu0 0.0
      %397 = vmatpush1.msra.mxu0 0.0
      %398 = vmatprep.subr.mxu0 0.0
      %399 = vmatpush1.msra.mxu0 0.0
      %400 = vmatprep.subr.mxu0 0.0
      %401 = vmatpush1.msra.mxu0 0.0
      %402 = vmatprep.subr.mxu0 0.0
      %403 = vmatpush1.msra.mxu0 0.0
      %404 = vmatprep.subr.mxu0 0.0
      %405 = vmatpush1.msra.mxu0 0.0
      %406 = vmatprep.subr.mxu0 0.0
      %407 = vmatpush1.msra.mxu0 0.0
      %408 = vmatprep.subr.mxu0 0.0
      %409 = vmatpush1.msra.mxu0 0.0
      %410 = vmatprep.subr.mxu0 0.0
      %411 = vmatpush1.msra.mxu0 0.0
      %412 = vmatprep.subr.mxu0 0.0
      %413 = vmatpush1.msra.mxu0 0.0
      %414 = vmatprep.subr.mxu0 0.0
      %415 = vmatpush1.msra.mxu0 0.0
      %416 = vmatprep.subr.mxu0 0.0
      %417 = vmatpush1.msra.mxu0 0.0
      %418 = vmatprep.subr.mxu0 0.0
      %419 = vmatpush1.msra.mxu0 0.0
      %420 = vmatprep.subr.mxu0 0.0
      %421 = vmatpush1.msra.mxu0 0.0
      %422 = vmatprep.subr.mxu0 0.0
      %423 = vmatpush1.msra.mxu0 0.0
      %424 = vmatprep.subr.mxu0 0.0
      %425 = vmatpush1.msra.mxu0 0.0
      %426 = vmatprep.mubr.f32.mxu0 0.0
      %427 = vmatmul.mubr.f32.gmra.mrb[0].mxu0 %v289
      %v428 = vpop.f32.mrb[0].mxu0
      %v429 = vadd.f32 %v285, %v428
      %v430 = vpop.f32.mrb[0].mxu0
      %v431 = vadd.f32 %v285, %v430
      %432 = vdwg.mxu0
      %433 = vmatprep.subr.mxu0 %v279
      %434 = vmatpush1.msra.mxu0 %v278
      %435 = vmatprep.subr.mxu0 0.0
      %436 = vmatpush1.msra.mxu0 0.0
      %437 = vmatprep.subr.mxu0 0.0
      %438 = vmatpush1.msra.mxu0 0.0
      %439 = vmatprep.subr.mxu0 0.0
      %440 = vmatpush1.msra.mxu0 0.0
      %441 = vmatprep.subr.mxu0 0.0
      %442 = vmatpush1.msra.mxu0 0.0
      %443 = vmatprep.subr.mxu0 0.0
      %444 = vmatpush1.msra.mxu0 0.0
      %445 = vmatprep.subr.mxu0 0.0
      %446 = vmatpush1.msra.mxu0 0.0
      %447 = vmatprep.subr.mxu0 0.0
      %448 = vmatpush1.msra.mxu0 0.0
      %449 = vmatprep.subr.mxu0 0.0
      %450 = vmatpush1.msra.mxu0 0.0
      %451 = vmatprep.subr.mxu0 0.0
      %452 = vmatpush1.msra.mxu0 0.0
      %453 = vmatprep.subr.mxu0 0.0
      %454 = vmatpush1.msra.mxu0 0.0
      %455 = vmatprep.subr.mxu0 0.0
      %456 = vmatpush1.msra.mxu0 0.0
      %457 = vmatprep.subr.mxu0 0.0
      %458 = vmatpush1.msra.mxu0 0.0
      %459 = vmatprep.subr.mxu0 0.0
      %460 = vmatpush1.msra.mxu0 0.0
      %461 = vmatprep.subr.mxu0 0.0
      %462 = vmatpush1.msra.mxu0 0.0
      %463 = vmatprep.subr.mxu0 0.0
      %464 = vmatpush1.msra.mxu0 0.0
      %465 = vmatprep.subr.mxu0 0.0
      %466 = vmatpush1.msra.mxu0 0.0
      %467 = vmatprep.subr.mxu0 0.0
      %468 = vmatpush1.msra.mxu0 0.0
      %469 = vmatprep.subr.mxu0 0.0
      %470 = vmatpush1.msra.mxu0 0.0
      %471 = vmatprep.subr.mxu0 0.0
      %472 = vmatpush1.msra.mxu0 0.0
      %473 = vmatprep.subr.mxu0 0.0
      %474 = vmatpush1.msra.mxu0 0.0
      %475 = vmatprep.subr.mxu0 0.0
      %476 = vmatpush1.msra.mxu0 0.0
      %477 = vmatprep.subr.mxu0 0.0
      %478 = vmatpush1.msra.mxu0 0.0
      %479 = vmatprep.subr.mxu0 0.0
      %480 = vmatpush1.msra.mxu0 0.0
      %481 = vmatprep.subr.mxu0 0.0
      %482 = vmatpush1.msra.mxu0 0.0
      %483 = vmatprep.subr.mxu0 0.0
      %484 = vmatpush1.msra.mxu0 0.0
      %485 = vmatprep.subr.mxu0 0.0
      %486 = vmatpush1.msra.mxu0 0.0
      %487 = vmatprep.subr.mxu0 0.0
      %488 = vmatpush1.msra.mxu0 0.0
      %489 = vmatprep.subr.mxu0 0.0
      %490 = vmatpush1.msra.mxu0 0.0
      %491 = vmatprep.subr.mxu0 0.0
      %492 = vmatpush1.msra.mxu0 0.0
      %493 = vmatprep.subr.mxu0 0.0
      %494 = vmatpush1.msra.mxu0 0.0
      %495 = vmatprep.subr.mxu0 0.0
      %496 = vmatpush1.msra.mxu0 0.0
      %497 = vmatprep.mubr.f32.mxu0 0.0
      %498 = vmatmul.mubr.f32.gmra.mrb[0].mxu0 %v289
      %v499 = vpop.f32.mrb[0].mxu0
      %v500 = vadd.f32 %v285, %v499
      %v501 = vpop.f32.mrb[0].mxu0
      %v502 = vadd.f32 %v285, %v501
      %503 = vdwg.mxu0
      %504 = vmatprep.subr.mxu0 0.0
      %505 = vmatpush1.msra.mxu0 %v280
      %506 = vmatprep.subr.mxu0 0.0
      %507 = vmatpush1.msra.mxu0 0.0
      %508 = vmatprep.subr.mxu0 0.0
      %509 = vmatpush1.msra.mxu0 0.0
      %510 = vmatprep.subr.mxu0 0.0
      %511 = vmatpush1.msra.mxu0 0.0
      %512 = vmatprep.subr.mxu0 0.0
      %513 = vmatpush1.msra.mxu0 0.0
      %514 = vmatprep.subr.mxu0 0.0
      %515 = vmatpush1.msra.mxu0 0.0
      %516 = vmatprep.subr.mxu0 0.0
      %517 = vmatpush1.msra.mxu0 0.0
      %518 = vmatprep.subr.mxu0 0.0
      %519 = vmatpush1.msra.mxu0 0.0
      %520 = vmatprep.subr.mxu0 0.0
      %521 = vmatpush1.msra.mxu0 0.0
      %522 = vmatprep.subr.mxu0 0.0
      %523 = vmatpush1.msra.mxu0 0.0
      %524 = vmatprep.subr.mxu0 0.0
      %525 = vmatpush1.msra.mxu0 0.0
      %526 = vmatprep.subr.mxu0 0.0
      %527 = vmatpush1.msra.mxu0 0.0
      %528 = vmatprep.subr.mxu0 0.0
      %529 = vmatpush1.msra.mxu0 0.0
      %530 = vmatprep.subr.mxu0 0.0
      %531 = vmatpush1.msra.mxu0 0.0
      %532 = vmatprep.subr.mxu0 0.0
      %533 = vmatpush1.msra.mxu0 0.0
      %534 = vmatprep.subr.mxu0 0.0
      %535 = vmatpush1.msra.mxu0 0.0
      %536 = vmatprep.subr.mxu0 0.0
      %537 = vmatpush1.msra.mxu0 0.0
      %538 = vmatprep.subr.mxu0 0.0
      %539 = vmatpush1.msra.mxu0 0.0
      %540 = vmatprep.subr.mxu0 0.0
      %541 = vmatpush1.msra.mxu0 0.0
      %542 = vmatprep.subr.mxu0 0.0
      %543 = vmatpush1.msra.mxu0 0.0
      %544 = vmatprep.subr.mxu0 0.0
      %545 = vmatpush1.msra.mxu0 0.0
      %546 = vmatprep.subr.mxu0 0.0
      %547 = vmatpush1.msra.mxu0 0.0
      %548 = vmatprep.subr.mxu0 0.0
      %549 = vmatpush1.msra.mxu0 0.0
      %550 = vmatprep.subr.mxu0 0.0
      %551 = vmatpush1.msra.mxu0 0.0
      %552 = vmatprep.subr.mxu0 0.0
      %553 = vmatpush1.msra.mxu0 0.0
      %554 = vmatprep.subr.mxu0 0.0
      %555 = vmatpush1.msra.mxu0 0.0
      %556 = vmatprep.subr.mxu0 0.0
      %557 = vmatpush1.msra.mxu0 0.0
      %558 = vmatprep.subr.mxu0 0.0
      %559 = vmatpush1.msra.mxu0 0.0
      %560 = vmatprep.subr.mxu0 0.0
      %561 = vmatpush1.msra.mxu0 0.0
      %562 = vmatprep.subr.mxu0 0.0
      %563 = vmatpush1.msra.mxu0 0.0
      %564 = vmatprep.subr.mxu0 0.0
      %565 = vmatpush1.msra.mxu0 0.0
      %566 = vmatprep.subr.mxu0 0.0
      %567 = vmatpush1.msra.mxu0 0.0
      %568 = vmatprep.mubr.f32.mxu0 0.0
      %569 = vmatmul.mubr.f32.gmra.mrb[0].mxu0 %v289
      %v570 = vpop.f32.mrb[0].mxu0
      %v571 = vadd.f32 %v285, %v570
      %v572 = vpop.f32.mrb[0].mxu0
      %573 = vdwg.mxu0
      %v574 = vld [vmem:[%s261] sm:$0xff]
      %v575 = vld [vmem:[%s261 + $0x8] sm:$0xff]
      %v576 = vld [vmem:[%s261 + $0x10] sm:$0xff]
      %v577 = vld [vmem:[%s261 + $0x18] sm:$0xff]
      %v578 = vld [vmem:[%s261 + $0x20] sm:$0xff]
      %v579 = vld [vmem:[%s261 + $0x28] sm:$0xff]
      %v580 = vld [vmem:[%s261 + $0x30] sm:$0xff]
      %v581 = vadd.f32 %v358, %v574
      %v582 = vadd.f32 %v360, %v575
      %v583 = vadd.f32 %v429, %v576
      %v584 = vadd.f32 %v431, %v577
      %v585 = vadd.f32 %v500, %v578
      %v586 = vadd.f32 %v502, %v579
      %v587 = vadd.f32 %v571, %v580
      %v588 = vmul.f32 %v581, 0.70710677
      %v589 = vmul.f32 %v582, 0.70710677
      %v590 = vmul.f32 %v583, 0.70710677
      %v591 = vmul.f32 %v584, 0.70710677
      %v592 = vmul.f32 %v585, 0.70710677
      %v593 = vmul.f32 %v586, 0.70710677
      %v594 = vmul.f32 %v587, 0.70710677
      %v595 = vand.u32 2147483647, %v588
      %v596 = vand.u32 2147483647, %v589
      %v597 = vand.u32 2147483647, %v590
      %v598 = vand.u32 2147483647, %v591
      %v599 = vand.u32 2147483647, %v592
      %v600 = vand.u32 2147483647, %v593
      %v601 = vand.u32 2147483647, %v594
      %v602 = vmul.f32 %v595, 0.3275911
      %v603 = vmul.f32 %v596, 0.3275911
      %v604 = vmul.f32 %v597, 0.3275911
      %v605 = vmul.f32 %v598, 0.3275911
      %v606 = vmul.f32 %v599, 0.3275911
      %v607 = vmul.f32 %v600, 0.3275911
      %v608 = vmul.f32 %v601, 0.3275911
      %v609 = vadd.f32 %v602, 1.0
      %v610 = vadd.f32 %v603, 1.0
      %v611 = vadd.f32 %v604, 1.0
      %v612 = vadd.f32 %v605, 1.0
      %v613 = vadd.f32 %v606, 1.0
      %v614 = vadd.f32 %v607, 1.0
      %v615 = vadd.f32 %v608, 1.0
      %v616 = vrcp.pop %v609
      %v617 = vrcp.pop %v610
      %v618 = vrcp.pop %v611
      %v619 = vrcp.pop %v612
      %v620 = vrcp.pop %v613
      %v621 = vrcp.pop %v614
      %v622 = vrcp.pop %v615
      %v623 = vmul.f32 %v609, %v616
      %v624 = vmul.f32 %v610, %v617
      %v625 = vmul.f32 %v611, %v618
      %v626 = vmul.f32 %v612, %v619
      %v627 = vmul.f32 %v613, %v620
      %v628 = vmul.f32 %v614, %v621
      %v629 = vmul.f32 %v615, %v622
      %v630 = vsub.f32 2.0, %v623
      %v631 = vsub.f32 2.0, %v624
      %v632 = vsub.f32 2.0, %v625
      %v633 = vsub.f32 2.0, %v626
      %v634 = vsub.f32 2.0, %v627
      %v635 = vsub.f32 2.0, %v628
      %v636 = vsub.f32 2.0, %v629
      %v637 = vmul.f32 %v616, %v630
      %v638 = vmul.f32 %v617, %v631
      %v639 = vmul.f32 %v618, %v632
      %v640 = vmul.f32 %v619, %v633
      %v641 = vmul.f32 %v620, %v634
      %v642 = vmul.f32 %v621, %v635
      %v643 = vmul.f32 %v622, %v636
      %v644 = vmul.f32 %v637, 1.0614054
      %v645 = vmul.f32 %v638, 1.0614054
      %v646 = vmul.f32 %v639, 1.0614054
      %v647 = vmul.f32 %v640, 1.0614054
      %v648 = vmul.f32 %v641, 1.0614054
      %v649 = vmul.f32 %v642, 1.0614054
      %v650 = vmul.f32 %v643, 1.0614054
      %v651 = vsub.f32 %v644, 1.4531521
      %v652 = vsub.f32 %v645, 1.4531521
      %v653 = vsub.f32 %v646, 1.4531521
      %v654 = vsub.f32 %v647, 1.4531521
      %v655 = vsub.f32 %v648, 1.4531521
      %v656 = vsub.f32 %v649, 1.4531521
      %v657 = vsub.f32 %v650, 1.4531521
      %v658 = vmul.f32 %v651, %v637
      %v659 = vmul.f32 %v652, %v638
      %v660 = vmul.f32 %v653, %v639
      %v661 = vmul.f32 %v654, %v640
      %v662 = vmul.f32 %v655, %v641
      %v663 = vmul.f32 %v656, %v642
      %v664 = vmul.f32 %v657, %v643
      %v665 = vadd.f32 %v658, 1.4214138
      %v666 = vadd.f32 %v659, 1.4214138
      %v667 = vadd.f32 %v660, 1.4214138
      %v668 = vadd.f32 %v661, 1.4214138
      %v669 = vadd.f32 %v662, 1.4214138
      %v670 = vadd.f32 %v663, 1.4214138
      %v671 = vadd.f32 %v664, 1.4214138
      %v672 = vmul.f32 %v665, %v637
      %v673 = vmul.f32 %v666, %v638
      %v674 = vmul.f32 %v667, %v639
      %v675 = vmul.f32 %v668, %v640
      %v676 = vmul.f32 %v669, %v641
      %v677 = vmul.f32 %v670, %v642
      %v678 = vmul.f32 %v671, %v643
      %v679 = vsub.f32 %v672, 0.28449672
      %v680 = vsub.f32 %v673, 0.28449672
      %v681 = vsub.f32 %v674, 0.28449672
      %v682 = vsub.f32 %v675, 0.28449672
      %v683 = vsub.f32 %v676, 0.28449672
      %v684 = vsub.f32 %v677, 0.28449672
      %v685 = vsub.f32 %v678, 0.28449672
      %v686 = vmul.f32 %v679, %v637
      %v687 = vmul.f32 %v680, %v638
      %v688 = vmul.f32 %v681, %v639
      %v689 = vmul.f32 %v682, %v640
      %v690 = vmul.f32 %v683, %v641
      %v691 = vmul.f32 %v684, %v642
      %v692 = vmul.f32 %v685, %v643
      %v693 = vadd.f32 %v686, 0.2548296
      %v694 = vadd.f32 %v687, 0.2548296
      %v695 = vadd.f32 %v688, 0.2548296
      %v696 = vadd.f32 %v689, 0.2548296
      %v697 = vadd.f32 %v690, 0.2548296
      %v698 = vadd.f32 %v691, 0.2548296
      %v699 = vadd.f32 %v692, 0.2548296
      %v700 = vmul.f32 %v693, %v637
      %v701 = vmul.f32 %v694, %v638
      %v702 = vmul.f32 %v695, %v639
      %v703 = vmul.f32 %v696, %v640
      %v704 = vmul.f32 %v697, %v641
      %v705 = vmul.f32 %v698, %v642
      %v706 = vmul.f32 %v699, %v643
      %v707 = vsub.f32 0.0, %v595
      %v708 = vsub.f32 0.0, %v596
      %v709 = vsub.f32 0.0, %v597
      %v710 = vsub.f32 0.0, %v598
      %v711 = vsub.f32 0.0, %v599
      %v712 = vsub.f32 0.0, %v600
      %v713 = vsub.f32 0.0, %v601
      %v714 = vmul.f32 %v707, %v595
      %v715 = vmul.f32 %v708, %v596
      %v716 = vmul.f32 %v709, %v597
      %v717 = vmul.f32 %v710, %v598
      %v718 = vmul.f32 %v711, %v599
      %v719 = vmul.f32 %v712, %v600
      %v720 = vmul.f32 %v713, %v601
      %v721 = vmul.f32 %v714, 1.442695
      %v722 = vpow.pop %v721
      %v723 = vmul.f32 %v715, 1.442695
      %v724 = vpow.pop %v723
      %v725 = vmul.f32 %v716, 1.442695
      %v726 = vpow.pop %v725
      %v727 = vmul.f32 %v717, 1.442695
      %v728 = vpow.pop %v727
      %v729 = vmul.f32 %v718, 1.442695
      %v730 = vpow.pop %v729
      %v731 = vmul.f32 %v719, 1.442695
      %v732 = vpow.pop %v731
      %v733 = vmul.f32 %v720, 1.442695
      %v734 = vpow.pop %v733
      %v735 = vmul.f32 %v700, %v722
      %v736 = vmul.f32 %v701, %v724
      %v737 = vmul.f32 %v702, %v726
      %v738 = vmul.f32 %v703, %v728
      %v739 = vmul.f32 %v704, %v730
      %v740 = vmul.f32 %v705, %v732
      %v741 = vmul.f32 %v706, %v734
      %v742 = vsub.f32 1.0, %v735
      %v743 = vsub.f32 1.0, %v736
      %v744 = vsub.f32 1.0, %v737
      %v745 = vsub.f32 1.0, %v738
      %v746 = vsub.f32 1.0, %v739
      %v747 = vsub.f32 1.0, %v740
      %v748 = vsub.f32 1.0, %v741
      %vm749 = vcmp.ge.f32.partialorder %v588, 0.0
      %vm750 = vcmp.ge.f32.partialorder %v589, 0.0
      %vm751 = vcmp.ge.f32.partialorder %v590, 0.0
      %vm752 = vcmp.ge.f32.partialorder %v591, 0.0
      %vm753 = vcmp.ge.f32.partialorder %v592, 0.0
      %vm754 = vcmp.ge.f32.partialorder %v593, 0.0
      %vm755 = vcmp.ge.f32.partialorder %v594, 0.0
      %v756 = vsub.f32 0.0, %v742
      %v757 = vsub.f32 0.0, %v743
      %v758 = vsub.f32 0.0, %v744
      %v759 = vsub.f32 0.0, %v745
      %v760 = vsub.f32 0.0, %v746
      %v761 = vsub.f32 0.0, %v747
      %v762 = vsub.f32 0.0, %v748
      %v763 = vsel %vm749, %v742, %v756
      %v764 = vsel %vm750, %v743, %v757
      %v765 = vsel %vm751, %v744, %v758
      %v766 = vsel %vm752, %v745, %v759
      %v767 = vsel %vm753, %v746, %v760
      %v768 = vsel %vm754, %v747, %v761
      %v769 = vsel %vm755, %v748, %v762
      %v770 = vmul.f32 %v581, 0.5
      %v771 = vmul.f32 %v582, 0.5
      %v772 = vmul.f32 %v583, 0.5
      %v773 = vmul.f32 %v584, 0.5
      %v774 = vmul.f32 %v585, 0.5
      %v775 = vmul.f32 %v586, 0.5
      %v776 = vmul.f32 %v587, 0.5
      %v777 = vadd.f32 %v763, 1.0
      %v778 = vadd.f32 %v764, 1.0
      %v779 = vadd.f32 %v765, 1.0
      %v780 = vadd.f32 %v766, 1.0
      %v781 = vadd.f32 %v767, 1.0
      %v782 = vadd.f32 %v768, 1.0
      %v783 = vadd.f32 %v769, 1.0
      %v784 = vmul.f32 %v770, %v777
      %v785 = vmul.f32 %v771, %v778
      %v786 = vmul.f32 %v772, %v779
      %v787 = vmul.f32 %v773, %v780
      %v788 = vmul.f32 %v774, %v781
      %v789 = vmul.f32 %v775, %v782
      %v790 = vmul.f32 %v776, %v783
      %791 = vst [vmem:[%s271] sm:$0xff] %v784
      %792 = vst [vmem:[%s271 + $0x8] sm:$0xff] %v785
      %793 = vst [vmem:[%s271 + $0x10] sm:$0xff] %v786
      %794 = vst [vmem:[%s271 + $0x18] sm:$0xff] %v787
      %795 = vst [vmem:[%s271 + $0x20] sm:$0xff] %v788
      %796 = vst [vmem:[%s271 + $0x28] sm:$0xff] %v789
      %797 = vst [vmem:[%s271 + $0x30] sm:$0xff] %v790
      %s798 = smul.u32 7, %s20
      %p799 = scmp.lt.s32.totalorder %s19, 1
      %s800 = scalar_select %p799, %s19, 1
      %p801 = scmp.lt.s32.totalorder %s798, 6
      %s802 = scalar_select %p801, %s798, 6
      %s803 = smul.addr %s800, 7
      %s804 = sadd.s32 %s802, %s803
      %s805 = smul.addr %s804, 8
      %s806 = scalar_lea.vmem %s4, %s805
      // Predicated region
      $region37: #{fno3d_binseg_forward.12} parent=35 // pred_check
        %p807 = pneg %p145
      $region38: #{fno3d_binseg_forward.12} parent=35 // pred_check_branch
        %809 = sbr.rel (%p807) target = $region40
      $region39: #{fno3d_binseg_forward.12} parent=35 // pred_region
        %s810 = smul.u32 7, %s20
      $region40: #{fno3d_binseg_forward.12} parent=35 // pred_fallthru
        _
    $region36: #{fno3d_binseg_forward.12} parent=5 // pred_fallthru
      _
    %p811 = scmp.le.s32.totalorder 2, %s10
    // Predicated region
    $region41: #{fno3d_binseg_forward.12} parent=5 // pred_check
      %p812 = pneg %p811
    $region42: #{fno3d_binseg_forward.12} parent=5 // pred_check_branch
      %814 = sbr.rel (%p812) target = $region44
    $region43: #{fno3d_binseg_forward.12} parent=5 // pred_region
      %s815 = ssub.s32 %s10, 2
      // Predicated region
      $region45: #{fno3d_binseg_forward.12} parent=43 // pred_check
        %p816 = pneg %p151
      $region46: #{fno3d_binseg_forward.12} parent=43 // pred_check_branch
        %818 = sbr.rel (%p816) target = $region48
      $region47: #{fno3d_binseg_forward.12} parent=43 // pred_region
        %s819 = smul.u32 7, %s22
        %p820 = scmp.lt.s32.totalorder %s21, 1
        %s821 = scalar_select %p820, %s21, 1
        %p822 = scmp.lt.s32.totalorder %s819, 6
        %s823 = scalar_select %p822, %s819, 6
        %s824 = smul.addr %s821, 7
        %s825 = sadd.s32 %s823, %s824
        %s826 = smul.addr %s825, 8
        %s827 = scalar_lea.vmem %s4, %s826
      $region48: #{fno3d_binseg_forward.12} parent=43 // pred_fallthru
        _
    $region44: #{fno3d_binseg_forward.12} parent=5 // pred_fallthru
      _
  $region6: #{fno3d_binseg_forward.12} parent=0 // loop_footer
    %s14 = sadd.s32 1, %s10
  $region7: #{fno3d_binseg_forward.12} parent=0 // loop_footer_branch
    %9 = sbr.rel target = $region3
  $region8: #{fno3d_binseg_forward.12} parent=0 // loop_exit
    _

// kernel: fno3d_binseg_forward.18
$region0: #{fno3d_binseg_forward.18}
  #allocation0 [shape = 'u32[]', space=smem, size = 0x4, offset = 0x4, fixed_abs, tag = 'smem constant byte address 0x4 - core index']
  #allocation1 [shape = 'u32[144,128]{1,0:T(1,128)}', space=vmem, size = 0x12000, scoped, tag = 'internal scratch']
  %s0 = inlined_call_operand.vmem [shape: f32[2,8,896], index: 0, kind: input, shape index: {}]
  %s1 = inlined_call_operand.vmem [shape: f32[2,8,896], index: 1, kind: input, shape index: {}]
  %s2 = inlined_call_operand.vmem [shape: f32[8,8], index: 2, kind: input, shape index: {}]
  %s3 = inlined_call_operand.vmem [shape: f32[8,1], index: 3, kind: input, shape index: {}]
  %s4 = inlined_call_operand.vmem [shape: f32[2,8,896], index: 4, kind: output, shape index: {}]
  %s5 = sld [smem:[#allocation0]]
  $region49: #{fno3d_binseg_forward.18} parent=0
    _
  %s7 = ssub.s32 1, %s5
  %s8 = scalar_select 0, %s7, %s5
  loop: start=0, step=1, limit=4
  $region2: #{fno3d_binseg_forward.18} parent=0 // loop_pre_header
    _
  $region3: #{fno3d_binseg_forward.18} parent=0 // loop_header
    %s10 = sphi 0, %s14
    %p11 = scmp.ge.s32.totalorder %s10, 4
    %s17 = sphi 0, %s29
    %s18 = sphi 0, %s25
    %s19 = sphi 0, %s17
    %s20 = sphi 0, %s18
    %s21 = sphi 0, %s19
    %s22 = sphi 0, %s20
    %s34 = sphi 0, %s36
    %s37 = sphi 0, %s34
    %s38 = sphi 0, %s37
    %s54 = sphi 0, %s38
    %s62 = sphi 0, %s64
    %s65 = sphi 0, %s62
    %s66 = sphi 0, %s65
    %s82 = sphi 0, %s66
    %s86 = sphi 0, %s86
    %s88 = sphi 0, %s86
    %s89 = sphi 0, %s88
    %s103 = sphi 0, %s89
    %s107 = sphi 0, %s107
    %s109 = sphi 0, %s107
    %s110 = sphi 0, %s109
    %s124 = sphi 0, %s110
    %s132 = sphi 0, %s134
    %s135 = sphi 0, %s132
    %s136 = sphi 0, %s135
    %s152 = sphi 0, %s136
  $region4: #{fno3d_binseg_forward.18} parent=0 // loop_header_branch
    %13 = sbr.rel (%p11) target = $region8
  $region5: #{fno3d_binseg_forward.18} parent=0 // loop_body
    %s15 = ssub.s32 %s10, 1
    %s16 = ssub.s32 %s10, 2
    %s23 = sadd.s32 1, %s18
    %p24 = scmp.ge.s32.totalorder %s23, 1
    %s25 = scalar_select %p24, 0, %s23
    %s26 = sadd.s32 1, %s17
    %s27 = scalar_select %p24, %s26, %s17
    %p28 = scmp.ge.s32.totalorder %s27, 2
    %s29 = scalar_select %p28, 0, %s27
    %s30 = ssub.s32 %s17, %s29
    %s31 = ssub.s32 %s18, %s25
    %s32 = sor.u32 %s30, %s31
    %p33 = scmp.eq.s32.totalorder %s32, 0
    %s35 = sadd.s32 %s34, 1
    %s36 = scalar_select %p33, %s34, %s35
    %p39 = pneg %p33
    %p40 = scmp.eq.s32.totalorder %s10, 1
    %p41 = por %p39, %p40
    %p42 = scmp.ne.s32.totalorder %s34, %s37
    %p43 = scmp.eq.s32.totalorder %s10, 0
    %p44 = por %p42, %p43
    %p45 = scmp.ne.s32.totalorder %s34, %s37
    %p46 = scmp.eq.s32.totalorder %s15, 1
    %p47 = por %p45, %p46
    %p48 = scmp.ne.s32.totalorder %s37, %s38
    %p49 = scmp.eq.s32.totalorder %s15, 0
    %p50 = por %p48, %p49
    %p51 = scmp.ne.s32.totalorder %s37, %s38
    %p52 = scmp.eq.s32.totalorder %s16, 1
    %p53 = por %p51, %p52
    %p55 = scmp.ne.s32.totalorder %s38, %s54
    %p56 = scmp.eq.s32.totalorder %s16, 0
    %p57 = por %p55, %p56
    %s58 = ssub.s32 %s17, %s29
    %s59 = ssub.s32 %s18, %s25
    %s60 = sor.u32 %s58, %s59
    %p61 = scmp.eq.s32.totalorder %s60, 0
    %s63 = sadd.s32 %s62, 1
    %s64 = scalar_select %p61, %s62, %s63
    %p67 = pneg %p61
    %p68 = scmp.eq.s32.totalorder %s10, 1
    %p69 = por %p67, %p68
    %p70 = scmp.ne.s32.totalorder %s62, %s65
    %p71 = scmp.eq.s32.totalorder %s10, 0
    %p72 = por %p70, %p71
    %p73 = scmp.ne.s32.totalorder %s62, %s65
    %p74 = scmp.eq.s32.totalorder %s15, 1
    %p75 = por %p73, %p74
    %p76 = scmp.ne.s32.totalorder %s65, %s66
    %p77 = scmp.eq.s32.totalorder %s15, 0
    %p78 = por %p76, %p77
    %p79 = scmp.ne.s32.totalorder %s65, %s66
    %p80 = scmp.eq.s32.totalorder %s16, 1
    %p81 = por %p79, %p80
    %p83 = scmp.ne.s32.totalorder %s66, %s82
    %p84 = scmp.eq.s32.totalorder %s16, 0
    %p85 = por %p83, %p84
    %s87 = sadd.s32 %s86, 1
    %p90 = scmp.eq.s32.totalorder %s10, 1
    %p91 = scmp.ne.s32.totalorder %s86, %s88
    %p92 = scmp.eq.s32.totalorder %s10, 0
    %p93 = por %p91, %p92
    %p94 = scmp.ne.s32.totalorder %s86, %s88
    %p95 = scmp.eq.s32.totalorder %s15, 1
    %p96 = por %p94, %p95
    %p97 = scmp.ne.s32.totalorder %s88, %s89
    %p98 = scmp.eq.s32.totalorder %s15, 0
    %p99 = por %p97, %p98
    %p100 = scmp.ne.s32.totalorder %s88, %s89
    %p101 = scmp.eq.s32.totalorder %s16, 1
    %p102 = por %p100, %p101
    %p104 = scmp.ne.s32.totalorder %s89, %s103
    %p105 = scmp.eq.s32.totalorder %s16, 0
    %p106 = por %p104, %p105
    %s108 = sadd.s32 %s107, 1
    %p111 = scmp.eq.s32.totalorder %s10, 1
    %p112 = scmp.ne.s32.totalorder %s107, %s109
    %p113 = scmp.eq.s32.totalorder %s10, 0
    %p114 = por %p112, %p113
    %p115 = scmp.ne.s32.totalorder %s107, %s109
    %p116 = scmp.eq.s32.totalorder %s15, 1
    %p117 = por %p115, %p116
    %p118 = scmp.ne.s32.totalorder %s109, %s110
    %p119 = scmp.eq.s32.totalorder %s15, 0
    %p120 = por %p118, %p119
    %p121 = scmp.ne.s32.totalorder %s109, %s110
    %p122 = scmp.eq.s32.totalorder %s16, 1
    %p123 = por %p121, %p122
    %p125 = scmp.ne.s32.totalorder %s110, %s124
    %p126 = scmp.eq.s32.totalorder %s16, 0
    %p127 = por %p125, %p126
    %s128 = ssub.s32 %s17, %s29
    %s129 = ssub.s32 %s18, %s25
    %s130 = sor.u32 %s128, %s129
    %p131 = scmp.eq.s32.totalorder %s130, 0
    %s133 = sadd.s32 %s132, 1
    %s134 = scalar_select %p131, %s132, %s133
    %p137 = pneg %p131
    %p138 = scmp.eq.s32.totalorder %s10, 1
    %p139 = por %p137, %p138
    %p140 = scmp.ne.s32.totalorder %s132, %s135
    %p141 = scmp.eq.s32.totalorder %s10, 0
    %p142 = por %p140, %p141
    %p143 = scmp.ne.s32.totalorder %s132, %s135
    %p144 = scmp.eq.s32.totalorder %s15, 1
    %p145 = por %p143, %p144
    %p146 = scmp.ne.s32.totalorder %s135, %s136
    %p147 = scmp.eq.s32.totalorder %s15, 0
    %p148 = por %p146, %p147
    %p149 = scmp.ne.s32.totalorder %s135, %s136
    %p150 = scmp.eq.s32.totalorder %s16, 1
    %p151 = por %p149, %p150
    %p153 = scmp.ne.s32.totalorder %s136, %s152
    %p154 = scmp.eq.s32.totalorder %s16, 0
    %p155 = por %p153, %p154
    %p156 = scmp.le.s32.totalorder 1, %s10
    %p157 = scmp.lt.s32.totalorder %s10, 3
    %p158 = pnand %p156, %p157
    %p159 = pneg %p158
    // Predicated region
    $region9: #{fno3d_binseg_forward.18} parent=5 // pred_check
      _
    $region10: #{fno3d_binseg_forward.18} parent=5 // pred_check_branch
      %161 = sbr.rel (%p158) target = $region12
    $region11: #{fno3d_binseg_forward.18} parent=5 // pred_region
      %s162 = ssub.s32 %s10, 1
      // Predicated region
      $region13: #{fno3d_binseg_forward.18} parent=11 // pred_check
        %p163 = pneg %p99
      $region14: #{fno3d_binseg_forward.18} parent=11 // pred_check_branch
        %165 = sbr.rel (%p163) target = $region16
      $region15: #{fno3d_binseg_forward.18} parent=11 // pred_region
        _
      $region16: #{fno3d_binseg_forward.18} parent=11 // pred_fallthru
        _
      // Predicated region
      $region17: #{fno3d_binseg_forward.18} parent=11 // pred_check
        %p166 = pneg %p120
      $region18: #{fno3d_binseg_forward.18} parent=11 // pred_check_branch
        %168 = sbr.rel (%p166) target = $region20
      $region19: #{fno3d_binseg_forward.18} parent=11 // pred_region
        _
      $region20: #{fno3d_binseg_forward.18} parent=11 // pred_fallthru
        _
    $region12: #{fno3d_binseg_forward.18} parent=5 // pred_fallthru
      _
    %p169 = scmp.lt.s32.totalorder %s10, 2
    // Predicated region
    $region21: #{fno3d_binseg_forward.18} parent=5 // pred_check
      %p170 = pneg %p169
    $region22: #{fno3d_binseg_forward.18} parent=5 // pred_check_branch
      %172 = sbr.rel (%p170) target = $region24
    $region23: #{fno3d_binseg_forward.18} parent=5 // pred_region
      // Predicated region
      $region25: #{fno3d_binseg_forward.18} parent=23 // pred_check
        %p173 = pneg %p44
      $region26: #{fno3d_binseg_forward.18} parent=23 // pred_check_branch
        %175 = sbr.rel (%p173) target = $region28
      $region27: #{fno3d_binseg_forward.18} parent=23 // pred_region
        %s176 = smul.u32 7, %s18
        %p177 = scmp.lt.s32.totalorder %s17, 1
        %s178 = scalar_select %p177, %s17, 1
        %p179 = scmp.lt.s32.totalorder %s176, 6
        %s180 = scalar_select %p179, %s176, 6
        %s181 = smul.addr %s178, 7
        %s182 = sadd.s32 %s180, %s181
        %s183 = smul.addr %s182, 8
        %s184 = scalar_lea.vmem %s0, %s183
        %s185 = smul.u32 7, %s18
      $region28: #{fno3d_binseg_forward.18} parent=23 // pred_fallthru
        _
      // Predicated region
      $region29: #{fno3d_binseg_forward.18} parent=23 // pred_check
        %p186 = pneg %p72
      $region30: #{fno3d_binseg_forward.18} parent=23 // pred_check_branch
        %188 = sbr.rel (%p186) target = $region32
      $region31: #{fno3d_binseg_forward.18} parent=23 // pred_region
        %s189 = smul.u32 7, %s18
        %p190 = scmp.lt.s32.totalorder %s17, 1
        %s191 = scalar_select %p190, %s17, 1
        %p192 = scmp.lt.s32.totalorder %s189, 6
        %s193 = scalar_select %p192, %s189, 6
        %s194 = smul.addr %s191, 7
        %s195 = sadd.s32 %s193, %s194
        %s196 = smul.addr %s195, 8
        %s197 = scalar_lea.vmem %s1, %s196
        %s198 = smul.u32 7, %s18
      $region32: #{fno3d_binseg_forward.18} parent=23 // pred_fallthru
        _
    $region24: #{fno3d_binseg_forward.18} parent=5 // pred_fallthru
      _
    %p199 = scmp.le.s32.totalorder 1, %s10
    %p200 = scmp.lt.s32.totalorder %s10, 3
    %p201 = pnand %p199, %p200
    %p202 = pneg %p201
    // Predicated region
    $region33: #{fno3d_binseg_forward.18} parent=5 // pred_check
      _
    $region34: #{fno3d_binseg_forward.18} parent=5 // pred_check_branch
      %204 = sbr.rel (%p201) target = $region36
    $region35: #{fno3d_binseg_forward.18} parent=5 // pred_region
      %s205 = ssub.s32 %s10, 1
      %s206 = smul.u32 7, %s20
      %p207 = scmp.lt.s32.totalorder %s19, 1
      %s208 = scalar_select %p207, %s19, 1
      %p209 = scmp.lt.s32.totalorder %s206, 6
      %s210 = scalar_select %p209, %s206, 6
      %s211 = smul.addr %s208, 7
      %s212 = sadd.s32 %s210, %s211
      %s213 = smul.addr %s212, 8
      %s214 = scalar_lea.vmem %s0, %s213
      %p215 = pneg %p50
      %p216 = pneg %p47
      %s217 = smul.u32 7, %s20
      %p218 = scmp.lt.s32.totalorder %s19, 1
      %s219 = scalar_select %p218, %s19, 1
      %p220 = scmp.lt.s32.totalorder %s217, 6
      %s221 = scalar_select %p220, %s217, 6
      %s222 = smul.addr %s219, 7
      %s223 = sadd.s32 %s221, %s222
      %s224 = smul.addr %s223, 8
      %s225 = scalar_lea.vmem %s1, %s224
      %p226 = pneg %p78
      %p227 = pneg %p75
      %p228 = pneg %p99
      %p229 = pneg %p96
      %p230 = pneg %p120
      %p231 = pneg %p117
      %p232 = pneg %p148
      %p233 = pneg %p145
      %s234 = smul.u32 7, %s20
      %p235 = scmp.lt.s32.totalorder %s19, 1
      %s236 = scalar_select %p235, %s19, 1
      %p237 = scmp.lt.s32.totalorder %s234, 6
      %s238 = scalar_select %p237, %s234, 6
      %s239 = smul.addr %s236, 7
      %s240 = sadd.s32 %s238, %s239
      %s241 = smul.addr %s240, 8
      %s242 = scalar_lea.vmem %s4, %s241
      %s243 = smul.u32 7, %s20
      %p244 = scmp.lt.s32.totalorder %s19, 1
      %s245 = scalar_select %p244, %s19, 1
      %p246 = scmp.lt.s32.totalorder %s243, 6
      %s247 = scalar_select %p246, %s243, 6
      %s248 = smul.addr %s245, 7
      %s249 = sadd.s32 %s247, %s248
      %s250 = smul.addr %s249, 8
      %s251 = scalar_lea.vmem %s0, %s250
      %s252 = smul.u32 7, %s20
      %s253 = smul.u32 7, %s20
      %p254 = scmp.lt.s32.totalorder %s19, 1
      %s255 = scalar_select %p254, %s19, 1
      %p256 = scmp.lt.s32.totalorder %s253, 6
      %s257 = scalar_select %p256, %s253, 6
      %s258 = smul.addr %s255, 7
      %s259 = sadd.s32 %s257, %s258
      %s260 = smul.addr %s259, 8
      %s261 = scalar_lea.vmem %s1, %s260
      %s262 = smul.u32 7, %s20
      %s263 = smul.u32 7, %s20
      %p264 = scmp.lt.s32.totalorder %s19, 1
      %s265 = scalar_select %p264, %s19, 1
      %p266 = scmp.lt.s32.totalorder %s263, 6
      %s267 = scalar_select %p266, %s263, 6
      %s268 = smul.addr %s265, 7
      %s269 = sadd.s32 %s267, %s268
      %s270 = smul.addr %s269, 8
      %s271 = scalar_lea.vmem %s4, %s270
      %s272 = smul.u32 7, %s20
      %v273 = vld [vmem:[%s2] sm:$0xff]
      %v274 = vld [vmem:[%s251] sm:$0xff]
      %v275 = vld [vmem:[%s251 + $0x8] sm:$0xff]
      %v276 = vld [vmem:[%s251 + $0x10] sm:$0xff]
      %v277 = vld [vmem:[%s251 + $0x18] sm:$0xff]
      %v278 = vld [vmem:[%s251 + $0x20] sm:$0xff]
      %v279 = vld [vmem:[%s251 + $0x28] sm:$0xff]
      %v280 = vld [vmem:[%s251 + $0x30] sm:$0xff]
      %v281 = vld [vmem:[%s3] sm:$0xff]
      %283 = vset.pattern.permute.xlu0 0
      %284 = vperm.xlu0 %283, %v281
      %v285 = vpop.permute.xlu0 %284
      %vm287 = vcmask 64512
      %v289 = vsel %vm287, %v273, 0
      %291 = vmatprep.subr.mxu0 %v275
      %292 = vmatpush1.msra.mxu0 %v274
      %293 = vmatprep.subr.mxu0 0.0
      %294 = vmatpush1.msra.mxu0 0.0
      %295 = vmatprep.subr.mxu0 0.0
      %296 = vmatpush1.msra.mxu0 0.0
      %297 = vmatprep.subr.mxu0 0.0
      %298 = vmatpush1.msra.mxu0 0.0
      %299 = vmatprep.subr.mxu0 0.0
      %300 = vmatpush1.msra.mxu0 0.0
      %301 = vmatprep.subr.mxu0 0.0
      %302 = vmatpush1.msra.mxu0 0.0
      %303 = vmatprep.subr.mxu0 0.0
      %304 = vmatpush1.msra.mxu0 0.0
      %305 = vmatprep.subr.mxu0 0.0
      %306 = vmatpush1.msra.mxu0 0.0
      %307 = vmatprep.subr.mxu0 0.0
      %308 = vmatpush1.msra.mxu0 0.0
      %309 = vmatprep.subr.mxu0 0.0
      %310 = vmatpush1.msra.mxu0 0.0
      %311 = vmatprep.subr.mxu0 0.0
      %312 = vmatpush1.msra.mxu0 0.0
      %313 = vmatprep.subr.mxu0 0.0
      %314 = vmatpush1.msra.mxu0 0.0
      %315 = vmatprep.subr.mxu0 0.0
      %316 = vmatpush1.msra.mxu0 0.0
      %317 = vmatprep.subr.mxu0 0.0
      %318 = vmatpush1.msra.mxu0 0.0
      %319 = vmatprep.subr.mxu0 0.0
      %320 = vmatpush1.msra.mxu0 0.0
      %321 = vmatprep.subr.mxu0 0.0
      %322 = vmatpush1.msra.mxu0 0.0
      %323 = vmatprep.subr.mxu0 0.0
      %324 = vmatpush1.msra.mxu0 0.0
      %325 = vmatprep.subr.mxu0 0.0
      %326 = vmatpush1.msra.mxu0 0.0
      %327 = vmatprep.subr.mxu0 0.0
      %328 = vmatpush1.msra.mxu0 0.0
      %329 = vmatprep.subr.mxu0 0.0
      %330 = vmatpush1.msra.mxu0 0.0
      %331 = vmatprep.subr.mxu0 0.0
      %332 = vmatpush1.msra.mxu0 0.0
      %333 = vmatprep.subr.mxu0 0.0
      %334 = vmatpush1.msra.mxu0 0.0
      %335 = vmatprep.subr.mxu0 0.0
      %336 = vmatpush1.msra.mxu0 0.0
      %337 = vmatprep.subr.mxu0 0.0
      %338 = vmatpush1.msra.mxu0 0.0
      %339 = vmatprep.subr.mxu0 0.0
      %340 = vmatpush1.msra.mxu0 0.0
      %341 = vmatprep.subr.mxu0 0.0
      %342 = vmatpush1.msra.mxu0 0.0
      %343 = vmatprep.subr.mxu0 0.0
      %344 = vmatpush1.msra.mxu0 0.0
      %345 = vmatprep.subr.mxu0 0.0
      %346 = vmatpush1.msra.mxu0 0.0
      %347 = vmatprep.subr.mxu0 0.0
      %348 = vmatpush1.msra.mxu0 0.0
      %349 = vmatprep.subr.mxu0 0.0
      %350 = vmatpush1.msra.mxu0 0.0
      %351 = vmatprep.subr.mxu0 0.0
      %352 = vmatpush1.msra.mxu0 0.0
      %353 = vmatprep.subr.mxu0 0.0
      %354 = vmatpush1.msra.mxu0 0.0
      %355 = vmatprep.mubr.f32.mxu0 0.0
      %356 = vmatmul.mubr.f32.gmra.mrb[0].mxu0 %v289
      %v357 = vpop.f32.mrb[0].mxu0
      %v358 = vadd.f32 %v285, %v357
      %v359 = vpop.f32.mrb[0].mxu0
      %v360 = vadd.f32 %v285, %v359
      %361 = vdwg.mxu0
      %362 = vmatprep.subr.mxu0 %v277
      %363 = vmatpush1.msra.mxu0 %v276
      %364 = vmatprep.subr.mxu0 0.0
      %365 = vmatpush1.msra.mxu0 0.0
      %366 = vmatprep.subr.mxu0 0.0
      %367 = vmatpush1.msra.mxu0 0.0
      %368 = vmatprep.subr.mxu0 0.0
      %369 = vmatpush1.msra.mxu0 0.0
      %370 = vmatprep.subr.mxu0 0.0
      %371 = vmatpush1.msra.mxu0 0.0
      %372 = vmatprep.subr.mxu0 0.0
      %373 = vmatpush1.msra.mxu0 0.0
      %374 = vmatprep.subr.mxu0 0.0
      %375 = vmatpush1.msra.mxu0 0.0
      %376 = vmatprep.subr.mxu0 0.0
      %377 = vmatpush1.msra.mxu0 0.0
      %378 = vmatprep.subr.mxu0 0.0
      %379 = vmatpush1.msra.mxu0 0.0
      %380 = vmatprep.subr.mxu0 0.0
      %381 = vmatpush1.msra.mxu0 0.0
      %382 = vmatprep.subr.mxu0 0.0
      %383 = vmatpush1.msra.mxu0 0.0
      %384 = vmatprep.subr.mxu0 0.0
      %385 = vmatpush1.msra.mxu0 0.0
      %386 = vmatprep.subr.mxu0 0.0
      %387 = vmatpush1.msra.mxu0 0.0
      %388 = vmatprep.subr.mxu0 0.0
      %389 = vmatpush1.msra.mxu0 0.0
      %390 = vmatprep.subr.mxu0 0.0
      %391 = vmatpush1.msra.mxu0 0.0
      %392 = vmatprep.subr.mxu0 0.0
      %393 = vmatpush1.msra.mxu0 0.0
      %394 = vmatprep.subr.mxu0 0.0
      %395 = vmatpush1.msra.mxu0 0.0
      %396 = vmatprep.subr.mxu0 0.0
      %397 = vmatpush1.msra.mxu0 0.0
      %398 = vmatprep.subr.mxu0 0.0
      %399 = vmatpush1.msra.mxu0 0.0
      %400 = vmatprep.subr.mxu0 0.0
      %401 = vmatpush1.msra.mxu0 0.0
      %402 = vmatprep.subr.mxu0 0.0
      %403 = vmatpush1.msra.mxu0 0.0
      %404 = vmatprep.subr.mxu0 0.0
      %405 = vmatpush1.msra.mxu0 0.0
      %406 = vmatprep.subr.mxu0 0.0
      %407 = vmatpush1.msra.mxu0 0.0
      %408 = vmatprep.subr.mxu0 0.0
      %409 = vmatpush1.msra.mxu0 0.0
      %410 = vmatprep.subr.mxu0 0.0
      %411 = vmatpush1.msra.mxu0 0.0
      %412 = vmatprep.subr.mxu0 0.0
      %413 = vmatpush1.msra.mxu0 0.0
      %414 = vmatprep.subr.mxu0 0.0
      %415 = vmatpush1.msra.mxu0 0.0
      %416 = vmatprep.subr.mxu0 0.0
      %417 = vmatpush1.msra.mxu0 0.0
      %418 = vmatprep.subr.mxu0 0.0
      %419 = vmatpush1.msra.mxu0 0.0
      %420 = vmatprep.subr.mxu0 0.0
      %421 = vmatpush1.msra.mxu0 0.0
      %422 = vmatprep.subr.mxu0 0.0
      %423 = vmatpush1.msra.mxu0 0.0
      %424 = vmatprep.subr.mxu0 0.0
      %425 = vmatpush1.msra.mxu0 0.0
      %426 = vmatprep.mubr.f32.mxu0 0.0
      %427 = vmatmul.mubr.f32.gmra.mrb[0].mxu0 %v289
      %v428 = vpop.f32.mrb[0].mxu0
      %v429 = vadd.f32 %v285, %v428
      %v430 = vpop.f32.mrb[0].mxu0
      %v431 = vadd.f32 %v285, %v430
      %432 = vdwg.mxu0
      %433 = vmatprep.subr.mxu0 %v279
      %434 = vmatpush1.msra.mxu0 %v278
      %435 = vmatprep.subr.mxu0 0.0
      %436 = vmatpush1.msra.mxu0 0.0
      %437 = vmatprep.subr.mxu0 0.0
      %438 = vmatpush1.msra.mxu0 0.0
      %439 = vmatprep.subr.mxu0 0.0
      %440 = vmatpush1.msra.mxu0 0.0
      %441 = vmatprep.subr.mxu0 0.0
      %442 = vmatpush1.msra.mxu0 0.0
      %443 = vmatprep.subr.mxu0 0.0
      %444 = vmatpush1.msra.mxu0 0.0
      %445 = vmatprep.subr.mxu0 0.0
      %446 = vmatpush1.msra.mxu0 0.0
      %447 = vmatprep.subr.mxu0 0.0
      %448 = vmatpush1.msra.mxu0 0.0
      %449 = vmatprep.subr.mxu0 0.0
      %450 = vmatpush1.msra.mxu0 0.0
      %451 = vmatprep.subr.mxu0 0.0
      %452 = vmatpush1.msra.mxu0 0.0
      %453 = vmatprep.subr.mxu0 0.0
      %454 = vmatpush1.msra.mxu0 0.0
      %455 = vmatprep.subr.mxu0 0.0
      %456 = vmatpush1.msra.mxu0 0.0
      %457 = vmatprep.subr.mxu0 0.0
      %458 = vmatpush1.msra.mxu0 0.0
      %459 = vmatprep.subr.mxu0 0.0
      %460 = vmatpush1.msra.mxu0 0.0
      %461 = vmatprep.subr.mxu0 0.0
      %462 = vmatpush1.msra.mxu0 0.0
      %463 = vmatprep.subr.mxu0 0.0
      %464 = vmatpush1.msra.mxu0 0.0
      %465 = vmatprep.subr.mxu0 0.0
      %466 = vmatpush1.msra.mxu0 0.0
      %467 = vmatprep.subr.mxu0 0.0
      %468 = vmatpush1.msra.mxu0 0.0
      %469 = vmatprep.subr.mxu0 0.0
      %470 = vmatpush1.msra.mxu0 0.0
      %471 = vmatprep.subr.mxu0 0.0
      %472 = vmatpush1.msra.mxu0 0.0
      %473 = vmatprep.subr.mxu0 0.0
      %474 = vmatpush1.msra.mxu0 0.0
      %475 = vmatprep.subr.mxu0 0.0
      %476 = vmatpush1.msra.mxu0 0.0
      %477 = vmatprep.subr.mxu0 0.0
      %478 = vmatpush1.msra.mxu0 0.0
      %479 = vmatprep.subr.mxu0 0.0
      %480 = vmatpush1.msra.mxu0 0.0
      %481 = vmatprep.subr.mxu0 0.0
      %482 = vmatpush1.msra.mxu0 0.0
      %483 = vmatprep.subr.mxu0 0.0
      %484 = vmatpush1.msra.mxu0 0.0
      %485 = vmatprep.subr.mxu0 0.0
      %486 = vmatpush1.msra.mxu0 0.0
      %487 = vmatprep.subr.mxu0 0.0
      %488 = vmatpush1.msra.mxu0 0.0
      %489 = vmatprep.subr.mxu0 0.0
      %490 = vmatpush1.msra.mxu0 0.0
      %491 = vmatprep.subr.mxu0 0.0
      %492 = vmatpush1.msra.mxu0 0.0
      %493 = vmatprep.subr.mxu0 0.0
      %494 = vmatpush1.msra.mxu0 0.0
      %495 = vmatprep.subr.mxu0 0.0
      %496 = vmatpush1.msra.mxu0 0.0
      %497 = vmatprep.mubr.f32.mxu0 0.0
      %498 = vmatmul.mubr.f32.gmra.mrb[0].mxu0 %v289
      %v499 = vpop.f32.mrb[0].mxu0
      %v500 = vadd.f32 %v285, %v499
      %v501 = vpop.f32.mrb[0].mxu0
      %v502 = vadd.f32 %v285, %v501
      %503 = vdwg.mxu0
      %504 = vmatprep.subr.mxu0 0.0
      %505 = vmatpush1.msra.mxu0 %v280
      %506 = vmatprep.subr.mxu0 0.0
      %507 = vmatpush1.msra.mxu0 0.0
      %508 = vmatprep.subr.mxu0 0.0
      %509 = vmatpush1.msra.mxu0 0.0
      %510 = vmatprep.subr.mxu0 0.0
      %511 = vmatpush1.msra.mxu0 0.0
      %512 = vmatprep.subr.mxu0 0.0
      %513 = vmatpush1.msra.mxu0 0.0
      %514 = vmatprep.subr.mxu0 0.0
      %515 = vmatpush1.msra.mxu0 0.0
      %516 = vmatprep.subr.mxu0 0.0
      %517 = vmatpush1.msra.mxu0 0.0
      %518 = vmatprep.subr.mxu0 0.0
      %519 = vmatpush1.msra.mxu0 0.0
      %520 = vmatprep.subr.mxu0 0.0
      %521 = vmatpush1.msra.mxu0 0.0
      %522 = vmatprep.subr.mxu0 0.0
      %523 = vmatpush1.msra.mxu0 0.0
      %524 = vmatprep.subr.mxu0 0.0
      %525 = vmatpush1.msra.mxu0 0.0
      %526 = vmatprep.subr.mxu0 0.0
      %527 = vmatpush1.msra.mxu0 0.0
      %528 = vmatprep.subr.mxu0 0.0
      %529 = vmatpush1.msra.mxu0 0.0
      %530 = vmatprep.subr.mxu0 0.0
      %531 = vmatpush1.msra.mxu0 0.0
      %532 = vmatprep.subr.mxu0 0.0
      %533 = vmatpush1.msra.mxu0 0.0
      %534 = vmatprep.subr.mxu0 0.0
      %535 = vmatpush1.msra.mxu0 0.0
      %536 = vmatprep.subr.mxu0 0.0
      %537 = vmatpush1.msra.mxu0 0.0
      %538 = vmatprep.subr.mxu0 0.0
      %539 = vmatpush1.msra.mxu0 0.0
      %540 = vmatprep.subr.mxu0 0.0
      %541 = vmatpush1.msra.mxu0 0.0
      %542 = vmatprep.subr.mxu0 0.0
      %543 = vmatpush1.msra.mxu0 0.0
      %544 = vmatprep.subr.mxu0 0.0
      %545 = vmatpush1.msra.mxu0 0.0
      %546 = vmatprep.subr.mxu0 0.0
      %547 = vmatpush1.msra.mxu0 0.0
      %548 = vmatprep.subr.mxu0 0.0
      %549 = vmatpush1.msra.mxu0 0.0
      %550 = vmatprep.subr.mxu0 0.0
      %551 = vmatpush1.msra.mxu0 0.0
      %552 = vmatprep.subr.mxu0 0.0
      %553 = vmatpush1.msra.mxu0 0.0
      %554 = vmatprep.subr.mxu0 0.0
      %555 = vmatpush1.msra.mxu0 0.0
      %556 = vmatprep.subr.mxu0 0.0
      %557 = vmatpush1.msra.mxu0 0.0
      %558 = vmatprep.subr.mxu0 0.0
      %559 = vmatpush1.msra.mxu0 0.0
      %560 = vmatprep.subr.mxu0 0.0
      %561 = vmatpush1.msra.mxu0 0.0
      %562 = vmatprep.subr.mxu0 0.0
      %563 = vmatpush1.msra.mxu0 0.0
      %564 = vmatprep.subr.mxu0 0.0
      %565 = vmatpush1.msra.mxu0 0.0
      %566 = vmatprep.subr.mxu0 0.0
      %567 = vmatpush1.msra.mxu0 0.0
      %568 = vmatprep.mubr.f32.mxu0 0.0
      %569 = vmatmul.mubr.f32.gmra.mrb[0].mxu0 %v289
      %v570 = vpop.f32.mrb[0].mxu0
      %v571 = vadd.f32 %v285, %v570
      %v572 = vpop.f32.mrb[0].mxu0
      %573 = vdwg.mxu0
      %v574 = vld [vmem:[%s261] sm:$0xff]
      %v575 = vld [vmem:[%s261 + $0x8] sm:$0xff]
      %v576 = vld [vmem:[%s261 + $0x10] sm:$0xff]
      %v577 = vld [vmem:[%s261 + $0x18] sm:$0xff]
      %v578 = vld [vmem:[%s261 + $0x20] sm:$0xff]
      %v579 = vld [vmem:[%s261 + $0x28] sm:$0xff]
      %v580 = vld [vmem:[%s261 + $0x30] sm:$0xff]
      %v581 = vadd.f32 %v358, %v574
      %v582 = vadd.f32 %v360, %v575
      %v583 = vadd.f32 %v429, %v576
      %v584 = vadd.f32 %v431, %v577
      %v585 = vadd.f32 %v500, %v578
      %v586 = vadd.f32 %v502, %v579
      %v587 = vadd.f32 %v571, %v580
      %588 = vst [vmem:[%s271] sm:$0xff] %v581
      %589 = vst [vmem:[%s271 + $0x8] sm:$0xff] %v582
      %590 = vst [vmem:[%s271 + $0x10] sm:$0xff] %v583
      %591 = vst [vmem:[%s271 + $0x18] sm:$0xff] %v584
      %592 = vst [vmem:[%s271 + $0x20] sm:$0xff] %v585
      %593 = vst [vmem:[%s271 + $0x28] sm:$0xff] %v586
      %594 = vst [vmem:[%s271 + $0x30] sm:$0xff] %v587
      %s595 = smul.u32 7, %s20
      %p596 = scmp.lt.s32.totalorder %s19, 1
      %s597 = scalar_select %p596, %s19, 1
      %p598 = scmp.lt.s32.totalorder %s595, 6
      %s599 = scalar_select %p598, %s595, 6
      %s600 = smul.addr %s597, 7
      %s601 = sadd.s32 %s599, %s600
      %s602 = smul.addr %s601, 8
      %s603 = scalar_lea.vmem %s4, %s602
      // Predicated region
      $region37: #{fno3d_binseg_forward.18} parent=35 // pred_check
        %p604 = pneg %p145
      $region38: #{fno3d_binseg_forward.18} parent=35 // pred_check_branch
        %606 = sbr.rel (%p604) target = $region40
      $region39: #{fno3d_binseg_forward.18} parent=35 // pred_region
        %s607 = smul.u32 7, %s20
      $region40: #{fno3d_binseg_forward.18} parent=35 // pred_fallthru
        _
    $region36: #{fno3d_binseg_forward.18} parent=5 // pred_fallthru
      _
    %p608 = scmp.le.s32.totalorder 2, %s10
    // Predicated region
    $region41: #{fno3d_binseg_forward.18} parent=5 // pred_check
      %p609 = pneg %p608
    $region42: #{fno3d_binseg_forward.18} parent=5 // pred_check_branch
      %611 = sbr.rel (%p609) target = $region44
    $region43: #{fno3d_binseg_forward.18} parent=5 // pred_region
      %s612 = ssub.s32 %s10, 2
      // Predicated region
      $region45: #{fno3d_binseg_forward.18} parent=43 // pred_check
        %p613 = pneg %p151
      $region46: #{fno3d_binseg_forward.18} parent=43 // pred_check_branch
        %615 = sbr.rel (%p613) target = $region48
      $region47: #{fno3d_binseg_forward.18} parent=43 // pred_region
        %s616 = smul.u32 7, %s22
        %p617 = scmp.lt.s32.totalorder %s21, 1
        %s618 = scalar_select %p617, %s21, 1
        %p619 = scmp.lt.s32.totalorder %s616, 6
        %s620 = scalar_select %p619, %s616, 6
        %s621 = smul.addr %s618, 7
        %s622 = sadd.s32 %s620, %s621
        %s623 = smul.addr %s622, 8
        %s624 = scalar_lea.vmem %s4, %s623
      $region48: #{fno3d_binseg_forward.18} parent=43 // pred_fallthru
        _
    $region44: #{fno3d_binseg_forward.18} parent=5 // pred_fallthru
      _
  $region6: #{fno3d_binseg_forward.18} parent=0 // loop_footer
    %s14 = sadd.s32 1, %s10
  $region7: #{fno3d_binseg_forward.18} parent=0 // loop_footer_branch
    %9 = sbr.rel target = $region3
  $region8: #{fno3d_binseg_forward.18} parent=0 // loop_exit
    _

// kernel: fno3d_binseg_forward.19
$region0: #{fno3d_binseg_forward.19}
  #allocation0 [shape = 'u32[]', space=smem, size = 0x4, offset = 0x4, fixed_abs, tag = 'smem constant byte address 0x4 - core index']
  #allocation1 [shape = 'u32[144,128]{1,0:T(1,128)}', space=vmem, size = 0x12000, scoped, tag = 'internal scratch']
  %s0 = inlined_call_operand.vmem [shape: f32[2,8,512], index: 0, kind: input, shape index: {}]
  %s1 = inlined_call_operand.vmem [shape: f32[128,8], index: 1, kind: input, shape index: {}]
  %s2 = inlined_call_operand.vmem [shape: f32[128,1], index: 2, kind: input, shape index: {}]
  %s3 = inlined_call_operand.vmem [shape: f32[2,128], index: 3, kind: input, shape index: {}]
  %s4 = inlined_call_operand.vmem [shape: f32[2,1], index: 4, kind: input, shape index: {}]
  %s5 = inlined_call_operand.vmem [shape: f32[2,2,512], index: 5, kind: output, shape index: {}]
  %s6 = sld [smem:[#allocation0]]
  $region53: #{fno3d_binseg_forward.19} parent=0
    _
  %s8 = ssub.s32 1, %s6
  %s9 = scalar_select 0, %s8, %s6
  loop: start=0, step=1, limit=4
  $region2: #{fno3d_binseg_forward.19} parent=0 // loop_pre_header
    _
  $region3: #{fno3d_binseg_forward.19} parent=0 // loop_header
    %s11 = sphi 0, %s15
    %p12 = scmp.ge.s32.totalorder %s11, 4
    %s18 = sphi 0, %s30
    %s19 = sphi 0, %s26
    %s20 = sphi 0, %s18
    %s21 = sphi 0, %s19
    %s22 = sphi 0, %s20
    %s23 = sphi 0, %s21
    %s35 = sphi 0, %s37
    %s38 = sphi 0, %s35
    %s39 = sphi 0, %s38
    %s55 = sphi 0, %s39
    %s59 = sphi 0, %s59
    %s61 = sphi 0, %s59
    %s62 = sphi 0, %s61
    %s76 = sphi 0, %s62
    %s80 = sphi 0, %s80
    %s82 = sphi 0, %s80
    %s83 = sphi 0, %s82
    %s97 = sphi 0, %s83
    %s101 = sphi 0, %s101
    %s103 = sphi 0, %s101
    %s104 = sphi 0, %s103
    %s118 = sphi 0, %s104
    %s122 = sphi 0, %s122
    %s124 = sphi 0, %s122
    %s125 = sphi 0, %s124
    %s139 = sphi 0, %s125
    %s147 = sphi 0, %s149
    %s150 = sphi 0, %s147
    %s151 = sphi 0, %s150
    %s167 = sphi 0, %s151
  $region4: #{fno3d_binseg_forward.19} parent=0 // loop_header_branch
    %14 = sbr.rel (%p12) target = $region8
  $region5: #{fno3d_binseg_forward.19} parent=0 // loop_body
    %s16 = ssub.s32 %s11, 1
    %s17 = ssub.s32 %s11, 2
    %s24 = sadd.s32 1, %s19
    %p25 = scmp.ge.s32.totalorder %s24, 1
    %s26 = scalar_select %p25, 0, %s24
    %s27 = sadd.s32 1, %s18
    %s28 = scalar_select %p25, %s27, %s18
    %p29 = scmp.ge.s32.totalorder %s28, 2
    %s30 = scalar_select %p29, 0, %s28
    %s31 = ssub.s32 %s18, %s30
    %s32 = ssub.s32 %s19, %s26
    %s33 = sor.u32 %s31, %s32
    %p34 = scmp.eq.s32.totalorder %s33, 0
    %s36 = sadd.s32 %s35, 1
    %s37 = scalar_select %p34, %s35, %s36
    %p40 = pneg %p34
    %p41 = scmp.eq.s32.totalorder %s11, 1
    %p42 = por %p40, %p41
    %p43 = scmp.ne.s32.totalorder %s35, %s38
    %p44 = scmp.eq.s32.totalorder %s11, 0
    %p45 = por %p43, %p44
    %p46 = scmp.ne.s32.totalorder %s35, %s38
    %p47 = scmp.eq.s32.totalorder %s16, 1
    %p48 = por %p46, %p47
    %p49 = scmp.ne.s32.totalorder %s38, %s39
    %p50 = scmp.eq.s32.totalorder %s16, 0
    %p51 = por %p49, %p50
    %p52 = scmp.ne.s32.totalorder %s38, %s39
    %p53 = scmp.eq.s32.totalorder %s17, 1
    %p54 = por %p52, %p53
    %p56 = scmp.ne.s32.totalorder %s39, %s55
    %p57 = scmp.eq.s32.totalorder %s17, 0
    %p58 = por %p56, %p57
    %s60 = sadd.s32 %s59, 1
    %p63 = scmp.eq.s32.totalorder %s11, 1
    %p64 = scmp.ne.s32.totalorder %s59, %s61
    %p65 = scmp.eq.s32.totalorder %s11, 0
    %p66 = por %p64, %p65
    %p67 = scmp.ne.s32.totalorder %s59, %s61
    %p68 = scmp.eq.s32.totalorder %s16, 1
    %p69 = por %p67, %p68
    %p70 = scmp.ne.s32.totalorder %s61, %s62
    %p71 = scmp.eq.s32.totalorder %s16, 0
    %p72 = por %p70, %p71
    %p73 = scmp.ne.s32.totalorder %s61, %s62
    %p74 = scmp.eq.s32.totalorder %s17, 1
    %p75 = por %p73, %p74
    %p77 = scmp.ne.s32.totalorder %s62, %s76
    %p78 = scmp.eq.s32.totalorder %s17, 0
    %p79 = por %p77, %p78
    %s81 = sadd.s32 %s80, 1
    %p84 = scmp.eq.s32.totalorder %s11, 1
    %p85 = scmp.ne.s32.totalorder %s80, %s82
    %p86 = scmp.eq.s32.totalorder %s11, 0
    %p87 = por %p85, %p86
    %p88 = scmp.ne.s32.totalorder %s80, %s82
    %p89 = scmp.eq.s32.totalorder %s16, 1
    %p90 = por %p88, %p89
    %p91 = scmp.ne.s32.totalorder %s82, %s83
    %p92 = scmp.eq.s32.totalorder %s16, 0
    %p93 = por %p91, %p92
    %p94 = scmp.ne.s32.totalorder %s82, %s83
    %p95 = scmp.eq.s32.totalorder %s17, 1
    %p96 = por %p94, %p95
    %p98 = scmp.ne.s32.totalorder %s83, %s97
    %p99 = scmp.eq.s32.totalorder %s17, 0
    %p100 = por %p98, %p99
    %s102 = sadd.s32 %s101, 1
    %p105 = scmp.eq.s32.totalorder %s11, 1
    %p106 = scmp.ne.s32.totalorder %s101, %s103
    %p107 = scmp.eq.s32.totalorder %s11, 0
    %p108 = por %p106, %p107
    %p109 = scmp.ne.s32.totalorder %s101, %s103
    %p110 = scmp.eq.s32.totalorder %s16, 1
    %p111 = por %p109, %p110
    %p112 = scmp.ne.s32.totalorder %s103, %s104
    %p113 = scmp.eq.s32.totalorder %s16, 0
    %p114 = por %p112, %p113
    %p115 = scmp.ne.s32.totalorder %s103, %s104
    %p116 = scmp.eq.s32.totalorder %s17, 1
    %p117 = por %p115, %p116
    %p119 = scmp.ne.s32.totalorder %s104, %s118
    %p120 = scmp.eq.s32.totalorder %s17, 0
    %p121 = por %p119, %p120
    %s123 = sadd.s32 %s122, 1
    %p126 = scmp.eq.s32.totalorder %s11, 1
    %p127 = scmp.ne.s32.totalorder %s122, %s124
    %p128 = scmp.eq.s32.totalorder %s11, 0
    %p129 = por %p127, %p128
    %p130 = scmp.ne.s32.totalorder %s122, %s124
    %p131 = scmp.eq.s32.totalorder %s16, 1
    %p132 = por %p130, %p131
    %p133 = scmp.ne.s32.totalorder %s124, %s125
    %p134 = scmp.eq.s32.totalorder %s16, 0
    %p135 = por %p133, %p134
    %p136 = scmp.ne.s32.totalorder %s124, %s125
    %p137 = scmp.eq.s32.totalorder %s17, 1
    %p138 = por %p136, %p137
    %p140 = scmp.ne.s32.totalorder %s125, %s139
    %p141 = scmp.eq.s32.totalorder %s17, 0
    %p142 = por %p140, %p141
    %s143 = ssub.s32 %s18, %s30
    %s144 = ssub.s32 %s19, %s26
    %s145 = sor.u32 %s143, %s144
    %p146 = scmp.eq.s32.totalorder %s145, 0
    %s148 = sadd.s32 %s147, 1
    %s149 = scalar_select %p146, %s147, %s148
    %p152 = pneg %p146
    %p153 = scmp.eq.s32.totalorder %s11, 1
    %p154 = por %p152, %p153
    %p155 = scmp.ne.s32.totalorder %s147, %s150
    %p156 = scmp.eq.s32.totalorder %s11, 0
    %p157 = por %p155, %p156
    %p158 = scmp.ne.s32.totalorder %s147, %s150
    %p159 = scmp.eq.s32.totalorder %s16, 1
    %p160 = por %p158, %p159
    %p161 = scmp.ne.s32.totalorder %s150, %s151
    %p162 = scmp.eq.s32.totalorder %s16, 0
    %p163 = por %p161, %p162
    %p164 = scmp.ne.s32.totalorder %s150, %s151
    %p165 = scmp.eq.s32.totalorder %s17, 1
    %p166 = por %p164, %p165
    %p168 = scmp.ne.s32.totalorder %s151, %s167
    %p169 = scmp.eq.s32.totalorder %s17, 0
    %p170 = por %p168, %p169
    %p171 = scmp.le.s32.totalorder 1, %s11
    %p172 = scmp.lt.s32.totalorder %s11, 3
    %p173 = pnand %p171, %p172
    %p174 = pneg %p173
    // Predicated region
    $region9: #{fno3d_binseg_forward.19} parent=5 // pred_check
      _
    $region10: #{fno3d_binseg_forward.19} parent=5 // pred_check_branch
      %176 = sbr.rel (%p173) target = $region12
    $region11: #{fno3d_binseg_forward.19} parent=5 // pred_region
      %s177 = ssub.s32 %s11, 1
      // Predicated region
      $region13: #{fno3d_binseg_forward.19} parent=11 // pred_check
        %p178 = pneg %p72
      $region14: #{fno3d_binseg_forward.19} parent=11 // pred_check_branch
        %180 = sbr.rel (%p178) target = $region16
      $region15: #{fno3d_binseg_forward.19} parent=11 // pred_region
        _
      $region16: #{fno3d_binseg_forward.19} parent=11 // pred_fallthru
        _
      // Predicated region
      $region17: #{fno3d_binseg_forward.19} parent=11 // pred_check
        %p181 = pneg %p93
      $region18: #{fno3d_binseg_forward.19} parent=11 // pred_check_branch
        %183 = sbr.rel (%p181) target = $region20
      $region19: #{fno3d_binseg_forward.19} parent=11 // pred_region
        _
      $region20: #{fno3d_binseg_forward.19} parent=11 // pred_fallthru
        _
      // Predicated region
      $region21: #{fno3d_binseg_forward.19} parent=11 // pred_check
        %p184 = pneg %p114
      $region22: #{fno3d_binseg_forward.19} parent=11 // pred_check_branch
        %186 = sbr.rel (%p184) target = $region24
      $region23: #{fno3d_binseg_forward.19} parent=11 // pred_region
        _
      $region24: #{fno3d_binseg_forward.19} parent=11 // pred_fallthru
        _
      // Predicated region
      $region25: #{fno3d_binseg_forward.19} parent=11 // pred_check
        %p187 = pneg %p135
      $region26: #{fno3d_binseg_forward.19} parent=11 // pred_check_branch
        %189 = sbr.rel (%p187) target = $region28
      $region27: #{fno3d_binseg_forward.19} parent=11 // pred_region
        _
      $region28: #{fno3d_binseg_forward.19} parent=11 // pred_fallthru
        _
    $region12: #{fno3d_binseg_forward.19} parent=5 // pred_fallthru
      _
    %p190 = scmp.lt.s32.totalorder %s11, 2
    // Predicated region
    $region29: #{fno3d_binseg_forward.19} parent=5 // pred_check
      %p191 = pneg %p190
    $region30: #{fno3d_binseg_forward.19} parent=5 // pred_check_branch
      %193 = sbr.rel (%p191) target = $region32
    $region31: #{fno3d_binseg_forward.19} parent=5 // pred_region
      // Predicated region
      $region33: #{fno3d_binseg_forward.19} parent=31 // pred_check
        %p194 = pneg %p45
      $region34: #{fno3d_binseg_forward.19} parent=31 // pred_check_branch
        %196 = sbr.rel (%p194) target = $region36
      $region35: #{fno3d_binseg_forward.19} parent=31 // pred_region
        %s197 = smul.u32 4, %s19
        %p198 = scmp.lt.s32.totalorder %s18, 1
        %s199 = scalar_select %p198, %s18, 1
        %p200 = scmp.lt.s32.totalorder %s197, 3
        %s201 = scalar_select %p200, %s197, 3
        %s202 = smul.addr %s199, 4
        %s203 = sadd.s32 %s201, %s202
        %s204 = smul.addr %s203, 8
        %s205 = scalar_lea.vmem %s0, %s204
        %s206 = smul.u32 4, %s19
      $region36: #{fno3d_binseg_forward.19} parent=31 // pred_fallthru
        _
    $region32: #{fno3d_binseg_forward.19} parent=5 // pred_fallthru
      _
    %p207 = scmp.le.s32.totalorder 1, %s11
    %p208 = scmp.lt.s32.totalorder %s11, 3
    %p209 = pnand %p207, %p208
    %p210 = pneg %p209
    // Predicated region
    $region37: #{fno3d_binseg_forward.19} parent=5 // pred_check
      _
    $region38: #{fno3d_binseg_forward.19} parent=5 // pred_check_branch
      %212 = sbr.rel (%p209) target = $region40
    $region39: #{fno3d_binseg_forward.19} parent=5 // pred_region
      %s213 = ssub.s32 %s11, 1
      %s214 = smul.u32 4, %s21
      %p215 = scmp.lt.s32.totalorder %s20, 1
      %s216 = scalar_select %p215, %s20, 1
      %p217 = scmp.lt.s32.totalorder %s214, 3
      %s218 = scalar_select %p217, %s214, 3
      %s219 = smul.addr %s216, 4
      %s220 = sadd.s32 %s218, %s219
      %s221 = smul.addr %s220, 8
      %s222 = scalar_lea.vmem %s0, %s221
      %p223 = pneg %p51
      %p224 = pneg %p48
      %p225 = pneg %p72
      %p226 = pneg %p69
      %p227 = pneg %p93
      %p228 = pneg %p90
      %p229 = pneg %p114
      %p230 = pneg %p111
      %p231 = pneg %p135
      %p232 = pneg %p132
      %p233 = pneg %p163
      %p234 = pneg %p160
      %s235 = smul.u32 4, %s21
      %p236 = scmp.lt.s32.totalorder %s20, 1
      %s237 = scalar_select %p236, %s20, 1
      %p238 = scmp.lt.s32.totalorder %s235, 3
      %s239 = scalar_select %p238, %s235, 3
      %s240 = smul.addr %s237, 4
      %s241 = sadd.s32 %s239, %s240
      %s242 = smul.addr %s241, 2
      %s243 = scalar_lea.vmem %s5, %s242
      %s244 = smul.u32 4, %s21
      %p245 = scmp.lt.s32.totalorder %s20, 1
      %s246 = scalar_select %p245, %s20, 1
      %p247 = scmp.lt.s32.totalorder %s244, 3
      %s248 = scalar_select %p247, %s244, 3
      %s249 = smul.addr %s246, 4
      %s250 = sadd.s32 %s248, %s249
      %s251 = smul.addr %s250, 8
      %s252 = scalar_lea.vmem %s0, %s251
      %s253 = smul.u32 4, %s21
      %s254 = smul.u32 4, %s21
      %p255 = scmp.lt.s32.totalorder %s20, 1
      %s256 = scalar_select %p255, %s20, 1
      %p257 = scmp.lt.s32.totalorder %s254, 3
      %s258 = scalar_select %p257, %s254, 3
      %s259 = smul.addr %s256, 4
      %s260 = sadd.s32 %s258, %s259
      %s261 = smul.addr %s260, 2
      %s262 = scalar_lea.vmem %s5, %s261
      %s263 = smul.u32 4, %s21
      %v264 = vld [vmem:[%s1] sm:$0xff]
      %v265 = vld [vmem:[%s1 + $0x8] sm:$0xff]
      %v266 = vld [vmem:[%s1 + $0x10] sm:$0xff]
      %v267 = vld [vmem:[%s1 + $0x18] sm:$0xff]
      %v268 = vld [vmem:[%s1 + $0x20] sm:$0xff]
      %v269 = vld [vmem:[%s1 + $0x28] sm:$0xff]
      %v270 = vld [vmem:[%s1 + $0x30] sm:$0xff]
      %v271 = vld [vmem:[%s1 + $0x38] sm:$0xff]
      %v272 = vld [vmem:[%s1 + $0x40] sm:$0xff]
      %v273 = vld [vmem:[%s1 + $0x48] sm:$0xff]
      %v274 = vld [vmem:[%s1 + $0x50] sm:$0xff]
      %v275 = vld [vmem:[%s1 + $0x58] sm:$0xff]
      %v276 = vld [vmem:[%s1 + $0x60] sm:$0xff]
      %v277 = vld [vmem:[%s1 + $0x68] sm:$0xff]
      %v278 = vld [vmem:[%s1 + $0x70] sm:$0xff]
      %v279 = vld [vmem:[%s1 + $0x78] sm:$0xff]
      %v280 = vld [vmem:[%s252] sm:$0xff]
      %v281 = vld [vmem:[%s252 + $0x8] sm:$0xff]
      %v282 = vld [vmem:[%s252 + $0x10] sm:$0xff]
      %v283 = vld [vmem:[%s252 + $0x18] sm:$0xff]
      %v284 = vld [vmem:[%s2] sm:$0xff]
      %v285 = vld [vmem:[%s2 + $0x8] sm:$0xff]
      %v286 = vld [vmem:[%s2 + $0x10] sm:$0xff]
      %v287 = vld [vmem:[%s2 + $0x18] sm:$0xff]
      %v288 = vld [vmem:[%s2 + $0x20] sm:$0xff]
      %v289 = vld [vmem:[%s2 + $0x28] sm:$0xff]
      %v290 = vld [vmem:[%s2 + $0x30] sm:$0xff]
      %v291 = vld [vmem:[%s2 + $0x38] sm:$0xff]
      %v292 = vld [vmem:[%s2 + $0x40] sm:$0xff]
      %v293 = vld [vmem:[%s2 + $0x48] sm:$0xff]
      %v294 = vld [vmem:[%s2 + $0x50] sm:$0xff]
      %v295 = vld [vmem:[%s2 + $0x58] sm:$0xff]
      %v296 = vld [vmem:[%s2 + $0x60] sm:$0xff]
      %v297 = vld [vmem:[%s2 + $0x68] sm:$0xff]
      %v298 = vld [vmem:[%s2 + $0x70] sm:$0xff]
      %v299 = vld [vmem:[%s2 + $0x78] sm:$0xff]
      %301 = vset.pattern.permute.xlu0 0
      %302 = vperm.xlu0 %301, %v284
      %v303 = vpop.permute.xlu0 %302
      %306 = vset.pattern.permute.xlu0 0
      %307 = vperm.xlu0 %306, %v285
      %v308 = vpop.permute.xlu0 %307
      %311 = vset.pattern.permute.xlu0 0
      %312 = vperm.xlu0 %311, %v286
      %v313 = vpop.permute.xlu0 %312
      %316 = vset.pattern.permute.xlu0 0
      %317 = vperm.xlu0 %316, %v287
      %v318 = vpop.permute.xlu0 %317
      %321 = vset.pattern.permute.xlu0 0
      %322 = vperm.xlu0 %321, %v288
      %v323 = vpop.permute.xlu0 %322
      %326 = vset.pattern.permute.xlu0 0
      %327 = vperm.xlu0 %326, %v289
      %v328 = vpop.permute.xlu0 %327
      %331 = vset.pattern.permute.xlu0 0
      %332 = vperm.xlu0 %331, %v290
      %v333 = vpop.permute.xlu0 %332
      %336 = vset.pattern.permute.xlu0 0
      %337 = vperm.xlu0 %336, %v291
      %v338 = vpop.permute.xlu0 %337
      %341 = vset.pattern.permute.xlu0 0
      %342 = vperm.xlu0 %341, %v292
      %v343 = vpop.permute.xlu0 %342
      %346 = vset.pattern.permute.xlu0 0
      %347 = vperm.xlu0 %346, %v293
      %v348 = vpop.permute.xlu0 %347
      %351 = vset.pattern.permute.xlu0 0
      %352 = vperm.xlu0 %351, %v294
      %v353 = vpop.permute.xlu0 %352
      %356 = vset.pattern.permute.xlu0 0
      %357 = vperm.xlu0 %356, %v295
      %v358 = vpop.permute.xlu0 %357
      %361 = vset.pattern.permute.xlu0 0
      %362 = vperm.xlu0 %361, %v296
      %v363 = vpop.permute.xlu0 %362
      %366 = vset.pattern.permute.xlu0 0
      %367 = vperm.xlu0 %366, %v297
      %v368 = vpop.permute.xlu0 %367
      %371 = vset.pattern.permute.xlu0 0
      %372 = vperm.xlu0 %371, %v298
      %v373 = vpop.permute.xlu0 %372
      %376 = vset.pattern.permute.xlu0 0
      %377 = vperm.xlu0 %376, %v299
      %v378 = vpop.permute.xlu0 %377
      %vm380 = vcmask 64512
      %v382 = vsel %vm380, %v264, 0
      %v385 = vsel %vm380, %v265, 0
      %v388 = vsel %vm380, %v266, 0
      %v391 = vsel %vm380, %v267, 0
      %v394 = vsel %vm380, %v268, 0
      %v397 = vsel %vm380, %v269, 0
      %v400 = vsel %vm380, %v270, 0
      %v403 = vsel %vm380, %v271, 0
      %v406 = vsel %vm380, %v272, 0
      %v409 = vsel %vm380, %v273, 0
      %v412 = vsel %vm380, %v274, 0
      %v415 = vsel %vm380, %v275, 0
      %v418 = vsel %vm380, %v276, 0
      %v421 = vsel %vm380, %v277, 0
      %v424 = vsel %vm380, %v278, 0
      %v427 = vsel %vm380, %v279, 0
      %429 = vmatprep.subr.mxu0 %v281
      %430 = vmatpush1.msra.mxu0 %v280
      %431 = vmatprep.subr.mxu0 0.0
      %432 = vmatpush1.msra.mxu0 0.0
      %433 = vmatprep.subr.mxu0 0.0
      %434 = vmatpush1.msra.mxu0 0.0
      %435 = vmatprep.subr.mxu0 0.0
      %436 = vmatpush1.msra.mxu0 0.0
      %437 = vmatprep.subr.mxu0 0.0
      %438 = vmatpush1.msra.mxu0 0.0
      %439 = vmatprep.subr.mxu0 0.0
      %440 = vmatpush1.msra.mxu0 0.0
      %441 = vmatprep.subr.mxu0 0.0
      %442 = vmatpush1.msra.mxu0 0.0
      %443 = vmatprep.subr.mxu0 0.0
      %444 = vmatpush1.msra.mxu0 0.0
      %445 = vmatprep.subr.mxu0 0.0
      %446 = vmatpush1.msra.mxu0 0.0
      %447 = vmatprep.subr.mxu0 0.0
      %448 = vmatpush1.msra.mxu0 0.0
      %449 = vmatprep.subr.mxu0 0.0
      %450 = vmatpush1.msra.mxu0 0.0
      %451 = vmatprep.subr.mxu0 0.0
      %452 = vmatpush1.msra.mxu0 0.0
      %453 = vmatprep.subr.mxu0 0.0
      %454 = vmatpush1.msra.mxu0 0.0
      %455 = vmatprep.subr.mxu0 0.0
      %456 = vmatpush1.msra.mxu0 0.0
      %457 = vmatprep.subr.mxu0 0.0
      %458 = vmatpush1.msra.mxu0 0.0
      %459 = vmatprep.subr.mxu0 0.0
      %460 = vmatpush1.msra.mxu0 0.0
      %461 = vmatprep.subr.mxu0 0.0
      %462 = vmatpush1.msra.mxu0 0.0
      %463 = vmatprep.subr.mxu0 0.0
      %464 = vmatpush1.msra.mxu0 0.0
      %465 = vmatprep.subr.mxu0 0.0
      %466 = vmatpush1.msra.mxu0 0.0
      %467 = vmatprep.subr.mxu0 0.0
      %468 = vmatpush1.msra.mxu0 0.0
      %469 = vmatprep.subr.mxu0 0.0
      %470 = vmatpush1.msra.mxu0 0.0
      %471 = vmatprep.subr.mxu0 0.0
      %472 = vmatpush1.msra.mxu0 0.0
      %473 = vmatprep.subr.mxu0 0.0
      %474 = vmatpush1.msra.mxu0 0.0
      %475 = vmatprep.subr.mxu0 0.0
      %476 = vmatpush1.msra.mxu0 0.0
      %477 = vmatprep.subr.mxu0 0.0
      %478 = vmatpush1.msra.mxu0 0.0
      %479 = vmatprep.subr.mxu0 0.0
      %480 = vmatpush1.msra.mxu0 0.0
      %481 = vmatprep.subr.mxu0 0.0
      %482 = vmatpush1.msra.mxu0 0.0
      %483 = vmatprep.subr.mxu0 0.0
      %484 = vmatpush1.msra.mxu0 0.0
      %485 = vmatprep.subr.mxu0 0.0
      %486 = vmatpush1.msra.mxu0 0.0
      %487 = vmatprep.subr.mxu0 0.0
      %488 = vmatpush1.msra.mxu0 0.0
      %489 = vmatprep.subr.mxu0 0.0
      %490 = vmatpush1.msra.mxu0 0.0
      %491 = vmatprep.subr.mxu0 0.0
      %492 = vmatpush1.msra.mxu0 0.0
      %493 = vmatprep.mubr.f32.mxu0 0.0
      %494 = vmatmul.mubr.f32.gmra.mrb[0].mxu0 %v382
      %v495 = vpop.f32.mrb[0].mxu0
      %v496 = vadd.f32 %v303, %v495
      %v497 = vpop.f32.mrb[0].mxu0
      %v498 = vadd.f32 %v303, %v497
      %499 = vmatprep.mubr.f32.mxu0 0.0
      %500 = vmatmul.mubr.f32.gmra.mrb[0].mxu0 %v385
      %v501 = vpop.f32.mrb[0].mxu0
      %v502 = vadd.f32 %v308, %v501
      %v503 = vpop.f32.mrb[0].mxu0
      %v504 = vadd.f32 %v308, %v503
      %505 = vmatprep.mubr.f32.mxu0 0.0
      %506 = vmatmul.mubr.f32.gmra.mrb[0].mxu0 %v388
      %v507 = vpop.f32.mrb[0].mxu0
      %v508 = vadd.f32 %v313, %v507
      %v509 = vpop.f32.mrb[0].mxu0
      %v510 = vadd.f32 %v313, %v509
      %511 = vmatprep.mubr.f32.mxu0 0.0
      %512 = vmatmul.mubr.f32.gmra.mrb[0].mxu0 %v391
      %v513 = vpop.f32.mrb[0].mxu0
      %v514 = vadd.f32 %v318, %v513
      %v515 = vpop.f32.mrb[0].mxu0
      %v516 = vadd.f32 %v318, %v515
      %517 = vmatprep.mubr.f32.mxu0 0.0
      %518 = vmatmul.mubr.f32.gmra.mrb[0].mxu0 %v394
      %v519 = vpop.f32.mrb[0].mxu0
      %v520 = vadd.f32 %v323, %v519
      %v521 = vpop.f32.mrb[0].mxu0
      %v522 = vadd.f32 %v323, %v521
      %523 = vmatprep.mubr.f32.mxu0 0.0
      %524 = vmatmul.mubr.f32.gmra.mrb[0].mxu0 %v397
      %v525 = vpop.f32.mrb[0].mxu0
      %v526 = vadd.f32 %v328, %v525
      %v527 = vpop.f32.mrb[0].mxu0
      %v528 = vadd.f32 %v328, %v527
      %529 = vmatprep.mubr.f32.mxu0 0.0
      %530 = vmatmul.mubr.f32.gmra.mrb[0].mxu0 %v400
      %v531 = vpop.f32.mrb[0].mxu0
      %v532 = vadd.f32 %v333, %v531
      %v533 = vpop.f32.mrb[0].mxu0
      %v534 = vadd.f32 %v333, %v533
      %535 = vmatprep.mubr.f32.mxu0 0.0
      %536 = vmatmul.mubr.f32.gmra.mrb[0].mxu0 %v403
      %v537 = vpop.f32.mrb[0].mxu0
      %v538 = vadd.f32 %v338, %v537
      %v539 = vpop.f32.mrb[0].mxu0
      %v540 = vadd.f32 %v338, %v539
      %541 = vmatprep.mubr.f32.mxu0 0.0
      %542 = vmatmul.mubr.f32.gmra.mrb[0].mxu0 %v406
      %v543 = vpop.f32.mrb[0].mxu0
      %v544 = vadd.f32 %v343, %v543
      %v545 = vpop.f32.mrb[0].mxu0
      %v546 = vadd.f32 %v343, %v545
      %547 = vmatprep.mubr.f32.mxu0 0.0
      %548 = vmatmul.mubr.f32.gmra.mrb[0].mxu0 %v409
      %v549 = vpop.f32.mrb[0].mxu0
      %v550 = vadd.f32 %v348, %v549
      %v551 = vpop.f32.mrb[0].mxu0
      %v552 = vadd.f32 %v348, %v551
      %553 = vmatprep.mubr.f32.mxu0 0.0
      %554 = vmatmul.mubr.f32.gmra.mrb[0].mxu0 %v412
      %v555 = vpop.f32.mrb[0].mxu0
      %v556 = vadd.f32 %v353, %v555
      %v557 = vpop.f32.mrb[0].mxu0
      %v558 = vadd.f32 %v353, %v557
      %559 = vmatprep.mubr.f32.mxu0 0.0
      %560 = vmatmul.mubr.f32.gmra.mrb[0].mxu0 %v415
      %v561 = vpop.f32.mrb[0].mxu0
      %v562 = vadd.f32 %v358, %v561
      %v563 = vpop.f32.mrb[0].mxu0
      %v564 = vadd.f32 %v358, %v563
      %565 = vmatprep.mubr.f32.mxu0 0.0
      %566 = vmatmul.mubr.f32.gmra.mrb[0].mxu0 %v418
      %v567 = vpop.f32.mrb[0].mxu0
      %v568 = vadd.f32 %v363, %v567
      %v569 = vpop.f32.mrb[0].mxu0
      %v570 = vadd.f32 %v363, %v569
      %571 = vmatprep.mubr.f32.mxu0 0.0
      %572 = vmatmul.mubr.f32.gmra.mrb[0].mxu0 %v421
      %v573 = vpop.f32.mrb[0].mxu0
      %v574 = vadd.f32 %v368, %v573
      %v575 = vpop.f32.mrb[0].mxu0
      %v576 = vadd.f32 %v368, %v575
      %577 = vmatprep.mubr.f32.mxu0 0.0
      %578 = vmatmul.mubr.f32.gmra.mrb[0].mxu0 %v424
      %v579 = vpop.f32.mrb[0].mxu0
      %v580 = vadd.f32 %v373, %v579
      %v581 = vpop.f32.mrb[0].mxu0
      %v582 = vadd.f32 %v373, %v581
      %583 = vmatprep.mubr.f32.mxu0 0.0
      %584 = vmatmul.mubr.f32.gmra.mrb[0].mxu0 %v427
      %v585 = vpop.f32.mrb[0].mxu0
      %v586 = vadd.f32 %v378, %v585
      %v587 = vpop.f32.mrb[0].mxu0
      %v588 = vadd.f32 %v378, %v587
      %589 = vdwg.mxu0
      %590 = vmatprep.subr.mxu0 %v283
      %591 = vmatpush1.msra.mxu0 %v282
      %592 = vmatprep.subr.mxu0 0.0
      %593 = vmatpush1.msra.mxu0 0.0
      %594 = vmatprep.subr.mxu0 0.0
      %595 = vmatpush1.msra.mxu0 0.0
      %596 = vmatprep.subr.mxu0 0.0
      %597 = vmatpush1.msra.mxu0 0.0
      %598 = vmatprep.subr.mxu0 0.0
      %599 = vmatpush1.msra.mxu0 0.0
      %600 = vmatprep.subr.mxu0 0.0
      %601 = vmatpush1.msra.mxu0 0.0
      %602 = vmatprep.subr.mxu0 0.0
      %603 = vmatpush1.msra.mxu0 0.0
      %604 = vmatprep.subr.mxu0 0.0
      %605 = vmatpush1.msra.mxu0 0.0
      %606 = vmatprep.subr.mxu0 0.0
      %607 = vmatpush1.msra.mxu0 0.0
      %608 = vmatprep.subr.mxu0 0.0
      %609 = vmatpush1.msra.mxu0 0.0
      %610 = vmatprep.subr.mxu0 0.0
      %611 = vmatpush1.msra.mxu0 0.0
      %612 = vmatprep.subr.mxu0 0.0
      %613 = vmatpush1.msra.mxu0 0.0
      %614 = vmatprep.subr.mxu0 0.0
      %615 = vmatpush1.msra.mxu0 0.0
      %616 = vmatprep.subr.mxu0 0.0
      %617 = vmatpush1.msra.mxu0 0.0
      %618 = vmatprep.subr.mxu0 0.0
      %619 = vmatpush1.msra.mxu0 0.0
      %620 = vmatprep.subr.mxu0 0.0
      %621 = vmatpush1.msra.mxu0 0.0
      %622 = vmatprep.subr.mxu0 0.0
      %623 = vmatpush1.msra.mxu0 0.0
      %624 = vmatprep.subr.mxu0 0.0
      %625 = vmatpush1.msra.mxu0 0.0
      %626 = vmatprep.subr.mxu0 0.0
      %627 = vmatpush1.msra.mxu0 0.0
      %628 = vmatprep.subr.mxu0 0.0
      %629 = vmatpush1.msra.mxu0 0.0
      %630 = vmatprep.subr.mxu0 0.0
      %631 = vmatpush1.msra.mxu0 0.0
      %632 = vmatprep.subr.mxu0 0.0
      %633 = vmatpush1.msra.mxu0 0.0
      %634 = vmatprep.subr.mxu0 0.0
      %635 = vmatpush1.msra.mxu0 0.0
      %636 = vmatprep.subr.mxu0 0.0
      %637 = vmatpush1.msra.mxu0 0.0
      %638 = vmatprep.subr.mxu0 0.0
      %639 = vmatpush1.msra.mxu0 0.0
      %640 = vmatprep.subr.mxu0 0.0
      %641 = vmatpush1.msra.mxu0 0.0
      %642 = vmatprep.subr.mxu0 0.0
      %643 = vmatpush1.msra.mxu0 0.0
      %644 = vmatprep.subr.mxu0 0.0
      %645 = vmatpush1.msra.mxu0 0.0
      %646 = vmatprep.subr.mxu0 0.0
      %647 = vmatpush1.msra.mxu0 0.0
      %648 = vmatprep.subr.mxu0 0.0
      %649 = vmatpush1.msra.mxu0 0.0
      %650 = vmatprep.subr.mxu0 0.0
      %651 = vmatpush1.msra.mxu0 0.0
      %652 = vmatprep.subr.mxu0 0.0
      %653 = vmatpush1.msra.mxu0 0.0
      %654 = vmatprep.mubr.f32.mxu0 0.0
      %655 = vmatmul.mubr.f32.gmra.mrb[0].mxu0 %v382
      %v656 = vpop.f32.mrb[0].mxu0
      %v657 = vadd.f32 %v303, %v656
      %v658 = vpop.f32.mrb[0].mxu0
      %v659 = vadd.f32 %v303, %v658
      %660 = vmatprep.mubr.f32.mxu0 0.0
      %661 = vmatmul.mubr.f32.gmra.mrb[0].mxu0 %v385
      %v662 = vpop.f32.mrb[0].mxu0
      %v663 = vadd.f32 %v308, %v662
      %v664 = vpop.f32.mrb[0].mxu0
      %v665 = vadd.f32 %v308, %v664
      %666 = vmatprep.mubr.f32.mxu0 0.0
      %667 = vmatmul.mubr.f32.gmra.mrb[0].mxu0 %v388
      %v668 = vpop.f32.mrb[0].mxu0
      %v669 = vadd.f32 %v313, %v668
      %v670 = vpop.f32.mrb[0].mxu0
      %v671 = vadd.f32 %v313, %v670
      %672 = vmatprep.mubr.f32.mxu0 0.0
      %673 = vmatmul.mubr.f32.gmra.mrb[0].mxu0 %v391
      %v674 = vpop.f32.mrb[0].mxu0
      %v675 = vadd.f32 %v318, %v674
      %v676 = vpop.f32.mrb[0].mxu0
      %v677 = vadd.f32 %v318, %v676
      %678 = vmatprep.mubr.f32.mxu0 0.0
      %679 = vmatmul.mubr.f32.gmra.mrb[0].mxu0 %v394
      %v680 = vpop.f32.mrb[0].mxu0
      %v681 = vadd.f32 %v323, %v680
      %v682 = vpop.f32.mrb[0].mxu0
      %v683 = vadd.f32 %v323, %v682
      %684 = vmatprep.mubr.f32.mxu0 0.0
      %685 = vmatmul.mubr.f32.gmra.mrb[0].mxu0 %v397
      %v686 = vpop.f32.mrb[0].mxu0
      %v687 = vadd.f32 %v328, %v686
      %v688 = vpop.f32.mrb[0].mxu0
      %v689 = vadd.f32 %v328, %v688
      %690 = vmatprep.mubr.f32.mxu0 0.0
      %691 = vmatmul.mubr.f32.gmra.mrb[0].mxu0 %v400
      %v692 = vpop.f32.mrb[0].mxu0
      %v693 = vadd.f32 %v333, %v692
      %v694 = vpop.f32.mrb[0].mxu0
      %v695 = vadd.f32 %v333, %v694
      %696 = vmatprep.mubr.f32.mxu0 0.0
      %697 = vmatmul.mubr.f32.gmra.mrb[0].mxu0 %v403
      %v698 = vpop.f32.mrb[0].mxu0
      %v699 = vadd.f32 %v338, %v698
      %v700 = vpop.f32.mrb[0].mxu0
      %v701 = vadd.f32 %v338, %v700
      %702 = vmatprep.mubr.f32.mxu0 0.0
      %703 = vmatmul.mubr.f32.gmra.mrb[0].mxu0 %v406
      %v704 = vpop.f32.mrb[0].mxu0
      %v705 = vadd.f32 %v343, %v704
      %v706 = vpop.f32.mrb[0].mxu0
      %v707 = vadd.f32 %v343, %v706
      %708 = vmatprep.mubr.f32.mxu0 0.0
      %709 = vmatmul.mubr.f32.gmra.mrb[0].mxu0 %v409
      %v710 = vpop.f32.mrb[0].mxu0
      %v711 = vadd.f32 %v348, %v710
      %v712 = vpop.f32.mrb[0].mxu0
      %v713 = vadd.f32 %v348, %v712
      %714 = vmatprep.mubr.f32.mxu0 0.0
      %715 = vmatmul.mubr.f32.gmra.mrb[0].mxu0 %v412
      %v716 = vpop.f32.mrb[0].mxu0
      %v717 = vadd.f32 %v353, %v716
      %v718 = vpop.f32.mrb[0].mxu0
      %v719 = vadd.f32 %v353, %v718
      %720 = vmatprep.mubr.f32.mxu0 0.0
      %721 = vmatmul.mubr.f32.gmra.mrb[0].mxu0 %v415
      %v722 = vpop.f32.mrb[0].mxu0
      %v723 = vadd.f32 %v358, %v722
      %v724 = vpop.f32.mrb[0].mxu0
      %v725 = vadd.f32 %v358, %v724
      %726 = vmatprep.mubr.f32.mxu0 0.0
      %727 = vmatmul.mubr.f32.gmra.mrb[0].mxu0 %v418
      %v728 = vpop.f32.mrb[0].mxu0
      %v729 = vadd.f32 %v363, %v728
      %v730 = vpop.f32.mrb[0].mxu0
      %v731 = vadd.f32 %v363, %v730
      %732 = vmatprep.mubr.f32.mxu0 0.0
      %733 = vmatmul.mubr.f32.gmra.mrb[0].mxu0 %v421
      %v734 = vpop.f32.mrb[0].mxu0
      %v735 = vadd.f32 %v368, %v734
      %v736 = vpop.f32.mrb[0].mxu0
      %v737 = vadd.f32 %v368, %v736
      %738 = vmatprep.mubr.f32.mxu0 0.0
      %739 = vmatmul.mubr.f32.gmra.mrb[0].mxu0 %v424
      %v740 = vpop.f32.mrb[0].mxu0
      %v741 = vadd.f32 %v373, %v740
      %v742 = vpop.f32.mrb[0].mxu0
      %v743 = vadd.f32 %v373, %v742
      %744 = vmatprep.mubr.f32.mxu0 0.0
      %745 = vmatmul.mubr.f32.gmra.mrb[0].mxu0 %v427
      %v746 = vpop.f32.mrb[0].mxu0
      %v747 = vadd.f32 %v378, %v746
      %v748 = vpop.f32.mrb[0].mxu0
      %v749 = vadd.f32 %v378, %v748
      %750 = vdwg.mxu0
      %v751 = vmul.f32 %v496, 0.70710677
      %v752 = vmul.f32 %v498, 0.70710677
      %v753 = vmul.f32 %v657, 0.70710677
      %v754 = vmul.f32 %v659, 0.70710677
      %v755 = vmul.f32 %v502, 0.70710677
      %v756 = vmul.f32 %v504, 0.70710677
      %v757 = vmul.f32 %v663, 0.70710677
      %v758 = vmul.f32 %v665, 0.70710677
      %v759 = vmul.f32 %v508, 0.70710677
      %v760 = vmul.f32 %v510, 0.70710677
      %v761 = vmul.f32 %v669, 0.70710677
      %v762 = vmul.f32 %v671, 0.70710677
      %v763 = vmul.f32 %v514, 0.70710677
      %v764 = vmul.f32 %v516, 0.70710677
      %v765 = vmul.f32 %v675, 0.70710677
      %v766 = vmul.f32 %v677, 0.70710677
      %v767 = vmul.f32 %v520, 0.70710677
      %v768 = vmul.f32 %v522, 0.70710677
      %v769 = vmul.f32 %v681, 0.70710677
      %v770 = vmul.f32 %v683, 0.70710677
      %v771 = vmul.f32 %v526, 0.70710677
      %v772 = vmul.f32 %v528, 0.70710677
      %v773 = vmul.f32 %v687, 0.70710677
      %v774 = vmul.f32 %v689, 0.70710677
      %v775 = vmul.f32 %v532, 0.70710677
      %v776 = vmul.f32 %v534, 0.70710677
      %v777 = vmul.f32 %v693, 0.70710677
      %v778 = vmul.f32 %v695, 0.70710677
      %v779 = vmul.f32 %v538, 0.70710677
      %v780 = vmul.f32 %v540, 0.70710677
      %v781 = vmul.f32 %v699, 0.70710677
      %v782 = vmul.f32 %v701, 0.70710677
      %v783 = vmul.f32 %v544, 0.70710677
      %v784 = vmul.f32 %v546, 0.70710677
      %v785 = vmul.f32 %v705, 0.70710677
      %v786 = vmul.f32 %v707, 0.70710677
      %v787 = vmul.f32 %v550, 0.70710677
      %v788 = vmul.f32 %v552, 0.70710677
      %v789 = vmul.f32 %v711, 0.70710677
      %v790 = vmul.f32 %v713, 0.70710677
      %v791 = vmul.f32 %v556, 0.70710677
      %v792 = vmul.f32 %v558, 0.70710677
      %v793 = vmul.f32 %v717, 0.70710677
      %v794 = vmul.f32 %v719, 0.70710677
      %v795 = vmul.f32 %v562, 0.70710677
      %v796 = vmul.f32 %v564, 0.70710677
      %v797 = vmul.f32 %v723, 0.70710677
      %v798 = vmul.f32 %v725, 0.70710677
      %v799 = vmul.f32 %v568, 0.70710677
      %v800 = vmul.f32 %v570, 0.70710677
      %v801 = vmul.f32 %v729, 0.70710677
      %v802 = vmul.f32 %v731, 0.70710677
      %v803 = vmul.f32 %v574, 0.70710677
      %v804 = vmul.f32 %v576, 0.70710677
      %v805 = vmul.f32 %v735, 0.70710677
      %v806 = vmul.f32 %v737, 0.70710677
      %v807 = vmul.f32 %v580, 0.70710677
      %v808 = vmul.f32 %v582, 0.70710677
      %v809 = vmul.f32 %v741, 0.70710677
      %v810 = vmul.f32 %v743, 0.70710677
      %v811 = vmul.f32 %v586, 0.70710677
      %v812 = vmul.f32 %v588, 0.70710677
      %v813 = vmul.f32 %v747, 0.70710677
      %v814 = vmul.f32 %v749, 0.70710677
      %v815 = vand.u32 2147483647, %v751
      %v816 = vand.u32 2147483647, %v752
      %v817 = vand.u32 2147483647, %v753
      %v818 = vand.u32 2147483647, %v754
      %v819 = vand.u32 2147483647, %v755
      %v820 = vand.u32 2147483647, %v756
      %v821 = vand.u32 2147483647, %v757
      %v822 = vand.u32 2147483647, %v758
      %v823 = vand.u32 2147483647, %v759
      %v824 = vand.u32 2147483647, %v760
      %v825 = vand.u32 2147483647, %v761
      %v826 = vand.u32 2147483647, %v762
      %v827 = vand.u32 2147483647, %v763
      %v828 = vand.u32 2147483647, %v764
      %v829 = vand.u32 2147483647, %v765
      %v830 = vand.u32 2147483647, %v766
      %v831 = vand.u32 2147483647, %v767
      %v832 = vand.u32 2147483647, %v768
      %v833 = vand.u32 2147483647, %v769
      %v834 = vand.u32 2147483647, %v770
      %v835 = vand.u32 2147483647, %v771
      %v836 = vand.u32 2147483647, %v772
      %v837 = vand.u32 2147483647, %v773
      %v838 = vand.u32 2147483647, %v774
      %v839 = vand.u32 2147483647, %v775
      %v840 = vand.u32 2147483647, %v776
      %v841 = vand.u32 2147483647, %v777
      %v842 = vand.u32 2147483647, %v778
      %v843 = vand.u32 2147483647, %v779
      %v844 = vand.u32 2147483647, %v780
      %v845 = vand.u32 2147483647, %v781
      %v846 = vand.u32 2147483647, %v782
      %v847 = vand.u32 2147483647, %v783
      %v848 = vand.u32 2147483647, %v784
      %v849 = vand.u32 2147483647, %v785
      %v850 = vand.u32 2147483647, %v786
      %v851 = vand.u32 2147483647, %v787
      %v852 = vand.u32 2147483647, %v788
      %v853 = vand.u32 2147483647, %v789
      %v854 = vand.u32 2147483647, %v790
      %v855 = vand.u32 2147483647, %v791
      %v856 = vand.u32 2147483647, %v792
      %v857 = vand.u32 2147483647, %v793
      %v858 = vand.u32 2147483647, %v794
      %v859 = vand.u32 2147483647, %v795
      %v860 = vand.u32 2147483647, %v796
      %v861 = vand.u32 2147483647, %v797
      %v862 = vand.u32 2147483647, %v798
      %v863 = vand.u32 2147483647, %v799
      %v864 = vand.u32 2147483647, %v800
      %v865 = vand.u32 2147483647, %v801
      %v866 = vand.u32 2147483647, %v802
      %v867 = vand.u32 2147483647, %v803
      %v868 = vand.u32 2147483647, %v804
      %v869 = vand.u32 2147483647, %v805
      %v870 = vand.u32 2147483647, %v806
      %v871 = vand.u32 2147483647, %v807
      %v872 = vand.u32 2147483647, %v808
      %v873 = vand.u32 2147483647, %v809
      %v874 = vand.u32 2147483647, %v810
      %v875 = vand.u32 2147483647, %v811
      %v876 = vand.u32 2147483647, %v812
      %v877 = vand.u32 2147483647, %v813
      %v878 = vand.u32 2147483647, %v814
      %v879 = vmul.f32 %v815, 0.3275911
      %v880 = vmul.f32 %v816, 0.3275911
      %v881 = vmul.f32 %v817, 0.3275911
      %v882 = vmul.f32 %v818, 0.3275911
      %v883 = vmul.f32 %v819, 0.3275911
      %v884 = vmul.f32 %v820, 0.3275911
      %v885 = vmul.f32 %v821, 0.3275911
      %v886 = vmul.f32 %v822, 0.3275911
      %v887 = vmul.f32 %v823, 0.3275911
      %v888 = vmul.f32 %v824, 0.3275911
      %v889 = vmul.f32 %v825, 0.3275911
      %v890 = vmul.f32 %v826, 0.3275911
      %v891 = vmul.f32 %v827, 0.3275911
      %v892 = vmul.f32 %v828, 0.3275911
      %v893 = vmul.f32 %v829, 0.3275911
      %v894 = vmul.f32 %v830, 0.3275911
      %v895 = vmul.f32 %v831, 0.3275911
      %v896 = vmul.f32 %v832, 0.3275911
      %v897 = vmul.f32 %v833, 0.3275911
      %v898 = vmul.f32 %v834, 0.3275911
      %v899 = vmul.f32 %v835, 0.3275911
      %v900 = vmul.f32 %v836, 0.3275911
      %v901 = vmul.f32 %v837, 0.3275911
      %v902 = vmul.f32 %v838, 0.3275911
      %v903 = vmul.f32 %v839, 0.3275911
      %v904 = vmul.f32 %v840, 0.3275911
      %v905 = vmul.f32 %v841, 0.3275911
      %v906 = vmul.f32 %v842, 0.3275911
      %v907 = vmul.f32 %v843, 0.3275911
      %v908 = vmul.f32 %v844, 0.3275911
      %v909 = vmul.f32 %v845, 0.3275911
      %v910 = vmul.f32 %v846, 0.3275911
      %v911 = vmul.f32 %v847, 0.3275911
      %v912 = vmul.f32 %v848, 0.3275911
      %v913 = vmul.f32 %v849, 0.3275911
      %v914 = vmul.f32 %v850, 0.3275911
      %v915 = vmul.f32 %v851, 0.3275911
      %v916 = vmul.f32 %v852, 0.3275911
      %v917 = vmul.f32 %v853, 0.3275911
      %v918 = vmul.f32 %v854, 0.3275911
      %v919 = vmul.f32 %v855, 0.3275911
      %v920 = vmul.f32 %v856, 0.3275911
      %v921 = vmul.f32 %v857, 0.3275911
      %v922 = vmul.f32 %v858, 0.3275911
      %v923 = vmul.f32 %v859, 0.3275911
      %v924 = vmul.f32 %v860, 0.3275911
      %v925 = vmul.f32 %v861, 0.3275911
      %v926 = vmul.f32 %v862, 0.3275911
      %v927 = vmul.f32 %v863, 0.3275911
      %v928 = vmul.f32 %v864, 0.3275911
      %v929 = vmul.f32 %v865, 0.3275911
      %v930 = vmul.f32 %v866, 0.3275911
      %v931 = vmul.f32 %v867, 0.3275911
      %v932 = vmul.f32 %v868, 0.3275911
      %v933 = vmul.f32 %v869, 0.3275911
      %v934 = vmul.f32 %v870, 0.3275911
      %v935 = vmul.f32 %v871, 0.3275911
      %v936 = vmul.f32 %v872, 0.3275911
      %v937 = vmul.f32 %v873, 0.3275911
      %v938 = vmul.f32 %v874, 0.3275911
      %v939 = vmul.f32 %v875, 0.3275911
      %v940 = vmul.f32 %v876, 0.3275911
      %v941 = vmul.f32 %v877, 0.3275911
      %v942 = vmul.f32 %v878, 0.3275911
      %v943 = vadd.f32 %v879, 1.0
      %v944 = vadd.f32 %v880, 1.0
      %v945 = vadd.f32 %v881, 1.0
      %v946 = vadd.f32 %v882, 1.0
      %v947 = vadd.f32 %v883, 1.0
      %v948 = vadd.f32 %v884, 1.0
      %v949 = vadd.f32 %v885, 1.0
      %v950 = vadd.f32 %v886, 1.0
      %v951 = vadd.f32 %v887, 1.0
      %v952 = vadd.f32 %v888, 1.0
      %v953 = vadd.f32 %v889, 1.0
      %v954 = vadd.f32 %v890, 1.0
      %v955 = vadd.f32 %v891, 1.0
      %v956 = vadd.f32 %v892, 1.0
      %v957 = vadd.f32 %v893, 1.0
      %v958 = vadd.f32 %v894, 1.0
      %v959 = vadd.f32 %v895, 1.0
      %v960 = vadd.f32 %v896, 1.0
      %v961 = vadd.f32 %v897, 1.0
      %v962 = vadd.f32 %v898, 1.0
      %v963 = vadd.f32 %v899, 1.0
      %v964 = vadd.f32 %v900, 1.0
      %v965 = vadd.f32 %v901, 1.0
      %v966 = vadd.f32 %v902, 1.0
      %v967 = vadd.f32 %v903, 1.0
      %v968 = vadd.f32 %v904, 1.0
      %v969 = vadd.f32 %v905, 1.0
      %v970 = vadd.f32 %v906, 1.0
      %v971 = vadd.f32 %v907, 1.0
      %v972 = vadd.f32 %v908, 1.0
      %v973 = vadd.f32 %v909, 1.0
      %v974 = vadd.f32 %v910, 1.0
      %v975 = vadd.f32 %v911, 1.0
      %v976 = vadd.f32 %v912, 1.0
      %v977 = vadd.f32 %v913, 1.0
      %v978 = vadd.f32 %v914, 1.0
      %v979 = vadd.f32 %v915, 1.0
      %v980 = vadd.f32 %v916, 1.0
      %v981 = vadd.f32 %v917, 1.0
      %v982 = vadd.f32 %v918, 1.0
      %v983 = vadd.f32 %v919, 1.0
      %v984 = vadd.f32 %v920, 1.0
      %v985 = vadd.f32 %v921, 1.0
      %v986 = vadd.f32 %v922, 1.0
      %v987 = vadd.f32 %v923, 1.0
      %v988 = vadd.f32 %v924, 1.0
      %v989 = vadd.f32 %v925, 1.0
      %v990 = vadd.f32 %v926, 1.0
      %v991 = vadd.f32 %v927, 1.0
      %v992 = vadd.f32 %v928, 1.0
      %v993 = vadd.f32 %v929, 1.0
      %v994 = vadd.f32 %v930, 1.0
      %v995 = vadd.f32 %v931, 1.0
      %v996 = vadd.f32 %v932, 1.0
      %v997 = vadd.f32 %v933, 1.0
      %v998 = vadd.f32 %v934, 1.0
      %v999 = vadd.f32 %v935, 1.0
      %v1000 = vadd.f32 %v936, 1.0
      %v1001 = vadd.f32 %v937, 1.0
      %v1002 = vadd.f32 %v938, 1.0
      %v1003 = vadd.f32 %v939, 1.0
      %v1004 = vadd.f32 %v940, 1.0
      %v1005 = vadd.f32 %v941, 1.0
      %v1006 = vadd.f32 %v942, 1.0
      %v1007 = vrcp.pop %v943
      %v1008 = vrcp.pop %v944
      %v1009 = vrcp.pop %v945
      %v1010 = vrcp.pop %v946
      %v1011 = vrcp.pop %v947
      %v1012 = vrcp.pop %v948
      %v1013 = vrcp.pop %v949
      %v1014 = vrcp.pop %v950
      %v1015 = vrcp.pop %v951
      %v1016 = vrcp.pop %v952
      %v1017 = vrcp.pop %v953
      %v1018 = vrcp.pop %v954
      %v1019 = vrcp.pop %v955
      %v1020 = vrcp.pop %v956
      %v1021 = vrcp.pop %v957
      %v1022 = vrcp.pop %v958
      %v1023 = vrcp.pop %v959
      %v1024 = vrcp.pop %v960
      %v1025 = vrcp.pop %v961
      %v1026 = vrcp.pop %v962
      %v1027 = vrcp.pop %v963
      %v1028 = vrcp.pop %v964
      %v1029 = vrcp.pop %v965
      %v1030 = vrcp.pop %v966
      %v1031 = vrcp.pop %v967
      %v1032 = vrcp.pop %v968
      %v1033 = vrcp.pop %v969
      %v1034 = vrcp.pop %v970
      %v1035 = vrcp.pop %v971
      %v1036 = vrcp.pop %v972
      %v1037 = vrcp.pop %v973
      %v1038 = vrcp.pop %v974
      %v1039 = vrcp.pop %v975
      %v1040 = vrcp.pop %v976
      %v1041 = vrcp.pop %v977
      %v1042 = vrcp.pop %v978
      %v1043 = vrcp.pop %v979
      %v1044 = vrcp.pop %v980
      %v1045 = vrcp.pop %v981
      %v1046 = vrcp.pop %v982
      %v1047 = vrcp.pop %v983
      %v1048 = vrcp.pop %v984
      %v1049 = vrcp.pop %v985
      %v1050 = vrcp.pop %v986
      %v1051 = vrcp.pop %v987
      %v1052 = vrcp.pop %v988
      %v1053 = vrcp.pop %v989
      %v1054 = vrcp.pop %v990
      %v1055 = vrcp.pop %v991
      %v1056 = vrcp.pop %v992
      %v1057 = vrcp.pop %v993
      %v1058 = vrcp.pop %v994
      %v1059 = vrcp.pop %v995
      %v1060 = vrcp.pop %v996
      %v1061 = vrcp.pop %v997
      %v1062 = vrcp.pop %v998
      %v1063 = vrcp.pop %v999
      %v1064 = vrcp.pop %v1000
      %v1065 = vrcp.pop %v1001
      %v1066 = vrcp.pop %v1002
      %v1067 = vrcp.pop %v1003
      %v1068 = vrcp.pop %v1004
      %v1069 = vrcp.pop %v1005
      %v1070 = vrcp.pop %v1006
      %v1071 = vmul.f32 %v943, %v1007
      %v1072 = vmul.f32 %v944, %v1008
      %v1073 = vmul.f32 %v945, %v1009
      %v1074 = vmul.f32 %v946, %v1010
      %v1075 = vmul.f32 %v947, %v1011
      %v1076 = vmul.f32 %v948, %v1012
      %v1077 = vmul.f32 %v949, %v1013
      %v1078 = vmul.f32 %v950, %v1014
      %v1079 = vmul.f32 %v951, %v1015
      %v1080 = vmul.f32 %v952, %v1016
      %v1081 = vmul.f32 %v953, %v1017
      %v1082 = vmul.f32 %v954, %v1018
      %v1083 = vmul.f32 %v955, %v1019
      %v1084 = vmul.f32 %v956, %v1020
      %v1085 = vmul.f32 %v957, %v1021
      %v1086 = vmul.f32 %v958, %v1022
      %v1087 = vmul.f32 %v959, %v1023
      %v1088 = vmul.f32 %v960, %v1024
      %v1089 = vmul.f32 %v961, %v1025
      %v1090 = vmul.f32 %v962, %v1026
      %v1091 = vmul.f32 %v963, %v1027
      %v1092 = vmul.f32 %v964, %v1028
      %v1093 = vmul.f32 %v965, %v1029
      %v1094 = vmul.f32 %v966, %v1030
      %v1095 = vmul.f32 %v967, %v1031
      %v1096 = vmul.f32 %v968, %v1032
      %v1097 = vmul.f32 %v969, %v1033
      %v1098 = vmul.f32 %v970, %v1034
      %v1099 = vmul.f32 %v971, %v1035
      %v1100 = vmul.f32 %v972, %v1036
      %v1101 = vmul.f32 %v973, %v1037
      %v1102 = vmul.f32 %v974, %v1038
      %v1103 = vmul.f32 %v975, %v1039
      %v1104 = vmul.f32 %v976, %v1040
      %v1105 = vmul.f32 %v977, %v1041
      %v1106 = vmul.f32 %v978, %v1042
      %v1107 = vmul.f32 %v979, %v1043
      %v1108 = vmul.f32 %v980, %v1044
      %v1109 = vmul.f32 %v981, %v1045
      %v1110 = vmul.f32 %v982, %v1046
      %v1111 = vmul.f32 %v983, %v1047
      %v1112 = vmul.f32 %v984, %v1048
      %v1113 = vmul.f32 %v985, %v1049
      %v1114 = vmul.f32 %v986, %v1050
      %v1115 = vmul.f32 %v987, %v1051
      %v1116 = vmul.f32 %v988, %v1052
      %v1117 = vmul.f32 %v989, %v1053
      %v1118 = vmul.f32 %v990, %v1054
      %v1119 = vmul.f32 %v991, %v1055
      %v1120 = vmul.f32 %v992, %v1056
      %v1121 = vmul.f32 %v993, %v1057
      %v1122 = vmul.f32 %v994, %v1058
      %v1123 = vmul.f32 %v995, %v1059
      %v1124 = vmul.f32 %v996, %v1060
      %v1125 = vmul.f32 %v997, %v1061
      %v1126 = vmul.f32 %v998, %v1062
      %v1127 = vmul.f32 %v999, %v1063
      %v1128 = vmul.f32 %v1000, %v1064
      %v1129 = vmul.f32 %v1001, %v1065
      %v1130 = vmul.f32 %v1002, %v1066
      %v1131 = vmul.f32 %v1003, %v1067
      %v1132 = vmul.f32 %v1004, %v1068
      %v1133 = vmul.f32 %v1005, %v1069
      %v1134 = vmul.f32 %v1006, %v1070
      %v1135 = vsub.f32 2.0, %v1071
      %v1136 = vsub.f32 2.0, %v1072
      %v1137 = vsub.f32 2.0, %v1073
      %v1138 = vsub.f32 2.0, %v1074
      %v1139 = vsub.f32 2.0, %v1075
      %v1140 = vsub.f32 2.0, %v1076
      %v1141 = vsub.f32 2.0, %v1077
      %v1142 = vsub.f32 2.0, %v1078
      %v1143 = vsub.f32 2.0, %v1079
      %v1144 = vsub.f32 2.0, %v1080
      %v1145 = vsub.f32 2.0, %v1081
      %v1146 = vsub.f32 2.0, %v1082
      %v1147 = vsub.f32 2.0, %v1083
      %v1148 = vsub.f32 2.0, %v1084
      %v1149 = vsub.f32 2.0, %v1085
      %v1150 = vsub.f32 2.0, %v1086
      %v1151 = vsub.f32 2.0, %v1087
      %v1152 = vsub.f32 2.0, %v1088
      %v1153 = vsub.f32 2.0, %v1089
      %v1154 = vsub.f32 2.0, %v1090
      %v1155 = vsub.f32 2.0, %v1091
      %v1156 = vsub.f32 2.0, %v1092
      %v1157 = vsub.f32 2.0, %v1093
      %v1158 = vsub.f32 2.0, %v1094
      %v1159 = vsub.f32 2.0, %v1095
      %v1160 = vsub.f32 2.0, %v1096
      %v1161 = vsub.f32 2.0, %v1097
      %v1162 = vsub.f32 2.0, %v1098
      %v1163 = vsub.f32 2.0, %v1099
      %v1164 = vsub.f32 2.0, %v1100
      %v1165 = vsub.f32 2.0, %v1101
      %v1166 = vsub.f32 2.0, %v1102
      %v1167 = vsub.f32 2.0, %v1103
      %v1168 = vsub.f32 2.0, %v1104
      %v1169 = vsub.f32 2.0, %v1105
      %v1170 = vsub.f32 2.0, %v1106
      %v1171 = vsub.f32 2.0, %v1107
      %v1172 = vsub.f32 2.0, %v1108
      %v1173 = vsub.f32 2.0, %v1109
      %v1174 = vsub.f32 2.0, %v1110
      %v1175 = vsub.f32 2.0, %v1111
      %v1176 = vsub.f32 2.0, %v1112
      %v1177 = vsub.f32 2.0, %v1113
      %v1178 = vsub.f32 2.0, %v1114
      %v1179 = vsub.f32 2.0, %v1115
      %v1180 = vsub.f32 2.0, %v1116
      %v1181 = vsub.f32 2.0, %v1117
      %v1182 = vsub.f32 2.0, %v1118
      %v1183 = vsub.f32 2.0, %v1119
      %v1184 = vsub.f32 2.0, %v1120
      %v1185 = vsub.f32 2.0, %v1121
      %v1186 = vsub.f32 2.0, %v1122
      %v1187 = vsub.f32 2.0, %v1123
      %v1188 = vsub.f32 2.0, %v1124
      %v1189 = vsub.f32 2.0, %v1125
      %v1190 = vsub.f32 2.0, %v1126
      %v1191 = vsub.f32 2.0, %v1127
      %v1192 = vsub.f32 2.0, %v1128
      %v1193 = vsub.f32 2.0, %v1129
      %v1194 = vsub.f32 2.0, %v1130
      %v1195 = vsub.f32 2.0, %v1131
      %v1196 = vsub.f32 2.0, %v1132
      %v1197 = vsub.f32 2.0, %v1133
      %v1198 = vsub.f32 2.0, %v1134
      %v1199 = vmul.f32 %v1007, %v1135
      %v1200 = vmul.f32 %v1008, %v1136
      %v1201 = vmul.f32 %v1009, %v1137
      %v1202 = vmul.f32 %v1010, %v1138
      %v1203 = vmul.f32 %v1011, %v1139
      %v1204 = vmul.f32 %v1012, %v1140
      %v1205 = vmul.f32 %v1013, %v1141
      %v1206 = vmul.f32 %v1014, %v1142
      %v1207 = vmul.f32 %v1015, %v1143
      %v1208 = vmul.f32 %v1016, %v1144
      %v1209 = vmul.f32 %v1017, %v1145
      %v1210 = vmul.f32 %v1018, %v1146
      %v1211 = vmul.f32 %v1019, %v1147
      %v1212 = vmul.f32 %v1020, %v1148
      %v1213 = vmul.f32 %v1021, %v1149
      %v1214 = vmul.f32 %v1022, %v1150
      %v1215 = vmul.f32 %v1023, %v1151
      %v1216 = vmul.f32 %v1024, %v1152
      %v1217 = vmul.f32 %v1025, %v1153
      %v1218 = vmul.f32 %v1026, %v1154
      %v1219 = vmul.f32 %v1027, %v1155
      %v1220 = vmul.f32 %v1028, %v1156
      %v1221 = vmul.f32 %v1029, %v1157
      %v1222 = vmul.f32 %v1030, %v1158
      %v1223 = vmul.f32 %v1031, %v1159
      %v1224 = vmul.f32 %v1032, %v1160
      %v1225 = vmul.f32 %v1033, %v1161
      %v1226 = vmul.f32 %v1034, %v1162
      %v1227 = vmul.f32 %v1035, %v1163
      %v1228 = vmul.f32 %v1036, %v1164
      %v1229 = vmul.f32 %v1037, %v1165
      %v1230 = vmul.f32 %v1038, %v1166
      %v1231 = vmul.f32 %v1039, %v1167
      %v1232 = vmul.f32 %v1040, %v1168
      %v1233 = vmul.f32 %v1041, %v1169
      %v1234 = vmul.f32 %v1042, %v1170
      %v1235 = vmul.f32 %v1043, %v1171
      %v1236 = vmul.f32 %v1044, %v1172
      %v1237 = vmul.f32 %v1045, %v1173
      %v1238 = vmul.f32 %v1046, %v1174
      %v1239 = vmul.f32 %v1047, %v1175
      %v1240 = vmul.f32 %v1048, %v1176
      %v1241 = vmul.f32 %v1049, %v1177
      %v1242 = vmul.f32 %v1050, %v1178
      %v1243 = vmul.f32 %v1051, %v1179
      %v1244 = vmul.f32 %v1052, %v1180
      %v1245 = vmul.f32 %v1053, %v1181
      %v1246 = vmul.f32 %v1054, %v1182
      %v1247 = vmul.f32 %v1055, %v1183
      %v1248 = vmul.f32 %v1056, %v1184
      %v1249 = vmul.f32 %v1057, %v1185
      %v1250 = vmul.f32 %v1058, %v1186
      %v1251 = vmul.f32 %v1059, %v1187
      %v1252 = vmul.f32 %v1060, %v1188
      %v1253 = vmul.f32 %v1061, %v1189
      %v1254 = vmul.f32 %v1062, %v1190
      %v1255 = vmul.f32 %v1063, %v1191
      %v1256 = vmul.f32 %v1064, %v1192
      %v1257 = vmul.f32 %v1065, %v1193
      %v1258 = vmul.f32 %v1066, %v1194
      %v1259 = vmul.f32 %v1067, %v1195
      %v1260 = vmul.f32 %v1068, %v1196
      %v1261 = vmul.f32 %v1069, %v1197
      %v1262 = vmul.f32 %v1070, %v1198
      %v1263 = vmul.f32 %v1199, 1.0614054
      %v1264 = vmul.f32 %v1200, 1.0614054
      %v1265 = vmul.f32 %v1201, 1.0614054
      %v1266 = vmul.f32 %v1202, 1.0614054
      %v1267 = vmul.f32 %v1203, 1.0614054
      %v1268 = vmul.f32 %v1204, 1.0614054
      %v1269 = vmul.f32 %v1205, 1.0614054
      %v1270 = vmul.f32 %v1206, 1.0614054
      %v1271 = vmul.f32 %v1207, 1.0614054
      %v1272 = vmul.f32 %v1208, 1.0614054
      %v1273 = vmul.f32 %v1209, 1.0614054
      %v1274 = vmul.f32 %v1210, 1.0614054
      %v1275 = vmul.f32 %v1211, 1.0614054
      %v1276 = vmul.f32 %v1212, 1.0614054
      %v1277 = vmul.f32 %v1213, 1.0614054
      %v1278 = vmul.f32 %v1214, 1.0614054
      %v1279 = vmul.f32 %v1215, 1.0614054
      %v1280 = vmul.f32 %v1216, 1.0614054
      %v1281 = vmul.f32 %v1217, 1.0614054
      %v1282 = vmul.f32 %v1218, 1.0614054
      %v1283 = vmul.f32 %v1219, 1.0614054
      %v1284 = vmul.f32 %v1220, 1.0614054
      %v1285 = vmul.f32 %v1221, 1.0614054
      %v1286 = vmul.f32 %v1222, 1.0614054
      %v1287 = vmul.f32 %v1223, 1.0614054
      %v1288 = vmul.f32 %v1224, 1.0614054
      %v1289 = vmul.f32 %v1225, 1.0614054
      %v1290 = vmul.f32 %v1226, 1.0614054
      %v1291 = vmul.f32 %v1227, 1.0614054
      %v1292 = vmul.f32 %v1228, 1.0614054
      %v1293 = vmul.f32 %v1229, 1.0614054
      %v1294 = vmul.f32 %v1230, 1.0614054
      %v1295 = vmul.f32 %v1231, 1.0614054
      %v1296 = vmul.f32 %v1232, 1.0614054
      %v1297 = vmul.f32 %v1233, 1.0614054
      %v1298 = vmul.f32 %v1234, 1.0614054
      %v1299 = vmul.f32 %v1235, 1.0614054
      %v1300 = vmul.f32 %v1236, 1.0614054
      %v1301 = vmul.f32 %v1237, 1.0614054
      %v1302 = vmul.f32 %v1238, 1.0614054
      %v1303 = vmul.f32 %v1239, 1.0614054
      %v1304 = vmul.f32 %v1240, 1.0614054
      %v1305 = vmul.f32 %v1241, 1.0614054
      %v1306 = vmul.f32 %v1242, 1.0614054
      %v1307 = vmul.f32 %v1243, 1.0614054
      %v1308 = vmul.f32 %v1244, 1.0614054
      %v1309 = vmul.f32 %v1245, 1.0614054
      %v1310 = vmul.f32 %v1246, 1.0614054
      %v1311 = vmul.f32 %v1247, 1.0614054
      %v1312 = vmul.f32 %v1248, 1.0614054
      %v1313 = vmul.f32 %v1249, 1.0614054
      %v1314 = vmul.f32 %v1250, 1.0614054
      %v1315 = vmul.f32 %v1251, 1.0614054
      %v1316 = vmul.f32 %v1252, 1.0614054
      %v1317 = vmul.f32 %v1253, 1.0614054
      %v1318 = vmul.f32 %v1254, 1.0614054
      %v1319 = vmul.f32 %v1255, 1.0614054
      %v1320 = vmul.f32 %v1256, 1.0614054
      %v1321 = vmul.f32 %v1257, 1.0614054
      %v1322 = vmul.f32 %v1258, 1.0614054
      %v1323 = vmul.f32 %v1259, 1.0614054
      %v1324 = vmul.f32 %v1260, 1.0614054
      %v1325 = vmul.f32 %v1261, 1.0614054
      %v1326 = vmul.f32 %v1262, 1.0614054
      %v1327 = vsub.f32 %v1263, 1.4531521
      %v1328 = vsub.f32 %v1264, 1.4531521
      %v1329 = vsub.f32 %v1265, 1.4531521
      %v1330 = vsub.f32 %v1266, 1.4531521
      %v1331 = vsub.f32 %v1267, 1.4531521
      %v1332 = vsub.f32 %v1268, 1.4531521
      %v1333 = vsub.f32 %v1269, 1.4531521
      %v1334 = vsub.f32 %v1270, 1.4531521
      %v1335 = vsub.f32 %v1271, 1.4531521
      %v1336 = vsub.f32 %v1272, 1.4531521
      %v1337 = vsub.f32 %v1273, 1.4531521
      %v1338 = vsub.f32 %v1274, 1.4531521
      %v1339 = vsub.f32 %v1275, 1.4531521
      %v1340 = vsub.f32 %v1276, 1.4531521
      %v1341 = vsub.f32 %v1277, 1.4531521
      %v1342 = vsub.f32 %v1278, 1.4531521
      %v1343 = vsub.f32 %v1279, 1.4531521
      %v1344 = vsub.f32 %v1280, 1.4531521
      %v1345 = vsub.f32 %v1281, 1.4531521
      %v1346 = vsub.f32 %v1282, 1.4531521
      %v1347 = vsub.f32 %v1283, 1.4531521
      %v1348 = vsub.f32 %v1284, 1.4531521
      %v1349 = vsub.f32 %v1285, 1.4531521
      %v1350 = vsub.f32 %v1286, 1.4531521
      %v1351 = vsub.f32 %v1287, 1.4531521
      %v1352 = vsub.f32 %v1288, 1.4531521
      %v1353 = vsub.f32 %v1289, 1.4531521
      %v1354 = vsub.f32 %v1290, 1.4531521
      %v1355 = vsub.f32 %v1291, 1.4531521
      %v1356 = vsub.f32 %v1292, 1.4531521
      %v1357 = vsub.f32 %v1293, 1.4531521
      %v1358 = vsub.f32 %v1294, 1.4531521
      %v1359 = vsub.f32 %v1295, 1.4531521
      %v1360 = vsub.f32 %v1296, 1.4531521
      %v1361 = vsub.f32 %v1297, 1.4531521
      %v1362 = vsub.f32 %v1298, 1.4531521
      %v1363 = vsub.f32 %v1299, 1.4531521
      %v1364 = vsub.f32 %v1300, 1.4531521
      %v1365 = vsub.f32 %v1301, 1.4531521
      %v1366 = vsub.f32 %v1302, 1.4531521
      %v1367 = vsub.f32 %v1303, 1.4531521
      %v1368 = vsub.f32 %v1304, 1.4531521
      %v1369 = vsub.f32 %v1305, 1.4531521
      %v1370 = vsub.f32 %v1306, 1.4531521
      %v1371 = vsub.f32 %v1307, 1.4531521
      %v1372 = vsub.f32 %v1308, 1.4531521
      %v1373 = vsub.f32 %v1309, 1.4531521
      %v1374 = vsub.f32 %v1310, 1.4531521
      %v1375 = vsub.f32 %v1311, 1.4531521
      %v1376 = vsub.f32 %v1312, 1.4531521
      %v1377 = vsub.f32 %v1313, 1.4531521
      %v1378 = vsub.f32 %v1314, 1.4531521
      %v1379 = vsub.f32 %v1315, 1.4531521
      %v1380 = vsub.f32 %v1316, 1.4531521
      %v1381 = vsub.f32 %v1317, 1.4531521
      %v1382 = vsub.f32 %v1318, 1.4531521
      %v1383 = vsub.f32 %v1319, 1.4531521
      %v1384 = vsub.f32 %v1320, 1.4531521
      %v1385 = vsub.f32 %v1321, 1.4531521
      %v1386 = vsub.f32 %v1322, 1.4531521
      %v1387 = vsub.f32 %v1323, 1.4531521
      %v1388 = vsub.f32 %v1324, 1.4531521
      %v1389 = vsub.f32 %v1325, 1.4531521
      %v1390 = vsub.f32 %v1326, 1.4531521
      %v1391 = vmul.f32 %v1327, %v1199
      %v1392 = vmul.f32 %v1328, %v1200
      %v1393 = vmul.f32 %v1329, %v1201
      %v1394 = vmul.f32 %v1330, %v1202
      %v1395 = vmul.f32 %v1331, %v1203
      %v1396 = vmul.f32 %v1332, %v1204
      %v1397 = vmul.f32 %v1333, %v1205
      %v1398 = vmul.f32 %v1334, %v1206
      %v1399 = vmul.f32 %v1335, %v1207
      %v1400 = vmul.f32 %v1336, %v1208
      %v1401 = vmul.f32 %v1337, %v1209
      %v1402 = vmul.f32 %v1338, %v1210
      %v1403 = vmul.f32 %v1339, %v1211
      %v1404 = vmul.f32 %v1340, %v1212
      %v1405 = vmul.f32 %v1341, %v1213
      %v1406 = vmul.f32 %v1342, %v1214
      %v1407 = vmul.f32 %v1343, %v1215
      %v1408 = vmul.f32 %v1344, %v1216
      %v1409 = vmul.f32 %v1345, %v1217
      %v1410 = vmul.f32 %v1346, %v1218
      %v1411 = vmul.f32 %v1347, %v1219
      %v1412 = vmul.f32 %v1348, %v1220
      %v1413 = vmul.f32 %v1349, %v1221
      %v1414 = vmul.f32 %v1350, %v1222
      %v1415 = vmul.f32 %v1351, %v1223
      %v1416 = vmul.f32 %v1352, %v1224
      %v1417 = vmul.f32 %v1353, %v1225
      %v1418 = vmul.f32 %v1354, %v1226
      %v1419 = vmul.f32 %v1355, %v1227
      %v1420 = vmul.f32 %v1356, %v1228
      %v1421 = vmul.f32 %v1357, %v1229
      %v1422 = vmul.f32 %v1358, %v1230
      %v1423 = vmul.f32 %v1359, %v1231
      %v1424 = vmul.f32 %v1360, %v1232
      %v1425 = vmul.f32 %v1361, %v1233
      %v1426 = vmul.f32 %v1362, %v1234
      %v1427 = vmul.f32 %v1363, %v1235
      %v1428 = vmul.f32 %v1364, %v1236
      %v1429 = vmul.f32 %v1365, %v1237
      %v1430 = vmul.f32 %v1366, %v1238
      %v1431 = vmul.f32 %v1367, %v1239
      %v1432 = vmul.f32 %v1368, %v1240
      %v1433 = vmul.f32 %v1369, %v1241
      %v1434 = vmul.f32 %v1370, %v1242
      %v1435 = vmul.f32 %v1371, %v1243
      %v1436 = vmul.f32 %v1372, %v1244
      %v1437 = vmul.f32 %v1373, %v1245
      %v1438 = vmul.f32 %v1374, %v1246
      %v1439 = vmul.f32 %v1375, %v1247
      %v1440 = vmul.f32 %v1376, %v1248
      %v1441 = vmul.f32 %v1377, %v1249
      %v1442 = vmul.f32 %v1378, %v1250
      %v1443 = vmul.f32 %v1379, %v1251
      %v1444 = vmul.f32 %v1380, %v1252
      %v1445 = vmul.f32 %v1381, %v1253
      %v1446 = vmul.f32 %v1382, %v1254
      %v1447 = vmul.f32 %v1383, %v1255
      %v1448 = vmul.f32 %v1384, %v1256
      %v1449 = vmul.f32 %v1385, %v1257
      %v1450 = vmul.f32 %v1386, %v1258
      %v1451 = vmul.f32 %v1387, %v1259
      %v1452 = vmul.f32 %v1388, %v1260
      %v1453 = vmul.f32 %v1389, %v1261
      %v1454 = vmul.f32 %v1390, %v1262
      %v1455 = vadd.f32 %v1391, 1.4214138
      %v1456 = vadd.f32 %v1392, 1.4214138
      %v1457 = vadd.f32 %v1393, 1.4214138
      %v1458 = vadd.f32 %v1394, 1.4214138
      %v1459 = vadd.f32 %v1395, 1.4214138
      %v1460 = vadd.f32 %v1396, 1.4214138
      %v1461 = vadd.f32 %v1397, 1.4214138
      %v1462 = vadd.f32 %v1398, 1.4214138
      %v1463 = vadd.f32 %v1399, 1.4214138
      %v1464 = vadd.f32 %v1400, 1.4214138
      %v1465 = vadd.f32 %v1401, 1.4214138
      %v1466 = vadd.f32 %v1402, 1.4214138
      %v1467 = vadd.f32 %v1403, 1.4214138
      %v1468 = vadd.f32 %v1404, 1.4214138
      %v1469 = vadd.f32 %v1405, 1.4214138
      %v1470 = vadd.f32 %v1406, 1.4214138
      %v1471 = vadd.f32 %v1407, 1.4214138
      %v1472 = vadd.f32 %v1408, 1.4214138
      %v1473 = vadd.f32 %v1409, 1.4214138
      %v1474 = vadd.f32 %v1410, 1.4214138
      %v1475 = vadd.f32 %v1411, 1.4214138
      %v1476 = vadd.f32 %v1412, 1.4214138
      %v1477 = vadd.f32 %v1413, 1.4214138
      %v1478 = vadd.f32 %v1414, 1.4214138
      %v1479 = vadd.f32 %v1415, 1.4214138
      %v1480 = vadd.f32 %v1416, 1.4214138
      %v1481 = vadd.f32 %v1417, 1.4214138
      %v1482 = vadd.f32 %v1418, 1.4214138
      %v1483 = vadd.f32 %v1419, 1.4214138
      %v1484 = vadd.f32 %v1420, 1.4214138
      %v1485 = vadd.f32 %v1421, 1.4214138
      %v1486 = vadd.f32 %v1422, 1.4214138
      %v1487 = vadd.f32 %v1423, 1.4214138
      %v1488 = vadd.f32 %v1424, 1.4214138
      %v1489 = vadd.f32 %v1425, 1.4214138
      %v1490 = vadd.f32 %v1426, 1.4214138
      %v1491 = vadd.f32 %v1427, 1.4214138
      %v1492 = vadd.f32 %v1428, 1.4214138
      %v1493 = vadd.f32 %v1429, 1.4214138
      %v1494 = vadd.f32 %v1430, 1.4214138
      %v1495 = vadd.f32 %v1431, 1.4214138
      %v1496 = vadd.f32 %v1432, 1.4214138
      %v1497 = vadd.f32 %v1433, 1.4214138
      %v1498 = vadd.f32 %v1434, 1.4214138
      %v1499 = vadd.f32 %v1435, 1.4214138
      %v1500 = vadd.f32 %v1436, 1.4214138
      %v1501 = vadd.f32 %v1437, 1.4214138
      %v1502 = vadd.f32 %v1438, 1.4214138
      %v1503 = vadd.f32 %v1439, 1.4214138
      %v1504 = vadd.f32 %v1440, 1.4214138
      %v1505 = vadd.f32 %v1441, 1.4214138
      %v1506 = vadd.f32 %v1442, 1.4214138
      %v1507 = vadd.f32 %v1443, 1.4214138
      %v1508 = vadd.f32 %v1444, 1.4214138
      %v1509 = vadd.f32 %v1445, 1.4214138
      %v1510 = vadd.f32 %v1446, 1.4214138
      %v1511 = vadd.f32 %v1447, 1.4214138
      %v1512 = vadd.f32 %v1448, 1.4214138
      %v1513 = vadd.f32 %v1449, 1.4214138
      %v1514 = vadd.f32 %v1450, 1.4214138
      %v1515 = vadd.f32 %v1451, 1.4214138
      %v1516 = vadd.f32 %v1452, 1.4214138
      %v1517 = vadd.f32 %v1453, 1.4214138
      %v1518 = vadd.f32 %v1454, 1.4214138
      %v1519 = vmul.f32 %v1455, %v1199
      %v1520 = vmul.f32 %v1456, %v1200
      %v1521 = vmul.f32 %v1457, %v1201
      %v1522 = vmul.f32 %v1458, %v1202
      %v1523 = vmul.f32 %v1459, %v1203
      %v1524 = vmul.f32 %v1460, %v1204
      %v1525 = vmul.f32 %v1461, %v1205
      %v1526 = vmul.f32 %v1462, %v1206
      %v1527 = vmul.f32 %v1463, %v1207
      %v1528 = vmul.f32 %v1464, %v1208
      %v1529 = vmul.f32 %v1465, %v1209
      %v1530 = vmul.f32 %v1466, %v1210
      %v1531 = vmul.f32 %v1467, %v1211
      %v1532 = vmul.f32 %v1468, %v1212
      %v1533 = vmul.f32 %v1469, %v1213
      %v1534 = vmul.f32 %v1470, %v1214
      %v1535 = vmul.f32 %v1471, %v1215
      %v1536 = vmul.f32 %v1472, %v1216
      %v1537 = vmul.f32 %v1473, %v1217
      %v1538 = vmul.f32 %v1474, %v1218
      %v1539 = vmul.f32 %v1475, %v1219
      %v1540 = vmul.f32 %v1476, %v1220
      %v1541 = vmul.f32 %v1477, %v1221
      %v1542 = vmul.f32 %v1478, %v1222
      %v1543 = vmul.f32 %v1479, %v1223
      %v1544 = vmul.f32 %v1480, %v1224
      %v1545 = vmul.f32 %v1481, %v1225
      %v1546 = vmul.f32 %v1482, %v1226
      %v1547 = vmul.f32 %v1483, %v1227
      %v1548 = vmul.f32 %v1484, %v1228
      %v1549 = vmul.f32 %v1485, %v1229
      %v1550 = vmul.f32 %v1486, %v1230
      %v1551 = vmul.f32 %v1487, %v1231
      %v1552 = vmul.f32 %v1488, %v1232
      %v1553 = vmul.f32 %v1489, %v1233
      %v1554 = vmul.f32 %v1490, %v1234
      %v1555 = vmul.f32 %v1491, %v1235
      %v1556 = vmul.f32 %v1492, %v1236
      %v1557 = vmul.f32 %v1493, %v1237
      %v1558 = vmul.f32 %v1494, %v1238
      %v1559 = vmul.f32 %v1495, %v1239
      %v1560 = vmul.f32 %v1496, %v1240
      %v1561 = vmul.f32 %v1497, %v1241
      %v1562 = vmul.f32 %v1498, %v1242
      %v1563 = vmul.f32 %v1499, %v1243
      %v1564 = vmul.f32 %v1500, %v1244
      %v1565 = vmul.f32 %v1501, %v1245
      %v1566 = vmul.f32 %v1502, %v1246
      %v1567 = vmul.f32 %v1503, %v1247
      %v1568 = vmul.f32 %v1504, %v1248
      %v1569 = vmul.f32 %v1505, %v1249
      %v1570 = vmul.f32 %v1506, %v1250
      %v1571 = vmul.f32 %v1507, %v1251
      %v1572 = vmul.f32 %v1508, %v1252
      %v1573 = vmul.f32 %v1509, %v1253
      %v1574 = vmul.f32 %v1510, %v1254
      %v1575 = vmul.f32 %v1511, %v1255
      %v1576 = vmul.f32 %v1512, %v1256
      %v1577 = vmul.f32 %v1513, %v1257
      %v1578 = vmul.f32 %v1514, %v1258
      %v1579 = vmul.f32 %v1515, %v1259
      %v1580 = vmul.f32 %v1516, %v1260
      %v1581 = vmul.f32 %v1517, %v1261
      %v1582 = vmul.f32 %v1518, %v1262
      %v1583 = vsub.f32 %v1519, 0.28449672
      %v1584 = vsub.f32 %v1520, 0.28449672
      %v1585 = vsub.f32 %v1521, 0.28449672
      %v1586 = vsub.f32 %v1522, 0.28449672
      %v1587 = vsub.f32 %v1523, 0.28449672
      %v1588 = vsub.f32 %v1524, 0.28449672
      %v1589 = vsub.f32 %v1525, 0.28449672
      %v1590 = vsub.f32 %v1526, 0.28449672
      %v1591 = vsub.f32 %v1527, 0.28449672
      %v1592 = vsub.f32 %v1528, 0.28449672
      %v1593 = vsub.f32 %v1529, 0.28449672
      %v1594 = vsub.f32 %v1530, 0.28449672
      %v1595 = vsub.f32 %v1531, 0.28449672
      %v1596 = vsub.f32 %v1532, 0.28449672
      %v1597 = vsub.f32 %v1533, 0.28449672
      %v1598 = vsub.f32 %v1534, 0.28449672
      %v1599 = vsub.f32 %v1535, 0.28449672
      %v1600 = vsub.f32 %v1536, 0.28449672
      %v1601 = vsub.f32 %v1537, 0.28449672
      %v1602 = vsub.f32 %v1538, 0.28449672
      %v1603 = vsub.f32 %v1539, 0.28449672
      %v1604 = vsub.f32 %v1540, 0.28449672
      %v1605 = vsub.f32 %v1541, 0.28449672
      %v1606 = vsub.f32 %v1542, 0.28449672
      %v1607 = vsub.f32 %v1543, 0.28449672
      %v1608 = vsub.f32 %v1544, 0.28449672
      %v1609 = vsub.f32 %v1545, 0.28449672
      %v1610 = vsub.f32 %v1546, 0.28449672
      %v1611 = vsub.f32 %v1547, 0.28449672
      %v1612 = vsub.f32 %v1548, 0.28449672
      %v1613 = vsub.f32 %v1549, 0.28449672
      %v1614 = vsub.f32 %v1550, 0.28449672
      %v1615 = vsub.f32 %v1551, 0.28449672
      %v1616 = vsub.f32 %v1552, 0.28449672
      %v1617 = vsub.f32 %v1553, 0.28449672
      %v1618 = vsub.f32 %v1554, 0.28449672
      %v1619 = vsub.f32 %v1555, 0.28449672
      %v1620 = vsub.f32 %v1556, 0.28449672
      %v1621 = vsub.f32 %v1557, 0.28449672
      %v1622 = vsub.f32 %v1558, 0.28449672
      %v1623 = vsub.f32 %v1559, 0.28449672
      %v1624 = vsub.f32 %v1560, 0.28449672
      %v1625 = vsub.f32 %v1561, 0.28449672
      %v1626 = vsub.f32 %v1562, 0.28449672
      %v1627 = vsub.f32 %v1563, 0.28449672
      %v1628 = vsub.f32 %v1564, 0.28449672
      %v1629 = vsub.f32 %v1565, 0.28449672
      %v1630 = vsub.f32 %v1566, 0.28449672
      %v1631 = vsub.f32 %v1567, 0.28449672
      %v1632 = vsub.f32 %v1568, 0.28449672
      %v1633 = vsub.f32 %v1569, 0.28449672
      %v1634 = vsub.f32 %v1570, 0.28449672
      %v1635 = vsub.f32 %v1571, 0.28449672
      %v1636 = vsub.f32 %v1572, 0.28449672
      %v1637 = vsub.f32 %v1573, 0.28449672
      %v1638 = vsub.f32 %v1574, 0.28449672
      %v1639 = vsub.f32 %v1575, 0.28449672
      %v1640 = vsub.f32 %v1576, 0.28449672
      %v1641 = vsub.f32 %v1577, 0.28449672
      %v1642 = vsub.f32 %v1578, 0.28449672
      %v1643 = vsub.f32 %v1579, 0.28449672
      %v1644 = vsub.f32 %v1580, 0.28449672
      %v1645 = vsub.f32 %v1581, 0.28449672
      %v1646 = vsub.f32 %v1582, 0.28449672
      %v1647 = vmul.f32 %v1583, %v1199
      %v1648 = vmul.f32 %v1584, %v1200
      %v1649 = vmul.f32 %v1585, %v1201
      %v1650 = vmul.f32 %v1586, %v1202
      %v1651 = vmul.f32 %v1587, %v1203
      %v1652 = vmul.f32 %v1588, %v1204
      %v1653 = vmul.f32 %v1589, %v1205
      %v1654 = vmul.f32 %v1590, %v1206
      %v1655 = vmul.f32 %v1591, %v1207
      %v1656 = vmul.f32 %v1592, %v1208
      %v1657 = vmul.f32 %v1593, %v1209
      %v1658 = vmul.f32 %v1594, %v1210
      %v1659 = vmul.f32 %v1595, %v1211
      %v1660 = vmul.f32 %v1596, %v1212
      %v1661 = vmul.f32 %v1597, %v1213
      %v1662 = vmul.f32 %v1598, %v1214
      %v1663 = vmul.f32 %v1599, %v1215
      %v1664 = vmul.f32 %v1600, %v1216
      %v1665 = vmul.f32 %v1601, %v1217
      %v1666 = vmul.f32 %v1602, %v1218
      %v1667 = vmul.f32 %v1603, %v1219
      %v1668 = vmul.f32 %v1604, %v1220
      %v1669 = vmul.f32 %v1605, %v1221
      %v1670 = vmul.f32 %v1606, %v1222
      %v1671 = vmul.f32 %v1607, %v1223
      %v1672 = vmul.f32 %v1608, %v1224
      %v1673 = vmul.f32 %v1609, %v1225
      %v1674 = vmul.f32 %v1610, %v1226
      %v1675 = vmul.f32 %v1611, %v1227
      %v1676 = vmul.f32 %v1612, %v1228
      %v1677 = vmul.f32 %v1613, %v1229
      %v1678 = vmul.f32 %v1614, %v1230
      %v1679 = vmul.f32 %v1615, %v1231
      %v1680 = vmul.f32 %v1616, %v1232
      %v1681 = vmul.f32 %v1617, %v1233
      %v1682 = vmul.f32 %v1618, %v1234
      %v1683 = vmul.f32 %v1619, %v1235
      %v1684 = vmul.f32 %v1620, %v1236
      %v1685 = vmul.f32 %v1621, %v1237
      %v1686 = vmul.f32 %v1622, %v1238
      %v1687 = vmul.f32 %v1623, %v1239
      %v1688 = vmul.f32 %v1624, %v1240
      %v1689 = vmul.f32 %v1625, %v1241
      %v1690 = vmul.f32 %v1626, %v1242
      %v1691 = vmul.f32 %v1627, %v1243
      %v1692 = vmul.f32 %v1628, %v1244
      %v1693 = vmul.f32 %v1629, %v1245
      %v1694 = vmul.f32 %v1630, %v1246
      %v1695 = vmul.f32 %v1631, %v1247
      %v1696 = vmul.f32 %v1632, %v1248
      %v1697 = vmul.f32 %v1633, %v1249
      %v1698 = vmul.f32 %v1634, %v1250
      %v1699 = vmul.f32 %v1635, %v1251
      %v1700 = vmul.f32 %v1636, %v1252
      %v1701 = vmul.f32 %v1637, %v1253
      %v1702 = vmul.f32 %v1638, %v1254
      %v1703 = vmul.f32 %v1639, %v1255
      %v1704 = vmul.f32 %v1640, %v1256
      %v1705 = vmul.f32 %v1641, %v1257
      %v1706 = vmul.f32 %v1642, %v1258
      %v1707 = vmul.f32 %v1643, %v1259
      %v1708 = vmul.f32 %v1644, %v1260
      %v1709 = vmul.f32 %v1645, %v1261
      %v1710 = vmul.f32 %v1646, %v1262
      %v1711 = vadd.f32 %v1647, 0.2548296
      %v1712 = vadd.f32 %v1648, 0.2548296
      %v1713 = vadd.f32 %v1649, 0.2548296
      %v1714 = vadd.f32 %v1650, 0.2548296
      %v1715 = vadd.f32 %v1651, 0.2548296
      %v1716 = vadd.f32 %v1652, 0.2548296
      %v1717 = vadd.f32 %v1653, 0.2548296
      %v1718 = vadd.f32 %v1654, 0.2548296
      %v1719 = vadd.f32 %v1655, 0.2548296
      %v1720 = vadd.f32 %v1656, 0.2548296
      %v1721 = vadd.f32 %v1657, 0.2548296
      %v1722 = vadd.f32 %v1658, 0.2548296
      %v1723 = vadd.f32 %v1659, 0.2548296
      %v1724 = vadd.f32 %v1660, 0.2548296
      %v1725 = vadd.f32 %v1661, 0.2548296
      %v1726 = vadd.f32 %v1662, 0.2548296
      %v1727 = vadd.f32 %v1663, 0.2548296
      %v1728 = vadd.f32 %v1664, 0.2548296
      %v1729 = vadd.f32 %v1665, 0.2548296
      %v1730 = vadd.f32 %v1666, 0.2548296
      %v1731 = vadd.f32 %v1667, 0.2548296
      %v1732 = vadd.f32 %v1668, 0.2548296
      %v1733 = vadd.f32 %v1669, 0.2548296
      %v1734 = vadd.f32 %v1670, 0.2548296
      %v1735 = vadd.f32 %v1671, 0.2548296
      %v1736 = vadd.f32 %v1672, 0.2548296
      %v1737 = vadd.f32 %v1673, 0.2548296
      %v1738 = vadd.f32 %v1674, 0.2548296
      %v1739 = vadd.f32 %v1675, 0.2548296
      %v1740 = vadd.f32 %v1676, 0.2548296
      %v1741 = vadd.f32 %v1677, 0.2548296
      %v1742 = vadd.f32 %v1678, 0.2548296
      %v1743 = vadd.f32 %v1679, 0.2548296
      %v1744 = vadd.f32 %v1680, 0.2548296
      %v1745 = vadd.f32 %v1681, 0.2548296
      %v1746 = vadd.f32 %v1682, 0.2548296
      %v1747 = vadd.f32 %v1683, 0.2548296
      %v1748 = vadd.f32 %v1684, 0.2548296
      %v1749 = vadd.f32 %v1685, 0.2548296
      %v1750 = vadd.f32 %v1686, 0.2548296
      %v1751 = vadd.f32 %v1687, 0.2548296
      %v1752 = vadd.f32 %v1688, 0.2548296
      %v1753 = vadd.f32 %v1689, 0.2548296
      %v1754 = vadd.f32 %v1690, 0.2548296
      %v1755 = vadd.f32 %v1691, 0.2548296
      %v1756 = vadd.f32 %v1692, 0.2548296
      %v1757 = vadd.f32 %v1693, 0.2548296
      %v1758 = vadd.f32 %v1694, 0.2548296
      %v1759 = vadd.f32 %v1695, 0.2548296
      %v1760 = vadd.f32 %v1696, 0.2548296
      %v1761 = vadd.f32 %v1697, 0.2548296
      %v1762 = vadd.f32 %v1698, 0.2548296
      %v1763 = vadd.f32 %v1699, 0.2548296
      %v1764 = vadd.f32 %v1700, 0.2548296
      %v1765 = vadd.f32 %v1701, 0.2548296
      %v1766 = vadd.f32 %v1702, 0.2548296
      %v1767 = vadd.f32 %v1703, 0.2548296
      %v1768 = vadd.f32 %v1704, 0.2548296
      %v1769 = vadd.f32 %v1705, 0.2548296
      %v1770 = vadd.f32 %v1706, 0.2548296
      %v1771 = vadd.f32 %v1707, 0.2548296
      %v1772 = vadd.f32 %v1708, 0.2548296
      %v1773 = vadd.f32 %v1709, 0.2548296
      %v1774 = vadd.f32 %v1710, 0.2548296
      %v1775 = vmul.f32 %v1711, %v1199
      %v1776 = vmul.f32 %v1712, %v1200
      %v1777 = vmul.f32 %v1713, %v1201
      %v1778 = vmul.f32 %v1714, %v1202
      %v1779 = vmul.f32 %v1715, %v1203
      %v1780 = vmul.f32 %v1716, %v1204
      %v1781 = vmul.f32 %v1717, %v1205
      %v1782 = vmul.f32 %v1718, %v1206
      %v1783 = vmul.f32 %v1719, %v1207
      %v1784 = vmul.f32 %v1720, %v1208
      %v1785 = vmul.f32 %v1721, %v1209
      %v1786 = vmul.f32 %v1722, %v1210
      %v1787 = vmul.f32 %v1723, %v1211
      %v1788 = vmul.f32 %v1724, %v1212
      %v1789 = vmul.f32 %v1725, %v1213
      %v1790 = vmul.f32 %v1726, %v1214
      %v1791 = vmul.f32 %v1727, %v1215
      %v1792 = vmul.f32 %v1728, %v1216
      %v1793 = vmul.f32 %v1729, %v1217
      %v1794 = vmul.f32 %v1730, %v1218
      %v1795 = vmul.f32 %v1731, %v1219
      %v1796 = vmul.f32 %v1732, %v1220
      %v1797 = vmul.f32 %v1733, %v1221
      %v1798 = vmul.f32 %v1734, %v1222
      %v1799 = vmul.f32 %v1735, %v1223
      %v1800 = vmul.f32 %v1736, %v1224
      %v1801 = vmul.f32 %v1737, %v1225
      %v1802 = vmul.f32 %v1738, %v1226
      %v1803 = vmul.f32 %v1739, %v1227
      %v1804 = vmul.f32 %v1740, %v1228
      %v1805 = vmul.f32 %v1741, %v1229
      %v1806 = vmul.f32 %v1742, %v1230
      %v1807 = vmul.f32 %v1743, %v1231
      %v1808 = vmul.f32 %v1744, %v1232
      %v1809 = vmul.f32 %v1745, %v1233
      %v1810 = vmul.f32 %v1746, %v1234
      %v1811 = vmul.f32 %v1747, %v1235
      %v1812 = vmul.f32 %v1748, %v1236
      %v1813 = vmul.f32 %v1749, %v1237
      %v1814 = vmul.f32 %v1750, %v1238
      %v1815 = vmul.f32 %v1751, %v1239
      %v1816 = vmul.f32 %v1752, %v1240
      %v1817 = vmul.f32 %v1753, %v1241
      %v1818 = vmul.f32 %v1754, %v1242
      %v1819 = vmul.f32 %v1755, %v1243
      %v1820 = vmul.f32 %v1756, %v1244
      %v1821 = vmul.f32 %v1757, %v1245
      %v1822 = vmul.f32 %v1758, %v1246
      %v1823 = vmul.f32 %v1759, %v1247
      %v1824 = vmul.f32 %v1760, %v1248
      %v1825 = vmul.f32 %v1761, %v1249
      %v1826 = vmul.f32 %v1762, %v1250
      %v1827 = vmul.f32 %v1763, %v1251
      %v1828 = vmul.f32 %v1764, %v1252
      %v1829 = vmul.f32 %v1765, %v1253
      %v1830 = vmul.f32 %v1766, %v1254
      %v1831 = vmul.f32 %v1767, %v1255
      %v1832 = vmul.f32 %v1768, %v1256
      %v1833 = vmul.f32 %v1769, %v1257
      %v1834 = vmul.f32 %v1770, %v1258
      %v1835 = vmul.f32 %v1771, %v1259
      %v1836 = vmul.f32 %v1772, %v1260
      %v1837 = vmul.f32 %v1773, %v1261
      %v1838 = vmul.f32 %v1774, %v1262
      %v1839 = vsub.f32 0.0, %v815
      %v1840 = vsub.f32 0.0, %v816
      %v1841 = vsub.f32 0.0, %v817
      %v1842 = vsub.f32 0.0, %v818
      %v1843 = vsub.f32 0.0, %v819
      %v1844 = vsub.f32 0.0, %v820
      %v1845 = vsub.f32 0.0, %v821
      %v1846 = vsub.f32 0.0, %v822
      %v1847 = vsub.f32 0.0, %v823
      %v1848 = vsub.f32 0.0, %v824
      %v1849 = vsub.f32 0.0, %v825
      %v1850 = vsub.f32 0.0, %v826
      %v1851 = vsub.f32 0.0, %v827
      %v1852 = vsub.f32 0.0, %v828
      %v1853 = vsub.f32 0.0, %v829
      %v1854 = vsub.f32 0.0, %v830
      %v1855 = vsub.f32 0.0, %v831
      %v1856 = vsub.f32 0.0, %v832
      %v1857 = vsub.f32 0.0, %v833
      %v1858 = vsub.f32 0.0, %v834
      %v1859 = vsub.f32 0.0, %v835
      %v1860 = vsub.f32 0.0, %v836
      %v1861 = vsub.f32 0.0, %v837
      %v1862 = vsub.f32 0.0, %v838
      %v1863 = vsub.f32 0.0, %v839
      %v1864 = vsub.f32 0.0, %v840
      %v1865 = vsub.f32 0.0, %v841
      %v1866 = vsub.f32 0.0, %v842
      %v1867 = vsub.f32 0.0, %v843
      %v1868 = vsub.f32 0.0, %v844
      %v1869 = vsub.f32 0.0, %v845
      %v1870 = vsub.f32 0.0, %v846
      %v1871 = vsub.f32 0.0, %v847
      %v1872 = vsub.f32 0.0, %v848
      %v1873 = vsub.f32 0.0, %v849
      %v1874 = vsub.f32 0.0, %v850
      %v1875 = vsub.f32 0.0, %v851
      %v1876 = vsub.f32 0.0, %v852
      %v1877 = vsub.f32 0.0, %v853
      %v1878 = vsub.f32 0.0, %v854
      %v1879 = vsub.f32 0.0, %v855
      %v1880 = vsub.f32 0.0, %v856
      %v1881 = vsub.f32 0.0, %v857
      %v1882 = vsub.f32 0.0, %v858
      %v1883 = vsub.f32 0.0, %v859
      %v1884 = vsub.f32 0.0, %v860
      %v1885 = vsub.f32 0.0, %v861
      %v1886 = vsub.f32 0.0, %v862
      %v1887 = vsub.f32 0.0, %v863
      %v1888 = vsub.f32 0.0, %v864
      %v1889 = vsub.f32 0.0, %v865
      %v1890 = vsub.f32 0.0, %v866
      %v1891 = vsub.f32 0.0, %v867
      %v1892 = vsub.f32 0.0, %v868
      %v1893 = vsub.f32 0.0, %v869
      %v1894 = vsub.f32 0.0, %v870
      %v1895 = vsub.f32 0.0, %v871
      %v1896 = vsub.f32 0.0, %v872
      %v1897 = vsub.f32 0.0, %v873
      %v1898 = vsub.f32 0.0, %v874
      %v1899 = vsub.f32 0.0, %v875
      %v1900 = vsub.f32 0.0, %v876
      %v1901 = vsub.f32 0.0, %v877
      %v1902 = vsub.f32 0.0, %v878
      %v1903 = vmul.f32 %v1839, %v815
      %v1904 = vmul.f32 %v1840, %v816
      %v1905 = vmul.f32 %v1841, %v817
      %v1906 = vmul.f32 %v1842, %v818
      %v1907 = vmul.f32 %v1843, %v819
      %v1908 = vmul.f32 %v1844, %v820
      %v1909 = vmul.f32 %v1845, %v821
      %v1910 = vmul.f32 %v1846, %v822
      %v1911 = vmul.f32 %v1847, %v823
      %v1912 = vmul.f32 %v1848, %v824
      %v1913 = vmul.f32 %v1849, %v825
      %v1914 = vmul.f32 %v1850, %v826
      %v1915 = vmul.f32 %v1851, %v827
      %v1916 = vmul.f32 %v1852, %v828
      %v1917 = vmul.f32 %v1853, %v829
      %v1918 = vmul.f32 %v1854, %v830
      %v1919 = vmul.f32 %v1855, %v831
      %v1920 = vmul.f32 %v1856, %v832
      %v1921 = vmul.f32 %v1857, %v833
      %v1922 = vmul.f32 %v1858, %v834
      %v1923 = vmul.f32 %v1859, %v835
      %v1924 = vmul.f32 %v1860, %v836
      %v1925 = vmul.f32 %v1861, %v837
      %v1926 = vmul.f32 %v1862, %v838
      %v1927 = vmul.f32 %v1863, %v839
      %v1928 = vmul.f32 %v1864, %v840
      %v1929 = vmul.f32 %v1865, %v841
      %v1930 = vmul.f32 %v1866, %v842
      %v1931 = vmul.f32 %v1867, %v843
      %v1932 = vmul.f32 %v1868, %v844
      %v1933 = vmul.f32 %v1869, %v845
      %v1934 = vmul.f32 %v1870, %v846
      %v1935 = vmul.f32 %v1871, %v847
      %v1936 = vmul.f32 %v1872, %v848
      %v1937 = vmul.f32 %v1873, %v849
      %v1938 = vmul.f32 %v1874, %v850
      %v1939 = vmul.f32 %v1875, %v851
      %v1940 = vmul.f32 %v1876, %v852
      %v1941 = vmul.f32 %v1877, %v853
      %v1942 = vmul.f32 %v1878, %v854
      %v1943 = vmul.f32 %v1879, %v855
      %v1944 = vmul.f32 %v1880, %v856
      %v1945 = vmul.f32 %v1881, %v857
      %v1946 = vmul.f32 %v1882, %v858
      %v1947 = vmul.f32 %v1883, %v859
      %v1948 = vmul.f32 %v1884, %v860
      %v1949 = vmul.f32 %v1885, %v861
      %v1950 = vmul.f32 %v1886, %v862
      %v1951 = vmul.f32 %v1887, %v863
      %v1952 = vmul.f32 %v1888, %v864
      %v1953 = vmul.f32 %v1889, %v865
      %v1954 = vmul.f32 %v1890, %v866
      %v1955 = vmul.f32 %v1891, %v867
      %v1956 = vmul.f32 %v1892, %v868
      %v1957 = vmul.f32 %v1893, %v869
      %v1958 = vmul.f32 %v1894, %v870
      %v1959 = vmul.f32 %v1895, %v871
      %v1960 = vmul.f32 %v1896, %v872
      %v1961 = vmul.f32 %v1897, %v873
      %v1962 = vmul.f32 %v1898, %v874
      %v1963 = vmul.f32 %v1899, %v875
      %v1964 = vmul.f32 %v1900, %v876
      %v1965 = vmul.f32 %v1901, %v877
      %v1966 = vmul.f32 %v1902, %v878
      %v1967 = vmul.f32 %v1903, 1.442695
      %v1968 = vpow.pop %v1967
      %v1969 = vmul.f32 %v1904, 1.442695
      %v1970 = vpow.pop %v1969
      %v1971 = vmul.f32 %v1905, 1.442695
      %v1972 = vpow.pop %v1971
      %v1973 = vmul.f32 %v1906, 1.442695
      %v1974 = vpow.pop %v1973
      %v1975 = vmul.f32 %v1907, 1.442695
      %v1976 = vpow.pop %v1975
      %v1977 = vmul.f32 %v1908, 1.442695
      %v1978 = vpow.pop %v1977
      %v1979 = vmul.f32 %v1909, 1.442695
      %v1980 = vpow.pop %v1979
      %v1981 = vmul.f32 %v1910, 1.442695
      %v1982 = vpow.pop %v1981
      %v1983 = vmul.f32 %v1911, 1.442695
      %v1984 = vpow.pop %v1983
      %v1985 = vmul.f32 %v1912, 1.442695
      %v1986 = vpow.pop %v1985
      %v1987 = vmul.f32 %v1913, 1.442695
      %v1988 = vpow.pop %v1987
      %v1989 = vmul.f32 %v1914, 1.442695
      %v1990 = vpow.pop %v1989
      %v1991 = vmul.f32 %v1915, 1.442695
      %v1992 = vpow.pop %v1991
      %v1993 = vmul.f32 %v1916, 1.442695
      %v1994 = vpow.pop %v1993
      %v1995 = vmul.f32 %v1917, 1.442695
      %v1996 = vpow.pop %v1995
      %v1997 = vmul.f32 %v1918, 1.442695
      %v1998 = vpow.pop %v1997
      %v1999 = vmul.f32 %v1919, 1.442695
      %v2000 = vpow.pop %v1999
      %v2001 = vmul.f32 %v1920, 1.442695
      %v2002 = vpow.pop %v2001
      %v2003 = vmul.f32 %v1921, 1.442695
      %v2004 = vpow.pop %v2003
      %v2005 = vmul.f32 %v1922, 1.442695
      %v2006 = vpow.pop %v2005
      %v2007 = vmul.f32 %v1923, 1.442695
      %v2008 = vpow.pop %v2007
      %v2009 = vmul.f32 %v1924, 1.442695
      %v2010 = vpow.pop %v2009
      %v2011 = vmul.f32 %v1925, 1.442695
      %v2012 = vpow.pop %v2011
      %v2013 = vmul.f32 %v1926, 1.442695
      %v2014 = vpow.pop %v2013
      %v2015 = vmul.f32 %v1927, 1.442695
      %v2016 = vpow.pop %v2015
      %v2017 = vmul.f32 %v1928, 1.442695
      %v2018 = vpow.pop %v2017
      %v2019 = vmul.f32 %v1929, 1.442695
      %v2020 = vpow.pop %v2019
      %v2021 = vmul.f32 %v1930, 1.442695
      %v2022 = vpow.pop %v2021
      %v2023 = vmul.f32 %v1931, 1.442695
      %v2024 = vpow.pop %v2023
      %v2025 = vmul.f32 %v1932, 1.442695
      %v2026 = vpow.pop %v2025
      %v2027 = vmul.f32 %v1933, 1.442695
      %v2028 = vpow.pop %v2027
      %v2029 = vmul.f32 %v1934, 1.442695
      %v2030 = vpow.pop %v2029
      %v2031 = vmul.f32 %v1935, 1.442695
      %v2032 = vpow.pop %v2031
      %v2033 = vmul.f32 %v1936, 1.442695
      %v2034 = vpow.pop %v2033
      %v2035 = vmul.f32 %v1937, 1.442695
      %v2036 = vpow.pop %v2035
      %v2037 = vmul.f32 %v1938, 1.442695
      %v2038 = vpow.pop %v2037
      %v2039 = vmul.f32 %v1939, 1.442695
      %v2040 = vpow.pop %v2039
      %v2041 = vmul.f32 %v1940, 1.442695
      %v2042 = vpow.pop %v2041
      %v2043 = vmul.f32 %v1941, 1.442695
      %v2044 = vpow.pop %v2043
      %v2045 = vmul.f32 %v1942, 1.442695
      %v2046 = vpow.pop %v2045
      %v2047 = vmul.f32 %v1943, 1.442695
      %v2048 = vpow.pop %v2047
      %v2049 = vmul.f32 %v1944, 1.442695
      %v2050 = vpow.pop %v2049
      %v2051 = vmul.f32 %v1945, 1.442695
      %v2052 = vpow.pop %v2051
      %v2053 = vmul.f32 %v1946, 1.442695
      %v2054 = vpow.pop %v2053
      %v2055 = vmul.f32 %v1947, 1.442695
      %v2056 = vpow.pop %v2055
      %v2057 = vmul.f32 %v1948, 1.442695
      %v2058 = vpow.pop %v2057
      %v2059 = vmul.f32 %v1949, 1.442695
      %v2060 = vpow.pop %v2059
      %v2061 = vmul.f32 %v1950, 1.442695
      %v2062 = vpow.pop %v2061
      %v2063 = vmul.f32 %v1951, 1.442695
      %v2064 = vpow.pop %v2063
      %v2065 = vmul.f32 %v1952, 1.442695
      %v2066 = vpow.pop %v2065
      %v2067 = vmul.f32 %v1953, 1.442695
      %v2068 = vpow.pop %v2067
      %v2069 = vmul.f32 %v1954, 1.442695
      %v2070 = vpow.pop %v2069
      %v2071 = vmul.f32 %v1955, 1.442695
      %v2072 = vpow.pop %v2071
      %v2073 = vmul.f32 %v1956, 1.442695
      %v2074 = vpow.pop %v2073
      %v2075 = vmul.f32 %v1957, 1.442695
      %v2076 = vpow.pop %v2075
      %v2077 = vmul.f32 %v1958, 1.442695
      %v2078 = vpow.pop %v2077
      %v2079 = vmul.f32 %v1959, 1.442695
      %v2080 = vpow.pop %v2079
      %v2081 = vmul.f32 %v1960, 1.442695
      %v2082 = vpow.pop %v2081
      %v2083 = vmul.f32 %v1961, 1.442695
      %v2084 = vpow.pop %v2083
      %v2085 = vmul.f32 %v1962, 1.442695
      %v2086 = vpow.pop %v2085
      %v2087 = vmul.f32 %v1963, 1.442695
      %v2088 = vpow.pop %v2087
      %v2089 = vmul.f32 %v1964, 1.442695
      %v2090 = vpow.pop %v2089
      %v2091 = vmul.f32 %v1965, 1.442695
      %v2092 = vpow.pop %v2091
      %v2093 = vmul.f32 %v1966, 1.442695
      %v2094 = vpow.pop %v2093
      %v2095 = vmul.f32 %v1775, %v1968
      %v2096 = vmul.f32 %v1776, %v1970
      %v2097 = vmul.f32 %v1777, %v1972
      %v2098 = vmul.f32 %v1778, %v1974
      %v2099 = vmul.f32 %v1779, %v1976
      %v2100 = vmul.f32 %v1780, %v1978
      %v2101 = vmul.f32 %v1781, %v1980
      %v2102 = vmul.f32 %v1782, %v1982
      %v2103 = vmul.f32 %v1783, %v1984
      %v2104 = vmul.f32 %v1784, %v1986
      %v2105 = vmul.f32 %v1785, %v1988
      %v2106 = vmul.f32 %v1786, %v1990
      %v2107 = vmul.f32 %v1787, %v1992
      %v2108 = vmul.f32 %v1788, %v1994
      %v2109 = vmul.f32 %v1789, %v1996
      %v2110 = vmul.f32 %v1790, %v1998
      %v2111 = vmul.f32 %v1791, %v2000
      %v2112 = vmul.f32 %v1792, %v2002
      %v2113 = vmul.f32 %v1793, %v2004
      %v2114 = vmul.f32 %v1794, %v2006
      %v2115 = vmul.f32 %v1795, %v2008
      %v2116 = vmul.f32 %v1796, %v2010
      %v2117 = vmul.f32 %v1797, %v2012
      %v2118 = vmul.f32 %v1798, %v2014
      %v2119 = vmul.f32 %v1799, %v2016
      %v2120 = vmul.f32 %v1800, %v2018
      %v2121 = vmul.f32 %v1801, %v2020
      %v2122 = vmul.f32 %v1802, %v2022
      %v2123 = vmul.f32 %v1803, %v2024
      %v2124 = vmul.f32 %v1804, %v2026
      %v2125 = vmul.f32 %v1805, %v2028
      %v2126 = vmul.f32 %v1806, %v2030
      %v2127 = vmul.f32 %v1807, %v2032
      %v2128 = vmul.f32 %v1808, %v2034
      %v2129 = vmul.f32 %v1809, %v2036
      %v2130 = vmul.f32 %v1810, %v2038
      %v2131 = vmul.f32 %v1811, %v2040
      %v2132 = vmul.f32 %v1812, %v2042
      %v2133 = vmul.f32 %v1813, %v2044
      %v2134 = vmul.f32 %v1814, %v2046
      %v2135 = vmul.f32 %v1815, %v2048
      %v2136 = vmul.f32 %v1816, %v2050
      %v2137 = vmul.f32 %v1817, %v2052
      %v2138 = vmul.f32 %v1818, %v2054
      %v2139 = vmul.f32 %v1819, %v2056
      %v2140 = vmul.f32 %v1820, %v2058
      %v2141 = vmul.f32 %v1821, %v2060
      %v2142 = vmul.f32 %v1822, %v2062
      %v2143 = vmul.f32 %v1823, %v2064
      %v2144 = vmul.f32 %v1824, %v2066
      %v2145 = vmul.f32 %v1825, %v2068
      %v2146 = vmul.f32 %v1826, %v2070
      %v2147 = vmul.f32 %v1827, %v2072
      %v2148 = vmul.f32 %v1828, %v2074
      %v2149 = vmul.f32 %v1829, %v2076
      %v2150 = vmul.f32 %v1830, %v2078
      %v2151 = vmul.f32 %v1831, %v2080
      %v2152 = vmul.f32 %v1832, %v2082
      %v2153 = vmul.f32 %v1833, %v2084
      %v2154 = vmul.f32 %v1834, %v2086
      %v2155 = vmul.f32 %v1835, %v2088
      %v2156 = vmul.f32 %v1836, %v2090
      %v2157 = vmul.f32 %v1837, %v2092
      %v2158 = vmul.f32 %v1838, %v2094
      %v2159 = vsub.f32 1.0, %v2095
      %v2160 = vsub.f32 1.0, %v2096
      %v2161 = vsub.f32 1.0, %v2097
      %v2162 = vsub.f32 1.0, %v2098
      %v2163 = vsub.f32 1.0, %v2099
      %v2164 = vsub.f32 1.0, %v2100
      %v2165 = vsub.f32 1.0, %v2101
      %v2166 = vsub.f32 1.0, %v2102
      %v2167 = vsub.f32 1.0, %v2103
      %v2168 = vsub.f32 1.0, %v2104
      %v2169 = vsub.f32 1.0, %v2105
      %v2170 = vsub.f32 1.0, %v2106
      %v2171 = vsub.f32 1.0, %v2107
      %v2172 = vsub.f32 1.0, %v2108
      %v2173 = vsub.f32 1.0, %v2109
      %v2174 = vsub.f32 1.0, %v2110
      %v2175 = vsub.f32 1.0, %v2111
      %v2176 = vsub.f32 1.0, %v2112
      %v2177 = vsub.f32 1.0, %v2113
      %v2178 = vsub.f32 1.0, %v2114
      %v2179 = vsub.f32 1.0, %v2115
      %v2180 = vsub.f32 1.0, %v2116
      %v2181 = vsub.f32 1.0, %v2117
      %v2182 = vsub.f32 1.0, %v2118
      %v2183 = vsub.f32 1.0, %v2119
      %v2184 = vsub.f32 1.0, %v2120
      %v2185 = vsub.f32 1.0, %v2121
      %v2186 = vsub.f32 1.0, %v2122
      %v2187 = vsub.f32 1.0, %v2123
      %v2188 = vsub.f32 1.0, %v2124
      %v2189 = vsub.f32 1.0, %v2125
      %v2190 = vsub.f32 1.0, %v2126
      %v2191 = vsub.f32 1.0, %v2127
      %v2192 = vsub.f32 1.0, %v2128
      %v2193 = vsub.f32 1.0, %v2129
      %v2194 = vsub.f32 1.0, %v2130
      %v2195 = vsub.f32 1.0, %v2131
      %v2196 = vsub.f32 1.0, %v2132
      %v2197 = vsub.f32 1.0, %v2133
      %v2198 = vsub.f32 1.0, %v2134
      %v2199 = vsub.f32 1.0, %v2135
      %v2200 = vsub.f32 1.0, %v2136
      %v2201 = vsub.f32 1.0, %v2137
      %v2202 = vsub.f32 1.0, %v2138
      %v2203 = vsub.f32 1.0, %v2139
      %v2204 = vsub.f32 1.0, %v2140
      %v2205 = vsub.f32 1.0, %v2141
      %v2206 = vsub.f32 1.0, %v2142
      %v2207 = vsub.f32 1.0, %v2143
      %v2208 = vsub.f32 1.0, %v2144
      %v2209 = vsub.f32 1.0, %v2145
      %v2210 = vsub.f32 1.0, %v2146
      %v2211 = vsub.f32 1.0, %v2147
      %v2212 = vsub.f32 1.0, %v2148
      %v2213 = vsub.f32 1.0, %v2149
      %v2214 = vsub.f32 1.0, %v2150
      %v2215 = vsub.f32 1.0, %v2151
      %v2216 = vsub.f32 1.0, %v2152
      %v2217 = vsub.f32 1.0, %v2153
      %v2218 = vsub.f32 1.0, %v2154
      %v2219 = vsub.f32 1.0, %v2155
      %v2220 = vsub.f32 1.0, %v2156
      %v2221 = vsub.f32 1.0, %v2157
      %v2222 = vsub.f32 1.0, %v2158
      %vm2223 = vcmp.ge.f32.partialorder %v751, 0.0
      %vm2224 = vcmp.ge.f32.partialorder %v752, 0.0
      %vm2225 = vcmp.ge.f32.partialorder %v753, 0.0
      %vm2226 = vcmp.ge.f32.partialorder %v754, 0.0
      %vm2227 = vcmp.ge.f32.partialorder %v755, 0.0
      %vm2228 = vcmp.ge.f32.partialorder %v756, 0.0
      %vm2229 = vcmp.ge.f32.partialorder %v757, 0.0
      %vm2230 = vcmp.ge.f32.partialorder %v758, 0.0
      %vm2231 = vcmp.ge.f32.partialorder %v759, 0.0
      %vm2232 = vcmp.ge.f32.partialorder %v760, 0.0
      %vm2233 = vcmp.ge.f32.partialorder %v761, 0.0
      %vm2234 = vcmp.ge.f32.partialorder %v762, 0.0
      %vm2235 = vcmp.ge.f32.partialorder %v763, 0.0
      %vm2236 = vcmp.ge.f32.partialorder %v764, 0.0
      %vm2237 = vcmp.ge.f32.partialorder %v765, 0.0
      %vm2238 = vcmp.ge.f32.partialorder %v766, 0.0
      %vm2239 = vcmp.ge.f32.partialorder %v767, 0.0
      %vm2240 = vcmp.ge.f32.partialorder %v768, 0.0
      %vm2241 = vcmp.ge.f32.partialorder %v769, 0.0
      %vm2242 = vcmp.ge.f32.partialorder %v770, 0.0
      %vm2243 = vcmp.ge.f32.partialorder %v771, 0.0
      %vm2244 = vcmp.ge.f32.partialorder %v772, 0.0
      %vm2245 = vcmp.ge.f32.partialorder %v773, 0.0
      %vm2246 = vcmp.ge.f32.partialorder %v774, 0.0
      %vm2247 = vcmp.ge.f32.partialorder %v775, 0.0
      %vm2248 = vcmp.ge.f32.partialorder %v776, 0.0
      %vm2249 = vcmp.ge.f32.partialorder %v777, 0.0
      %vm2250 = vcmp.ge.f32.partialorder %v778, 0.0
      %vm2251 = vcmp.ge.f32.partialorder %v779, 0.0
      %vm2252 = vcmp.ge.f32.partialorder %v780, 0.0
      %vm2253 = vcmp.ge.f32.partialorder %v781, 0.0
      %vm2254 = vcmp.ge.f32.partialorder %v782, 0.0
      %vm2255 = vcmp.ge.f32.partialorder %v783, 0.0
      %vm2256 = vcmp.ge.f32.partialorder %v784, 0.0
      %vm2257 = vcmp.ge.f32.partialorder %v785, 0.0
      %vm2258 = vcmp.ge.f32.partialorder %v786, 0.0
      %vm2259 = vcmp.ge.f32.partialorder %v787, 0.0
      %vm2260 = vcmp.ge.f32.partialorder %v788, 0.0
      %vm2261 = vcmp.ge.f32.partialorder %v789, 0.0
      %vm2262 = vcmp.ge.f32.partialorder %v790, 0.0
      %vm2263 = vcmp.ge.f32.partialorder %v791, 0.0
      %vm2264 = vcmp.ge.f32.partialorder %v792, 0.0
      %vm2265 = vcmp.ge.f32.partialorder %v793, 0.0
      %vm2266 = vcmp.ge.f32.partialorder %v794, 0.0
      %vm2267 = vcmp.ge.f32.partialorder %v795, 0.0
      %vm2268 = vcmp.ge.f32.partialorder %v796, 0.0
      %vm2269 = vcmp.ge.f32.partialorder %v797, 0.0
      %vm2270 = vcmp.ge.f32.partialorder %v798, 0.0
      %vm2271 = vcmp.ge.f32.partialorder %v799, 0.0
      %vm2272 = vcmp.ge.f32.partialorder %v800, 0.0
      %vm2273 = vcmp.ge.f32.partialorder %v801, 0.0
      %vm2274 = vcmp.ge.f32.partialorder %v802, 0.0
      %vm2275 = vcmp.ge.f32.partialorder %v803, 0.0
      %vm2276 = vcmp.ge.f32.partialorder %v804, 0.0
      %vm2277 = vcmp.ge.f32.partialorder %v805, 0.0
      %vm2278 = vcmp.ge.f32.partialorder %v806, 0.0
      %vm2279 = vcmp.ge.f32.partialorder %v807, 0.0
      %vm2280 = vcmp.ge.f32.partialorder %v808, 0.0
      %vm2281 = vcmp.ge.f32.partialorder %v809, 0.0
      %vm2282 = vcmp.ge.f32.partialorder %v810, 0.0
      %vm2283 = vcmp.ge.f32.partialorder %v811, 0.0
      %vm2284 = vcmp.ge.f32.partialorder %v812, 0.0
      %vm2285 = vcmp.ge.f32.partialorder %v813, 0.0
      %vm2286 = vcmp.ge.f32.partialorder %v814, 0.0
      %v2287 = vsub.f32 0.0, %v2159
      %v2288 = vsub.f32 0.0, %v2160
      %v2289 = vsub.f32 0.0, %v2161
      %v2290 = vsub.f32 0.0, %v2162
      %v2291 = vsub.f32 0.0, %v2163
      %v2292 = vsub.f32 0.0, %v2164
      %v2293 = vsub.f32 0.0, %v2165
      %v2294 = vsub.f32 0.0, %v2166
      %v2295 = vsub.f32 0.0, %v2167
      %v2296 = vsub.f32 0.0, %v2168
      %v2297 = vsub.f32 0.0, %v2169
      %v2298 = vsub.f32 0.0, %v2170
      %v2299 = vsub.f32 0.0, %v2171
      %v2300 = vsub.f32 0.0, %v2172
      %v2301 = vsub.f32 0.0, %v2173
      %v2302 = vsub.f32 0.0, %v2174
      %v2303 = vsub.f32 0.0, %v2175
      %v2304 = vsub.f32 0.0, %v2176
      %v2305 = vsub.f32 0.0, %v2177
      %v2306 = vsub.f32 0.0, %v2178
      %v2307 = vsub.f32 0.0, %v2179
      %v2308 = vsub.f32 0.0, %v2180
      %v2309 = vsub.f32 0.0, %v2181
      %v2310 = vsub.f32 0.0, %v2182
      %v2311 = vsub.f32 0.0, %v2183
      %v2312 = vsub.f32 0.0, %v2184
      %v2313 = vsub.f32 0.0, %v2185
      %v2314 = vsub.f32 0.0, %v2186
      %v2315 = vsub.f32 0.0, %v2187
      %v2316 = vsub.f32 0.0, %v2188
      %v2317 = vsub.f32 0.0, %v2189
      %v2318 = vsub.f32 0.0, %v2190
      %v2319 = vsub.f32 0.0, %v2191
      %v2320 = vsub.f32 0.0, %v2192
      %v2321 = vsub.f32 0.0, %v2193
      %v2322 = vsub.f32 0.0, %v2194
      %v2323 = vsub.f32 0.0, %v2195
      %v2324 = vsub.f32 0.0, %v2196
      %v2325 = vsub.f32 0.0, %v2197
      %v2326 = vsub.f32 0.0, %v2198
      %v2327 = vsub.f32 0.0, %v2199
      %v2328 = vsub.f32 0.0, %v2200
      %v2329 = vsub.f32 0.0, %v2201
      %v2330 = vsub.f32 0.0, %v2202
      %v2331 = vsub.f32 0.0, %v2203
      %v2332 = vsub.f32 0.0, %v2204
      %v2333 = vsub.f32 0.0, %v2205
      %v2334 = vsub.f32 0.0, %v2206
      %v2335 = vsub.f32 0.0, %v2207
      %v2336 = vsub.f32 0.0, %v2208
      %v2337 = vsub.f32 0.0, %v2209
      %v2338 = vsub.f32 0.0, %v2210
      %v2339 = vsub.f32 0.0, %v2211
      %v2340 = vsub.f32 0.0, %v2212
      %v2341 = vsub.f32 0.0, %v2213
      %v2342 = vsub.f32 0.0, %v2214
      %v2343 = vsub.f32 0.0, %v2215
      %v2344 = vsub.f32 0.0, %v2216
      %v2345 = vsub.f32 0.0, %v2217
      %v2346 = vsub.f32 0.0, %v2218
      %v2347 = vsub.f32 0.0, %v2219
      %v2348 = vsub.f32 0.0, %v2220
      %v2349 = vsub.f32 0.0, %v2221
      %v2350 = vsub.f32 0.0, %v2222
      %v2351 = vsel %vm2223, %v2159, %v2287
      %v2352 = vsel %vm2224, %v2160, %v2288
      %v2353 = vsel %vm2225, %v2161, %v2289
      %v2354 = vsel %vm2226, %v2162, %v2290
      %v2355 = vsel %vm2227, %v2163, %v2291
      %v2356 = vsel %vm2228, %v2164, %v2292
      %v2357 = vsel %vm2229, %v2165, %v2293
      %v2358 = vsel %vm2230, %v2166, %v2294
      %v2359 = vsel %vm2231, %v2167, %v2295
      %v2360 = vsel %vm2232, %v2168, %v2296
      %v2361 = vsel %vm2233, %v2169, %v2297
      %v2362 = vsel %vm2234, %v2170, %v2298
      %v2363 = vsel %vm2235, %v2171, %v2299
      %v2364 = vsel %vm2236, %v2172, %v2300
      %v2365 = vsel %vm2237, %v2173, %v2301
      %v2366 = vsel %vm2238, %v2174, %v2302
      %v2367 = vsel %vm2239, %v2175, %v2303
      %v2368 = vsel %vm2240, %v2176, %v2304
      %v2369 = vsel %vm2241, %v2177, %v2305
      %v2370 = vsel %vm2242, %v2178, %v2306
      %v2371 = vsel %vm2243, %v2179, %v2307
      %v2372 = vsel %vm2244, %v2180, %v2308
      %v2373 = vsel %vm2245, %v2181, %v2309
      %v2374 = vsel %vm2246, %v2182, %v2310
      %v2375 = vsel %vm2247, %v2183, %v2311
      %v2376 = vsel %vm2248, %v2184, %v2312
      %v2377 = vsel %vm2249, %v2185, %v2313
      %v2378 = vsel %vm2250, %v2186, %v2314
      %v2379 = vsel %vm2251, %v2187, %v2315
      %v2380 = vsel %vm2252, %v2188, %v2316
      %v2381 = vsel %vm2253, %v2189, %v2317
      %v2382 = vsel %vm2254, %v2190, %v2318
      %v2383 = vsel %vm2255, %v2191, %v2319
      %v2384 = vsel %vm2256, %v2192, %v2320
      %v2385 = vsel %vm2257, %v2193, %v2321
      %v2386 = vsel %vm2258, %v2194, %v2322
      %v2387 = vsel %vm2259, %v2195, %v2323
      %v2388 = vsel %vm2260, %v2196, %v2324
      %v2389 = vsel %vm2261, %v2197, %v2325
      %v2390 = vsel %vm2262, %v2198, %v2326
      %v2391 = vsel %vm2263, %v2199, %v2327
      %v2392 = vsel %vm2264, %v2200, %v2328
      %v2393 = vsel %vm2265, %v2201, %v2329
      %v2394 = vsel %vm2266, %v2202, %v2330
      %v2395 = vsel %vm2267, %v2203, %v2331
      %v2396 = vsel %vm2268, %v2204, %v2332
      %v2397 = vsel %vm2269, %v2205, %v2333
      %v2398 = vsel %vm2270, %v2206, %v2334
      %v2399 = vsel %vm2271, %v2207, %v2335
      %v2400 = vsel %vm2272, %v2208, %v2336
      %v2401 = vsel %vm2273, %v2209, %v2337
      %v2402 = vsel %vm2274, %v2210, %v2338
      %v2403 = vsel %vm2275, %v2211, %v2339
      %v2404 = vsel %vm2276, %v2212, %v2340
      %v2405 = vsel %vm2277, %v2213, %v2341
      %v2406 = vsel %vm2278, %v2214, %v2342
      %v2407 = vsel %vm2279, %v2215, %v2343
      %v2408 = vsel %vm2280, %v2216, %v2344
      %v2409 = vsel %vm2281, %v2217, %v2345
      %v2410 = vsel %vm2282, %v2218, %v2346
      %v2411 = vsel %vm2283, %v2219, %v2347
      %v2412 = vsel %vm2284, %v2220, %v2348
      %v2413 = vsel %vm2285, %v2221, %v2349
      %v2414 = vsel %vm2286, %v2222, %v2350
      %v2415 = vmul.f32 %v496, 0.5
      %v2416 = vmul.f32 %v498, 0.5
      %v2417 = vmul.f32 %v657, 0.5
      %v2418 = vmul.f32 %v659, 0.5
      %v2419 = vmul.f32 %v502, 0.5
      %v2420 = vmul.f32 %v504, 0.5
      %v2421 = vmul.f32 %v663, 0.5
      %v2422 = vmul.f32 %v665, 0.5
      %v2423 = vmul.f32 %v508, 0.5
      %v2424 = vmul.f32 %v510, 0.5
      %v2425 = vmul.f32 %v669, 0.5
      %v2426 = vmul.f32 %v671, 0.5
      %v2427 = vmul.f32 %v514, 0.5
      %v2428 = vmul.f32 %v516, 0.5
      %v2429 = vmul.f32 %v675, 0.5
      %v2430 = vmul.f32 %v677, 0.5
      %v2431 = vmul.f32 %v520, 0.5
      %v2432 = vmul.f32 %v522, 0.5
      %v2433 = vmul.f32 %v681, 0.5
      %v2434 = vmul.f32 %v683, 0.5
      %v2435 = vmul.f32 %v526, 0.5
      %v2436 = vmul.f32 %v528, 0.5
      %v2437 = vmul.f32 %v687, 0.5
      %v2438 = vmul.f32 %v689, 0.5
      %v2439 = vmul.f32 %v532, 0.5
      %v2440 = vmul.f32 %v534, 0.5
      %v2441 = vmul.f32 %v693, 0.5
      %v2442 = vmul.f32 %v695, 0.5
      %v2443 = vmul.f32 %v538, 0.5
      %v2444 = vmul.f32 %v540, 0.5
      %v2445 = vmul.f32 %v699, 0.5
      %v2446 = vmul.f32 %v701, 0.5
      %v2447 = vmul.f32 %v544, 0.5
      %v2448 = vmul.f32 %v546, 0.5
      %v2449 = vmul.f32 %v705, 0.5
      %v2450 = vmul.f32 %v707, 0.5
      %v2451 = vmul.f32 %v550, 0.5
      %v2452 = vmul.f32 %v552, 0.5
      %v2453 = vmul.f32 %v711, 0.5
      %v2454 = vmul.f32 %v713, 0.5
      %v2455 = vmul.f32 %v556, 0.5
      %v2456 = vmul.f32 %v558, 0.5
      %v2457 = vmul.f32 %v717, 0.5
      %v2458 = vmul.f32 %v719, 0.5
      %v2459 = vmul.f32 %v562, 0.5
      %v2460 = vmul.f32 %v564, 0.5
      %v2461 = vmul.f32 %v723, 0.5
      %v2462 = vmul.f32 %v725, 0.5
      %v2463 = vmul.f32 %v568, 0.5
      %v2464 = vmul.f32 %v570, 0.5
      %v2465 = vmul.f32 %v729, 0.5
      %v2466 = vmul.f32 %v731, 0.5
      %v2467 = vmul.f32 %v574, 0.5
      %v2468 = vmul.f32 %v576, 0.5
      %v2469 = vmul.f32 %v735, 0.5
      %v2470 = vmul.f32 %v737, 0.5
      %v2471 = vmul.f32 %v580, 0.5
      %v2472 = vmul.f32 %v582, 0.5
      %v2473 = vmul.f32 %v741, 0.5
      %v2474 = vmul.f32 %v743, 0.5
      %v2475 = vmul.f32 %v586, 0.5
      %v2476 = vmul.f32 %v588, 0.5
      %v2477 = vmul.f32 %v747, 0.5
      %v2478 = vmul.f32 %v749, 0.5
      %v2479 = vadd.f32 %v2351, 1.0
      %v2480 = vadd.f32 %v2352, 1.0
      %v2481 = vadd.f32 %v2353, 1.0
      %v2482 = vadd.f32 %v2354, 1.0
      %v2483 = vadd.f32 %v2355, 1.0
      %v2484 = vadd.f32 %v2356, 1.0
      %v2485 = vadd.f32 %v2357, 1.0
      %v2486 = vadd.f32 %v2358, 1.0
      %v2487 = vadd.f32 %v2359, 1.0
      %v2488 = vadd.f32 %v2360, 1.0
      %v2489 = vadd.f32 %v2361, 1.0
      %v2490 = vadd.f32 %v2362, 1.0
      %v2491 = vadd.f32 %v2363, 1.0
      %v2492 = vadd.f32 %v2364, 1.0
      %v2493 = vadd.f32 %v2365, 1.0
      %v2494 = vadd.f32 %v2366, 1.0
      %v2495 = vadd.f32 %v2367, 1.0
      %v2496 = vadd.f32 %v2368, 1.0
      %v2497 = vadd.f32 %v2369, 1.0
      %v2498 = vadd.f32 %v2370, 1.0
      %v2499 = vadd.f32 %v2371, 1.0
      %v2500 = vadd.f32 %v2372, 1.0
      %v2501 = vadd.f32 %v2373, 1.0
      %v2502 = vadd.f32 %v2374, 1.0
      %v2503 = vadd.f32 %v2375, 1.0
      %v2504 = vadd.f32 %v2376, 1.0
      %v2505 = vadd.f32 %v2377, 1.0
      %v2506 = vadd.f32 %v2378, 1.0
      %v2507 = vadd.f32 %v2379, 1.0
      %v2508 = vadd.f32 %v2380, 1.0
      %v2509 = vadd.f32 %v2381, 1.0
      %v2510 = vadd.f32 %v2382, 1.0
      %v2511 = vadd.f32 %v2383, 1.0
      %v2512 = vadd.f32 %v2384, 1.0
      %v2513 = vadd.f32 %v2385, 1.0
      %v2514 = vadd.f32 %v2386, 1.0
      %v2515 = vadd.f32 %v2387, 1.0
      %v2516 = vadd.f32 %v2388, 1.0
      %v2517 = vadd.f32 %v2389, 1.0
      %v2518 = vadd.f32 %v2390, 1.0
      %v2519 = vadd.f32 %v2391, 1.0
      %v2520 = vadd.f32 %v2392, 1.0
      %v2521 = vadd.f32 %v2393, 1.0
      %v2522 = vadd.f32 %v2394, 1.0
      %v2523 = vadd.f32 %v2395, 1.0
      %v2524 = vadd.f32 %v2396, 1.0
      %v2525 = vadd.f32 %v2397, 1.0
      %v2526 = vadd.f32 %v2398, 1.0
      %v2527 = vadd.f32 %v2399, 1.0
      %v2528 = vadd.f32 %v2400, 1.0
      %v2529 = vadd.f32 %v2401, 1.0
      %v2530 = vadd.f32 %v2402, 1.0
      %v2531 = vadd.f32 %v2403, 1.0
      %v2532 = vadd.f32 %v2404, 1.0
      %v2533 = vadd.f32 %v2405, 1.0
      %v2534 = vadd.f32 %v2406, 1.0
      %v2535 = vadd.f32 %v2407, 1.0
      %v2536 = vadd.f32 %v2408, 1.0
      %v2537 = vadd.f32 %v2409, 1.0
      %v2538 = vadd.f32 %v2410, 1.0
      %v2539 = vadd.f32 %v2411, 1.0
      %v2540 = vadd.f32 %v2412, 1.0
      %v2541 = vadd.f32 %v2413, 1.0
      %v2542 = vadd.f32 %v2414, 1.0
      %v2543 = vmul.f32 %v2415, %v2479
      %v2544 = vmul.f32 %v2416, %v2480
      %v2545 = vmul.f32 %v2417, %v2481
      %v2546 = vmul.f32 %v2418, %v2482
      %v2547 = vmul.f32 %v2419, %v2483
      %v2548 = vmul.f32 %v2420, %v2484
      %v2549 = vmul.f32 %v2421, %v2485
      %v2550 = vmul.f32 %v2422, %v2486
      %v2551 = vmul.f32 %v2423, %v2487
      %v2552 = vmul.f32 %v2424, %v2488
      %v2553 = vmul.f32 %v2425, %v2489
      %v2554 = vmul.f32 %v2426, %v2490
      %v2555 = vmul.f32 %v2427, %v2491
      %v2556 = vmul.f32 %v2428, %v2492
      %v2557 = vmul.f32 %v2429, %v2493
      %v2558 = vmul.f32 %v2430, %v2494
      %v2559 = vmul.f32 %v2431, %v2495
      %v2560 = vmul.f32 %v2432, %v2496
      %v2561 = vmul.f32 %v2433, %v2497
      %v2562 = vmul.f32 %v2434, %v2498
      %v2563 = vmul.f32 %v2435, %v2499
      %v2564 = vmul.f32 %v2436, %v2500
      %v2565 = vmul.f32 %v2437, %v2501
      %v2566 = vmul.f32 %v2438, %v2502
      %v2567 = vmul.f32 %v2439, %v2503
      %v2568 = vmul.f32 %v2440, %v2504
      %v2569 = vmul.f32 %v2441, %v2505
      %v2570 = vmul.f32 %v2442, %v2506
      %v2571 = vmul.f32 %v2443, %v2507
      %v2572 = vmul.f32 %v2444, %v2508
      %v2573 = vmul.f32 %v2445, %v2509
      %v2574 = vmul.f32 %v2446, %v2510
      %v2575 = vmul.f32 %v2447, %v2511
      %v2576 = vmul.f32 %v2448, %v2512
      %v2577 = vmul.f32 %v2449, %v2513
      %v2578 = vmul.f32 %v2450, %v2514
      %v2579 = vmul.f32 %v2451, %v2515
      %v2580 = vmul.f32 %v2452, %v2516
      %v2581 = vmul.f32 %v2453, %v2517
      %v2582 = vmul.f32 %v2454, %v2518
      %v2583 = vmul.f32 %v2455, %v2519
      %v2584 = vmul.f32 %v2456, %v2520
      %v2585 = vmul.f32 %v2457, %v2521
      %v2586 = vmul.f32 %v2458, %v2522
      %v2587 = vmul.f32 %v2459, %v2523
      %v2588 = vmul.f32 %v2460, %v2524
      %v2589 = vmul.f32 %v2461, %v2525
      %v2590 = vmul.f32 %v2462, %v2526
      %v2591 = vmul.f32 %v2463, %v2527
      %v2592 = vmul.f32 %v2464, %v2528
      %v2593 = vmul.f32 %v2465, %v2529
      %v2594 = vmul.f32 %v2466, %v2530
      %v2595 = vmul.f32 %v2467, %v2531
      %v2596 = vmul.f32 %v2468, %v2532
      %v2597 = vmul.f32 %v2469, %v2533
      %v2598 = vmul.f32 %v2470, %v2534
      %v2599 = vmul.f32 %v2471, %v2535
      %v2600 = vmul.f32 %v2472, %v2536
      %v2601 = vmul.f32 %v2473, %v2537
      %v2602 = vmul.f32 %v2474, %v2538
      %v2603 = vmul.f32 %v2475, %v2539
      %v2604 = vmul.f32 %v2476, %v2540
      %v2605 = vmul.f32 %v2477, %v2541
      %v2606 = vmul.f32 %v2478, %v2542
      %v2607 = vld [vmem:[%s3] sm:$0x3]
      %v2608 = vld [vmem:[%s4] sm:$0x3]
      %2610 = vset.pattern.permute.xlu0 0
      %2611 = vperm.xlu0 %2610, %v2608
      %v2612 = vpop.permute.xlu0 %2611
      %2614 = vmatprep.subr.mxu0 %v2544
      %2615 = vmatpush1.msra.mxu0 %v2543
      %2616 = vmatprep.subr.mxu0 %v2548
      %2617 = vmatpush1.msra.mxu0 %v2547
      %2618 = vmatprep.subr.mxu0 %v2552
      %2619 = vmatpush1.msra.mxu0 %v2551
      %2620 = vmatprep.subr.mxu0 %v2556
      %2621 = vmatpush1.msra.mxu0 %v2555
      %2622 = vmatprep.subr.mxu0 %v2560
      %2623 = vmatpush1.msra.mxu0 %v2559
      %2624 = vmatprep.subr.mxu0 %v2564
      %2625 = vmatpush1.msra.mxu0 %v2563
      %2626 = vmatprep.subr.mxu0 %v2568
      %2627 = vmatpush1.msra.mxu0 %v2567
      %2628 = vmatprep.subr.mxu0 %v2572
      %2629 = vmatpush1.msra.mxu0 %v2571
      %2630 = vmatprep.subr.mxu0 %v2576
      %2631 = vmatpush1.msra.mxu0 %v2575
      %2632 = vmatprep.subr.mxu0 %v2580
      %2633 = vmatpush1.msra.mxu0 %v2579
      %2634 = vmatprep.subr.mxu0 %v2584
      %2635 = vmatpush1.msra.mxu0 %v2583
      %2636 = vmatprep.subr.mxu0 %v2588
      %2637 = vmatpush1.msra.mxu0 %v2587
      %2638 = vmatprep.subr.mxu0 %v2592
      %2639 = vmatpush1.msra.mxu0 %v2591
      %2640 = vmatprep.subr.mxu0 %v2596
      %2641 = vmatpush1.msra.mxu0 %v2595
      %2642 = vmatprep.subr.mxu0 %v2600
      %2643 = vmatpush1.msra.mxu0 %v2599
      %2644 = vmatprep.subr.mxu0 %v2604
      %2645 = vmatpush1.msra.mxu0 %v2603
      %2646 = vmatprep.subr.mxu0 0.0
      %2647 = vmatpush1.msra.mxu0 0.0
      %2648 = vmatprep.subr.mxu0 0.0
      %2649 = vmatpush1.msra.mxu0 0.0
      %2650 = vmatprep.subr.mxu0 0.0
      %2651 = vmatpush1.msra.mxu0 0.0
      %2652 = vmatprep.subr.mxu0 0.0
      %2653 = vmatpush1.msra.mxu0 0.0
      %2654 = vmatprep.subr.mxu0 0.0
      %2655 = vmatpush1.msra.mxu0 0.0
      %2656 = vmatprep.subr.mxu0 0.0
      %2657 = vmatpush1.msra.mxu0 0.0
      %2658 = vmatprep.subr.mxu0 0.0
      %2659 = vmatpush1.msra.mxu0 0.0
      %2660 = vmatprep.subr.mxu0 0.0
      %2661 = vmatpush1.msra.mxu0 0.0
      %2662 = vmatprep.subr.mxu0 0.0
      %2663 = vmatpush1.msra.mxu0 0.0
      %2664 = vmatprep.subr.mxu0 0.0
      %2665 = vmatpush1.msra.mxu0 0.0
      %2666 = vmatprep.subr.mxu0 0.0
      %2667 = vmatpush1.msra.mxu0 0.0
      %2668 = vmatprep.subr.mxu0 0.0
      %2669 = vmatpush1.msra.mxu0 0.0
      %2670 = vmatprep.subr.mxu0 0.0
      %2671 = vmatpush1.msra.mxu0 0.0
      %2672 = vmatprep.subr.mxu0 0.0
      %2673 = vmatpush1.msra.mxu0 0.0
      %2674 = vmatprep.subr.mxu0 0.0
      %2675 = vmatpush1.msra.mxu0 0.0
      %2676 = vmatprep.subr.mxu0 0.0
      %2677 = vmatpush1.msra.mxu0 0.0
      %2678 = vmatprep.mubr.f32.mxu0 0.0
      %2679 = vmatmul.mubr.f32.gmra.mrb[0].mxu0 %v2607
      %v2680 = vpop.f32.mrb[0].mxu0
      %v2681 = vadd.f32 %v2612, %v2680
      %v2682 = vpop.f32.mrb[0].mxu0
      %v2683 = vadd.f32 %v2612, %v2682
      %2684 = vdwg.mxu0
      %2685 = vmatprep.subr.mxu0 %v2546
      %2686 = vmatpush1.msra.mxu0 %v2545
      %2687 = vmatprep.subr.mxu0 %v2550
      %2688 = vmatpush1.msra.mxu0 %v2549
      %2689 = vmatprep.subr.mxu0 %v2554
      %2690 = vmatpush1.msra.mxu0 %v2553
      %2691 = vmatprep.subr.mxu0 %v2558
      %2692 = vmatpush1.msra.mxu0 %v2557
      %2693 = vmatprep.subr.mxu0 %v2562
      %2694 = vmatpush1.msra.mxu0 %v2561
      %2695 = vmatprep.subr.mxu0 %v2566
      %2696 = vmatpush1.msra.mxu0 %v2565
      %2697 = vmatprep.subr.mxu0 %v2570
      %2698 = vmatpush1.msra.mxu0 %v2569
      %2699 = vmatprep.subr.mxu0 %v2574
      %2700 = vmatpush1.msra.mxu0 %v2573
      %2701 = vmatprep.subr.mxu0 %v2578
      %2702 = vmatpush1.msra.mxu0 %v2577
      %2703 = vmatprep.subr.mxu0 %v2582
      %2704 = vmatpush1.msra.mxu0 %v2581
      %2705 = vmatprep.subr.mxu0 %v2586
      %2706 = vmatpush1.msra.mxu0 %v2585
      %2707 = vmatprep.subr.mxu0 %v2590
      %2708 = vmatpush1.msra.mxu0 %v2589
      %2709 = vmatprep.subr.mxu0 %v2594
      %2710 = vmatpush1.msra.mxu0 %v2593
      %2711 = vmatprep.subr.mxu0 %v2598
      %2712 = vmatpush1.msra.mxu0 %v2597
      %2713 = vmatprep.subr.mxu0 %v2602
      %2714 = vmatpush1.msra.mxu0 %v2601
      %2715 = vmatprep.subr.mxu0 %v2606
      %2716 = vmatpush1.msra.mxu0 %v2605
      %2717 = vmatprep.subr.mxu0 0.0
      %2718 = vmatpush1.msra.mxu0 0.0
      %2719 = vmatprep.subr.mxu0 0.0
      %2720 = vmatpush1.msra.mxu0 0.0
      %2721 = vmatprep.subr.mxu0 0.0
      %2722 = vmatpush1.msra.mxu0 0.0
      %2723 = vmatprep.subr.mxu0 0.0
      %2724 = vmatpush1.msra.mxu0 0.0
      %2725 = vmatprep.subr.mxu0 0.0
      %2726 = vmatpush1.msra.mxu0 0.0
      %2727 = vmatprep.subr.mxu0 0.0
      %2728 = vmatpush1.msra.mxu0 0.0
      %2729 = vmatprep.subr.mxu0 0.0
      %2730 = vmatpush1.msra.mxu0 0.0
      %2731 = vmatprep.subr.mxu0 0.0
      %2732 = vmatpush1.msra.mxu0 0.0
      %2733 = vmatprep.subr.mxu0 0.0
      %2734 = vmatpush1.msra.mxu0 0.0
      %2735 = vmatprep.subr.mxu0 0.0
      %2736 = vmatpush1.msra.mxu0 0.0
      %2737 = vmatprep.subr.mxu0 0.0
      %2738 = vmatpush1.msra.mxu0 0.0
      %2739 = vmatprep.subr.mxu0 0.0
      %2740 = vmatpush1.msra.mxu0 0.0
      %2741 = vmatprep.subr.mxu0 0.0
      %2742 = vmatpush1.msra.mxu0 0.0
      %2743 = vmatprep.subr.mxu0 0.0
      %2744 = vmatpush1.msra.mxu0 0.0
      %2745 = vmatprep.subr.mxu0 0.0
      %2746 = vmatpush1.msra.mxu0 0.0
      %2747 = vmatprep.subr.mxu0 0.0
      %2748 = vmatpush1.msra.mxu0 0.0
      %2749 = vmatprep.mubr.f32.mxu0 0.0
      %2750 = vmatmul.mubr.f32.gmra.mrb[0].mxu0 %v2607
      %v2751 = vpop.f32.mrb[0].mxu0
      %v2752 = vadd.f32 %v2612, %v2751
      %v2753 = vpop.f32.mrb[0].mxu0
      %v2754 = vadd.f32 %v2612, %v2753
      %2755 = vdwg.mxu0
      %v2760 = vcombine.low %v2681, %v2683
      %v2761 = vcombine.low %v2752, %v2754
      %v2763 = vunpack.c.l.s4 1983009808
      %v2764 = vunpack.c.0.s8 %v2763
      %v2765 = vlaneseq
      %v2766 = vshrl.u32 %v2765, 7
      %v2767 = vsub.s32 %v2764, %v2766
      %v2768 = vrot.slane %v2760, %v2767
      %v2770 = vunpack.c.l.s4 1983009808
      %v2771 = vunpack.c.0.s8 %v2770
      %v2772 = vlaneseq
      %v2773 = vshrl.u32 %v2772, 7
      %v2774 = vsub.s32 %v2771, %v2773
      %v2775 = vrot.slane %v2761, %v2774
      %v2776 = vcombine.low %v2768, %v2775
      %2778 = vst [vmem:[%s262] sm:$0xff] %v2776
      %s2779 = smul.u32 4, %s21
      %p2780 = scmp.lt.s32.totalorder %s20, 1
      %s2781 = scalar_select %p2780, %s20, 1
      %p2782 = scmp.lt.s32.totalorder %s2779, 3
      %s2783 = scalar_select %p2782, %s2779, 3
      %s2784 = smul.addr %s2781, 4
      %s2785 = sadd.s32 %s2783, %s2784
      %s2786 = smul.addr %s2785, 2
      %s2787 = scalar_lea.vmem %s5, %s2786
      // Predicated region
      $region41: #{fno3d_binseg_forward.19} parent=39 // pred_check
        %p2788 = pneg %p160
      $region42: #{fno3d_binseg_forward.19} parent=39 // pred_check_branch
        %2790 = sbr.rel (%p2788) target = $region44
      $region43: #{fno3d_binseg_forward.19} parent=39 // pred_region
        %s2791 = smul.u32 4, %s21
      $region44: #{fno3d_binseg_forward.19} parent=39 // pred_fallthru
        _
    $region40: #{fno3d_binseg_forward.19} parent=5 // pred_fallthru
      _
    %p2792 = scmp.le.s32.totalorder 2, %s11
    // Predicated region
    $region45: #{fno3d_binseg_forward.19} parent=5 // pred_check
      %p2793 = pneg %p2792
    $region46: #{fno3d_binseg_forward.19} parent=5 // pred_check_branch
      %2795 = sbr.rel (%p2793) target = $region48
    $region47: #{fno3d_binseg_forward.19} parent=5 // pred_region
      %s2796 = ssub.s32 %s11, 2
      // Predicated region
      $region49: #{fno3d_binseg_forward.19} parent=47 // pred_check
        %p2797 = pneg %p166
      $region50: #{fno3d_binseg_forward.19} parent=47 // pred_check_branch
        %2799 = sbr.rel (%p2797) target = $region52
      $region51: #{fno3d_binseg_forward.19} parent=47 // pred_region
        %s2800 = smul.u32 4, %s23
        %p2801 = scmp.lt.s32.totalorder %s22, 1
        %s2802 = scalar_select %p2801, %s22, 1
        %p2803 = scmp.lt.s32.totalorder %s2800, 3
        %s2804 = scalar_select %p2803, %s2800, 3
        %s2805 = smul.addr %s2802, 4
        %s2806 = sadd.s32 %s2804, %s2805
        %s2807 = smul.addr %s2806, 2
        %s2808 = scalar_lea.vmem %s5, %s2807
      $region52: #{fno3d_binseg_forward.19} parent=47 // pred_fallthru
        _
    $region48: #{fno3d_binseg_forward.19} parent=5 // pred_fallthru
      _
  $region6: #{fno3d_binseg_forward.19} parent=0 // loop_footer
    %s15 = sadd.s32 1, %s11
  $region7: #{fno3d_binseg_forward.19} parent=0 // loop_footer_branch
    %10 = sbr.rel target = $region3
  $region8: #{fno3d_binseg_forward.19} parent=0 // loop_exit
    _

</llo_original>
